<compile_context>
chip_gen: v7x
topology: tpu7x:2x2x1
jax: 0.10.0
libtpu: 0.0.40
codegen_flags: <defaults>
</compile_context>

<pallas_src>
import functools

import jax
import jax.numpy as jnp
from jax.experimental import pallas as pl
from jax.experimental.pallas import tpu as pltpu


# ----------------------------- helpers --------------------------------------

def _pick_tile(dim, candidates):
    for c in candidates:
        if dim % c == 0:
            return c
    return dim  # full-extent block (always legal: equals the array dim)


# ------------------------ fused matmul + BN + res + ReLU ---------------------

def _matmul_bn_kernel(*refs, relu, add_res):
    if add_res:
        x_ref, w_ref, shift_ref, res_ref, o_ref, acc_ref = refs
    else:
        x_ref, w_ref, shift_ref, o_ref, acc_ref = refs
        res_ref = None
    k = pl.program_id(1)

    @pl.when(k == 0)
    def _():
        acc_ref[...] = jnp.zeros_like(acc_ref)

    # bf16 MXU inputs, f32 accumulation.
    acc_ref[...] += jnp.dot(
        x_ref[...].astype(jnp.bfloat16),
        w_ref[...].astype(jnp.bfloat16),
        preferred_element_type=jnp.float32)

    @pl.when(k == pl.num_programs(1) - 1)
    def _():
        y = acc_ref[...] + shift_ref[...]          # BN shift (scale folded into W)
        if add_res:
            y = y + res_ref[...].astype(jnp.float32)
        if relu:
            y = jnp.maximum(y, 0.0)
        o_ref[...] = y.astype(o_ref.dtype)


def matmul_bn(x2, w, shift, residual2=None, relu=False, out_dtype=jnp.bfloat16):
    """Fused (X @ W) + shift [+ residual] [ReLU], tiled over M and K."""
    M, K = x2.shape
    K2, N = w.shape
    assert K == K2
    tm = _pick_tile(M, (256, 512, 128))
    tk = _pick_tile(K, (256, 512, 192, 128))
    grid = (M // tm, K // tk)

    in_specs = [
        pl.BlockSpec((tm, tk), lambda i, k: (i, k)),
        pl.BlockSpec((tk, N), lambda i, k: (k, 0)),
        pl.BlockSpec((1, N), lambda i, k: (0, 0)),
    ]
    args = [x2, w, shift.reshape(1, N).astype(jnp.float32)]
    if residual2 is not None:
        in_specs.append(pl.BlockSpec((tm, N), lambda i, k: (i, 0)))
        args.append(residual2)

    kernel = functools.partial(
        _matmul_bn_kernel, relu=relu, add_res=residual2 is not None)

    return pl.pallas_call(
        kernel,
        out_shape=jax.ShapeDtypeStruct((M, N), out_dtype),
        grid_spec=pltpu.PrefetchScalarGridSpec(
            num_scalar_prefetch=0,
            grid=grid,
            in_specs=in_specs,
            out_specs=pl.BlockSpec((tm, N), lambda i, k: (i, 0)),
            scratch_shapes=[pltpu.VMEM((tm, N), jnp.float32)],
        ),
        compiler_params=pltpu.CompilerParams(
            dimension_semantics=("parallel", "arbitrary")),
    )(*args)


def conv1x1_bn(x_nhwc, w, shift, residual=None, relu=False):
    B, H, W, C = x_nhwc.shape
    x2 = x_nhwc.reshape(B * H * W, C)
    res2 = None
    if residual is not None:
        res2 = residual.reshape(B * H * W, residual.shape[-1])
    y2 = matmul_bn(x2, w, shift, res2, relu)
    return y2.reshape(B, H, W, w.shape[-1])


# -------------------- 3x3 conv: in-kernel tap accumulation -------------------

def _conv3x3_bn_kernel(x_ref, w_ref, shift_ref, o_ref, *, height, width, relu):
    # x_ref: (3, (H+2)*W, C) f32   -- 3 column-shifted, H-padded, flattened copies
    # w_ref: (9, C, N) bf16 (tap-major, BN scale folded), o_ref: (H*W, N)
    hw = height * width
    n = w_ref.shape[-1]
    acc = jnp.zeros((hw, n), jnp.float32)
    for dx in range(3):
        for dy in range(3):
            # Row offset dy*width is a multiple of 8 (width % 8 == 0): aligned.
            patch = x_ref[dx, pl.ds(dy * width, hw), :].astype(jnp.bfloat16)
            acc = acc + jnp.dot(patch, w_ref[dy * 3 + dx],
                                preferred_element_type=jnp.float32)
    y = acc + shift_ref[...]
    if relu:
        y = jnp.maximum(y, 0.0)
    o_ref[...] = y.astype(o_ref.dtype)


def conv3x3_bn(x_nhwc, w9, shift, relu=True):
    """3x3 / stride-1 / pad-1 conv + BN [+ ReLU]; taps accumulated in-kernel."""
    B, H, W, C = x_nhwc.shape
    N = w9.shape[-1]
    assert W % 8 == 0, "width must be a multiple of 8 for aligned tap slices"
    # SAME padding; keep this feed in f32 so the in-kernel row-offset slices
    # stay on the unpacked (8,128) layout path.
    xp = jnp.pad(x_nhwc.astype(jnp.float32), ((0, 0), (1, 1), (1, 1), (0, 0)))
    # 3 column-shifted copies, flattened over (H+2, W): tap (dy, dx) becomes a
    # contiguous row slice [dy*W, dy*W + H*W) of copy dx.  Only 3x the
    # activation hits HBM (vs 9x for a full im2col).
    cols = [xp[:, :, dx:dx + W, :].reshape(B, (H + 2) * W, C) for dx in range(3)]
    xs = jnp.stack(cols, axis=1)                      # (B, 3, (H+2)*W, C)

    kernel = functools.partial(_conv3x3_bn_kernel, height=H, width=W, relu=relu)
    y2 = pl.pallas_call(
        kernel,
        out_shape=jax.ShapeDtypeStruct((B, H * W, N), jnp.bfloat16),
        grid_spec=pltpu.PrefetchScalarGridSpec(
            num_scalar_prefetch=0,
            grid=(B,),
            in_specs=[
                pl.BlockSpec((None, 3, (H + 2) * W, C), lambda b: (b, 0, 0, 0)),
                pl.BlockSpec((9, C, N), lambda b: (0, 0, 0)),
                pl.BlockSpec((1, N), lambda b: (0, 0)),
            ],
            out_specs=pl.BlockSpec((None, H * W, N), lambda b: (b, 0, 0)),
        ),
        compiler_params=pltpu.CompilerParams(
            dimension_semantics=("parallel",)),
    )(xs, w9, shift.reshape(1, N).astype(jnp.float32))
    return y2.reshape(B, H, W, N)


# ----------------------- 7x7 stride-2 stem conv ------------------------------

def conv7x7_bn_relu(x_nhwc, w, shift, stride=2, pad=3):
    B, H, W, C = x_nhwc.shape
    Ho = (H + 2 * pad - 7) // stride + 1
    Wo = (W + 2 * pad - 7) // stride + 1
    xp = jnp.pad(x_nhwc, ((0, 0), (pad, pad), (pad, pad), (0, 0)))
    patches = []
    for dy in range(7):
        for dx in range(7):
            patches.append(
                xp[:, dy:dy + (Ho - 1) * stride + 1:stride,
                   dx:dx + (Wo - 1) * stride + 1:stride, :])
    x2 = jnp.concatenate(patches, axis=-1).reshape(B * Ho * Wo, 49 * C)
    y2 = matmul_bn(x2, w, shift, relu=True)
    return y2.reshape(B, Ho, Wo, w.shape[-1])


# --------------------------- 3x3 / stride-2 maxpool --------------------------

def _max9_kernel(x_ref, o_ref):
    o_ref[...] = jnp.max(x_ref[...], axis=0)


def maxpool_3x3_s2(x_nhwc):
    B, H, W, C = x_nhwc.shape
    Ho = (H + 2 - 3) // 2 + 1
    Wo = (W + 2 - 3) // 2 + 1
    xp = jnp.pad(x_nhwc, ((0, 0), (1, 1), (1, 1), (0, 0)),
                 constant_values=-jnp.inf)
    wins = []
    for dy in range(3):
        for dx in range(3):
            wins.append(xp[:, dy:dy + 2 * Ho - 1:2, dx:dx + 2 * Wo - 1:2, :])
    xs = jnp.stack(wins, axis=0).reshape(9, B * Ho * Wo, C)
    M = B * Ho * Wo
    tm = _pick_tile(M, (256, 512, 128))
    y2 = pl.pallas_call(
        _max9_kernel,
        out_shape=jax.ShapeDtypeStruct((M, C), x_nhwc.dtype),
        grid_spec=pltpu.PrefetchScalarGridSpec(
            num_scalar_prefetch=0,
            grid=(M // tm,),
            in_specs=[pl.BlockSpec((9, tm, C), lambda i: (0, i, 0))],
            out_specs=pl.BlockSpec((tm, C), lambda i: (i, 0)),
        ),
        compiler_params=pltpu.CompilerParams(
            dimension_semantics=("parallel",)),
    )(xs)
    return y2.reshape(B, Ho, Wo, C)


# ------------------------------- parameters ----------------------------------

def _make_conv_weight(key, cin, cout, k):
    # kaiming_normal_(mode='fan_out', nonlinearity='relu'): std = sqrt(2/fan_out)
    fan_out = cout * k * k
    std = (2.0 / fan_out) ** 0.5
    return jax.random.normal(key, (k, k, cin, cout), jnp.float32) * std


def init_stage0_params(key, eps=1e-5):
    # (weight name, cin, cout, kernel, bn-shift name)
    convs = [
        ("w2",  3,   64, 7, "b3"),    # layer2  + BN layer3
        ("w6",  64,  64, 1, "b7"),    # layer6  + BN layer7
        ("w9",  64,  64, 3, "b11"),   # layer9  + BN layer11
        ("w10", 64, 256, 1, "b14"),   # layer10 + BN layer14
        ("w13", 64, 256, 1, "b15"),   # layer13 + BN layer15
        ("w18", 256, 64, 1, "b19"),   # layer18 + BN layer19
        ("w21", 64,  64, 3, "b22"),   # layer21 + BN layer22
        ("w24", 64, 256, 1, "b25"),   # layer24 + BN layer25
    ]
    p = {}
    for i, (wname, cin, cout, k, bname) in enumerate(convs):
        w = _make_conv_weight(jax.random.fold_in(key, i), cin, cout, k)
        # Eval-mode BN with gamma=1, beta=0, running_mean=0, running_var=1:
        # fold scale into the conv weight, keep shift as a bias.
        scale = jnp.ones((cout,), jnp.float32) / jnp.sqrt(1.0 + eps)
        shift = jnp.zeros((cout,), jnp.float32)
        w = w * scale
        if k == 1:
            w2d = w.reshape(cin, cout)
        elif k == 3:
            w2d = w.reshape(9, cin, cout)          # tap-major for the 3x3 kernel
        else:
            w2d = w.reshape(k * k * cin, cout)
        p[wname] = w2d.astype(jnp.bfloat16)
        p[bname] = shift
    return p


# --------------------------------- forward -----------------------------------

def stage0_forward(x_nchw, p):
    x = jnp.transpose(x_nchw, (0, 2, 3, 1)).astype(jnp.bfloat16)   # NCHW -> NHWC

    # stem: conv7x7/2 + BN3 + ReLU4, then maxpool 3x3/2 (layer5)
    out4 = conv7x7_bn_relu(x, p["w2"], p["b3"])
    out5 = maxpool_3x3_s2(out4)

    # first bottleneck (projection residual)
    out8 = conv1x1_bn(out5, p["w6"], p["b7"], relu=True)            # 64->64
    out12 = conv3x3_bn(out8, p["w9"], p["b11"], relu=True)          # 64->64 3x3
    out14 = conv1x1_bn(out5, p["w10"], p["b14"], relu=False)        # 64->256 proj
    out17 = conv1x1_bn(out12, p["w13"], p["b15"],
                       residual=out14, relu=True)                   # 64->256 (+proj, ReLU17)

    # second bottleneck (identity residual)
    out20 = conv1x1_bn(out17, p["w18"], p["b19"], relu=True)        # 256->64
    out23 = conv3x3_bn(out20, p["w21"], p["b22"], relu=True)        # 64->64 3x3
    out25 = conv1x1_bn(out23, p["w24"], p["b25"],
                       residual=out17, relu=False)                  # 64->256 (+out17)

    return jnp.transpose(out25.astype(jnp.float32), (0, 3, 1, 2))   # NHWC -> NCHW


# ----------------------------------- main -------------------------------------

if __name__ == "__main__":
    key = jax.random.PRNGKey(0)
    k_x, k_p = jax.random.split(key)

    # Small but module-consistent input: batch=2, 3 channels, 32x32 spatial.
    x = jax.random.normal(k_x, (2, 3, 32, 32), jnp.float32)
    params = init_stage0_params(k_p)

    out = jax.jit(stage0_forward)(x, params)
    out = jax.block_until_ready(out)

    assert out.shape == (2, 256, 8, 8), out.shape
    assert bool(jnp.all(jnp.isfinite(out)))
    print("KERNEL_OK")
</pallas_src>

<mosaic_0001>
module attributes {stable_mosaic.version = 11 : i64} {
  func.func @_matmul_bn_kernel(%arg0: i32, %arg1: i32, %arg2: memref<256x147xbf16, #tpu.memory_space<vmem>>, %arg3: memref<147x64xbf16, #tpu.memory_space<vmem>>, %arg4: memref<1x64xf32, #tpu.memory_space<vmem>>, %arg5: memref<256x64xbf16, #tpu.memory_space<vmem>>, %arg6: memref<256x64xf32, #tpu.memory_space<vmem>>) attributes {dimension_semantics = [#tpu.dimension_semantics<parallel>, #tpu.dimension_semantics<arbitrary>], iteration_bounds = array<i64: 2, 1>, scalar_prefetch = 0 : i64, scratch_operands = 1 : i64, tpu.core_type = #tpu.core_type<tc>, window_params = [{transform_indices = @transform_0, window_bounds = array<i64: 256, 147>}, {transform_indices = @transform_1, window_bounds = array<i64: 147, 64>}, {pipeline_mode = #tpu.pipeline_mode<synchronous>, transform_indices = @transform_2, window_bounds = array<i64: 1, 64>}, {transform_indices = @transform_3, window_bounds = array<i64: 256, 64>}]} {
    %c0_i32 = arith.constant 0 : i32
    %0 = arith.cmpi eq, %arg1, %c0_i32 : i32
    %1 = arith.extui %0 : i1 to i32
    %c0_i32_0 = arith.constant 0 : i32
    %2 = arith.cmpi ne, %1, %c0_i32_0 : i32
    scf.if %2 {
      %cst_10 = arith.constant 0.000000e+00 : f32
      %12 = vector.broadcast %cst_10 : f32 to vector<256x64xf32>
      %c0_11 = arith.constant 0 : index
      %c0_12 = arith.constant 0 : index
      %13 = vector.load %arg6[%c0_11, %c0_12] : memref<256x64xf32, #tpu.memory_space<vmem>>, vector<256x64xf32>
      tpu.vector_store %arg6[%c0_11, %c0_12], %12 {strides = array<i32>} : memref<256x64xf32, #tpu.memory_space<vmem>>, vector<256x64xf32>,
    } else {
    }
    %c0 = arith.constant 0 : index
    %c0_1 = arith.constant 0 : index
    %3 = vector.load %arg6[%c0, %c0_1] : memref<256x64xf32, #tpu.memory_space<vmem>>, vector<256x64xf32>
    %c0_2 = arith.constant 0 : index
    %c0_3 = arith.constant 0 : index
    %4 = vector.load %arg2[%c0_2, %c0_3] : memref<256x147xbf16, #tpu.memory_space<vmem>>, vector<256x147xbf16>
    %c0_4 = arith.constant 0 : index
    %c0_5 = arith.constant 0 : index
    %5 = vector.load %arg3[%c0_4, %c0_5] : memref<147x64xbf16, #tpu.memory_space<vmem>>, vector<147x64xbf16>
    %cst = arith.constant dense<0.000000e+00> : vector<256x64xf32>
    %6 = tpu.matmul %4, %5, %cst {dimension_numbers = #tpu.dot_dimension_numbers<[1], [0], [0], [1], [0, 0, 1, 1], [], []>} : vector<256x147xbf16>, vector<147x64xbf16>, vector<256x64xf32> -> vector<256x64xf32>
    %7 = arith.addf %3, %6 : vector<256x64xf32>
    %c0_6 = arith.constant 0 : index
    %c0_7 = arith.constant 0 : index
    %8 = vector.load %arg6[%c0_6, %c0_7] : memref<256x64xf32, #tpu.memory_space<vmem>>, vector<256x64xf32>
    tpu.vector_store %arg6[%c0_6, %c0_7], %7 {strides = array<i32>} : memref<256x64xf32, #tpu.memory_space<vmem>>, vector<256x64xf32>,
    %c0_i32_8 = arith.constant 0 : i32
    %9 = arith.cmpi eq, %arg1, %c0_i32_8 : i32
    %10 = arith.extui %9 : i1 to i32
    %c0_i32_9 = arith.constant 0 : i32
    %11 = arith.cmpi ne, %10, %c0_i32_9 : i32
    scf.if %11 {
      %c0_10 = arith.constant 0 : index
      %c0_11 = arith.constant 0 : index
      %12 = vector.load %arg6[%c0_10, %c0_11] : memref<256x64xf32, #tpu.memory_space<vmem>>, vector<256x64xf32>
      %c0_12 = arith.constant 0 : index
      %c0_13 = arith.constant 0 : index
      %13 = vector.load %arg4[%c0_12, %c0_13] : memref<1x64xf32, #tpu.memory_space<vmem>>, vector<1x64xf32>
      %14 = vector.broadcast %13 : vector<1x64xf32> to vector<256x64xf32>
      %15 = arith.addf %12, %14 : vector<256x64xf32>
      %cst_14 = arith.constant 0.000000e+00 : f32
      %16 = vector.broadcast %cst_14 : f32 to vector<256x64xf32>
      %17 = arith.maximumf %15, %16 : vector<256x64xf32>
      %18 = arith.truncf %17 : vector<256x64xf32> to vector<256x64xbf16>
      %c0_15 = arith.constant 0 : index
      %c0_16 = arith.constant 0 : index
      %19 = vector.load %arg5[%c0_15, %c0_16] : memref<256x64xbf16, #tpu.memory_space<vmem>>, vector<256x64xbf16>
      tpu.vector_store %arg5[%c0_15, %c0_16], %18 {strides = array<i32>} : memref<256x64xbf16, #tpu.memory_space<vmem>>, vector<256x64xbf16>,
    } else {
    }
    return
  }
  func.func @transform_0(%arg0: i32, %arg1: i32) -> (i32, i32) {
    %c0_i32 = arith.constant 0 : i32
    return %arg0, %arg1 : i32, i32
  }
  func.func @transform_1(%arg0: i32, %arg1: i32) -> (i32, i32) {
    %c0_i32 = arith.constant 0 : i32
    %c0_i32_0 = arith.constant 0 : i32
    return %arg1, %c0_i32 : i32, i32
  }
  func.func @transform_2(%arg0: i32, %arg1: i32) -> (i32, i32) {
    %c0_i32 = arith.constant 0 : i32
    %c0_i32_0 = arith.constant 0 : i32
    %c0_i32_1 = arith.constant 0 : i32
    return %c0_i32, %c0_i32_0 : i32, i32
  }
  func.func @transform_3(%arg0: i32, %arg1: i32) -> (i32, i32) {
    %c0_i32 = arith.constant 0 : i32
    %c0_i32_0 = arith.constant 0 : i32
    return %arg0, %c0_i32 : i32, i32
  }
}

module attributes {stable_mosaic.version = 11 : i64} {
  func.func @_max9_kernel(%arg0: i32, %arg1: memref<9x128x64xbf16, #tpu.memory_space<vmem>>, %arg2: memref<128x64xbf16, #tpu.memory_space<vmem>>) attributes {dimension_semantics = [#tpu.dimension_semantics<parallel>], iteration_bounds = array<i64: 1>, scalar_prefetch = 0 : i64, scratch_operands = 0 : i64, tpu.core_type = #tpu.core_type<tc>, window_params = [{transform_indices = @transform_0, window_bounds = array<i64: 9, 128, 64>}, {transform_indices = @transform_1, window_bounds = array<i64: 128, 64>}]} {
    %c0 = arith.constant 0 : index
    %c0_0 = arith.constant 0 : index
    %c0_1 = arith.constant 0 : index
    %0 = vector.load %arg1[%c0, %c0_0, %c0_1] : memref<9x128x64xbf16, #tpu.memory_space<vmem>>, vector<9x128x64xbf16>
    %cst = arith.constant dense<0xFF80> : vector<128x64xbf16>
    %1 = vector.multi_reduction <maximumf>, %0, %cst [0] : vector<9x128x64xbf16> to vector<128x64xbf16>
    %c0_2 = arith.constant 0 : index
    %c0_3 = arith.constant 0 : index
    %2 = vector.load %arg2[%c0_2, %c0_3] : memref<128x64xbf16, #tpu.memory_space<vmem>>, vector<128x64xbf16>
    tpu.vector_store %arg2[%c0_2, %c0_3], %1 {strides = array<i32>} : memref<128x64xbf16, #tpu.memory_space<vmem>>, vector<128x64xbf16>,
    return
  }
  func.func @transform_0(%arg0: i32) -> (i32, i32, i32) {
    %c0_i32 = arith.constant 0 : i32
    %c0_i32_0 = arith.constant 0 : i32
    %c0_i32_1 = arith.constant 0 : i32
    return %c0_i32, %arg0, %c0_i32_0 : i32, i32, i32
  }
  func.func @transform_1(%arg0: i32) -> (i32, i32) {
    %c0_i32 = arith.constant 0 : i32
    %c0_i32_0 = arith.constant 0 : i32
    return %arg0, %c0_i32 : i32, i32
  }
}

module attributes {stable_mosaic.version = 11 : i64} {
  func.func @_matmul_bn_kernel(%arg0: i32, %arg1: i32, %arg2: memref<128x64xbf16, #tpu.memory_space<vmem>>, %arg3: memref<64x64xbf16, #tpu.memory_space<vmem>>, %arg4: memref<1x64xf32, #tpu.memory_space<vmem>>, %arg5: memref<128x64xbf16, #tpu.memory_space<vmem>>, %arg6: memref<128x64xf32, #tpu.memory_space<vmem>>) attributes {dimension_semantics = [#tpu.dimension_semantics<parallel>, #tpu.dimension_semantics<arbitrary>], iteration_bounds = array<i64: 1, 1>, scalar_prefetch = 0 : i64, scratch_operands = 1 : i64, tpu.core_type = #tpu.core_type<tc>, window_params = [{transform_indices = @transform_0, window_bounds = array<i64: 128, 64>}, {transform_indices = @transform_1, window_bounds = array<i64: 64, 64>}, {pipeline_mode = #tpu.pipeline_mode<synchronous>, transform_indices = @transform_2, window_bounds = array<i64: 1, 64>}, {transform_indices = @transform_3, window_bounds = array<i64: 128, 64>}]} {
    %c0_i32 = arith.constant 0 : i32
    %0 = arith.cmpi eq, %arg1, %c0_i32 : i32
    %1 = arith.extui %0 : i1 to i32
    %c0_i32_0 = arith.constant 0 : i32
    %2 = arith.cmpi ne, %1, %c0_i32_0 : i32
    scf.if %2 {
      %cst_10 = arith.constant 0.000000e+00 : f32
      %12 = vector.broadcast %cst_10 : f32 to vector<128x64xf32>
      %c0_11 = arith.constant 0 : index
      %c0_12 = arith.constant 0 : index
      %13 = vector.load %arg6[%c0_11, %c0_12] : memref<128x64xf32, #tpu.memory_space<vmem>>, vector<128x64xf32>
      tpu.vector_store %arg6[%c0_11, %c0_12], %12 {strides = array<i32>} : memref<128x64xf32, #tpu.memory_space<vmem>>, vector<128x64xf32>,
    } else {
    }
    %c0 = arith.constant 0 : index
    %c0_1 = arith.constant 0 : index
    %3 = vector.load %arg6[%c0, %c0_1] : memref<128x64xf32, #tpu.memory_space<vmem>>, vector<128x64xf32>
    %c0_2 = arith.constant 0 : index
    %c0_3 = arith.constant 0 : index
    %4 = vector.load %arg2[%c0_2, %c0_3] : memref<128x64xbf16, #tpu.memory_space<vmem>>, vector<128x64xbf16>
    %c0_4 = arith.constant 0 : index
    %c0_5 = arith.constant 0 : index
    %5 = vector.load %arg3[%c0_4, %c0_5] : memref<64x64xbf16, #tpu.memory_space<vmem>>, vector<64x64xbf16>
    %cst = arith.constant dense<0.000000e+00> : vector<128x64xf32>
    %6 = tpu.matmul %4, %5, %cst {dimension_numbers = #tpu.dot_dimension_numbers<[1], [0], [0], [1], [0, 0, 1, 1], [], []>} : vector<128x64xbf16>, vector<64x64xbf16>, vector<128x64xf32> -> vector<128x64xf32>
    %7 = arith.addf %3, %6 : vector<128x64xf32>
    %c0_6 = arith.constant 0 : index
    %c0_7 = arith.constant 0 : index
    %8 = vector.load %arg6[%c0_6, %c0_7] : memref<128x64xf32, #tpu.memory_space<vmem>>, vector<128x64xf32>
    tpu.vector_store %arg6[%c0_6, %c0_7], %7 {strides = array<i32>} : memref<128x64xf32, #tpu.memory_space<vmem>>, vector<128x64xf32>,
    %c0_i32_8 = arith.constant 0 : i32
    %9 = arith.cmpi eq, %arg1, %c0_i32_8 : i32
    %10 = arith.extui %9 : i1 to i32
    %c0_i32_9 = arith.constant 0 : i32
    %11 = arith.cmpi ne, %10, %c0_i32_9 : i32
    scf.if %11 {
      %c0_10 = arith.constant 0 : index
      %c0_11 = arith.constant 0 : index
      %12 = vector.load %arg6[%c0_10, %c0_11] : memref<128x64xf32, #tpu.memory_space<vmem>>, vector<128x64xf32>
      %c0_12 = arith.constant 0 : index
      %c0_13 = arith.constant 0 : index
      %13 = vector.load %arg4[%c0_12, %c0_13] : memref<1x64xf32, #tpu.memory_space<vmem>>, vector<1x64xf32>
      %14 = vector.broadcast %13 : vector<1x64xf32> to vector<128x64xf32>
      %15 = arith.addf %12, %14 : vector<128x64xf32>
      %cst_14 = arith.constant 0.000000e+00 : f32
      %16 = vector.broadcast %cst_14 : f32 to vector<128x64xf32>
      %17 = arith.maximumf %15, %16 : vector<128x64xf32>
      %18 = arith.truncf %17 : vector<128x64xf32> to vector<128x64xbf16>
      %c0_15 = arith.constant 0 : index
      %c0_16 = arith.constant 0 : index
      %19 = vector.load %arg5[%c0_15, %c0_16] : memref<128x64xbf16, #tpu.memory_space<vmem>>, vector<128x64xbf16>
      tpu.vector_store %arg5[%c0_15, %c0_16], %18 {strides = array<i32>} : memref<128x64xbf16, #tpu.memory_space<vmem>>, vector<128x64xbf16>,
    } else {
    }
    return
  }
  func.func @transform_0(%arg0: i32, %arg1: i32) -> (i32, i32) {
    %c0_i32 = arith.constant 0 : i32
    return %arg0, %arg1 : i32, i32
  }
  func.func @transform_1(%arg0: i32, %arg1: i32) -> (i32, i32) {
    %c0_i32 = arith.constant 0 : i32
    %c0_i32_0 = arith.constant 0 : i32
    return %arg1, %c0_i32 : i32, i32
  }
  func.func @transform_2(%arg0: i32, %arg1: i32) -> (i32, i32) {
    %c0_i32 = arith.constant 0 : i32
    %c0_i32_0 = arith.constant 0 : i32
    %c0_i32_1 = arith.constant 0 : i32
    return %c0_i32, %c0_i32_0 : i32, i32
  }
  func.func @transform_3(%arg0: i32, %arg1: i32) -> (i32, i32) {
    %c0_i32 = arith.constant 0 : i32
    %c0_i32_0 = arith.constant 0 : i32
    return %arg0, %c0_i32 : i32, i32
  }
}

module attributes {stable_mosaic.version = 11 : i64} {
  func.func @_conv3x3_bn_kernel(%arg0: i32, %arg1: memref<1x3x80x64xf32, #tpu.memory_space<vmem>>, %arg2: memref<9x64x64xbf16, #tpu.memory_space<vmem>>, %arg3: memref<1x64xf32, #tpu.memory_space<vmem>>, %arg4: memref<1x64x64xbf16, #tpu.memory_space<vmem>>) attributes {dimension_semantics = [#tpu.dimension_semantics<parallel>], iteration_bounds = array<i64: 2>, scalar_prefetch = 0 : i64, scratch_operands = 0 : i64, tpu.core_type = #tpu.core_type<tc>, window_params = [{transform_indices = @transform_0, window_bounds = array<i64: 1, 3, 80, 64>}, {pipeline_mode = #tpu.pipeline_mode<synchronous>, transform_indices = @transform_1, window_bounds = array<i64: 9, 64, 64>}, {pipeline_mode = #tpu.pipeline_mode<synchronous>, transform_indices = @transform_2, window_bounds = array<i64: 1, 64>}, {transform_indices = @transform_3, window_bounds = array<i64: 1, 64, 64>}]} {
    %cst = arith.constant 0.000000e+00 : f32
    %0 = vector.broadcast %cst : f32 to vector<64x64xf32>
    %c0 = arith.constant 0 : index
    %c0_0 = arith.constant 0 : index
    %c0_1 = arith.constant 0 : index
    %c0_2 = arith.constant 0 : index
    %1 = vector.load %arg1[%c0, %c0_0, %c0_1, %c0_2] : memref<1x3x80x64xf32, #tpu.memory_space<vmem>>, vector<1x1x64x64xf32>
    %2 = vector.shape_cast %1 : vector<1x1x64x64xf32> to vector<64x64xf32>
    %3 = arith.truncf %2 : vector<64x64xf32> to vector<64x64xbf16>
    %c0_3 = arith.constant 0 : index
    %c0_4 = arith.constant 0 : index
    %c0_5 = arith.constant 0 : index
    %4 = vector.load %arg2[%c0_3, %c0_4, %c0_5] : memref<9x64x64xbf16, #tpu.memory_space<vmem>>, vector<1x64x64xbf16>
    %5 = vector.shape_cast %4 : vector<1x64x64xbf16> to vector<64x64xbf16>
    %cst_6 = arith.constant dense<0.000000e+00> : vector<64x64xf32>
    %6 = tpu.matmul %3, %5, %cst_6 {dimension_numbers = #tpu.dot_dimension_numbers<[1], [0], [0], [1], [0, 0, 1, 1], [], []>} : vector<64x64xbf16>, vector<64x64xbf16>, vector<64x64xf32> -> vector<64x64xf32>
    %7 = arith.addf %0, %6 : vector<64x64xf32>
    %c0_7 = arith.constant 0 : index
    %c0_8 = arith.constant 0 : index
    %c8 = arith.constant 8 : index
    %c0_9 = arith.constant 0 : index
    %8 = vector.load %arg1[%c0_7, %c0_8, %c8, %c0_9] : memref<1x3x80x64xf32, #tpu.memory_space<vmem>>, vector<1x1x64x64xf32>
    %9 = vector.shape_cast %8 : vector<1x1x64x64xf32> to vector<64x64xf32>
    %10 = arith.truncf %9 : vector<64x64xf32> to vector<64x64xbf16>
    %c3 = arith.constant 3 : index
    %c0_10 = arith.constant 0 : index
    %c0_11 = arith.constant 0 : index
    %11 = vector.load %arg2[%c3, %c0_10, %c0_11] : memref<9x64x64xbf16, #tpu.memory_space<vmem>>, vector<1x64x64xbf16>
    %12 = vector.shape_cast %11 : vector<1x64x64xbf16> to vector<64x64xbf16>
    %cst_12 = arith.constant dense<0.000000e+00> : vector<64x64xf32>
    %13 = tpu.matmul %10, %12, %cst_12 {dimension_numbers = #tpu.dot_dimension_numbers<[1], [0], [0], [1], [0, 0, 1, 1], [], []>} : vector<64x64xbf16>, vector<64x64xbf16>, vector<64x64xf32> -> vector<64x64xf32>
    %14 = arith.addf %7, %13 : vector<64x64xf32>
    %c0_13 = arith.constant 0 : index
    %c0_14 = arith.constant 0 : index
    %c16 = arith.constant 16 : index
    %c0_15 = arith.constant 0 : index
    %15 = vector.load %arg1[%c0_13, %c0_14, %c16, %c0_15] : memref<1x3x80x64xf32, #tpu.memory_space<vmem>>, vector<1x1x64x64xf32>
    %16 = vector.shape_cast %15 : vector<1x1x64x64xf32> to vector<64x64xf32>
    %17 = arith.truncf %16 : vector<64x64xf32> to vector<64x64xbf16>
    %c6 = arith.constant 6 : index
    %c0_16 = arith.constant 0 : index
    %c0_17 = arith.constant 0 : index
    %18 = vector.load %arg2[%c6, %c0_16, %c0_17] : memref<9x64x64xbf16, #tpu.memory_space<vmem>>, vector<1x64x64xbf16>
    %19 = vector.shape_cast %18 : vector<1x64x64xbf16> to vector<64x64xbf16>
    %cst_18 = arith.constant dense<0.000000e+00> : vector<64x64xf32>
    %20 = tpu.matmul %17, %19, %cst_18 {dimension_numbers = #tpu.dot_dimension_numbers<[1], [0], [0], [1], [0, 0, 1, 1], [], []>} : vector<64x64xbf16>, vector<64x64xbf16>, vector<64x64xf32> -> vector<64x64xf32>
    %21 = arith.addf %14, %20 : vector<64x64xf32>
    %c0_19 = arith.constant 0 : index
    %c1 = arith.constant 1 : index
    %c0_20 = arith.constant 0 : index
    %c0_21 = arith.constant 0 : index
    %22 = vector.load %arg1[%c0_19, %c1, %c0_20, %c0_21] : memref<1x3x80x64xf32, #tpu.memory_space<vmem>>, vector<1x1x64x64xf32>
    %23 = vector.shape_cast %22 : vector<1x1x64x64xf32> to vector<64x64xf32>
    %24 = arith.truncf %23 : vector<64x64xf32> to vector<64x64xbf16>
    %c1_22 = arith.constant 1 : index
    %c0_23 = arith.constant 0 : index
    %c0_24 = arith.constant 0 : index
    %25 = vector.load %arg2[%c1_22, %c0_23, %c0_24] : memref<9x64x64xbf16, #tpu.memory_space<vmem>>, vector<1x64x64xbf16>
    %26 = vector.shape_cast %25 : vector<1x64x64xbf16> to vector<64x64xbf16>
    %cst_25 = arith.constant dense<0.000000e+00> : vector<64x64xf32>
    %27 = tpu.matmul %24, %26, %cst_25 {dimension_numbers = #tpu.dot_dimension_numbers<[1], [0], [0], [1], [0, 0, 1, 1], [], []>} : vector<64x64xbf16>, vector<64x64xbf16>, vector<64x64xf32> -> vector<64x64xf32>
    %28 = arith.addf %21, %27 : vector<64x64xf32>
    %c0_26 = arith.constant 0 : index
    %c1_27 = arith.constant 1 : index
    %c8_28 = arith.constant 8 : index
    %c0_29 = arith.constant 0 : index
    %29 = vector.load %arg1[%c0_26, %c1_27, %c8_28, %c0_29] : memref<1x3x80x64xf32, #tpu.memory_space<vmem>>, vector<1x1x64x64xf32>
    %30 = vector.shape_cast %29 : vector<1x1x64x64xf32> to vector<64x64xf32>
    %31 = arith.truncf %30 : vector<64x64xf32> to vector<64x64xbf16>
    %c4 = arith.constant 4 : index
    %c0_30 = arith.constant 0 : index
    %c0_31 = arith.constant 0 : index
    %32 = vector.load %arg2[%c4, %c0_30, %c0_31] : memref<9x64x64xbf16, #tpu.memory_space<vmem>>, vector<1x64x64xbf16>
    %33 = vector.shape_cast %32 : vector<1x64x64xbf16> to vector<64x64xbf16>
    %cst_32 = arith.constant dense<0.000000e+00> : vector<64x64xf32>
    %34 = tpu.matmul %31, %33, %cst_32 {dimension_numbers = #tpu.dot_dimension_numbers<[1], [0], [0], [1], [0, 0, 1, 1], [], []>} : vector<64x64xbf16>, vector<64x64xbf16>, vector<64x64xf32> -> vector<64x64xf32>
    %35 = arith.addf %28, %34 : vector<64x64xf32>
    %c0_33 = arith.constant 0 : index
    %c1_34 = arith.constant 1 : index
    %c16_35 = arith.constant 16 : index
    %c0_36 = arith.constant 0 : index
    %36 = vector.load %arg1[%c0_33, %c1_34, %c16_35, %c0_36] : memref<1x3x80x64xf32, #tpu.memory_space<vmem>>, vector<1x1x64x64xf32>
    %37 = vector.shape_cast %36 : vector<1x1x64x64xf32> to vector<64x64xf32>
    %38 = arith.truncf %37 : vector<64x64xf32> to vector<64x64xbf16>
    %c7 = arith.constant 7 : index
    %c0_37 = arith.constant 0 : index
    %c0_38 = arith.constant 0 : index
    %39 = vector.load %arg2[%c7, %c0_37, %c0_38] : memref<9x64x64xbf16, #tpu.memory_space<vmem>>, vector<1x64x64xbf16>
    %40 = vector.shape_cast %39 : vector<1x64x64xbf16> to vector<64x64xbf16>
    %cst_39 = arith.constant dense<0.000000e+00> : vector<64x64xf32>
    %41 = tpu.matmul %38, %40, %cst_39 {dimension_numbers = #tpu.dot_dimension_numbers<[1], [0], [0], [1], [0, 0, 1, 1], [], []>} : vector<64x64xbf16>, vector<64x64xbf16>, vector<64x64xf32> -> vector<64x64xf32>
    %42 = arith.addf %35, %41 : vector<64x64xf32>
    %c0_40 = arith.constant 0 : index
    %c2 = arith.constant 2 : index
    %c0_41 = arith.constant 0 : index
    %c0_42 = arith.constant 0 : index
    %43 = vector.load %arg1[%c0_40, %c2, %c0_41, %c0_42] : memref<1x3x80x64xf32, #tpu.memory_space<vmem>>, vector<1x1x64x64xf32>
    %44 = vector.shape_cast %43 : vector<1x1x64x64xf32> to vector<64x64xf32>
    %45 = arith.truncf %44 : vector<64x64xf32> to vector<64x64xbf16>
    %c2_43 = arith.constant 2 : index
    %c0_44 = arith.constant 0 : index
    %c0_45 = arith.constant 0 : index
    %46 = vector.load %arg2[%c2_43, %c0_44, %c0_45] : memref<9x64x64xbf16, #tpu.memory_space<vmem>>, vector<1x64x64xbf16>
    %47 = vector.shape_cast %46 : vector<1x64x64xbf16> to vector<64x64xbf16>
    %cst_46 = arith.constant dense<0.000000e+00> : vector<64x64xf32>
    %48 = tpu.matmul %45, %47, %cst_46 {dimension_numbers = #tpu.dot_dimension_numbers<[1], [0], [0], [1], [0, 0, 1, 1], [], []>} : vector<64x64xbf16>, vector<64x64xbf16>, vector<64x64xf32> -> vector<64x64xf32>
    %49 = arith.addf %42, %48 : vector<64x64xf32>
    %c0_47 = arith.constant 0 : index
    %c2_48 = arith.constant 2 : index
    %c8_49 = arith.constant 8 : index
    %c0_50 = arith.constant 0 : index
    %50 = vector.load %arg1[%c0_47, %c2_48, %c8_49, %c0_50] : memref<1x3x80x64xf32, #tpu.memory_space<vmem>>, vector<1x1x64x64xf32>
    %51 = vector.shape_cast %50 : vector<1x1x64x64xf32> to vector<64x64xf32>
    %52 = arith.truncf %51 : vector<64x64xf32> to vector<64x64xbf16>
    %c5 = arith.constant 5 : index
    %c0_51 = arith.constant 0 : index
    %c0_52 = arith.constant 0 : index
    %53 = vector.load %arg2[%c5, %c0_51, %c0_52] : memref<9x64x64xbf16, #tpu.memory_space<vmem>>, vector<1x64x64xbf16>
    %54 = vector.shape_cast %53 : vector<1x64x64xbf16> to vector<64x64xbf16>
    %cst_53 = arith.constant dense<0.000000e+00> : vector<64x64xf32>
    %55 = tpu.matmul %52, %54, %cst_53 {dimension_numbers = #tpu.dot_dimension_numbers<[1], [0], [0], [1], [0, 0, 1, 1], [], []>} : vector<64x64xbf16>, vector<64x64xbf16>, vector<64x64xf32> -> vector<64x64xf32>
    %56 = arith.addf %49, %55 : vector<64x64xf32>
    %c0_54 = arith.constant 0 : index
    %c2_55 = arith.constant 2 : index
    %c16_56 = arith.constant 16 : index
    %c0_57 = arith.constant 0 : index
    %57 = vector.load %arg1[%c0_54, %c2_55, %c16_56, %c0_57] : memref<1x3x80x64xf32, #tpu.memory_space<vmem>>, vector<1x1x64x64xf32>
    %58 = vector.shape_cast %57 : vector<1x1x64x64xf32> to vector<64x64xf32>
    %59 = arith.truncf %58 : vector<64x64xf32> to vector<64x64xbf16>
    %c8_58 = arith.constant 8 : index
    %c0_59 = arith.constant 0 : index
    %c0_60 = arith.constant 0 : index
    %60 = vector.load %arg2[%c8_58, %c0_59, %c0_60] : memref<9x64x64xbf16, #tpu.memory_space<vmem>>, vector<1x64x64xbf16>
    %61 = vector.shape_cast %60 : vector<1x64x64xbf16> to vector<64x64xbf16>
    %cst_61 = arith.constant dense<0.000000e+00> : vector<64x64xf32>
    %62 = tpu.matmul %59, %61, %cst_61 {dimension_numbers = #tpu.dot_dimension_numbers<[1], [0], [0], [1], [0, 0, 1, 1], [], []>} : vector<64x64xbf16>, vector<64x64xbf16>, vector<64x64xf32> -> vector<64x64xf32>
    %63 = arith.addf %56, %62 : vector<64x64xf32>
    %c0_62 = arith.constant 0 : index
    %c0_63 = arith.constant 0 : index
    %64 = vector.load %arg3[%c0_62, %c0_63] : memref<1x64xf32, #tpu.memory_space<vmem>>, vector<1x64xf32>
    %65 = vector.broadcast %64 : vector<1x64xf32> to vector<64x64xf32>
    %66 = arith.addf %63, %65 : vector<64x64xf32>
    %cst_64 = arith.constant 0.000000e+00 : f32
    %67 = vector.broadcast %cst_64 : f32 to vector<64x64xf32>
    %68 = arith.maximumf %66, %67 : vector<64x64xf32>
    %69 = arith.truncf %68 : vector<64x64xf32> to vector<64x64xbf16>
    %c0_65 = arith.constant 0 : index
    %c0_66 = arith.constant 0 : index
    %c0_67 = arith.constant 0 : index
    %70 = vector.load %arg4[%c0_65, %c0_66, %c0_67] : memref<1x64x64xbf16, #tpu.memory_space<vmem>>, vector<1x64x64xbf16>
    %71 = vector.shape_cast %70 : vector<1x64x64xbf16> to vector<64x64xbf16>
    %72 = vector.shape_cast %69 : vector<64x64xbf16> to vector<1x64x64xbf16>
    tpu.vector_store %arg4[%c0_65, %c0_66, %c0_67], %72 {strides = array<i32>} : memref<1x64x64xbf16, #tpu.memory_space<vmem>>, vector<1x64x64xbf16>,
    return
  }
  func.func @transform_0(%arg0: i32) -> (i32, i32, i32, i32) {
    %c0_i32 = arith.constant 0 : i32
    %c0_i32_0 = arith.constant 0 : i32
    %c0_i32_1 = arith.constant 0 : i32
    %c0_i32_2 = arith.constant 0 : i32
    return %arg0, %c0_i32, %c0_i32_0, %c0_i32_1 : i32, i32, i32, i32
  }
  func.func @transform_1(%arg0: i32) -> (i32, i32, i32) {
    %c0_i32 = arith.constant 0 : i32
    %c0_i32_0 = arith.constant 0 : i32
    %c0_i32_1 = arith.constant 0 : i32
    %c0_i32_2 = arith.constant 0 : i32
    return %c0_i32, %c0_i32_0, %c0_i32_1 : i32, i32, i32
  }
  func.func @transform_2(%arg0: i32) -> (i32, i32) {
    %c0_i32 = arith.constant 0 : i32
    %c0_i32_0 = arith.constant 0 : i32
    %c0_i32_1 = arith.constant 0 : i32
    return %c0_i32, %c0_i32_0 : i32, i32
  }
  func.func @transform_3(%arg0: i32) -> (i32, i32, i32) {
    %c0_i32 = arith.constant 0 : i32
    %c0_i32_0 = arith.constant 0 : i32
    %c0_i32_1 = arith.constant 0 : i32
    return %arg0, %c0_i32, %c0_i32_0 : i32, i32, i32
  }
}

module attributes {stable_mosaic.version = 11 : i64} {
  func.func @_matmul_bn_kernel(%arg0: i32, %arg1: i32, %arg2: memref<128x64xbf16, #tpu.memory_space<vmem>>, %arg3: memref<64x256xbf16, #tpu.memory_space<vmem>>, %arg4: memref<1x256xf32, #tpu.memory_space<vmem>>, %arg5: memref<128x256xbf16, #tpu.memory_space<vmem>>, %arg6: memref<128x256xf32, #tpu.memory_space<vmem>>) attributes {dimension_semantics = [#tpu.dimension_semantics<parallel>, #tpu.dimension_semantics<arbitrary>], iteration_bounds = array<i64: 1, 1>, scalar_prefetch = 0 : i64, scratch_operands = 1 : i64, tpu.core_type = #tpu.core_type<tc>, window_params = [{transform_indices = @transform_0, window_bounds = array<i64: 128, 64>}, {transform_indices = @transform_1, window_bounds = array<i64: 64, 256>}, {pipeline_mode = #tpu.pipeline_mode<synchronous>, transform_indices = @transform_2, window_bounds = array<i64: 1, 256>}, {transform_indices = @transform_3, window_bounds = array<i64: 128, 256>}]} {
    %c0_i32 = arith.constant 0 : i32
    %0 = arith.cmpi eq, %arg1, %c0_i32 : i32
    %1 = arith.extui %0 : i1 to i32
    %c0_i32_0 = arith.constant 0 : i32
    %2 = arith.cmpi ne, %1, %c0_i32_0 : i32
    scf.if %2 {
      %cst_10 = arith.constant 0.000000e+00 : f32
      %12 = vector.broadcast %cst_10 : f32 to vector<128x256xf32>
      %c0_11 = arith.constant 0 : index
      %c0_12 = arith.constant 0 : index
      %13 = vector.load %arg6[%c0_11, %c0_12] : memref<128x256xf32, #tpu.memory_space<vmem>>, vector<128x256xf32>
      tpu.vector_store %arg6[%c0_11, %c0_12], %12 {strides = array<i32>} : memref<128x256xf32, #tpu.memory_space<vmem>>, vector<128x256xf32>,
    } else {
    }
    %c0 = arith.constant 0 : index
    %c0_1 = arith.constant 0 : index
    %3 = vector.load %arg6[%c0, %c0_1] : memref<128x256xf32, #tpu.memory_space<vmem>>, vector<128x256xf32>
    %c0_2 = arith.constant 0 : index
    %c0_3 = arith.constant 0 : index
    %4 = vector.load %arg2[%c0_2, %c0_3] : memref<128x64xbf16, #tpu.memory_space<vmem>>, vector<128x64xbf16>
    %c0_4 = arith.constant 0 : index
    %c0_5 = arith.constant 0 : index
    %5 = vector.load %arg3[%c0_4, %c0_5] : memref<64x256xbf16, #tpu.memory_space<vmem>>, vector<64x256xbf16>
    %cst = arith.constant dense<0.000000e+00> : vector<128x256xf32>
    %6 = tpu.matmul %4, %5, %cst {dimension_numbers = #tpu.dot_dimension_numbers<[1], [0], [0], [1], [0, 0, 1, 1], [], []>} : vector<128x64xbf16>, vector<64x256xbf16>, vector<128x256xf32> -> vector<128x256xf32>
    %7 = arith.addf %3, %6 : vector<128x256xf32>
    %c0_6 = arith.constant 0 : index
    %c0_7 = arith.constant 0 : index
    %8 = vector.load %arg6[%c0_6, %c0_7] : memref<128x256xf32, #tpu.memory_space<vmem>>, vector<128x256xf32>
    tpu.vector_store %arg6[%c0_6, %c0_7], %7 {strides = array<i32>} : memref<128x256xf32, #tpu.memory_space<vmem>>, vector<128x256xf32>,
    %c0_i32_8 = arith.constant 0 : i32
    %9 = arith.cmpi eq, %arg1, %c0_i32_8 : i32
    %10 = arith.extui %9 : i1 to i32
    %c0_i32_9 = arith.constant 0 : i32
    %11 = arith.cmpi ne, %10, %c0_i32_9 : i32
    scf.if %11 {
      %c0_10 = arith.constant 0 : index
      %c0_11 = arith.constant 0 : index
      %12 = vector.load %arg6[%c0_10, %c0_11] : memref<128x256xf32, #tpu.memory_space<vmem>>, vector<128x256xf32>
      %c0_12 = arith.constant 0 : index
      %c0_13 = arith.constant 0 : index
      %13 = vector.load %arg4[%c0_12, %c0_13] : memref<1x256xf32, #tpu.memory_space<vmem>>, vector<1x256xf32>
      %14 = vector.broadcast %13 : vector<1x256xf32> to vector<128x256xf32>
      %15 = arith.addf %12, %14 : vector<128x256xf32>
      %16 = arith.truncf %15 : vector<128x256xf32> to vector<128x256xbf16>
      %c0_14 = arith.constant 0 : index
      %c0_15 = arith.constant 0 : index
      %17 = vector.load %arg5[%c0_14, %c0_15] : memref<128x256xbf16, #tpu.memory_space<vmem>>, vector<128x256xbf16>
      tpu.vector_store %arg5[%c0_14, %c0_15], %16 {strides = array<i32>} : memref<128x256xbf16, #tpu.memory_space<vmem>>, vector<128x256xbf16>,
    } else {
    }
    return
  }
  func.func @transform_0(%arg0: i32, %arg1: i32) -> (i32, i32) {
    %c0_i32 = arith.constant 0 : i32
    return %arg0, %arg1 : i32, i32
  }
  func.func @transform_1(%arg0: i32, %arg1: i32) -> (i32, i32) {
    %c0_i32 = arith.constant 0 : i32
    %c0_i32_0 = arith.constant 0 : i32
    return %arg1, %c0_i32 : i32, i32
  }
  func.func @transform_2(%arg0: i32, %arg1: i32) -> (i32, i32) {
    %c0_i32 = arith.constant 0 : i32
    %c0_i32_0 = arith.constant 0 : i32
    %c0_i32_1 = arith.constant 0 : i32
    return %c0_i32, %c0_i32_0 : i32, i32
  }
  func.func @transform_3(%arg0: i32, %arg1: i32) -> (i32, i32) {
    %c0_i32 = arith.constant 0 : i32
    %c0_i32_0 = arith.constant 0 : i32
    return %arg0, %c0_i32 : i32, i32
  }
}

module attributes {stable_mosaic.version = 11 : i64} {
  func.func @_matmul_bn_kernel(%arg0: i32, %arg1: i32, %arg2: memref<128x64xbf16, #tpu.memory_space<vmem>>, %arg3: memref<64x256xbf16, #tpu.memory_space<vmem>>, %arg4: memref<1x256xf32, #tpu.memory_space<vmem>>, %arg5: memref<128x256xbf16, #tpu.memory_space<vmem>>, %arg6: memref<128x256xbf16, #tpu.memory_space<vmem>>, %arg7: memref<128x256xf32, #tpu.memory_space<vmem>>) attributes {dimension_semantics = [#tpu.dimension_semantics<parallel>, #tpu.dimension_semantics<arbitrary>], iteration_bounds = array<i64: 1, 1>, scalar_prefetch = 0 : i64, scratch_operands = 1 : i64, tpu.core_type = #tpu.core_type<tc>, window_params = [{transform_indices = @transform_0, window_bounds = array<i64: 128, 64>}, {transform_indices = @transform_1, window_bounds = array<i64: 64, 256>}, {pipeline_mode = #tpu.pipeline_mode<synchronous>, transform_indices = @transform_2, window_bounds = array<i64: 1, 256>}, {transform_indices = @transform_3, window_bounds = array<i64: 128, 256>}, {transform_indices = @transform_4, window_bounds = array<i64: 128, 256>}]} {
    %c0_i32 = arith.constant 0 : i32
    %0 = arith.cmpi eq, %arg1, %c0_i32 : i32
    %1 = arith.extui %0 : i1 to i32
    %c0_i32_0 = arith.constant 0 : i32
    %2 = arith.cmpi ne, %1, %c0_i32_0 : i32
    scf.if %2 {
      %cst_10 = arith.constant 0.000000e+00 : f32
      %12 = vector.broadcast %cst_10 : f32 to vector<128x256xf32>
      %c0_11 = arith.constant 0 : index
      %c0_12 = arith.constant 0 : index
      %13 = vector.load %arg7[%c0_11, %c0_12] : memref<128x256xf32, #tpu.memory_space<vmem>>, vector<128x256xf32>
      tpu.vector_store %arg7[%c0_11, %c0_12], %12 {strides = array<i32>} : memref<128x256xf32, #tpu.memory_space<vmem>>, vector<128x256xf32>,
    } else {
    }
    %c0 = arith.constant 0 : index
    %c0_1 = arith.constant 0 : index
    %3 = vector.load %arg7[%c0, %c0_1] : memref<128x256xf32, #tpu.memory_space<vmem>>, vector<128x256xf32>
    %c0_2 = arith.constant 0 : index
    %c0_3 = arith.constant 0 : index
    %4 = vector.load %arg2[%c0_2, %c0_3] : memref<128x64xbf16, #tpu.memory_space<vmem>>, vector<128x64xbf16>
    %c0_4 = arith.constant 0 : index
    %c0_5 = arith.constant 0 : index
    %5 = vector.load %arg3[%c0_4, %c0_5] : memref<64x256xbf16, #tpu.memory_space<vmem>>, vector<64x256xbf16>
    %cst = arith.constant dense<0.000000e+00> : vector<128x256xf32>
    %6 = tpu.matmul %4, %5, %cst {dimension_numbers = #tpu.dot_dimension_numbers<[1], [0], [0], [1], [0, 0, 1, 1], [], []>} : vector<128x64xbf16>, vector<64x256xbf16>, vector<128x256xf32> -> vector<128x256xf32>
    %7 = arith.addf %3, %6 : vector<128x256xf32>
    %c0_6 = arith.constant 0 : index
    %c0_7 = arith.constant 0 : index
    %8 = vector.load %arg7[%c0_6, %c0_7] : memref<128x256xf32, #tpu.memory_space<vmem>>, vector<128x256xf32>
    tpu.vector_store %arg7[%c0_6, %c0_7], %7 {strides = array<i32>} : memref<128x256xf32, #tpu.memory_space<vmem>>, vector<128x256xf32>,
    %c0_i32_8 = arith.constant 0 : i32
    %9 = arith.cmpi eq, %arg1, %c0_i32_8 : i32
    %10 = arith.extui %9 : i1 to i32
    %c0_i32_9 = arith.constant 0 : i32
    %11 = arith.cmpi ne, %10, %c0_i32_9 : i32
    scf.if %11 {
      %c0_10 = arith.constant 0 : index
      %c0_11 = arith.constant 0 : index
      %12 = vector.load %arg7[%c0_10, %c0_11] : memref<128x256xf32, #tpu.memory_space<vmem>>, vector<128x256xf32>
      %c0_12 = arith.constant 0 : index
      %c0_13 = arith.constant 0 : index
      %13 = vector.load %arg4[%c0_12, %c0_13] : memref<1x256xf32, #tpu.memory_space<vmem>>, vector<1x256xf32>
      %14 = vector.broadcast %13 : vector<1x256xf32> to vector<128x256xf32>
      %15 = arith.addf %12, %14 : vector<128x256xf32>
      %c0_14 = arith.constant 0 : index
      %c0_15 = arith.constant 0 : index
      %16 = vector.load %arg5[%c0_14, %c0_15] : memref<128x256xbf16, #tpu.memory_space<vmem>>, vector<128x256xbf16>
      %17 = arith.extf %16 : vector<128x256xbf16> to vector<128x256xf32>
      %18 = arith.addf %15, %17 : vector<128x256xf32>
      %cst_16 = arith.constant 0.000000e+00 : f32
      %19 = vector.broadcast %cst_16 : f32 to vector<128x256xf32>
      %20 = arith.maximumf %18, %19 : vector<128x256xf32>
      %21 = arith.truncf %20 : vector<128x256xf32> to vector<128x256xbf16>
      %c0_17 = arith.constant 0 : index
      %c0_18 = arith.constant 0 : index
      %22 = vector.load %arg6[%c0_17, %c0_18] : memref<128x256xbf16, #tpu.memory_space<vmem>>, vector<128x256xbf16>
      tpu.vector_store %arg6[%c0_17, %c0_18], %21 {strides = array<i32>} : memref<128x256xbf16, #tpu.memory_space<vmem>>, vector<128x256xbf16>,
    } else {
    }
    return
  }
  func.func @transform_0(%arg0: i32, %arg1: i32) -> (i32, i32) {
    %c0_i32 = arith.constant 0 : i32
    return %arg0, %arg1 : i32, i32
  }
  func.func @transform_1(%arg0: i32, %arg1: i32) -> (i32, i32) {
    %c0_i32 = arith.constant 0 : i32
    %c0_i32_0 = arith.constant 0 : i32
    return %arg1, %c0_i32 : i32, i32
  }
  func.func @transform_2(%arg0: i32, %arg1: i32) -> (i32, i32) {
    %c0_i32 = arith.constant 0 : i32
    %c0_i32_0 = arith.constant 0 : i32
    %c0_i32_1 = arith.constant 0 : i32
    return %c0_i32, %c0_i32_0 : i32, i32
  }
  func.func @transform_3(%arg0: i32, %arg1: i32) -> (i32, i32) {
    %c0_i32 = arith.constant 0 : i32
    %c0_i32_0 = arith.constant 0 : i32
    return %arg0, %c0_i32 : i32, i32
  }
  func.func @transform_4(%arg0: i32, %arg1: i32) -> (i32, i32) {
    %c0_i32 = arith.constant 0 : i32
    %c0_i32_0 = arith.constant 0 : i32
    return %arg0, %c0_i32 : i32, i32
  }
}

module attributes {stable_mosaic.version = 11 : i64} {
  func.func @_matmul_bn_kernel(%arg0: i32, %arg1: i32, %arg2: memref<128x256xbf16, #tpu.memory_space<vmem>>, %arg3: memref<256x64xbf16, #tpu.memory_space<vmem>>, %arg4: memref<1x64xf32, #tpu.memory_space<vmem>>, %arg5: memref<128x64xbf16, #tpu.memory_space<vmem>>, %arg6: memref<128x64xf32, #tpu.memory_space<vmem>>) attributes {dimension_semantics = [#tpu.dimension_semantics<parallel>, #tpu.dimension_semantics<arbitrary>], iteration_bounds = array<i64: 1, 1>, scalar_prefetch = 0 : i64, scratch_operands = 1 : i64, tpu.core_type = #tpu.core_type<tc>, window_params = [{transform_indices = @transform_0, window_bounds = array<i64: 128, 256>}, {transform_indices = @transform_1, window_bounds = array<i64: 256, 64>}, {pipeline_mode = #tpu.pipeline_mode<synchronous>, transform_indices = @transform_2, window_bounds = array<i64: 1, 64>}, {transform_indices = @transform_3, window_bounds = array<i64: 128, 64>}]} {
    %c0_i32 = arith.constant 0 : i32
    %0 = arith.cmpi eq, %arg1, %c0_i32 : i32
    %1 = arith.extui %0 : i1 to i32
    %c0_i32_0 = arith.constant 0 : i32
    %2 = arith.cmpi ne, %1, %c0_i32_0 : i32
    scf.if %2 {
      %cst_10 = arith.constant 0.000000e+00 : f32
      %12 = vector.broadcast %cst_10 : f32 to vector<128x64xf32>
      %c0_11 = arith.constant 0 : index
      %c0_12 = arith.constant 0 : index
      %13 = vector.load %arg6[%c0_11, %c0_12] : memref<128x64xf32, #tpu.memory_space<vmem>>, vector<128x64xf32>
      tpu.vector_store %arg6[%c0_11, %c0_12], %12 {strides = array<i32>} : memref<128x64xf32, #tpu.memory_space<vmem>>, vector<128x64xf32>,
    } else {
    }
    %c0 = arith.constant 0 : index
    %c0_1 = arith.constant 0 : index
    %3 = vector.load %arg6[%c0, %c0_1] : memref<128x64xf32, #tpu.memory_space<vmem>>, vector<128x64xf32>
    %c0_2 = arith.constant 0 : index
    %c0_3 = arith.constant 0 : index
    %4 = vector.load %arg2[%c0_2, %c0_3] : memref<128x256xbf16, #tpu.memory_space<vmem>>, vector<128x256xbf16>
    %c0_4 = arith.constant 0 : index
    %c0_5 = arith.constant 0 : index
    %5 = vector.load %arg3[%c0_4, %c0_5] : memref<256x64xbf16, #tpu.memory_space<vmem>>, vector<256x64xbf16>
    %cst = arith.constant dense<0.000000e+00> : vector<128x64xf32>
    %6 = tpu.matmul %4, %5, %cst {dimension_numbers = #tpu.dot_dimension_numbers<[1], [0], [0], [1], [0, 0, 1, 1], [], []>} : vector<128x256xbf16>, vector<256x64xbf16>, vector<128x64xf32> -> vector<128x64xf32>
    %7 = arith.addf %3, %6 : vector<128x64xf32>
    %c0_6 = arith.constant 0 : index
    %c0_7 = arith.constant 0 : index
    %8 = vector.load %arg6[%c0_6, %c0_7] : memref<128x64xf32, #tpu.memory_space<vmem>>, vector<128x64xf32>
    tpu.vector_store %arg6[%c0_6, %c0_7], %7 {strides = array<i32>} : memref<128x64xf32, #tpu.memory_space<vmem>>, vector<128x64xf32>,
    %c0_i32_8 = arith.constant 0 : i32
    %9 = arith.cmpi eq, %arg1, %c0_i32_8 : i32
    %10 = arith.extui %9 : i1 to i32
    %c0_i32_9 = arith.constant 0 : i32
    %11 = arith.cmpi ne, %10, %c0_i32_9 : i32
    scf.if %11 {
      %c0_10 = arith.constant 0 : index
      %c0_11 = arith.constant 0 : index
      %12 = vector.load %arg6[%c0_10, %c0_11] : memref<128x64xf32, #tpu.memory_space<vmem>>, vector<128x64xf32>
      %c0_12 = arith.constant 0 : index
      %c0_13 = arith.constant 0 : index
      %13 = vector.load %arg4[%c0_12, %c0_13] : memref<1x64xf32, #tpu.memory_space<vmem>>, vector<1x64xf32>
      %14 = vector.broadcast %13 : vector<1x64xf32> to vector<128x64xf32>
      %15 = arith.addf %12, %14 : vector<128x64xf32>
      %cst_14 = arith.constant 0.000000e+00 : f32
      %16 = vector.broadcast %cst_14 : f32 to vector<128x64xf32>
      %17 = arith.maximumf %15, %16 : vector<128x64xf32>
      %18 = arith.truncf %17 : vector<128x64xf32> to vector<128x64xbf16>
      %c0_15 = arith.constant 0 : index
      %c0_16 = arith.constant 0 : index
      %19 = vector.load %arg5[%c0_15, %c0_16] : memref<128x64xbf16, #tpu.memory_space<vmem>>, vector<128x64xbf16>
      tpu.vector_store %arg5[%c0_15, %c0_16], %18 {strides = array<i32>} : memref<128x64xbf16, #tpu.memory_space<vmem>>, vector<128x64xbf16>,
    } else {
    }
    return
  }
  func.func @transform_0(%arg0: i32, %arg1: i32) -> (i32, i32) {
    %c0_i32 = arith.constant 0 : i32
    return %arg0, %arg1 : i32, i32
  }
  func.func @transform_1(%arg0: i32, %arg1: i32) -> (i32, i32) {
    %c0_i32 = arith.constant 0 : i32
    %c0_i32_0 = arith.constant 0 : i32
    return %arg1, %c0_i32 : i32, i32
  }
  func.func @transform_2(%arg0: i32, %arg1: i32) -> (i32, i32) {
    %c0_i32 = arith.constant 0 : i32
    %c0_i32_0 = arith.constant 0 : i32
    %c0_i32_1 = arith.constant 0 : i32
    return %c0_i32, %c0_i32_0 : i32, i32
  }
  func.func @transform_3(%arg0: i32, %arg1: i32) -> (i32, i32) {
    %c0_i32 = arith.constant 0 : i32
    %c0_i32_0 = arith.constant 0 : i32
    return %arg0, %c0_i32 : i32, i32
  }
}

module attributes {stable_mosaic.version = 11 : i64} {
  func.func @_matmul_bn_kernel(%arg0: i32, %arg1: i32, %arg2: memref<128x64xbf16, #tpu.memory_space<vmem>>, %arg3: memref<64x256xbf16, #tpu.memory_space<vmem>>, %arg4: memref<1x256xf32, #tpu.memory_space<vmem>>, %arg5: memref<128x256xbf16, #tpu.memory_space<vmem>>, %arg6: memref<128x256xbf16, #tpu.memory_space<vmem>>, %arg7: memref<128x256xf32, #tpu.memory_space<vmem>>) attributes {dimension_semantics = [#tpu.dimension_semantics<parallel>, #tpu.dimension_semantics<arbitrary>], iteration_bounds = array<i64: 1, 1>, scalar_prefetch = 0 : i64, scratch_operands = 1 : i64, tpu.core_type = #tpu.core_type<tc>, window_params = [{transform_indices = @transform_0, window_bounds = array<i64: 128, 64>}, {transform_indices = @transform_1, window_bounds = array<i64: 64, 256>}, {pipeline_mode = #tpu.pipeline_mode<synchronous>, transform_indices = @transform_2, window_bounds = array<i64: 1, 256>}, {transform_indices = @transform_3, window_bounds = array<i64: 128, 256>}, {transform_indices = @transform_4, window_bounds = array<i64: 128, 256>}]} {
    %c0_i32 = arith.constant 0 : i32
    %0 = arith.cmpi eq, %arg1, %c0_i32 : i32
    %1 = arith.extui %0 : i1 to i32
    %c0_i32_0 = arith.constant 0 : i32
    %2 = arith.cmpi ne, %1, %c0_i32_0 : i32
    scf.if %2 {
      %cst_10 = arith.constant 0.000000e+00 : f32
      %12 = vector.broadcast %cst_10 : f32 to vector<128x256xf32>
      %c0_11 = arith.constant 0 : index
      %c0_12 = arith.constant 0 : index
      %13 = vector.load %arg7[%c0_11, %c0_12] : memref<128x256xf32, #tpu.memory_space<vmem>>, vector<128x256xf32>
      tpu.vector_store %arg7[%c0_11, %c0_12], %12 {strides = array<i32>} : memref<128x256xf32, #tpu.memory_space<vmem>>, vector<128x256xf32>,
    } else {
    }
    %c0 = arith.constant 0 : index
    %c0_1 = arith.constant 0 : index
    %3 = vector.load %arg7[%c0, %c0_1] : memref<128x256xf32, #tpu.memory_space<vmem>>, vector<128x256xf32>
    %c0_2 = arith.constant 0 : index
    %c0_3 = arith.constant 0 : index
    %4 = vector.load %arg2[%c0_2, %c0_3] : memref<128x64xbf16, #tpu.memory_space<vmem>>, vector<128x64xbf16>
    %c0_4 = arith.constant 0 : index
    %c0_5 = arith.constant 0 : index
    %5 = vector.load %arg3[%c0_4, %c0_5] : memref<64x256xbf16, #tpu.memory_space<vmem>>, vector<64x256xbf16>
    %cst = arith.constant dense<0.000000e+00> : vector<128x256xf32>
    %6 = tpu.matmul %4, %5, %cst {dimension_numbers = #tpu.dot_dimension_numbers<[1], [0], [0], [1], [0, 0, 1, 1], [], []>} : vector<128x64xbf16>, vector<64x256xbf16>, vector<128x256xf32> -> vector<128x256xf32>
    %7 = arith.addf %3, %6 : vector<128x256xf32>
    %c0_6 = arith.constant 0 : index
    %c0_7 = arith.constant 0 : index
    %8 = vector.load %arg7[%c0_6, %c0_7] : memref<128x256xf32, #tpu.memory_space<vmem>>, vector<128x256xf32>
    tpu.vector_store %arg7[%c0_6, %c0_7], %7 {strides = array<i32>} : memref<128x256xf32, #tpu.memory_space<vmem>>, vector<128x256xf32>,
    %c0_i32_8 = arith.constant 0 : i32
    %9 = arith.cmpi eq, %arg1, %c0_i32_8 : i32
    %10 = arith.extui %9 : i1 to i32
    %c0_i32_9 = arith.constant 0 : i32
    %11 = arith.cmpi ne, %10, %c0_i32_9 : i32
    scf.if %11 {
      %c0_10 = arith.constant 0 : index
      %c0_11 = arith.constant 0 : index
      %12 = vector.load %arg7[%c0_10, %c0_11] : memref<128x256xf32, #tpu.memory_space<vmem>>, vector<128x256xf32>
      %c0_12 = arith.constant 0 : index
      %c0_13 = arith.constant 0 : index
      %13 = vector.load %arg4[%c0_12, %c0_13] : memref<1x256xf32, #tpu.memory_space<vmem>>, vector<1x256xf32>
      %14 = vector.broadcast %13 : vector<1x256xf32> to vector<128x256xf32>
      %15 = arith.addf %12, %14 : vector<128x256xf32>
      %c0_14 = arith.constant 0 : index
      %c0_15 = arith.constant 0 : index
      %16 = vector.load %arg5[%c0_14, %c0_15] : memref<128x256xbf16, #tpu.memory_space<vmem>>, vector<128x256xbf16>
      %17 = arith.extf %16 : vector<128x256xbf16> to vector<128x256xf32>
      %18 = arith.addf %15, %17 : vector<128x256xf32>
      %19 = arith.truncf %18 : vector<128x256xf32> to vector<128x256xbf16>
      %c0_16 = arith.constant 0 : index
      %c0_17 = arith.constant 0 : index
      %20 = vector.load %arg6[%c0_16, %c0_17] : memref<128x256xbf16, #tpu.memory_space<vmem>>, vector<128x256xbf16>
      tpu.vector_store %arg6[%c0_16, %c0_17], %19 {strides = array<i32>} : memref<128x256xbf16, #tpu.memory_space<vmem>>, vector<128x256xbf16>,
    } else {
    }
    return
  }
  func.func @transform_0(%arg0: i32, %arg1: i32) -> (i32, i32) {
    %c0_i32 = arith.constant 0 : i32
    return %arg0, %arg1 : i32, i32
  }
  func.func @transform_1(%arg0: i32, %arg1: i32) -> (i32, i32) {
    %c0_i32 = arith.constant 0 : i32
    %c0_i32_0 = arith.constant 0 : i32
    return %arg1, %c0_i32 : i32, i32
  }
  func.func @transform_2(%arg0: i32, %arg1: i32) -> (i32, i32) {
    %c0_i32 = arith.constant 0 : i32
    %c0_i32_0 = arith.constant 0 : i32
    %c0_i32_1 = arith.constant 0 : i32
    return %c0_i32, %c0_i32_0 : i32, i32
  }
  func.func @transform_3(%arg0: i32, %arg1: i32) -> (i32, i32) {
    %c0_i32 = arith.constant 0 : i32
    %c0_i32_0 = arith.constant 0 : i32
    return %arg0, %c0_i32 : i32, i32
  }
  func.func @transform_4(%arg0: i32, %arg1: i32) -> (i32, i32) {
    %c0_i32 = arith.constant 0 : i32
    %c0_i32_0 = arith.constant 0 : i32
    return %arg0, %c0_i32 : i32, i32
  }
}

</mosaic_0001>

<llo_original>
// kernel: stage0_forward.9
$region0: #{stage0_forward.9}
  #allocation0 [shape = 'u32[]', space=smem, size = 0x4, offset = 0x4, fixed_abs, tag = 'smem constant byte address 0x4 - core index']
  #allocation1 [shape = 'u32[144,128]{1,0:T(1,128)}', space=vmem, size = 0x12000, scoped, tag = 'internal scratch']
  #allocation2 [shape = 'f32[256,64]{1,0:T(8,128)}', space=vmem, size = 0x20000, scoped, tag = 'scratch operand']
  %s0 = inlined_call_operand.vmem [shape: bf16[512,147], index: 0, kind: input, shape index: {}]
  %s1 = inlined_call_operand.vmem [shape: bf16[147,64], index: 1, kind: input, shape index: {}]
  %s2 = inlined_call_operand.vmem [shape: f32[1,64], index: 2, kind: input, shape index: {}]
  %s3 = inlined_call_operand.vmem [shape: bf16[512,64], index: 3, kind: output, shape index: {}]
  %s4 = sld [smem:[#allocation0]]
  $region53: #{stage0_forward.9} parent=0
    _
  %s6 = ssub.s32 1, %s4
  %s7 = scalar_select 0, %s6, %s4
  loop: start=0, step=1, limit=4
  $region2: #{stage0_forward.9} parent=0 // loop_pre_header
    _
  $region3: #{stage0_forward.9} parent=0 // loop_header
    %s9 = sphi 0, %s13
    %p10 = scmp.ge.s32.totalorder %s9, 4
    %s16 = sphi 0, %s28
    %s17 = sphi 0, %s24
    %s18 = sphi 0, %s16
    %s19 = sphi 0, %s17
    %s20 = sphi 0, %s18
    %s21 = sphi 0, %s19
    %s33 = sphi 0, %s35
    %s36 = sphi 0, %s33
    %s37 = sphi 0, %s36
    %s53 = sphi 0, %s37
    %s59 = sphi 0, %s61
    %s62 = sphi 0, %s59
    %s63 = sphi 0, %s62
    %s79 = sphi 0, %s63
    %s83 = sphi 0, %s83
    %s85 = sphi 0, %s83
    %s86 = sphi 0, %s85
    %s100 = sphi 0, %s86
    %s106 = sphi 0, %s108
    %s109 = sphi 0, %s106
    %s110 = sphi 0, %s109
    %s126 = sphi 0, %s110
  $region4: #{stage0_forward.9} parent=0 // loop_header_branch
    %12 = sbr.rel (%p10) target = $region8
  $region5: #{stage0_forward.9} parent=0 // loop_body
    %s14 = ssub.s32 %s9, 1
    %s15 = ssub.s32 %s9, 2
    %s22 = sadd.s32 1, %s17
    %p23 = scmp.ge.s32.totalorder %s22, 1
    %s24 = scalar_select %p23, 0, %s22
    %s25 = sadd.s32 1, %s16
    %s26 = scalar_select %p23, %s25, %s16
    %p27 = scmp.ge.s32.totalorder %s26, 2
    %s28 = scalar_select %p27, 0, %s26
    %s29 = ssub.s32 %s16, %s28
    %s30 = ssub.s32 %s17, %s24
    %s31 = sor.u32 %s29, %s30
    %p32 = scmp.eq.s32.totalorder %s31, 0
    %s34 = sadd.s32 %s33, 1
    %s35 = scalar_select %p32, %s33, %s34
    %p38 = pneg %p32
    %p39 = scmp.eq.s32.totalorder %s9, 1
    %p40 = por %p38, %p39
    %p41 = scmp.ne.s32.totalorder %s33, %s36
    %p42 = scmp.eq.s32.totalorder %s9, 0
    %p43 = por %p41, %p42
    %p44 = scmp.ne.s32.totalorder %s33, %s36
    %p45 = scmp.eq.s32.totalorder %s14, 1
    %p46 = por %p44, %p45
    %p47 = scmp.ne.s32.totalorder %s36, %s37
    %p48 = scmp.eq.s32.totalorder %s14, 0
    %p49 = por %p47, %p48
    %p50 = scmp.ne.s32.totalorder %s36, %s37
    %p51 = scmp.eq.s32.totalorder %s15, 1
    %p52 = por %p50, %p51
    %p54 = scmp.ne.s32.totalorder %s37, %s53
    %p55 = scmp.eq.s32.totalorder %s15, 0
    %p56 = por %p54, %p55
    %s57 = ssub.s32 %s17, %s24
    %p58 = scmp.eq.s32.totalorder %s57, 0
    %s60 = sadd.s32 %s59, 1
    %s61 = scalar_select %p58, %s59, %s60
    %p64 = pneg %p58
    %p65 = scmp.eq.s32.totalorder %s9, 1
    %p66 = por %p64, %p65
    %p67 = scmp.ne.s32.totalorder %s59, %s62
    %p68 = scmp.eq.s32.totalorder %s9, 0
    %p69 = por %p67, %p68
    %p70 = scmp.ne.s32.totalorder %s59, %s62
    %p71 = scmp.eq.s32.totalorder %s14, 1
    %p72 = por %p70, %p71
    %p73 = scmp.ne.s32.totalorder %s62, %s63
    %p74 = scmp.eq.s32.totalorder %s14, 0
    %p75 = por %p73, %p74
    %p76 = scmp.ne.s32.totalorder %s62, %s63
    %p77 = scmp.eq.s32.totalorder %s15, 1
    %p78 = por %p76, %p77
    %p80 = scmp.ne.s32.totalorder %s63, %s79
    %p81 = scmp.eq.s32.totalorder %s15, 0
    %p82 = por %p80, %p81
    %s84 = sadd.s32 %s83, 1
    %p87 = scmp.eq.s32.totalorder %s9, 1
    %p88 = scmp.ne.s32.totalorder %s83, %s85
    %p89 = scmp.eq.s32.totalorder %s9, 0
    %p90 = por %p88, %p89
    %p91 = scmp.ne.s32.totalorder %s83, %s85
    %p92 = scmp.eq.s32.totalorder %s14, 1
    %p93 = por %p91, %p92
    %p94 = scmp.ne.s32.totalorder %s85, %s86
    %p95 = scmp.eq.s32.totalorder %s14, 0
    %p96 = por %p94, %p95
    %p97 = scmp.ne.s32.totalorder %s85, %s86
    %p98 = scmp.eq.s32.totalorder %s15, 1
    %p99 = por %p97, %p98
    %p101 = scmp.ne.s32.totalorder %s86, %s100
    %p102 = scmp.eq.s32.totalorder %s15, 0
    %p103 = por %p101, %p102
    %s104 = ssub.s32 %s16, %s28
    %p105 = scmp.eq.s32.totalorder %s104, 0
    %s107 = sadd.s32 %s106, 1
    %s108 = scalar_select %p105, %s106, %s107
    %p111 = pneg %p105
    %p112 = scmp.eq.s32.totalorder %s9, 1
    %p113 = por %p111, %p112
    %p114 = scmp.ne.s32.totalorder %s106, %s109
    %p115 = scmp.eq.s32.totalorder %s9, 0
    %p116 = por %p114, %p115
    %p117 = scmp.ne.s32.totalorder %s106, %s109
    %p118 = scmp.eq.s32.totalorder %s14, 1
    %p119 = por %p117, %p118
    %p120 = scmp.ne.s32.totalorder %s109, %s110
    %p121 = scmp.eq.s32.totalorder %s14, 0
    %p122 = por %p120, %p121
    %p123 = scmp.ne.s32.totalorder %s109, %s110
    %p124 = scmp.eq.s32.totalorder %s15, 1
    %p125 = por %p123, %p124
    %p127 = scmp.ne.s32.totalorder %s110, %s126
    %p128 = scmp.eq.s32.totalorder %s15, 0
    %p129 = por %p127, %p128
    %p130 = scmp.le.s32.totalorder 1, %s9
    %p131 = scmp.lt.s32.totalorder %s9, 3
    %p132 = pnand %p130, %p131
    %p133 = pneg %p132
    // Predicated region
    $region9: #{stage0_forward.9} parent=5 // pred_check
      _
    $region10: #{stage0_forward.9} parent=5 // pred_check_branch
      %135 = sbr.rel (%p132) target = $region12
    $region11: #{stage0_forward.9} parent=5 // pred_region
      %s136 = ssub.s32 %s9, 1
      // Predicated region
      $region13: #{stage0_forward.9} parent=11 // pred_check
        %p137 = pneg %p75
      $region14: #{stage0_forward.9} parent=11 // pred_check_branch
        %139 = sbr.rel (%p137) target = $region16
      $region15: #{stage0_forward.9} parent=11 // pred_region
        %s140 = smul.u32 19, %s19
        %p141 = scmp.lt.s32.totalorder %s140, 18
        %s142 = scalar_select %p141, %s140, 18
        %s143 = smul.addr %s142, 4
        %s144 = scalar_lea.vmem %s1, %s143
        %s145 = smul.u32 19, %s19
      $region16: #{stage0_forward.9} parent=11 // pred_fallthru
        _
      // Predicated region
      $region17: #{stage0_forward.9} parent=11 // pred_check
        %p146 = pneg %p96
      $region18: #{stage0_forward.9} parent=11 // pred_check_branch
        %148 = sbr.rel (%p146) target = $region20
      $region19: #{stage0_forward.9} parent=11 // pred_region
        _
      $region20: #{stage0_forward.9} parent=11 // pred_fallthru
        _
    $region12: #{stage0_forward.9} parent=5 // pred_fallthru
      _
    %p149 = scmp.lt.s32.totalorder %s9, 2
    // Predicated region
    $region21: #{stage0_forward.9} parent=5 // pred_check
      %p150 = pneg %p149
    $region22: #{stage0_forward.9} parent=5 // pred_check_branch
      %152 = sbr.rel (%p150) target = $region24
    $region23: #{stage0_forward.9} parent=5 // pred_region
      // Predicated region
      $region25: #{stage0_forward.9} parent=23 // pred_check
        %p153 = pneg %p43
      $region26: #{stage0_forward.9} parent=23 // pred_check_branch
        %155 = sbr.rel (%p153) target = $region28
      $region27: #{stage0_forward.9} parent=23 // pred_region
        %s156 = smul.u32 32, %s16
        %s157 = smul.u32 2, %s17
        %p158 = scmp.lt.s32.totalorder %s156, 63
        %s159 = scalar_select %p158, %s156, 63
        %p160 = scmp.lt.s32.totalorder %s157, 1
        %s161 = scalar_select %p160, %s157, 1
        %s162 = smul.addr %s159, 2
        %s163 = sadd.s32 %s161, %s162
        %s164 = smul.addr %s163, 4
        %s165 = scalar_lea.vmem %s0, %s164
        %s166 = smul.u32 32, %s16
        %s167 = smul.u32 2, %s17
      $region28: #{stage0_forward.9} parent=23 // pred_fallthru
        _
    $region24: #{stage0_forward.9} parent=5 // pred_fallthru
      _
    %p168 = scmp.le.s32.totalorder 1, %s9
    %p169 = scmp.lt.s32.totalorder %s9, 3
    %p170 = pnand %p168, %p169
    %p171 = pneg %p170
    // Predicated region
    $region29: #{stage0_forward.9} parent=5 // pred_check
      _
    $region30: #{stage0_forward.9} parent=5 // pred_check_branch
      %173 = sbr.rel (%p170) target = $region32
    $region31: #{stage0_forward.9} parent=5 // pred_region
      %s174 = ssub.s32 %s9, 1
      %s175 = smul.u32 32, %s18
      %s176 = smul.u32 2, %s19
      %p177 = scmp.lt.s32.totalorder %s175, 63
      %s178 = scalar_select %p177, %s175, 63
      %p179 = scmp.lt.s32.totalorder %s176, 1
      %s180 = scalar_select %p179, %s176, 1
      %s181 = smul.addr %s178, 2
      %s182 = sadd.s32 %s180, %s181
      %s183 = smul.addr %s182, 4
      %s184 = scalar_lea.vmem %s0, %s183
      %p185 = pneg %p49
      %p186 = pneg %p46
      %s187 = smul.u32 19, %s19
      %p188 = scmp.lt.s32.totalorder %s187, 18
      %s189 = scalar_select %p188, %s187, 18
      %s190 = smul.addr %s189, 4
      %s191 = scalar_lea.vmem %s1, %s190
      %p192 = pneg %p75
      %p193 = pneg %p72
      %p194 = pneg %p96
      %p195 = pneg %p93
      %p196 = pneg %p122
      %p197 = pneg %p119
      %s198 = smul.u32 32, %s18
      %p199 = scmp.lt.s32.totalorder %s198, 63
      %s200 = scalar_select %p199, %s198, 63
      %s201 = smul.addr %s200, 4
      %s202 = scalar_lea.vmem %s3, %s201
      %s203 = smul.u32 32, %s18
      %s204 = smul.u32 2, %s19
      %p205 = scmp.lt.s32.totalorder %s203, 63
      %s206 = scalar_select %p205, %s203, 63
      %p207 = scmp.lt.s32.totalorder %s204, 1
      %s208 = scalar_select %p207, %s204, 1
      %s209 = smul.addr %s206, 2
      %s210 = sadd.s32 %s208, %s209
      %s211 = smul.addr %s210, 4
      %s212 = scalar_lea.vmem %s0, %s211
      %s213 = smul.u32 32, %s18
      %s214 = smul.u32 2, %s19
      %s215 = smul.u32 19, %s19
      %p216 = scmp.lt.s32.totalorder %s215, 18
      %s217 = scalar_select %p216, %s215, 18
      %s218 = smul.addr %s217, 4
      %s219 = scalar_lea.vmem %s1, %s218
      %s220 = smul.u32 19, %s19
      %s221 = smul.u32 32, %s18
      %p222 = scmp.lt.s32.totalorder %s221, 63
      %s223 = scalar_select %p222, %s221, 63
      %s224 = smul.addr %s223, 4
      %s225 = scalar_lea.vmem %s3, %s224
      %s226 = smul.u32 32, %s18
      %p228 = scmp.eq.s32.totalorder %s19, 0
      // Predicated region
      $region33: #{stage0_forward.9} parent=31 // pred_check
        %p229 = pneg %p228
      $region34: #{stage0_forward.9} parent=31 // pred_check_branch
        %231 = sbr.rel (%p229) target = $region36
      $region35: #{stage0_forward.9} parent=31 // pred_region
        %vm232 = vcmask 523264
        %233 = vst.msk [vmem:[#allocation2] sm:$0xff] %vm232, 0.0
        %234 = vst.msk [vmem:[#allocation2 + $0x8] sm:$0xff] %vm232, 0.0
        %235 = vst.msk [vmem:[#allocation2 + $0x10] sm:$0xff] %vm232, 0.0
        %236 = vst.msk [vmem:[#allocation2 + $0x18] sm:$0xff] %vm232, 0.0
        %237 = vst.msk [vmem:[#allocation2 + $0x20] sm:$0xff] %vm232, 0.0
        %238 = vst.msk [vmem:[#allocation2 + $0x28] sm:$0xff] %vm232, 0.0
        %239 = vst.msk [vmem:[#allocation2 + $0x30] sm:$0xff] %vm232, 0.0
        %240 = vst.msk [vmem:[#allocation2 + $0x38] sm:$0xff] %vm232, 0.0
        %241 = vst.msk [vmem:[#allocation2 + $0x40] sm:$0xff] %vm232, 0.0
        %242 = vst.msk [vmem:[#allocation2 + $0x48] sm:$0xff] %vm232, 0.0
        %243 = vst.msk [vmem:[#allocation2 + $0x50] sm:$0xff] %vm232, 0.0
        %244 = vst.msk [vmem:[#allocation2 + $0x58] sm:$0xff] %vm232, 0.0
        %245 = vst.msk [vmem:[#allocation2 + $0x60] sm:$0xff] %vm232, 0.0
        %246 = vst.msk [vmem:[#allocation2 + $0x68] sm:$0xff] %vm232, 0.0
        %247 = vst.msk [vmem:[#allocation2 + $0x70] sm:$0xff] %vm232, 0.0
        %248 = vst.msk [vmem:[#allocation2 + $0x78] sm:$0xff] %vm232, 0.0
        %249 = vst.msk [vmem:[#allocation2 + $0x80] sm:$0xff] %vm232, 0.0
        %250 = vst.msk [vmem:[#allocation2 + $0x88] sm:$0xff] %vm232, 0.0
        %251 = vst.msk [vmem:[#allocation2 + $0x90] sm:$0xff] %vm232, 0.0
        %252 = vst.msk [vmem:[#allocation2 + $0x98] sm:$0xff] %vm232, 0.0
        %253 = vst.msk [vmem:[#allocation2 + $0xa0] sm:$0xff] %vm232, 0.0
        %254 = vst.msk [vmem:[#allocation2 + $0xa8] sm:$0xff] %vm232, 0.0
        %255 = vst.msk [vmem:[#allocation2 + $0xb0] sm:$0xff] %vm232, 0.0
        %256 = vst.msk [vmem:[#allocation2 + $0xb8] sm:$0xff] %vm232, 0.0
        %257 = vst.msk [vmem:[#allocation2 + $0xc0] sm:$0xff] %vm232, 0.0
        %258 = vst.msk [vmem:[#allocation2 + $0xc8] sm:$0xff] %vm232, 0.0
        %259 = vst.msk [vmem:[#allocation2 + $0xd0] sm:$0xff] %vm232, 0.0
        %260 = vst.msk [vmem:[#allocation2 + $0xd8] sm:$0xff] %vm232, 0.0
        %261 = vst.msk [vmem:[#allocation2 + $0xe0] sm:$0xff] %vm232, 0.0
        %262 = vst.msk [vmem:[#allocation2 + $0xe8] sm:$0xff] %vm232, 0.0
        %263 = vst.msk [vmem:[#allocation2 + $0xf0] sm:$0xff] %vm232, 0.0
        %264 = vst.msk [vmem:[#allocation2 + $0xf8] sm:$0xff] %vm232, 0.0
      $region36: #{stage0_forward.9} parent=31 // pred_fallthru
        _
      %v265 = vld [vmem:[#allocation2] sm:$0xff]
      %v266 = vld [vmem:[#allocation2 + $0x8] sm:$0xff]
      %v267 = vld [vmem:[#allocation2 + $0x10] sm:$0xff]
      %v268 = vld [vmem:[#allocation2 + $0x18] sm:$0xff]
      %v269 = vld [vmem:[#allocation2 + $0x20] sm:$0xff]
      %v270 = vld [vmem:[#allocation2 + $0x28] sm:$0xff]
      %v271 = vld [vmem:[#allocation2 + $0x30] sm:$0xff]
      %v272 = vld [vmem:[#allocation2 + $0x38] sm:$0xff]
      %v273 = vld [vmem:[#allocation2 + $0x40] sm:$0xff]
      %v274 = vld [vmem:[#allocation2 + $0x48] sm:$0xff]
      %v275 = vld [vmem:[#allocation2 + $0x50] sm:$0xff]
      %v276 = vld [vmem:[#allocation2 + $0x58] sm:$0xff]
      %v277 = vld [vmem:[#allocation2 + $0x60] sm:$0xff]
      %v278 = vld [vmem:[#allocation2 + $0x68] sm:$0xff]
      %v279 = vld [vmem:[#allocation2 + $0x70] sm:$0xff]
      %v280 = vld [vmem:[#allocation2 + $0x78] sm:$0xff]
      %v281 = vld [vmem:[#allocation2 + $0x80] sm:$0xff]
      %v282 = vld [vmem:[#allocation2 + $0x88] sm:$0xff]
      %v283 = vld [vmem:[#allocation2 + $0x90] sm:$0xff]
      %v284 = vld [vmem:[#allocation2 + $0x98] sm:$0xff]
      %v285 = vld [vmem:[#allocation2 + $0xa0] sm:$0xff]
      %v286 = vld [vmem:[#allocation2 + $0xa8] sm:$0xff]
      %v287 = vld [vmem:[#allocation2 + $0xb0] sm:$0xff]
      %v288 = vld [vmem:[#allocation2 + $0xb8] sm:$0xff]
      %v289 = vld [vmem:[#allocation2 + $0xc0] sm:$0xff]
      %v290 = vld [vmem:[#allocation2 + $0xc8] sm:$0xff]
      %v291 = vld [vmem:[#allocation2 + $0xd0] sm:$0xff]
      %v292 = vld [vmem:[#allocation2 + $0xd8] sm:$0xff]
      %v293 = vld [vmem:[#allocation2 + $0xe0] sm:$0xff]
      %v294 = vld [vmem:[#allocation2 + $0xe8] sm:$0xff]
      %v295 = vld [vmem:[#allocation2 + $0xf0] sm:$0xff]
      %v296 = vld [vmem:[#allocation2 + $0xf8] sm:$0xff]
      %v297 = vld [vmem:[%s212] sm:$0xff]
      %v298 = vld [vmem:[%s212 + $0x8] sm:$0xff]
      %v299 = vld [vmem:[%s212 + $0x10] sm:$0xff]
      %v300 = vld [vmem:[%s212 + $0x18] sm:$0xff]
      %v301 = vld [vmem:[%s212 + $0x20] sm:$0xff]
      %v302 = vld [vmem:[%s212 + $0x28] sm:$0xff]
      %v303 = vld [vmem:[%s212 + $0x30] sm:$0xff]
      %v304 = vld [vmem:[%s212 + $0x38] sm:$0xff]
      %v305 = vld [vmem:[%s212 + $0x40] sm:$0xff]
      %v306 = vld [vmem:[%s212 + $0x48] sm:$0xff]
      %v307 = vld [vmem:[%s212 + $0x50] sm:$0xff]
      %v308 = vld [vmem:[%s212 + $0x58] sm:$0xff]
      %v309 = vld [vmem:[%s212 + $0x60] sm:$0xff]
      %v310 = vld [vmem:[%s212 + $0x68] sm:$0xff]
      %v311 = vld [vmem:[%s212 + $0x70] sm:$0xff]
      %v312 = vld [vmem:[%s212 + $0x78] sm:$0xff]
      %v313 = vld [vmem:[%s212 + $0x80] sm:$0xff]
      %v314 = vld [vmem:[%s212 + $0x88] sm:$0xff]
      %v315 = vld [vmem:[%s212 + $0x90] sm:$0xff]
      %v316 = vld [vmem:[%s212 + $0x98] sm:$0xff]
      %v317 = vld [vmem:[%s212 + $0xa0] sm:$0xff]
      %v318 = vld [vmem:[%s212 + $0xa8] sm:$0xff]
      %v319 = vld [vmem:[%s212 + $0xb0] sm:$0xff]
      %v320 = vld [vmem:[%s212 + $0xb8] sm:$0xff]
      %v321 = vld [vmem:[%s212 + $0xc0] sm:$0xff]
      %v322 = vld [vmem:[%s212 + $0xc8] sm:$0xff]
      %v323 = vld [vmem:[%s212 + $0xd0] sm:$0xff]
      %v324 = vld [vmem:[%s212 + $0xd8] sm:$0xff]
      %v325 = vld [vmem:[%s212 + $0xe0] sm:$0xff]
      %v326 = vld [vmem:[%s212 + $0xe8] sm:$0xff]
      %v327 = vld [vmem:[%s212 + $0xf0] sm:$0xff]
      %v328 = vld [vmem:[%s212 + $0xf8] sm:$0xff]
      %v329 = vld [vmem:[%s219] sm:$0xf]
      %v330 = vld [vmem:[%s219 + $0x4] sm:$0xf]
      %v331 = vld [vmem:[%s219 + $0x8] sm:$0xf]
      %v332 = vld [vmem:[%s219 + $0xc] sm:$0xf]
      %v333 = vld [vmem:[%s219 + $0x10] sm:$0xf]
      %v334 = vld [vmem:[%s219 + $0x14] sm:$0xf]
      %v335 = vld [vmem:[%s219 + $0x18] sm:$0xf]
      %v336 = vld [vmem:[%s219 + $0x1c] sm:$0xf]
      %v337 = vld [vmem:[%s219 + $0x20] sm:$0xf]
      %v338 = vld [vmem:[%s219 + $0x24] sm:$0xf]
      %v339 = vld [vmem:[%s219 + $0x28] sm:$0xf]
      %v340 = vld [vmem:[%s219 + $0x2c] sm:$0xf]
      %v341 = vld [vmem:[%s219 + $0x30] sm:$0xf]
      %v342 = vld [vmem:[%s219 + $0x34] sm:$0xf]
      %v343 = vld [vmem:[%s219 + $0x38] sm:$0xf]
      %v344 = vld [vmem:[%s219 + $0x3c] sm:$0xf]
      %v345 = vld [vmem:[%s219 + $0x40] sm:$0xf]
      %v346 = vld [vmem:[%s219 + $0x44] sm:$0xf]
      %v347 = vld [vmem:[%s219 + $0x48] sm:$0x3]
      %v380 = vunpack.c.l.b16 %v297
      %v381 = vunpack.c.h.b16 %v297
      %v382 = vunpack.c.l.b16 %v298
      %v383 = vunpack.c.h.b16 %v298
      %v384 = vunpack.c.l.b16 %v299
      %v385 = vunpack.c.h.b16 %v299
      %v386 = vunpack.c.l.b16 %v300
      %v387 = vunpack.c.h.b16 %v300
      %v388 = vunpack.c.l.b16 %v301
      %v389 = vunpack.c.h.b16 %v301
      %v390 = vunpack.c.l.b16 %v302
      %v391 = vunpack.c.h.b16 %v302
      %v392 = vunpack.c.l.b16 %v303
      %v393 = vunpack.c.h.b16 %v303
      %v394 = vunpack.c.l.b16 %v304
      %v395 = vunpack.c.h.b16 %v304
      %v396 = vunpack.c.l.b16 %v305
      %v397 = vunpack.c.h.b16 %v305
      %v398 = vunpack.c.l.b16 %v306
      %v399 = vunpack.c.h.b16 %v306
      %v400 = vunpack.c.l.b16 %v307
      %v401 = vunpack.c.h.b16 %v307
      %v402 = vunpack.c.l.b16 %v308
      %v403 = vunpack.c.h.b16 %v308
      %v404 = vunpack.c.l.b16 %v309
      %v405 = vunpack.c.h.b16 %v309
      %v406 = vunpack.c.l.b16 %v310
      %v407 = vunpack.c.h.b16 %v310
      %v408 = vunpack.c.l.b16 %v311
      %v409 = vunpack.c.h.b16 %v311
      %v410 = vunpack.c.l.b16 %v312
      %v411 = vunpack.c.h.b16 %v312
      %v412 = vunpack.c.l.b16 %v313
      %v413 = vunpack.c.h.b16 %v313
      %v414 = vunpack.c.l.b16 %v314
      %v415 = vunpack.c.h.b16 %v314
      %v416 = vunpack.c.l.b16 %v315
      %v417 = vunpack.c.h.b16 %v315
      %v418 = vunpack.c.l.b16 %v316
      %v419 = vunpack.c.h.b16 %v316
      %v420 = vunpack.c.l.b16 %v317
      %v421 = vunpack.c.h.b16 %v317
      %v422 = vunpack.c.l.b16 %v318
      %v423 = vunpack.c.h.b16 %v318
      %v424 = vunpack.c.l.b16 %v319
      %v425 = vunpack.c.h.b16 %v319
      %v426 = vunpack.c.l.b16 %v320
      %v427 = vunpack.c.h.b16 %v320
      %v428 = vunpack.c.l.b16 %v321
      %v429 = vunpack.c.h.b16 %v321
      %v430 = vunpack.c.l.b16 %v322
      %v431 = vunpack.c.h.b16 %v322
      %v432 = vunpack.c.l.b16 %v323
      %v433 = vunpack.c.h.b16 %v323
      %v434 = vunpack.c.l.b16 %v324
      %v435 = vunpack.c.h.b16 %v324
      %v436 = vunpack.c.l.b16 %v325
      %v437 = vunpack.c.h.b16 %v325
      %v438 = vunpack.c.l.b16 %v326
      %v439 = vunpack.c.h.b16 %v326
      %v440 = vunpack.c.l.b16 %v327
      %v441 = vunpack.c.h.b16 %v327
      %v442 = vunpack.c.l.b16 %v328
      %v443 = vunpack.c.h.b16 %v328
      %v444 = vpack.c.b16 %v382, %v380
      %v445 = vpack.c.b16 %v383, %v381
      %v446 = vpack.c.b16 %v386, %v384
      %v447 = vpack.c.b16 %v387, %v385
      %v448 = vpack.c.b16 %v390, %v388
      %v449 = vpack.c.b16 %v391, %v389
      %v450 = vpack.c.b16 %v394, %v392
      %v451 = vpack.c.b16 %v395, %v393
      %v452 = vpack.c.b16 %v398, %v396
      %v453 = vpack.c.b16 %v399, %v397
      %v454 = vpack.c.b16 %v402, %v400
      %v455 = vpack.c.b16 %v403, %v401
      %v456 = vpack.c.b16 %v406, %v404
      %v457 = vpack.c.b16 %v407, %v405
      %v458 = vpack.c.b16 %v410, %v408
      %v459 = vpack.c.b16 %v411, %v409
      %v460 = vpack.c.b16 %v414, %v412
      %v461 = vpack.c.b16 %v415, %v413
      %v462 = vpack.c.b16 %v418, %v416
      %v463 = vpack.c.b16 %v419, %v417
      %v464 = vpack.c.b16 %v422, %v420
      %v465 = vpack.c.b16 %v423, %v421
      %v466 = vpack.c.b16 %v426, %v424
      %v467 = vpack.c.b16 %v427, %v425
      %v468 = vpack.c.b16 %v430, %v428
      %v469 = vpack.c.b16 %v431, %v429
      %v470 = vpack.c.b16 %v434, %v432
      %v471 = vpack.c.b16 %v435, %v433
      %v472 = vpack.c.b16 %v438, %v436
      %v473 = vpack.c.b16 %v439, %v437
      %v474 = vpack.c.b16 %v442, %v440
      %v475 = vpack.c.b16 %v443, %v441
      %v511 = vunpack.c.l.b16 %v329
      %v512 = vunpack.c.l.b16 %v330
      %v513 = vunpack.c.l.b16 %v331
      %v514 = vunpack.c.l.b16 %v332
      %v515 = vunpack.c.l.b16 %v333
      %v516 = vunpack.c.l.b16 %v334
      %v517 = vunpack.c.l.b16 %v335
      %v518 = vunpack.c.l.b16 %v336
      %v519 = vunpack.c.l.b16 %v337
      %v520 = vunpack.c.l.b16 %v338
      %v521 = vunpack.c.l.b16 %v339
      %v522 = vunpack.c.l.b16 %v340
      %v523 = vunpack.c.l.b16 %v341
      %v524 = vunpack.c.l.b16 %v342
      %v525 = vunpack.c.l.b16 %v343
      %v526 = vunpack.c.l.b16 %v344
      %v527 = vunpack.c.l.b16 %v345
      %v528 = vunpack.c.l.b16 %v346
      %v529 = vunpack.c.l.b16 %v347
      %v530 = vpack.c.b16 %v512, %v511
      %v531 = vpack.c.b16 %v514, %v513
      %v532 = vpack.c.b16 %v516, %v515
      %v533 = vpack.c.b16 %v518, %v517
      %v534 = vpack.c.b16 %v520, %v519
      %v535 = vpack.c.b16 %v522, %v521
      %v536 = vpack.c.b16 %v524, %v523
      %v537 = vpack.c.b16 %v526, %v525
      %v538 = vpack.c.b16 %v528, %v527
      %v539 = vpack.c.b16 %v529, %v529
      %vm549 = vcmask 154624
      %v551 = vsel %vm549, %v445, 0
      %v554 = vsel %vm549, %v447, 0
      %v557 = vsel %vm549, %v449, 0
      %v560 = vsel %vm549, %v451, 0
      %v563 = vsel %vm549, %v453, 0
      %v566 = vsel %vm549, %v455, 0
      %v569 = vsel %vm549, %v457, 0
      %v572 = vsel %vm549, %v459, 0
      %v575 = vsel %vm549, %v461, 0
      %v578 = vsel %vm549, %v463, 0
      %v581 = vsel %vm549, %v465, 0
      %v584 = vsel %vm549, %v467, 0
      %v587 = vsel %vm549, %v469, 0
      %v590 = vsel %vm549, %v471, 0
      %v593 = vsel %vm549, %v473, 0
      %v596 = vsel %vm549, %v475, 0
      %vm598 = vcmask 1040384
      %vm599 = vcmask 1041408
      %v600 = vsel %vm598, 4294967295, 65535
      %v601 = vsel %vm599, %v600, 0
      %v603 = vand.u32 %v539, %v601
      %605 = vmatprep.subr.bf16.mxu0 0
      %606 = vmatpush1.bf16.msra.mxu0 %v530
      %607 = vmatprep.subr.bf16.mxu0 0
      %608 = vmatpush1.bf16.msra.mxu0 %v531
      %609 = vmatprep.subr.bf16.mxu0 0
      %610 = vmatpush1.bf16.msra.mxu0 %v532
      %611 = vmatprep.subr.bf16.mxu0 0
      %612 = vmatpush1.bf16.msra.mxu0 %v533
      %613 = vmatprep.subr.bf16.mxu0 0
      %614 = vmatpush1.bf16.msra.mxu0 %v534
      %615 = vmatprep.subr.bf16.mxu0 0
      %616 = vmatpush1.bf16.msra.mxu0 %v535
      %617 = vmatprep.subr.bf16.mxu0 0
      %618 = vmatpush1.bf16.msra.mxu0 %v536
      %619 = vmatprep.subr.bf16.mxu0 0
      %620 = vmatpush1.bf16.msra.mxu0 %v537
      %621 = vmatprep.subr.bf16.mxu0 0
      %622 = vmatpush1.bf16.msra.mxu0 %v538
      %623 = vmatprep.subr.bf16.mxu0 0
      %624 = vmatpush1.bf16.msra.mxu0 %v603
      %625 = vmatprep.subr.bf16.mxu0 0
      %626 = vmatpush1.bf16.msra.mxu0 0
      %627 = vmatprep.subr.bf16.mxu0 0
      %628 = vmatpush1.bf16.msra.mxu0 0
      %629 = vmatprep.subr.bf16.mxu0 0
      %630 = vmatpush1.bf16.msra.mxu0 0
      %631 = vmatprep.subr.bf16.mxu0 0
      %632 = vmatpush1.bf16.msra.mxu0 0
      %633 = vmatprep.subr.bf16.mxu0 0
      %634 = vmatpush1.bf16.msra.mxu0 0
      %635 = vmatprep.subr.bf16.mxu0 0
      %636 = vmatpush1.bf16.msra.mxu0 0
      %637 = vmatprep.mubr.bf16.mxu0 %v551
      %638 = vmatmul.mubr.bf16.gmra.mrb[0].mxu0 %v444
      %v639 = vpop.f32.mrb[0].mxu0
      %v640 = vadd.f32 0.0, %v639
      %v641 = vpop.f32.mrb[0].mxu0
      %v642 = vpop.f32.mrb[0].mxu0
      %v643 = vadd.f32 0.0, %v642
      %v644 = vpop.f32.mrb[0].mxu0
      %645 = vmatprep.mubr.bf16.mxu0 %v554
      %646 = vmatmul.mubr.bf16.gmra.mrb[0].mxu0 %v446
      %v647 = vpop.f32.mrb[0].mxu0
      %v648 = vadd.f32 0.0, %v647
      %v649 = vpop.f32.mrb[0].mxu0
      %v650 = vpop.f32.mrb[0].mxu0
      %v651 = vadd.f32 0.0, %v650
      %v652 = vpop.f32.mrb[0].mxu0
      %653 = vmatprep.mubr.bf16.mxu0 %v557
      %654 = vmatmul.mubr.bf16.gmra.mrb[0].mxu0 %v448
      %v655 = vpop.f32.mrb[0].mxu0
      %v656 = vadd.f32 0.0, %v655
      %v657 = vpop.f32.mrb[0].mxu0
      %v658 = vpop.f32.mrb[0].mxu0
      %v659 = vadd.f32 0.0, %v658
      %v660 = vpop.f32.mrb[0].mxu0
      %661 = vmatprep.mubr.bf16.mxu0 %v560
      %662 = vmatmul.mubr.bf16.gmra.mrb[0].mxu0 %v450
      %v663 = vpop.f32.mrb[0].mxu0
      %v664 = vadd.f32 0.0, %v663
      %v665 = vpop.f32.mrb[0].mxu0
      %v666 = vpop.f32.mrb[0].mxu0
      %v667 = vadd.f32 0.0, %v666
      %v668 = vpop.f32.mrb[0].mxu0
      %669 = vmatprep.mubr.bf16.mxu0 %v563
      %670 = vmatmul.mubr.bf16.gmra.mrb[0].mxu0 %v452
      %v671 = vpop.f32.mrb[0].mxu0
      %v672 = vadd.f32 0.0, %v671
      %v673 = vpop.f32.mrb[0].mxu0
      %v674 = vpop.f32.mrb[0].mxu0
      %v675 = vadd.f32 0.0, %v674
      %v676 = vpop.f32.mrb[0].mxu0
      %677 = vmatprep.mubr.bf16.mxu0 %v566
      %678 = vmatmul.mubr.bf16.gmra.mrb[0].mxu0 %v454
      %v679 = vpop.f32.mrb[0].mxu0
      %v680 = vadd.f32 0.0, %v679
      %v681 = vpop.f32.mrb[0].mxu0
      %v682 = vpop.f32.mrb[0].mxu0
      %v683 = vadd.f32 0.0, %v682
      %v684 = vpop.f32.mrb[0].mxu0
      %685 = vmatprep.mubr.bf16.mxu0 %v569
      %686 = vmatmul.mubr.bf16.gmra.mrb[0].mxu0 %v456
      %v687 = vpop.f32.mrb[0].mxu0
      %v688 = vadd.f32 0.0, %v687
      %v689 = vpop.f32.mrb[0].mxu0
      %v690 = vpop.f32.mrb[0].mxu0
      %v691 = vadd.f32 0.0, %v690
      %v692 = vpop.f32.mrb[0].mxu0
      %693 = vmatprep.mubr.bf16.mxu0 %v572
      %694 = vmatmul.mubr.bf16.gmra.mrb[0].mxu0 %v458
      %v695 = vpop.f32.mrb[0].mxu0
      %v696 = vadd.f32 0.0, %v695
      %v697 = vpop.f32.mrb[0].mxu0
      %v698 = vpop.f32.mrb[0].mxu0
      %v699 = vadd.f32 0.0, %v698
      %v700 = vpop.f32.mrb[0].mxu0
      %701 = vmatprep.mubr.bf16.mxu0 %v575
      %702 = vmatmul.mubr.bf16.gmra.mrb[0].mxu0 %v460
      %v703 = vpop.f32.mrb[0].mxu0
      %v704 = vadd.f32 0.0, %v703
      %v705 = vpop.f32.mrb[0].mxu0
      %v706 = vpop.f32.mrb[0].mxu0
      %v707 = vadd.f32 0.0, %v706
      %v708 = vpop.f32.mrb[0].mxu0
      %709 = vmatprep.mubr.bf16.mxu0 %v578
      %710 = vmatmul.mubr.bf16.gmra.mrb[0].mxu0 %v462
      %v711 = vpop.f32.mrb[0].mxu0
      %v712 = vadd.f32 0.0, %v711
      %v713 = vpop.f32.mrb[0].mxu0
      %v714 = vpop.f32.mrb[0].mxu0
      %v715 = vadd.f32 0.0, %v714
      %v716 = vpop.f32.mrb[0].mxu0
      %717 = vmatprep.mubr.bf16.mxu0 %v581
      %718 = vmatmul.mubr.bf16.gmra.mrb[0].mxu0 %v464
      %v719 = vpop.f32.mrb[0].mxu0
      %v720 = vadd.f32 0.0, %v719
      %v721 = vpop.f32.mrb[0].mxu0
      %v722 = vpop.f32.mrb[0].mxu0
      %v723 = vadd.f32 0.0, %v722
      %v724 = vpop.f32.mrb[0].mxu0
      %725 = vmatprep.mubr.bf16.mxu0 %v584
      %726 = vmatmul.mubr.bf16.gmra.mrb[0].mxu0 %v466
      %v727 = vpop.f32.mrb[0].mxu0
      %v728 = vadd.f32 0.0, %v727
      %v729 = vpop.f32.mrb[0].mxu0
      %v730 = vpop.f32.mrb[0].mxu0
      %v731 = vadd.f32 0.0, %v730
      %v732 = vpop.f32.mrb[0].mxu0
      %733 = vmatprep.mubr.bf16.mxu0 %v587
      %734 = vmatmul.mubr.bf16.gmra.mrb[0].mxu0 %v468
      %v735 = vpop.f32.mrb[0].mxu0
      %v736 = vadd.f32 0.0, %v735
      %v737 = vpop.f32.mrb[0].mxu0
      %v738 = vpop.f32.mrb[0].mxu0
      %v739 = vadd.f32 0.0, %v738
      %v740 = vpop.f32.mrb[0].mxu0
      %741 = vmatprep.mubr.bf16.mxu0 %v590
      %742 = vmatmul.mubr.bf16.gmra.mrb[0].mxu0 %v470
      %v743 = vpop.f32.mrb[0].mxu0
      %v744 = vadd.f32 0.0, %v743
      %v745 = vpop.f32.mrb[0].mxu0
      %v746 = vpop.f32.mrb[0].mxu0
      %v747 = vadd.f32 0.0, %v746
      %v748 = vpop.f32.mrb[0].mxu0
      %749 = vmatprep.mubr.bf16.mxu0 %v593
      %750 = vmatmul.mubr.bf16.gmra.mrb[0].mxu0 %v472
      %v751 = vpop.f32.mrb[0].mxu0
      %v752 = vadd.f32 0.0, %v751
      %v753 = vpop.f32.mrb[0].mxu0
      %v754 = vpop.f32.mrb[0].mxu0
      %v755 = vadd.f32 0.0, %v754
      %v756 = vpop.f32.mrb[0].mxu0
      %757 = vmatprep.mubr.bf16.mxu0 %v596
      %758 = vmatmul.mubr.bf16.gmra.mrb[0].mxu0 %v474
      %v759 = vpop.f32.mrb[0].mxu0
      %v760 = vadd.f32 0.0, %v759
      %v761 = vpop.f32.mrb[0].mxu0
      %v762 = vpop.f32.mrb[0].mxu0
      %v763 = vadd.f32 0.0, %v762
      %v764 = vpop.f32.mrb[0].mxu0
      %765 = vdwg.mxu0
      %v766 = vadd.f32 %v265, %v640
      %v767 = vadd.f32 %v266, %v643
      %v768 = vadd.f32 %v267, %v648
      %v769 = vadd.f32 %v268, %v651
      %v770 = vadd.f32 %v269, %v656
      %v771 = vadd.f32 %v270, %v659
      %v772 = vadd.f32 %v271, %v664
      %v773 = vadd.f32 %v272, %v667
      %v774 = vadd.f32 %v273, %v672
      %v775 = vadd.f32 %v274, %v675
      %v776 = vadd.f32 %v275, %v680
      %v777 = vadd.f32 %v276, %v683
      %v778 = vadd.f32 %v277, %v688
      %v779 = vadd.f32 %v278, %v691
      %v780 = vadd.f32 %v279, %v696
      %v781 = vadd.f32 %v280, %v699
      %v782 = vadd.f32 %v281, %v704
      %v783 = vadd.f32 %v282, %v707
      %v784 = vadd.f32 %v283, %v712
      %v785 = vadd.f32 %v284, %v715
      %v786 = vadd.f32 %v285, %v720
      %v787 = vadd.f32 %v286, %v723
      %v788 = vadd.f32 %v287, %v728
      %v789 = vadd.f32 %v288, %v731
      %v790 = vadd.f32 %v289, %v736
      %v791 = vadd.f32 %v290, %v739
      %v792 = vadd.f32 %v291, %v744
      %v793 = vadd.f32 %v292, %v747
      %v794 = vadd.f32 %v293, %v752
      %v795 = vadd.f32 %v294, %v755
      %v796 = vadd.f32 %v295, %v760
      %v797 = vadd.f32 %v296, %v763
      %vm798 = vcmask 523264
      %799 = vst.msk [vmem:[#allocation2] sm:$0xff] %vm798, %v766
      %800 = vst.msk [vmem:[#allocation2 + $0x8] sm:$0xff] %vm798, %v767
      %801 = vst.msk [vmem:[#allocation2 + $0x10] sm:$0xff] %vm798, %v768
      %802 = vst.msk [vmem:[#allocation2 + $0x18] sm:$0xff] %vm798, %v769
      %803 = vst.msk [vmem:[#allocation2 + $0x20] sm:$0xff] %vm798, %v770
      %804 = vst.msk [vmem:[#allocation2 + $0x28] sm:$0xff] %vm798, %v771
      %805 = vst.msk [vmem:[#allocation2 + $0x30] sm:$0xff] %vm798, %v772
      %806 = vst.msk [vmem:[#allocation2 + $0x38] sm:$0xff] %vm798, %v773
      %807 = vst.msk [vmem:[#allocation2 + $0x40] sm:$0xff] %vm798, %v774
      %808 = vst.msk [vmem:[#allocation2 + $0x48] sm:$0xff] %vm798, %v775
      %809 = vst.msk [vmem:[#allocation2 + $0x50] sm:$0xff] %vm798, %v776
      %810 = vst.msk [vmem:[#allocation2 + $0x58] sm:$0xff] %vm798, %v777
      %811 = vst.msk [vmem:[#allocation2 + $0x60] sm:$0xff] %vm798, %v778
      %812 = vst.msk [vmem:[#allocation2 + $0x68] sm:$0xff] %vm798, %v779
      %813 = vst.msk [vmem:[#allocation2 + $0x70] sm:$0xff] %vm798, %v780
      %814 = vst.msk [vmem:[#allocation2 + $0x78] sm:$0xff] %vm798, %v781
      %815 = vst.msk [vmem:[#allocation2 + $0x80] sm:$0xff] %vm798, %v782
      %816 = vst.msk [vmem:[#allocation2 + $0x88] sm:$0xff] %vm798, %v783
      %817 = vst.msk [vmem:[#allocation2 + $0x90] sm:$0xff] %vm798, %v784
      %818 = vst.msk [vmem:[#allocation2 + $0x98] sm:$0xff] %vm798, %v785
      %819 = vst.msk [vmem:[#allocation2 + $0xa0] sm:$0xff] %vm798, %v786
      %820 = vst.msk [vmem:[#allocation2 + $0xa8] sm:$0xff] %vm798, %v787
      %821 = vst.msk [vmem:[#allocation2 + $0xb0] sm:$0xff] %vm798, %v788
      %822 = vst.msk [vmem:[#allocation2 + $0xb8] sm:$0xff] %vm798, %v789
      %823 = vst.msk [vmem:[#allocation2 + $0xc0] sm:$0xff] %vm798, %v790
      %824 = vst.msk [vmem:[#allocation2 + $0xc8] sm:$0xff] %vm798, %v791
      %825 = vst.msk [vmem:[#allocation2 + $0xd0] sm:$0xff] %vm798, %v792
      %826 = vst.msk [vmem:[#allocation2 + $0xd8] sm:$0xff] %vm798, %v793
      %827 = vst.msk [vmem:[#allocation2 + $0xe0] sm:$0xff] %vm798, %v794
      %828 = vst.msk [vmem:[#allocation2 + $0xe8] sm:$0xff] %vm798, %v795
      %829 = vst.msk [vmem:[#allocation2 + $0xf0] sm:$0xff] %vm798, %v796
      %830 = vst.msk [vmem:[#allocation2 + $0xf8] sm:$0xff] %vm798, %v797
      // Predicated region
      $region37: #{stage0_forward.9} parent=31 // pred_check
        %p831 = pneg %p228
      $region38: #{stage0_forward.9} parent=31 // pred_check_branch
        %833 = sbr.rel (%p831) target = $region40
      $region39: #{stage0_forward.9} parent=31 // pred_region
        %v834 = vld [vmem:[#allocation2] sm:$0xff]
        %v835 = vld [vmem:[#allocation2 + $0x8] sm:$0xff]
        %v836 = vld [vmem:[#allocation2 + $0x10] sm:$0xff]
        %v837 = vld [vmem:[#allocation2 + $0x18] sm:$0xff]
        %v838 = vld [vmem:[#allocation2 + $0x20] sm:$0xff]
        %v839 = vld [vmem:[#allocation2 + $0x28] sm:$0xff]
        %v840 = vld [vmem:[#allocation2 + $0x30] sm:$0xff]
        %v841 = vld [vmem:[#allocation2 + $0x38] sm:$0xff]
        %v842 = vld [vmem:[#allocation2 + $0x40] sm:$0xff]
        %v843 = vld [vmem:[#allocation2 + $0x48] sm:$0xff]
        %v844 = vld [vmem:[#allocation2 + $0x50] sm:$0xff]
        %v845 = vld [vmem:[#allocation2 + $0x58] sm:$0xff]
        %v846 = vld [vmem:[#allocation2 + $0x60] sm:$0xff]
        %v847 = vld [vmem:[#allocation2 + $0x68] sm:$0xff]
        %v848 = vld [vmem:[#allocation2 + $0x70] sm:$0xff]
        %v849 = vld [vmem:[#allocation2 + $0x78] sm:$0xff]
        %v850 = vld [vmem:[#allocation2 + $0x80] sm:$0xff]
        %v851 = vld [vmem:[#allocation2 + $0x88] sm:$0xff]
        %v852 = vld [vmem:[#allocation2 + $0x90] sm:$0xff]
        %v853 = vld [vmem:[#allocation2 + $0x98] sm:$0xff]
        %v854 = vld [vmem:[#allocation2 + $0xa0] sm:$0xff]
        %v855 = vld [vmem:[#allocation2 + $0xa8] sm:$0xff]
        %v856 = vld [vmem:[#allocation2 + $0xb0] sm:$0xff]
        %v857 = vld [vmem:[#allocation2 + $0xb8] sm:$0xff]
        %v858 = vld [vmem:[#allocation2 + $0xc0] sm:$0xff]
        %v859 = vld [vmem:[#allocation2 + $0xc8] sm:$0xff]
        %v860 = vld [vmem:[#allocation2 + $0xd0] sm:$0xff]
        %v861 = vld [vmem:[#allocation2 + $0xd8] sm:$0xff]
        %v862 = vld [vmem:[#allocation2 + $0xe0] sm:$0xff]
        %v863 = vld [vmem:[#allocation2 + $0xe8] sm:$0xff]
        %v864 = vld [vmem:[#allocation2 + $0xf0] sm:$0xff]
        %v865 = vld [vmem:[#allocation2 + $0xf8] sm:$0xff]
        %v866 = vld [vmem:[%s2] sm:$0x1]
        %v868 = vlaneseq
        %v869 = vshrl.u32 %v868, 7
        %v870 = vsub.s32 0, %v869
        %v871 = vrot.slane %v866, %v870
        %v873 = vadd.f32 %v834, %v871
        %v874 = vadd.f32 %v835, %v871
        %v875 = vadd.f32 %v836, %v871
        %v876 = vadd.f32 %v837, %v871
        %v877 = vadd.f32 %v838, %v871
        %v878 = vadd.f32 %v839, %v871
        %v879 = vadd.f32 %v840, %v871
        %v880 = vadd.f32 %v841, %v871
        %v881 = vadd.f32 %v842, %v871
        %v882 = vadd.f32 %v843, %v871
        %v883 = vadd.f32 %v844, %v871
        %v884 = vadd.f32 %v845, %v871
        %v885 = vadd.f32 %v846, %v871
        %v886 = vadd.f32 %v847, %v871
        %v887 = vadd.f32 %v848, %v871
        %v888 = vadd.f32 %v849, %v871
        %v889 = vadd.f32 %v850, %v871
        %v890 = vadd.f32 %v851, %v871
        %v891 = vadd.f32 %v852, %v871
        %v892 = vadd.f32 %v853, %v871
        %v893 = vadd.f32 %v854, %v871
        %v894 = vadd.f32 %v855, %v871
        %v895 = vadd.f32 %v856, %v871
        %v896 = vadd.f32 %v857, %v871
        %v897 = vadd.f32 %v858, %v871
        %v898 = vadd.f32 %v859, %v871
        %v899 = vadd.f32 %v860, %v871
        %v900 = vadd.f32 %v861, %v871
        %v901 = vadd.f32 %v862, %v871
        %v902 = vadd.f32 %v863, %v871
        %v903 = vadd.f32 %v864, %v871
        %v904 = vadd.f32 %v865, %v871
        %v905 = vmax.f32 %v873, 0.0
        %v906 = vmax.f32 %v874, 0.0
        %v907 = vmax.f32 %v875, 0.0
        %v908 = vmax.f32 %v876, 0.0
        %v909 = vmax.f32 %v877, 0.0
        %v910 = vmax.f32 %v878, 0.0
        %v911 = vmax.f32 %v879, 0.0
        %v912 = vmax.f32 %v880, 0.0
        %v913 = vmax.f32 %v881, 0.0
        %v914 = vmax.f32 %v882, 0.0
        %v915 = vmax.f32 %v883, 0.0
        %v916 = vmax.f32 %v884, 0.0
        %v917 = vmax.f32 %v885, 0.0
        %v918 = vmax.f32 %v886, 0.0
        %v919 = vmax.f32 %v887, 0.0
        %v920 = vmax.f32 %v888, 0.0
        %v921 = vmax.f32 %v889, 0.0
        %v922 = vmax.f32 %v890, 0.0
        %v923 = vmax.f32 %v891, 0.0
        %v924 = vmax.f32 %v892, 0.0
        %v925 = vmax.f32 %v893, 0.0
        %v926 = vmax.f32 %v894, 0.0
        %v927 = vmax.f32 %v895, 0.0
        %v928 = vmax.f32 %v896, 0.0
        %v929 = vmax.f32 %v897, 0.0
        %v930 = vmax.f32 %v898, 0.0
        %v931 = vmax.f32 %v899, 0.0
        %v932 = vmax.f32 %v900, 0.0
        %v933 = vmax.f32 %v901, 0.0
        %v934 = vmax.f32 %v902, 0.0
        %v935 = vmax.f32 %v903, 0.0
        %v936 = vmax.f32 %v904, 0.0
        %v937 = vpack.c.bf16 %v906, %v905
        %v938 = vpack.c.bf16 %v908, %v907
        %v939 = vpack.c.bf16 %v910, %v909
        %v940 = vpack.c.bf16 %v912, %v911
        %v941 = vpack.c.bf16 %v914, %v913
        %v942 = vpack.c.bf16 %v916, %v915
        %v943 = vpack.c.bf16 %v918, %v917
        %v944 = vpack.c.bf16 %v920, %v919
        %v945 = vpack.c.bf16 %v922, %v921
        %v946 = vpack.c.bf16 %v924, %v923
        %v947 = vpack.c.bf16 %v926, %v925
        %v948 = vpack.c.bf16 %v928, %v927
        %v949 = vpack.c.bf16 %v930, %v929
        %v950 = vpack.c.bf16 %v932, %v931
        %v951 = vpack.c.bf16 %v934, %v933
        %v952 = vpack.c.bf16 %v936, %v935
        %v969 = vunpack.c.l.b16 %v937
        %v970 = vunpack.c.h.b16 %v937
        %v971 = vunpack.c.l.b16 %v938
        %v972 = vunpack.c.h.b16 %v938
        %v973 = vunpack.c.l.b16 %v939
        %v974 = vunpack.c.h.b16 %v939
        %v975 = vunpack.c.l.b16 %v940
        %v976 = vunpack.c.h.b16 %v940
        %v977 = vunpack.c.l.b16 %v941
        %v978 = vunpack.c.h.b16 %v941
        %v979 = vunpack.c.l.b16 %v942
        %v980 = vunpack.c.h.b16 %v942
        %v981 = vunpack.c.l.b16 %v943
        %v982 = vunpack.c.h.b16 %v943
        %v983 = vunpack.c.l.b16 %v944
        %v984 = vunpack.c.h.b16 %v944
        %v985 = vunpack.c.l.b16 %v945
        %v986 = vunpack.c.h.b16 %v945
        %v987 = vunpack.c.l.b16 %v946
        %v988 = vunpack.c.h.b16 %v946
        %v989 = vunpack.c.l.b16 %v947
        %v990 = vunpack.c.h.b16 %v947
        %v991 = vunpack.c.l.b16 %v948
        %v992 = vunpack.c.h.b16 %v948
        %v993 = vunpack.c.l.b16 %v949
        %v994 = vunpack.c.h.b16 %v949
        %v995 = vunpack.c.l.b16 %v950
        %v996 = vunpack.c.h.b16 %v950
        %v997 = vunpack.c.l.b16 %v951
        %v998 = vunpack.c.h.b16 %v951
        %v999 = vunpack.c.l.b16 %v952
        %v1000 = vunpack.c.h.b16 %v952
        %v1001 = vpack.c.b16 %v969, %v969
        %v1002 = vpack.c.b16 %v970, %v970
        %v1003 = vpack.c.b16 %v971, %v971
        %v1004 = vpack.c.b16 %v972, %v972
        %v1005 = vpack.c.b16 %v973, %v973
        %v1006 = vpack.c.b16 %v974, %v974
        %v1007 = vpack.c.b16 %v975, %v975
        %v1008 = vpack.c.b16 %v976, %v976
        %v1009 = vpack.c.b16 %v977, %v977
        %v1010 = vpack.c.b16 %v978, %v978
        %v1011 = vpack.c.b16 %v979, %v979
        %v1012 = vpack.c.b16 %v980, %v980
        %v1013 = vpack.c.b16 %v981, %v981
        %v1014 = vpack.c.b16 %v982, %v982
        %v1015 = vpack.c.b16 %v983, %v983
        %v1016 = vpack.c.b16 %v984, %v984
        %v1017 = vpack.c.b16 %v985, %v985
        %v1018 = vpack.c.b16 %v986, %v986
        %v1019 = vpack.c.b16 %v987, %v987
        %v1020 = vpack.c.b16 %v988, %v988
        %v1021 = vpack.c.b16 %v989, %v989
        %v1022 = vpack.c.b16 %v990, %v990
        %v1023 = vpack.c.b16 %v991, %v991
        %v1024 = vpack.c.b16 %v992, %v992
        %v1025 = vpack.c.b16 %v993, %v993
        %v1026 = vpack.c.b16 %v994, %v994
        %v1027 = vpack.c.b16 %v995, %v995
        %v1028 = vpack.c.b16 %v996, %v996
        %v1029 = vpack.c.b16 %v997, %v997
        %v1030 = vpack.c.b16 %v998, %v998
        %v1031 = vpack.c.b16 %v999, %v999
        %v1032 = vpack.c.b16 %v1000, %v1000
        %vm1065 = vcmask 519168
        %1066 = vst.msk [vmem:[%s225] sm:$0xf] %vm1065, %v1001
        %1067 = vst.msk [vmem:[%s225 + $0x4] sm:$0xf] %vm1065, %v1002
        %1068 = vst.msk [vmem:[%s225 + $0x8] sm:$0xf] %vm1065, %v1003
        %1069 = vst.msk [vmem:[%s225 + $0xc] sm:$0xf] %vm1065, %v1004
        %1070 = vst.msk [vmem:[%s225 + $0x10] sm:$0xf] %vm1065, %v1005
        %1071 = vst.msk [vmem:[%s225 + $0x14] sm:$0xf] %vm1065, %v1006
        %1072 = vst.msk [vmem:[%s225 + $0x18] sm:$0xf] %vm1065, %v1007
        %1073 = vst.msk [vmem:[%s225 + $0x1c] sm:$0xf] %vm1065, %v1008
        %1074 = vst.msk [vmem:[%s225 + $0x20] sm:$0xf] %vm1065, %v1009
        %1075 = vst.msk [vmem:[%s225 + $0x24] sm:$0xf] %vm1065, %v1010
        %1076 = vst.msk [vmem:[%s225 + $0x28] sm:$0xf] %vm1065, %v1011
        %1077 = vst.msk [vmem:[%s225 + $0x2c] sm:$0xf] %vm1065, %v1012
        %1078 = vst.msk [vmem:[%s225 + $0x30] sm:$0xf] %vm1065, %v1013
        %1079 = vst.msk [vmem:[%s225 + $0x34] sm:$0xf] %vm1065, %v1014
        %1080 = vst.msk [vmem:[%s225 + $0x38] sm:$0xf] %vm1065, %v1015
        %1081 = vst.msk [vmem:[%s225 + $0x3c] sm:$0xf] %vm1065, %v1016
        %1082 = vst.msk [vmem:[%s225 + $0x40] sm:$0xf] %vm1065, %v1017
        %1083 = vst.msk [vmem:[%s225 + $0x44] sm:$0xf] %vm1065, %v1018
        %1084 = vst.msk [vmem:[%s225 + $0x48] sm:$0xf] %vm1065, %v1019
        %1085 = vst.msk [vmem:[%s225 + $0x4c] sm:$0xf] %vm1065, %v1020
        %1086 = vst.msk [vmem:[%s225 + $0x50] sm:$0xf] %vm1065, %v1021
        %1087 = vst.msk [vmem:[%s225 + $0x54] sm:$0xf] %vm1065, %v1022
        %1088 = vst.msk [vmem:[%s225 + $0x58] sm:$0xf] %vm1065, %v1023
        %1089 = vst.msk [vmem:[%s225 + $0x5c] sm:$0xf] %vm1065, %v1024
        %1090 = vst.msk [vmem:[%s225 + $0x60] sm:$0xf] %vm1065, %v1025
        %1091 = vst.msk [vmem:[%s225 + $0x64] sm:$0xf] %vm1065, %v1026
        %1092 = vst.msk [vmem:[%s225 + $0x68] sm:$0xf] %vm1065, %v1027
        %1093 = vst.msk [vmem:[%s225 + $0x6c] sm:$0xf] %vm1065, %v1028
        %1094 = vst.msk [vmem:[%s225 + $0x70] sm:$0xf] %vm1065, %v1029
        %1095 = vst.msk [vmem:[%s225 + $0x74] sm:$0xf] %vm1065, %v1030
        %1096 = vst.msk [vmem:[%s225 + $0x78] sm:$0xf] %vm1065, %v1031
        %1097 = vst.msk [vmem:[%s225 + $0x7c] sm:$0xf] %vm1065, %v1032
      $region40: #{stage0_forward.9} parent=31 // pred_fallthru
        _
      %s1098 = smul.u32 32, %s18
      %p1099 = scmp.lt.s32.totalorder %s1098, 63
      %s1100 = scalar_select %p1099, %s1098, 63
      %s1101 = smul.addr %s1100, 4
      %s1102 = scalar_lea.vmem %s3, %s1101
      // Predicated region
      $region41: #{stage0_forward.9} parent=31 // pred_check
        %p1103 = pneg %p119
      $region42: #{stage0_forward.9} parent=31 // pred_check_branch
        %1105 = sbr.rel (%p1103) target = $region44
      $region43: #{stage0_forward.9} parent=31 // pred_region
        %s1106 = smul.u32 32, %s18
      $region44: #{stage0_forward.9} parent=31 // pred_fallthru
        _
    $region32: #{stage0_forward.9} parent=5 // pred_fallthru
      _
    %p1107 = scmp.le.s32.totalorder 2, %s9
    // Predicated region
    $region45: #{stage0_forward.9} parent=5 // pred_check
      %p1108 = pneg %p1107
    $region46: #{stage0_forward.9} parent=5 // pred_check_branch
      %1110 = sbr.rel (%p1108) target = $region48
    $region47: #{stage0_forward.9} parent=5 // pred_region
      %s1111 = ssub.s32 %s9, 2
      // Predicated region
      $region49: #{stage0_forward.9} parent=47 // pred_check
        %p1112 = pneg %p125
      $region50: #{stage0_forward.9} parent=47 // pred_check_branch
        %1114 = sbr.rel (%p1112) target = $region52
      $region51: #{stage0_forward.9} parent=47 // pred_region
        %s1115 = smul.u32 32, %s20
        %p1116 = scmp.lt.s32.totalorder %s1115, 63
        %s1117 = scalar_select %p1116, %s1115, 63
        %s1118 = smul.addr %s1117, 4
        %s1119 = scalar_lea.vmem %s3, %s1118
      $region52: #{stage0_forward.9} parent=47 // pred_fallthru
        _
    $region48: #{stage0_forward.9} parent=5 // pred_fallthru
      _
  $region6: #{stage0_forward.9} parent=0 // loop_footer
    %s13 = sadd.s32 1, %s9
  $region7: #{stage0_forward.9} parent=0 // loop_footer_branch
    %8 = sbr.rel target = $region3
  $region8: #{stage0_forward.9} parent=0 // loop_exit
    _

// kernel: stage0_forward.11
$region0: #{stage0_forward.11}
  #allocation0 [shape = 'u32[]', space=smem, size = 0x4, offset = 0x4, fixed_abs, tag = 'smem constant byte address 0x4 - core index']
  #allocation1 [shape = 'u32[144,128]{1,0:T(1,128)}', space=vmem, size = 0x12000, scoped, tag = 'internal scratch']
  #allocation2 [shape = 'f32[128,64]{1,0:T(8,128)}', space=vmem, size = 0x10000, scoped, tag = 'scratch operand']
  %s0 = inlined_call_operand.vmem [shape: bf16[128,64], index: 0, kind: input, shape index: {}]
  %s1 = inlined_call_operand.vmem [shape: bf16[64,64], index: 1, kind: input, shape index: {}]
  %s2 = inlined_call_operand.vmem [shape: f32[1,64], index: 2, kind: input, shape index: {}]
  %s3 = inlined_call_operand.vmem [shape: bf16[128,64], index: 3, kind: output, shape index: {}]
  %s4 = sld [smem:[#allocation0]]
  $region30: #{stage0_forward.11} parent=0
    _
  %s6 = ssub.s32 1, %s4
  %s7 = scalar_select 0, %s6, %s4
  // Predicated region
  $region2: #{stage0_forward.11} parent=0 // pred_check
    _
  $region3: #{stage0_forward.11} parent=0 // pred_check_branch
    %9 = sbr.rel (0) target = $region5
  $region4: #{stage0_forward.11} parent=0 // pred_region
    _
  $region5: #{stage0_forward.11} parent=0 // pred_fallthru
    _
  // Predicated region
  $region6: #{stage0_forward.11} parent=0 // pred_check
    _
  $region7: #{stage0_forward.11} parent=0 // pred_check_branch
    %11 = sbr.rel (0) target = $region9
  $region8: #{stage0_forward.11} parent=0 // pred_region
    _
  $region9: #{stage0_forward.11} parent=0 // pred_fallthru
    _
  // Predicated region
  $region10: #{stage0_forward.11} parent=0 // pred_check
    _
  $region11: #{stage0_forward.11} parent=0 // pred_check_branch
    %13 = sbr.rel (0) target = $region13
  $region12: #{stage0_forward.11} parent=0 // pred_region
    _
  $region13: #{stage0_forward.11} parent=0 // pred_fallthru
    _
  %p15 = scmp.eq.s32.totalorder 0, 0
  // Predicated region
  $region14: #{stage0_forward.11} parent=0 // pred_check
    %p16 = pneg %p15
  $region15: #{stage0_forward.11} parent=0 // pred_check_branch
    %18 = sbr.rel (%p16) target = $region17
  $region16: #{stage0_forward.11} parent=0 // pred_region
    %vm19 = vcmask 523264
    %20 = vst.msk [vmem:[#allocation2] sm:$0xff] %vm19, 0.0
    %21 = vst.msk [vmem:[#allocation2 + $0x8] sm:$0xff] %vm19, 0.0
    %22 = vst.msk [vmem:[#allocation2 + $0x10] sm:$0xff] %vm19, 0.0
    %23 = vst.msk [vmem:[#allocation2 + $0x18] sm:$0xff] %vm19, 0.0
    %24 = vst.msk [vmem:[#allocation2 + $0x20] sm:$0xff] %vm19, 0.0
    %25 = vst.msk [vmem:[#allocation2 + $0x28] sm:$0xff] %vm19, 0.0
    %26 = vst.msk [vmem:[#allocation2 + $0x30] sm:$0xff] %vm19, 0.0
    %27 = vst.msk [vmem:[#allocation2 + $0x38] sm:$0xff] %vm19, 0.0
    %28 = vst.msk [vmem:[#allocation2 + $0x40] sm:$0xff] %vm19, 0.0
    %29 = vst.msk [vmem:[#allocation2 + $0x48] sm:$0xff] %vm19, 0.0
    %30 = vst.msk [vmem:[#allocation2 + $0x50] sm:$0xff] %vm19, 0.0
    %31 = vst.msk [vmem:[#allocation2 + $0x58] sm:$0xff] %vm19, 0.0
    %32 = vst.msk [vmem:[#allocation2 + $0x60] sm:$0xff] %vm19, 0.0
    %33 = vst.msk [vmem:[#allocation2 + $0x68] sm:$0xff] %vm19, 0.0
    %34 = vst.msk [vmem:[#allocation2 + $0x70] sm:$0xff] %vm19, 0.0
    %35 = vst.msk [vmem:[#allocation2 + $0x78] sm:$0xff] %vm19, 0.0
  $region17: #{stage0_forward.11} parent=0 // pred_fallthru
    _
  %v36 = vld [vmem:[#allocation2] sm:$0xff]
  %v37 = vld [vmem:[#allocation2 + $0x8] sm:$0xff]
  %v38 = vld [vmem:[#allocation2 + $0x10] sm:$0xff]
  %v39 = vld [vmem:[#allocation2 + $0x18] sm:$0xff]
  %v40 = vld [vmem:[#allocation2 + $0x20] sm:$0xff]
  %v41 = vld [vmem:[#allocation2 + $0x28] sm:$0xff]
  %v42 = vld [vmem:[#allocation2 + $0x30] sm:$0xff]
  %v43 = vld [vmem:[#allocation2 + $0x38] sm:$0xff]
  %v44 = vld [vmem:[#allocation2 + $0x40] sm:$0xff]
  %v45 = vld [vmem:[#allocation2 + $0x48] sm:$0xff]
  %v46 = vld [vmem:[#allocation2 + $0x50] sm:$0xff]
  %v47 = vld [vmem:[#allocation2 + $0x58] sm:$0xff]
  %v48 = vld [vmem:[#allocation2 + $0x60] sm:$0xff]
  %v49 = vld [vmem:[#allocation2 + $0x68] sm:$0xff]
  %v50 = vld [vmem:[#allocation2 + $0x70] sm:$0xff]
  %v51 = vld [vmem:[#allocation2 + $0x78] sm:$0xff]
  %v52 = vld [vmem:[%s0] sm:$0xf]
  %v53 = vld [vmem:[%s0 + $0x4] sm:$0xf]
  %v54 = vld [vmem:[%s0 + $0x8] sm:$0xf]
  %v55 = vld [vmem:[%s0 + $0xc] sm:$0xf]
  %v56 = vld [vmem:[%s0 + $0x10] sm:$0xf]
  %v57 = vld [vmem:[%s0 + $0x14] sm:$0xf]
  %v58 = vld [vmem:[%s0 + $0x18] sm:$0xf]
  %v59 = vld [vmem:[%s0 + $0x1c] sm:$0xf]
  %v60 = vld [vmem:[%s0 + $0x20] sm:$0xf]
  %v61 = vld [vmem:[%s0 + $0x24] sm:$0xf]
  %v62 = vld [vmem:[%s0 + $0x28] sm:$0xf]
  %v63 = vld [vmem:[%s0 + $0x2c] sm:$0xf]
  %v64 = vld [vmem:[%s0 + $0x30] sm:$0xf]
  %v65 = vld [vmem:[%s0 + $0x34] sm:$0xf]
  %v66 = vld [vmem:[%s0 + $0x38] sm:$0xf]
  %v67 = vld [vmem:[%s0 + $0x3c] sm:$0xf]
  %v68 = vld [vmem:[%s1] sm:$0xf]
  %v69 = vld [vmem:[%s1 + $0x4] sm:$0xf]
  %v70 = vld [vmem:[%s1 + $0x8] sm:$0xf]
  %v71 = vld [vmem:[%s1 + $0xc] sm:$0xf]
  %v72 = vld [vmem:[%s1 + $0x10] sm:$0xf]
  %v73 = vld [vmem:[%s1 + $0x14] sm:$0xf]
  %v74 = vld [vmem:[%s1 + $0x18] sm:$0xf]
  %v75 = vld [vmem:[%s1 + $0x1c] sm:$0xf]
  %v92 = vunpack.c.l.b16 %v52
  %v93 = vunpack.c.l.b16 %v53
  %v94 = vunpack.c.l.b16 %v54
  %v95 = vunpack.c.l.b16 %v55
  %v96 = vunpack.c.l.b16 %v56
  %v97 = vunpack.c.l.b16 %v57
  %v98 = vunpack.c.l.b16 %v58
  %v99 = vunpack.c.l.b16 %v59
  %v100 = vunpack.c.l.b16 %v60
  %v101 = vunpack.c.l.b16 %v61
  %v102 = vunpack.c.l.b16 %v62
  %v103 = vunpack.c.l.b16 %v63
  %v104 = vunpack.c.l.b16 %v64
  %v105 = vunpack.c.l.b16 %v65
  %v106 = vunpack.c.l.b16 %v66
  %v107 = vunpack.c.l.b16 %v67
  %v108 = vpack.c.b16 %v93, %v92
  %v109 = vpack.c.b16 %v95, %v94
  %v110 = vpack.c.b16 %v97, %v96
  %v111 = vpack.c.b16 %v99, %v98
  %v112 = vpack.c.b16 %v101, %v100
  %v113 = vpack.c.b16 %v103, %v102
  %v114 = vpack.c.b16 %v105, %v104
  %v115 = vpack.c.b16 %v107, %v106
  %v124 = vunpack.c.l.b16 %v68
  %v125 = vunpack.c.l.b16 %v69
  %v126 = vunpack.c.l.b16 %v70
  %v127 = vunpack.c.l.b16 %v71
  %v128 = vunpack.c.l.b16 %v72
  %v129 = vunpack.c.l.b16 %v73
  %v130 = vunpack.c.l.b16 %v74
  %v131 = vunpack.c.l.b16 %v75
  %v132 = vpack.c.b16 %v125, %v124
  %v133 = vpack.c.b16 %v127, %v126
  %v134 = vpack.c.b16 %v129, %v128
  %v135 = vpack.c.b16 %v131, %v130
  %vm140 = vcmask 523264
  %v142 = vsel %vm140, %v108, 0
  %v145 = vsel %vm140, %v109, 0
  %v148 = vsel %vm140, %v110, 0
  %v151 = vsel %vm140, %v111, 0
  %v154 = vsel %vm140, %v112, 0
  %v157 = vsel %vm140, %v113, 0
  %v160 = vsel %vm140, %v114, 0
  %v163 = vsel %vm140, %v115, 0
  %165 = vmatprep.subr.bf16.mxu0 0
  %166 = vmatpush1.bf16.msra.mxu0 %v132
  %167 = vmatprep.subr.bf16.mxu0 0
  %168 = vmatpush1.bf16.msra.mxu0 %v133
  %169 = vmatprep.subr.bf16.mxu0 0
  %170 = vmatpush1.bf16.msra.mxu0 %v134
  %171 = vmatprep.subr.bf16.mxu0 0
  %172 = vmatpush1.bf16.msra.mxu0 %v135
  %173 = vmatprep.subr.bf16.mxu0 0
  %174 = vmatpush1.bf16.msra.mxu0 0
  %175 = vmatprep.subr.bf16.mxu0 0
  %176 = vmatpush1.bf16.msra.mxu0 0
  %177 = vmatprep.subr.bf16.mxu0 0
  %178 = vmatpush1.bf16.msra.mxu0 0
  %179 = vmatprep.subr.bf16.mxu0 0
  %180 = vmatpush1.bf16.msra.mxu0 0
  %181 = vmatprep.subr.bf16.mxu0 0
  %182 = vmatpush1.bf16.msra.mxu0 0
  %183 = vmatprep.subr.bf16.mxu0 0
  %184 = vmatpush1.bf16.msra.mxu0 0
  %185 = vmatprep.subr.bf16.mxu0 0
  %186 = vmatpush1.bf16.msra.mxu0 0
  %187 = vmatprep.subr.bf16.mxu0 0
  %188 = vmatpush1.bf16.msra.mxu0 0
  %189 = vmatprep.subr.bf16.mxu0 0
  %190 = vmatpush1.bf16.msra.mxu0 0
  %191 = vmatprep.subr.bf16.mxu0 0
  %192 = vmatpush1.bf16.msra.mxu0 0
  %193 = vmatprep.subr.bf16.mxu0 0
  %194 = vmatpush1.bf16.msra.mxu0 0
  %195 = vmatprep.subr.bf16.mxu0 0
  %196 = vmatpush1.bf16.msra.mxu0 0
  %197 = vmatprep.mubr.bf16.mxu0 0
  %198 = vmatmul.mubr.bf16.gmra.mrb[0].mxu0 %v142
  %v199 = vpop.f32.mrb[0].mxu0
  %v200 = vadd.f32 0.0, %v199
  %v201 = vpop.f32.mrb[0].mxu0
  %v202 = vpop.f32.mrb[0].mxu0
  %v203 = vadd.f32 0.0, %v202
  %v204 = vpop.f32.mrb[0].mxu0
  %205 = vmatprep.mubr.bf16.mxu0 0
  %206 = vmatmul.mubr.bf16.gmra.mrb[0].mxu0 %v145
  %v207 = vpop.f32.mrb[0].mxu0
  %v208 = vadd.f32 0.0, %v207
  %v209 = vpop.f32.mrb[0].mxu0
  %v210 = vpop.f32.mrb[0].mxu0
  %v211 = vadd.f32 0.0, %v210
  %v212 = vpop.f32.mrb[0].mxu0
  %213 = vmatprep.mubr.bf16.mxu0 0
  %214 = vmatmul.mubr.bf16.gmra.mrb[0].mxu0 %v148
  %v215 = vpop.f32.mrb[0].mxu0
  %v216 = vadd.f32 0.0, %v215
  %v217 = vpop.f32.mrb[0].mxu0
  %v218 = vpop.f32.mrb[0].mxu0
  %v219 = vadd.f32 0.0, %v218
  %v220 = vpop.f32.mrb[0].mxu0
  %221 = vmatprep.mubr.bf16.mxu0 0
  %222 = vmatmul.mubr.bf16.gmra.mrb[0].mxu0 %v151
  %v223 = vpop.f32.mrb[0].mxu0
  %v224 = vadd.f32 0.0, %v223
  %v225 = vpop.f32.mrb[0].mxu0
  %v226 = vpop.f32.mrb[0].mxu0
  %v227 = vadd.f32 0.0, %v226
  %v228 = vpop.f32.mrb[0].mxu0
  %229 = vmatprep.mubr.bf16.mxu0 0
  %230 = vmatmul.mubr.bf16.gmra.mrb[0].mxu0 %v154
  %v231 = vpop.f32.mrb[0].mxu0
  %v232 = vadd.f32 0.0, %v231
  %v233 = vpop.f32.mrb[0].mxu0
  %v234 = vpop.f32.mrb[0].mxu0
  %v235 = vadd.f32 0.0, %v234
  %v236 = vpop.f32.mrb[0].mxu0
  %237 = vmatprep.mubr.bf16.mxu0 0
  %238 = vmatmul.mubr.bf16.gmra.mrb[0].mxu0 %v157
  %v239 = vpop.f32.mrb[0].mxu0
  %v240 = vadd.f32 0.0, %v239
  %v241 = vpop.f32.mrb[0].mxu0
  %v242 = vpop.f32.mrb[0].mxu0
  %v243 = vadd.f32 0.0, %v242
  %v244 = vpop.f32.mrb[0].mxu0
  %245 = vmatprep.mubr.bf16.mxu0 0
  %246 = vmatmul.mubr.bf16.gmra.mrb[0].mxu0 %v160
  %v247 = vpop.f32.mrb[0].mxu0
  %v248 = vadd.f32 0.0, %v247
  %v249 = vpop.f32.mrb[0].mxu0
  %v250 = vpop.f32.mrb[0].mxu0
  %v251 = vadd.f32 0.0, %v250
  %v252 = vpop.f32.mrb[0].mxu0
  %253 = vmatprep.mubr.bf16.mxu0 0
  %254 = vmatmul.mubr.bf16.gmra.mrb[0].mxu0 %v163
  %v255 = vpop.f32.mrb[0].mxu0
  %v256 = vadd.f32 0.0, %v255
  %v257 = vpop.f32.mrb[0].mxu0
  %v258 = vpop.f32.mrb[0].mxu0
  %v259 = vadd.f32 0.0, %v258
  %v260 = vpop.f32.mrb[0].mxu0
  %261 = vdwg.mxu0
  %v262 = vadd.f32 %v36, %v200
  %v263 = vadd.f32 %v37, %v203
  %v264 = vadd.f32 %v38, %v208
  %v265 = vadd.f32 %v39, %v211
  %v266 = vadd.f32 %v40, %v216
  %v267 = vadd.f32 %v41, %v219
  %v268 = vadd.f32 %v42, %v224
  %v269 = vadd.f32 %v43, %v227
  %v270 = vadd.f32 %v44, %v232
  %v271 = vadd.f32 %v45, %v235
  %v272 = vadd.f32 %v46, %v240
  %v273 = vadd.f32 %v47, %v243
  %v274 = vadd.f32 %v48, %v248
  %v275 = vadd.f32 %v49, %v251
  %v276 = vadd.f32 %v50, %v256
  %v277 = vadd.f32 %v51, %v259
  %278 = vst.msk [vmem:[#allocation2] sm:$0xff] %vm140, %v262
  %279 = vst.msk [vmem:[#allocation2 + $0x8] sm:$0xff] %vm140, %v263
  %280 = vst.msk [vmem:[#allocation2 + $0x10] sm:$0xff] %vm140, %v264
  %281 = vst.msk [vmem:[#allocation2 + $0x18] sm:$0xff] %vm140, %v265
  %282 = vst.msk [vmem:[#allocation2 + $0x20] sm:$0xff] %vm140, %v266
  %283 = vst.msk [vmem:[#allocation2 + $0x28] sm:$0xff] %vm140, %v267
  %284 = vst.msk [vmem:[#allocation2 + $0x30] sm:$0xff] %vm140, %v268
  %285 = vst.msk [vmem:[#allocation2 + $0x38] sm:$0xff] %vm140, %v269
  %286 = vst.msk [vmem:[#allocation2 + $0x40] sm:$0xff] %vm140, %v270
  %287 = vst.msk [vmem:[#allocation2 + $0x48] sm:$0xff] %vm140, %v271
  %288 = vst.msk [vmem:[#allocation2 + $0x50] sm:$0xff] %vm140, %v272
  %289 = vst.msk [vmem:[#allocation2 + $0x58] sm:$0xff] %vm140, %v273
  %290 = vst.msk [vmem:[#allocation2 + $0x60] sm:$0xff] %vm140, %v274
  %291 = vst.msk [vmem:[#allocation2 + $0x68] sm:$0xff] %vm140, %v275
  %292 = vst.msk [vmem:[#allocation2 + $0x70] sm:$0xff] %vm140, %v276
  %293 = vst.msk [vmem:[#allocation2 + $0x78] sm:$0xff] %vm140, %v277
  // Predicated region
  $region18: #{stage0_forward.11} parent=0 // pred_check
    %p294 = pneg %p15
  $region19: #{stage0_forward.11} parent=0 // pred_check_branch
    %296 = sbr.rel (%p294) target = $region21
  $region20: #{stage0_forward.11} parent=0 // pred_region
    %v297 = vld [vmem:[#allocation2] sm:$0xff]
    %v298 = vld [vmem:[#allocation2 + $0x8] sm:$0xff]
    %v299 = vld [vmem:[#allocation2 + $0x10] sm:$0xff]
    %v300 = vld [vmem:[#allocation2 + $0x18] sm:$0xff]
    %v301 = vld [vmem:[#allocation2 + $0x20] sm:$0xff]
    %v302 = vld [vmem:[#allocation2 + $0x28] sm:$0xff]
    %v303 = vld [vmem:[#allocation2 + $0x30] sm:$0xff]
    %v304 = vld [vmem:[#allocation2 + $0x38] sm:$0xff]
    %v305 = vld [vmem:[#allocation2 + $0x40] sm:$0xff]
    %v306 = vld [vmem:[#allocation2 + $0x48] sm:$0xff]
    %v307 = vld [vmem:[#allocation2 + $0x50] sm:$0xff]
    %v308 = vld [vmem:[#allocation2 + $0x58] sm:$0xff]
    %v309 = vld [vmem:[#allocation2 + $0x60] sm:$0xff]
    %v310 = vld [vmem:[#allocation2 + $0x68] sm:$0xff]
    %v311 = vld [vmem:[#allocation2 + $0x70] sm:$0xff]
    %v312 = vld [vmem:[#allocation2 + $0x78] sm:$0xff]
    %v313 = vld [vmem:[%s2] sm:$0x1]
    %v315 = vlaneseq
    %v316 = vshrl.u32 %v315, 7
    %v317 = vsub.s32 0, %v316
    %v318 = vrot.slane %v313, %v317
    %v320 = vadd.f32 %v297, %v318
    %v321 = vadd.f32 %v298, %v318
    %v322 = vadd.f32 %v299, %v318
    %v323 = vadd.f32 %v300, %v318
    %v324 = vadd.f32 %v301, %v318
    %v325 = vadd.f32 %v302, %v318
    %v326 = vadd.f32 %v303, %v318
    %v327 = vadd.f32 %v304, %v318
    %v328 = vadd.f32 %v305, %v318
    %v329 = vadd.f32 %v306, %v318
    %v330 = vadd.f32 %v307, %v318
    %v331 = vadd.f32 %v308, %v318
    %v332 = vadd.f32 %v309, %v318
    %v333 = vadd.f32 %v310, %v318
    %v334 = vadd.f32 %v311, %v318
    %v335 = vadd.f32 %v312, %v318
    %v336 = vmax.f32 %v320, 0.0
    %v337 = vmax.f32 %v321, 0.0
    %v338 = vmax.f32 %v322, 0.0
    %v339 = vmax.f32 %v323, 0.0
    %v340 = vmax.f32 %v324, 0.0
    %v341 = vmax.f32 %v325, 0.0
    %v342 = vmax.f32 %v326, 0.0
    %v343 = vmax.f32 %v327, 0.0
    %v344 = vmax.f32 %v328, 0.0
    %v345 = vmax.f32 %v329, 0.0
    %v346 = vmax.f32 %v330, 0.0
    %v347 = vmax.f32 %v331, 0.0
    %v348 = vmax.f32 %v332, 0.0
    %v349 = vmax.f32 %v333, 0.0
    %v350 = vmax.f32 %v334, 0.0
    %v351 = vmax.f32 %v335, 0.0
    %v352 = vpack.c.bf16 %v337, %v336
    %v353 = vpack.c.bf16 %v339, %v338
    %v354 = vpack.c.bf16 %v341, %v340
    %v355 = vpack.c.bf16 %v343, %v342
    %v356 = vpack.c.bf16 %v345, %v344
    %v357 = vpack.c.bf16 %v347, %v346
    %v358 = vpack.c.bf16 %v349, %v348
    %v359 = vpack.c.bf16 %v351, %v350
    %v368 = vunpack.c.l.b16 %v352
    %v369 = vunpack.c.h.b16 %v352
    %v370 = vunpack.c.l.b16 %v353
    %v371 = vunpack.c.h.b16 %v353
    %v372 = vunpack.c.l.b16 %v354
    %v373 = vunpack.c.h.b16 %v354
    %v374 = vunpack.c.l.b16 %v355
    %v375 = vunpack.c.h.b16 %v355
    %v376 = vunpack.c.l.b16 %v356
    %v377 = vunpack.c.h.b16 %v356
    %v378 = vunpack.c.l.b16 %v357
    %v379 = vunpack.c.h.b16 %v357
    %v380 = vunpack.c.l.b16 %v358
    %v381 = vunpack.c.h.b16 %v358
    %v382 = vunpack.c.l.b16 %v359
    %v383 = vunpack.c.h.b16 %v359
    %v384 = vpack.c.b16 %v368, %v368
    %v385 = vpack.c.b16 %v369, %v369
    %v386 = vpack.c.b16 %v370, %v370
    %v387 = vpack.c.b16 %v371, %v371
    %v388 = vpack.c.b16 %v372, %v372
    %v389 = vpack.c.b16 %v373, %v373
    %v390 = vpack.c.b16 %v374, %v374
    %v391 = vpack.c.b16 %v375, %v375
    %v392 = vpack.c.b16 %v376, %v376
    %v393 = vpack.c.b16 %v377, %v377
    %v394 = vpack.c.b16 %v378, %v378
    %v395 = vpack.c.b16 %v379, %v379
    %v396 = vpack.c.b16 %v380, %v380
    %v397 = vpack.c.b16 %v381, %v381
    %v398 = vpack.c.b16 %v382, %v382
    %v399 = vpack.c.b16 %v383, %v383
    %vm416 = vcmask 519168
    %417 = vst.msk [vmem:[%s3] sm:$0xf] %vm416, %v384
    %418 = vst.msk [vmem:[%s3 + $0x4] sm:$0xf] %vm416, %v385
    %419 = vst.msk [vmem:[%s3 + $0x8] sm:$0xf] %vm416, %v386
    %420 = vst.msk [vmem:[%s3 + $0xc] sm:$0xf] %vm416, %v387
    %421 = vst.msk [vmem:[%s3 + $0x10] sm:$0xf] %vm416, %v388
    %422 = vst.msk [vmem:[%s3 + $0x14] sm:$0xf] %vm416, %v389
    %423 = vst.msk [vmem:[%s3 + $0x18] sm:$0xf] %vm416, %v390
    %424 = vst.msk [vmem:[%s3 + $0x1c] sm:$0xf] %vm416, %v391
    %425 = vst.msk [vmem:[%s3 + $0x20] sm:$0xf] %vm416, %v392
    %426 = vst.msk [vmem:[%s3 + $0x24] sm:$0xf] %vm416, %v393
    %427 = vst.msk [vmem:[%s3 + $0x28] sm:$0xf] %vm416, %v394
    %428 = vst.msk [vmem:[%s3 + $0x2c] sm:$0xf] %vm416, %v395
    %429 = vst.msk [vmem:[%s3 + $0x30] sm:$0xf] %vm416, %v396
    %430 = vst.msk [vmem:[%s3 + $0x34] sm:$0xf] %vm416, %v397
    %431 = vst.msk [vmem:[%s3 + $0x38] sm:$0xf] %vm416, %v398
    %432 = vst.msk [vmem:[%s3 + $0x3c] sm:$0xf] %vm416, %v399
  $region21: #{stage0_forward.11} parent=0 // pred_fallthru
    _
  // Predicated region
  $region22: #{stage0_forward.11} parent=0 // pred_check
    _
  $region23: #{stage0_forward.11} parent=0 // pred_check_branch
    %434 = sbr.rel (0) target = $region25
  $region24: #{stage0_forward.11} parent=0 // pred_region
    _
  $region25: #{stage0_forward.11} parent=0 // pred_fallthru
    _
  // Predicated region
  $region26: #{stage0_forward.11} parent=0 // pred_check
    _
  $region27: #{stage0_forward.11} parent=0 // pred_check_branch
    %436 = sbr.rel (0) target = $region29
  $region28: #{stage0_forward.11} parent=0 // pred_region
    _
  $region29: #{stage0_forward.11} parent=0 // pred_fallthru
    _

// kernel: stage0_forward.10
$region0: #{stage0_forward.10}
  #allocation0 [shape = 'u32[]', space=smem, size = 0x4, offset = 0x4, fixed_abs, tag = 'smem constant byte address 0x4 - core index']
  #allocation1 [shape = 'u32[144,128]{1,0:T(1,128)}', space=vmem, size = 0x12000, scoped, tag = 'internal scratch']
  %s0 = inlined_call_operand.vmem [shape: bf16[9,128,64], index: 0, kind: input, shape index: {}]
  %s1 = inlined_call_operand.vmem [shape: bf16[128,64], index: 1, kind: output, shape index: {}]
  %s2 = sld [smem:[#allocation0]]
  $region14: #{stage0_forward.10} parent=0
    _
  %s4 = ssub.s32 1, %s2
  %s5 = scalar_select 0, %s4, %s2
  // Predicated region
  $region2: #{stage0_forward.10} parent=0 // pred_check
    _
  $region3: #{stage0_forward.10} parent=0 // pred_check_branch
    %7 = sbr.rel (0) target = $region5
  $region4: #{stage0_forward.10} parent=0 // pred_region
    _
  $region5: #{stage0_forward.10} parent=0 // pred_fallthru
    _
  %v9 = vld [vmem:[%s0] sm:$0xf]
  %v10 = vld [vmem:[%s0 + $0x4] sm:$0xf]
  %v11 = vld [vmem:[%s0 + $0x8] sm:$0xf]
  %v12 = vld [vmem:[%s0 + $0xc] sm:$0xf]
  %v13 = vld [vmem:[%s0 + $0x10] sm:$0xf]
  %v14 = vld [vmem:[%s0 + $0x14] sm:$0xf]
  %v15 = vld [vmem:[%s0 + $0x18] sm:$0xf]
  %v16 = vld [vmem:[%s0 + $0x1c] sm:$0xf]
  %v17 = vld [vmem:[%s0 + $0x20] sm:$0xf]
  %v18 = vld [vmem:[%s0 + $0x24] sm:$0xf]
  %v19 = vld [vmem:[%s0 + $0x28] sm:$0xf]
  %v20 = vld [vmem:[%s0 + $0x2c] sm:$0xf]
  %v21 = vld [vmem:[%s0 + $0x30] sm:$0xf]
  %v22 = vld [vmem:[%s0 + $0x34] sm:$0xf]
  %v23 = vld [vmem:[%s0 + $0x38] sm:$0xf]
  %v24 = vld [vmem:[%s0 + $0x3c] sm:$0xf]
  %v25 = vld [vmem:[%s0 + $0x40] sm:$0xf]
  %v26 = vld [vmem:[%s0 + $0x44] sm:$0xf]
  %v27 = vld [vmem:[%s0 + $0x48] sm:$0xf]
  %v28 = vld [vmem:[%s0 + $0x4c] sm:$0xf]
  %v29 = vld [vmem:[%s0 + $0x50] sm:$0xf]
  %v30 = vld [vmem:[%s0 + $0x54] sm:$0xf]
  %v31 = vld [vmem:[%s0 + $0x58] sm:$0xf]
  %v32 = vld [vmem:[%s0 + $0x5c] sm:$0xf]
  %v33 = vld [vmem:[%s0 + $0x60] sm:$0xf]
  %v34 = vld [vmem:[%s0 + $0x64] sm:$0xf]
  %v35 = vld [vmem:[%s0 + $0x68] sm:$0xf]
  %v36 = vld [vmem:[%s0 + $0x6c] sm:$0xf]
  %v37 = vld [vmem:[%s0 + $0x70] sm:$0xf]
  %v38 = vld [vmem:[%s0 + $0x74] sm:$0xf]
  %v39 = vld [vmem:[%s0 + $0x78] sm:$0xf]
  %v40 = vld [vmem:[%s0 + $0x7c] sm:$0xf]
  %v41 = vld [vmem:[%s0 + $0x80] sm:$0xf]
  %v42 = vld [vmem:[%s0 + $0x84] sm:$0xf]
  %v43 = vld [vmem:[%s0 + $0x88] sm:$0xf]
  %v44 = vld [vmem:[%s0 + $0x8c] sm:$0xf]
  %v45 = vld [vmem:[%s0 + $0x90] sm:$0xf]
  %v46 = vld [vmem:[%s0 + $0x94] sm:$0xf]
  %v47 = vld [vmem:[%s0 + $0x98] sm:$0xf]
  %v48 = vld [vmem:[%s0 + $0x9c] sm:$0xf]
  %v49 = vld [vmem:[%s0 + $0xa0] sm:$0xf]
  %v50 = vld [vmem:[%s0 + $0xa4] sm:$0xf]
  %v51 = vld [vmem:[%s0 + $0xa8] sm:$0xf]
  %v52 = vld [vmem:[%s0 + $0xac] sm:$0xf]
  %v53 = vld [vmem:[%s0 + $0xb0] sm:$0xf]
  %v54 = vld [vmem:[%s0 + $0xb4] sm:$0xf]
  %v55 = vld [vmem:[%s0 + $0xb8] sm:$0xf]
  %v56 = vld [vmem:[%s0 + $0xbc] sm:$0xf]
  %v57 = vld [vmem:[%s0 + $0xc0] sm:$0xf]
  %v58 = vld [vmem:[%s0 + $0xc4] sm:$0xf]
  %v59 = vld [vmem:[%s0 + $0xc8] sm:$0xf]
  %v60 = vld [vmem:[%s0 + $0xcc] sm:$0xf]
  %v61 = vld [vmem:[%s0 + $0xd0] sm:$0xf]
  %v62 = vld [vmem:[%s0 + $0xd4] sm:$0xf]
  %v63 = vld [vmem:[%s0 + $0xd8] sm:$0xf]
  %v64 = vld [vmem:[%s0 + $0xdc] sm:$0xf]
  %v65 = vld [vmem:[%s0 + $0xe0] sm:$0xf]
  %v66 = vld [vmem:[%s0 + $0xe4] sm:$0xf]
  %v67 = vld [vmem:[%s0 + $0xe8] sm:$0xf]
  %v68 = vld [vmem:[%s0 + $0xec] sm:$0xf]
  %v69 = vld [vmem:[%s0 + $0xf0] sm:$0xf]
  %v70 = vld [vmem:[%s0 + $0xf4] sm:$0xf]
  %v71 = vld [vmem:[%s0 + $0xf8] sm:$0xf]
  %v72 = vld [vmem:[%s0 + $0xfc] sm:$0xf]
  %v73 = vld [vmem:[%s0 + $0x100] sm:$0xf]
  %v74 = vld [vmem:[%s0 + $0x104] sm:$0xf]
  %v75 = vld [vmem:[%s0 + $0x108] sm:$0xf]
  %v76 = vld [vmem:[%s0 + $0x10c] sm:$0xf]
  %v77 = vld [vmem:[%s0 + $0x110] sm:$0xf]
  %v78 = vld [vmem:[%s0 + $0x114] sm:$0xf]
  %v79 = vld [vmem:[%s0 + $0x118] sm:$0xf]
  %v80 = vld [vmem:[%s0 + $0x11c] sm:$0xf]
  %v81 = vld [vmem:[%s0 + $0x120] sm:$0xf]
  %v82 = vld [vmem:[%s0 + $0x124] sm:$0xf]
  %v83 = vld [vmem:[%s0 + $0x128] sm:$0xf]
  %v84 = vld [vmem:[%s0 + $0x12c] sm:$0xf]
  %v85 = vld [vmem:[%s0 + $0x130] sm:$0xf]
  %v86 = vld [vmem:[%s0 + $0x134] sm:$0xf]
  %v87 = vld [vmem:[%s0 + $0x138] sm:$0xf]
  %v88 = vld [vmem:[%s0 + $0x13c] sm:$0xf]
  %v89 = vld [vmem:[%s0 + $0x140] sm:$0xf]
  %v90 = vld [vmem:[%s0 + $0x144] sm:$0xf]
  %v91 = vld [vmem:[%s0 + $0x148] sm:$0xf]
  %v92 = vld [vmem:[%s0 + $0x14c] sm:$0xf]
  %v93 = vld [vmem:[%s0 + $0x150] sm:$0xf]
  %v94 = vld [vmem:[%s0 + $0x154] sm:$0xf]
  %v95 = vld [vmem:[%s0 + $0x158] sm:$0xf]
  %v96 = vld [vmem:[%s0 + $0x15c] sm:$0xf]
  %v97 = vld [vmem:[%s0 + $0x160] sm:$0xf]
  %v98 = vld [vmem:[%s0 + $0x164] sm:$0xf]
  %v99 = vld [vmem:[%s0 + $0x168] sm:$0xf]
  %v100 = vld [vmem:[%s0 + $0x16c] sm:$0xf]
  %v101 = vld [vmem:[%s0 + $0x170] sm:$0xf]
  %v102 = vld [vmem:[%s0 + $0x174] sm:$0xf]
  %v103 = vld [vmem:[%s0 + $0x178] sm:$0xf]
  %v104 = vld [vmem:[%s0 + $0x17c] sm:$0xf]
  %v105 = vld [vmem:[%s0 + $0x180] sm:$0xf]
  %v106 = vld [vmem:[%s0 + $0x184] sm:$0xf]
  %v107 = vld [vmem:[%s0 + $0x188] sm:$0xf]
  %v108 = vld [vmem:[%s0 + $0x18c] sm:$0xf]
  %v109 = vld [vmem:[%s0 + $0x190] sm:$0xf]
  %v110 = vld [vmem:[%s0 + $0x194] sm:$0xf]
  %v111 = vld [vmem:[%s0 + $0x198] sm:$0xf]
  %v112 = vld [vmem:[%s0 + $0x19c] sm:$0xf]
  %v113 = vld [vmem:[%s0 + $0x1a0] sm:$0xf]
  %v114 = vld [vmem:[%s0 + $0x1a4] sm:$0xf]
  %v115 = vld [vmem:[%s0 + $0x1a8] sm:$0xf]
  %v116 = vld [vmem:[%s0 + $0x1ac] sm:$0xf]
  %v117 = vld [vmem:[%s0 + $0x1b0] sm:$0xf]
  %v118 = vld [vmem:[%s0 + $0x1b4] sm:$0xf]
  %v119 = vld [vmem:[%s0 + $0x1b8] sm:$0xf]
  %v120 = vld [vmem:[%s0 + $0x1bc] sm:$0xf]
  %v121 = vld [vmem:[%s0 + $0x1c0] sm:$0xf]
  %v122 = vld [vmem:[%s0 + $0x1c4] sm:$0xf]
  %v123 = vld [vmem:[%s0 + $0x1c8] sm:$0xf]
  %v124 = vld [vmem:[%s0 + $0x1cc] sm:$0xf]
  %v125 = vld [vmem:[%s0 + $0x1d0] sm:$0xf]
  %v126 = vld [vmem:[%s0 + $0x1d4] sm:$0xf]
  %v127 = vld [vmem:[%s0 + $0x1d8] sm:$0xf]
  %v128 = vld [vmem:[%s0 + $0x1dc] sm:$0xf]
  %v129 = vld [vmem:[%s0 + $0x1e0] sm:$0xf]
  %v130 = vld [vmem:[%s0 + $0x1e4] sm:$0xf]
  %v131 = vld [vmem:[%s0 + $0x1e8] sm:$0xf]
  %v132 = vld [vmem:[%s0 + $0x1ec] sm:$0xf]
  %v133 = vld [vmem:[%s0 + $0x1f0] sm:$0xf]
  %v134 = vld [vmem:[%s0 + $0x1f4] sm:$0xf]
  %v135 = vld [vmem:[%s0 + $0x1f8] sm:$0xf]
  %v136 = vld [vmem:[%s0 + $0x1fc] sm:$0xf]
  %v137 = vld [vmem:[%s0 + $0x200] sm:$0xf]
  %v138 = vld [vmem:[%s0 + $0x204] sm:$0xf]
  %v139 = vld [vmem:[%s0 + $0x208] sm:$0xf]
  %v140 = vld [vmem:[%s0 + $0x20c] sm:$0xf]
  %v141 = vld [vmem:[%s0 + $0x210] sm:$0xf]
  %v142 = vld [vmem:[%s0 + $0x214] sm:$0xf]
  %v143 = vld [vmem:[%s0 + $0x218] sm:$0xf]
  %v144 = vld [vmem:[%s0 + $0x21c] sm:$0xf]
  %v145 = vld [vmem:[%s0 + $0x220] sm:$0xf]
  %v146 = vld [vmem:[%s0 + $0x224] sm:$0xf]
  %v147 = vld [vmem:[%s0 + $0x228] sm:$0xf]
  %v148 = vld [vmem:[%s0 + $0x22c] sm:$0xf]
  %v149 = vld [vmem:[%s0 + $0x230] sm:$0xf]
  %v150 = vld [vmem:[%s0 + $0x234] sm:$0xf]
  %v151 = vld [vmem:[%s0 + $0x238] sm:$0xf]
  %v152 = vld [vmem:[%s0 + $0x23c] sm:$0xf]
  %vm153 = vcmask 519168
  %v156 = vsel %vm153, %v9, 4286644096
  %v159 = vsel %vm153, %v25, 4286644096
  %v161 = vmax.bf16 %v156, %v159
  %v163 = vsel %vm153, %v41, 4286644096
  %v165 = vmax.bf16 %v161, %v163
  %v167 = vsel %vm153, %v57, 4286644096
  %v169 = vmax.bf16 %v165, %v167
  %v171 = vsel %vm153, %v73, 4286644096
  %v173 = vmax.bf16 %v169, %v171
  %v175 = vsel %vm153, %v89, 4286644096
  %v177 = vmax.bf16 %v173, %v175
  %v179 = vsel %vm153, %v105, 4286644096
  %v181 = vmax.bf16 %v177, %v179
  %v183 = vsel %vm153, %v121, 4286644096
  %v185 = vmax.bf16 %v181, %v183
  %v187 = vsel %vm153, %v137, 4286644096
  %v189 = vmax.bf16 %v185, %v187
  %v191 = vsel %vm153, %v10, 4286644096
  %v194 = vsel %vm153, %v26, 4286644096
  %v196 = vmax.bf16 %v191, %v194
  %v198 = vsel %vm153, %v42, 4286644096
  %v200 = vmax.bf16 %v196, %v198
  %v202 = vsel %vm153, %v58, 4286644096
  %v204 = vmax.bf16 %v200, %v202
  %v206 = vsel %vm153, %v74, 4286644096
  %v208 = vmax.bf16 %v204, %v206
  %v210 = vsel %vm153, %v90, 4286644096
  %v212 = vmax.bf16 %v208, %v210
  %v214 = vsel %vm153, %v106, 4286644096
  %v216 = vmax.bf16 %v212, %v214
  %v218 = vsel %vm153, %v122, 4286644096
  %v220 = vmax.bf16 %v216, %v218
  %v222 = vsel %vm153, %v138, 4286644096
  %v224 = vmax.bf16 %v220, %v222
  %v226 = vsel %vm153, %v11, 4286644096
  %v229 = vsel %vm153, %v27, 4286644096
  %v231 = vmax.bf16 %v226, %v229
  %v233 = vsel %vm153, %v43, 4286644096
  %v235 = vmax.bf16 %v231, %v233
  %v237 = vsel %vm153, %v59, 4286644096
  %v239 = vmax.bf16 %v235, %v237
  %v241 = vsel %vm153, %v75, 4286644096
  %v243 = vmax.bf16 %v239, %v241
  %v245 = vsel %vm153, %v91, 4286644096
  %v247 = vmax.bf16 %v243, %v245
  %v249 = vsel %vm153, %v107, 4286644096
  %v251 = vmax.bf16 %v247, %v249
  %v253 = vsel %vm153, %v123, 4286644096
  %v255 = vmax.bf16 %v251, %v253
  %v257 = vsel %vm153, %v139, 4286644096
  %v259 = vmax.bf16 %v255, %v257
  %v261 = vsel %vm153, %v12, 4286644096
  %v264 = vsel %vm153, %v28, 4286644096
  %v266 = vmax.bf16 %v261, %v264
  %v268 = vsel %vm153, %v44, 4286644096
  %v270 = vmax.bf16 %v266, %v268
  %v272 = vsel %vm153, %v60, 4286644096
  %v274 = vmax.bf16 %v270, %v272
  %v276 = vsel %vm153, %v76, 4286644096
  %v278 = vmax.bf16 %v274, %v276
  %v280 = vsel %vm153, %v92, 4286644096
  %v282 = vmax.bf16 %v278, %v280
  %v284 = vsel %vm153, %v108, 4286644096
  %v286 = vmax.bf16 %v282, %v284
  %v288 = vsel %vm153, %v124, 4286644096
  %v290 = vmax.bf16 %v286, %v288
  %v292 = vsel %vm153, %v140, 4286644096
  %v294 = vmax.bf16 %v290, %v292
  %v296 = vsel %vm153, %v13, 4286644096
  %v299 = vsel %vm153, %v29, 4286644096
  %v301 = vmax.bf16 %v296, %v299
  %v303 = vsel %vm153, %v45, 4286644096
  %v305 = vmax.bf16 %v301, %v303
  %v307 = vsel %vm153, %v61, 4286644096
  %v309 = vmax.bf16 %v305, %v307
  %v311 = vsel %vm153, %v77, 4286644096
  %v313 = vmax.bf16 %v309, %v311
  %v315 = vsel %vm153, %v93, 4286644096
  %v317 = vmax.bf16 %v313, %v315
  %v319 = vsel %vm153, %v109, 4286644096
  %v321 = vmax.bf16 %v317, %v319
  %v323 = vsel %vm153, %v125, 4286644096
  %v325 = vmax.bf16 %v321, %v323
  %v327 = vsel %vm153, %v141, 4286644096
  %v329 = vmax.bf16 %v325, %v327
  %v331 = vsel %vm153, %v14, 4286644096
  %v334 = vsel %vm153, %v30, 4286644096
  %v336 = vmax.bf16 %v331, %v334
  %v338 = vsel %vm153, %v46, 4286644096
  %v340 = vmax.bf16 %v336, %v338
  %v342 = vsel %vm153, %v62, 4286644096
  %v344 = vmax.bf16 %v340, %v342
  %v346 = vsel %vm153, %v78, 4286644096
  %v348 = vmax.bf16 %v344, %v346
  %v350 = vsel %vm153, %v94, 4286644096
  %v352 = vmax.bf16 %v348, %v350
  %v354 = vsel %vm153, %v110, 4286644096
  %v356 = vmax.bf16 %v352, %v354
  %v358 = vsel %vm153, %v126, 4286644096
  %v360 = vmax.bf16 %v356, %v358
  %v362 = vsel %vm153, %v142, 4286644096
  %v364 = vmax.bf16 %v360, %v362
  %v366 = vsel %vm153, %v15, 4286644096
  %v369 = vsel %vm153, %v31, 4286644096
  %v371 = vmax.bf16 %v366, %v369
  %v373 = vsel %vm153, %v47, 4286644096
  %v375 = vmax.bf16 %v371, %v373
  %v377 = vsel %vm153, %v63, 4286644096
  %v379 = vmax.bf16 %v375, %v377
  %v381 = vsel %vm153, %v79, 4286644096
  %v383 = vmax.bf16 %v379, %v381
  %v385 = vsel %vm153, %v95, 4286644096
  %v387 = vmax.bf16 %v383, %v385
  %v389 = vsel %vm153, %v111, 4286644096
  %v391 = vmax.bf16 %v387, %v389
  %v393 = vsel %vm153, %v127, 4286644096
  %v395 = vmax.bf16 %v391, %v393
  %v397 = vsel %vm153, %v143, 4286644096
  %v399 = vmax.bf16 %v395, %v397
  %v401 = vsel %vm153, %v16, 4286644096
  %v404 = vsel %vm153, %v32, 4286644096
  %v406 = vmax.bf16 %v401, %v404
  %v408 = vsel %vm153, %v48, 4286644096
  %v410 = vmax.bf16 %v406, %v408
  %v412 = vsel %vm153, %v64, 4286644096
  %v414 = vmax.bf16 %v410, %v412
  %v416 = vsel %vm153, %v80, 4286644096
  %v418 = vmax.bf16 %v414, %v416
  %v420 = vsel %vm153, %v96, 4286644096
  %v422 = vmax.bf16 %v418, %v420
  %v424 = vsel %vm153, %v112, 4286644096
  %v426 = vmax.bf16 %v422, %v424
  %v428 = vsel %vm153, %v128, 4286644096
  %v430 = vmax.bf16 %v426, %v428
  %v432 = vsel %vm153, %v144, 4286644096
  %v434 = vmax.bf16 %v430, %v432
  %v436 = vsel %vm153, %v17, 4286644096
  %v439 = vsel %vm153, %v33, 4286644096
  %v441 = vmax.bf16 %v436, %v439
  %v443 = vsel %vm153, %v49, 4286644096
  %v445 = vmax.bf16 %v441, %v443
  %v447 = vsel %vm153, %v65, 4286644096
  %v449 = vmax.bf16 %v445, %v447
  %v451 = vsel %vm153, %v81, 4286644096
  %v453 = vmax.bf16 %v449, %v451
  %v455 = vsel %vm153, %v97, 4286644096
  %v457 = vmax.bf16 %v453, %v455
  %v459 = vsel %vm153, %v113, 4286644096
  %v461 = vmax.bf16 %v457, %v459
  %v463 = vsel %vm153, %v129, 4286644096
  %v465 = vmax.bf16 %v461, %v463
  %v467 = vsel %vm153, %v145, 4286644096
  %v469 = vmax.bf16 %v465, %v467
  %v471 = vsel %vm153, %v18, 4286644096
  %v474 = vsel %vm153, %v34, 4286644096
  %v476 = vmax.bf16 %v471, %v474
  %v478 = vsel %vm153, %v50, 4286644096
  %v480 = vmax.bf16 %v476, %v478
  %v482 = vsel %vm153, %v66, 4286644096
  %v484 = vmax.bf16 %v480, %v482
  %v486 = vsel %vm153, %v82, 4286644096
  %v488 = vmax.bf16 %v484, %v486
  %v490 = vsel %vm153, %v98, 4286644096
  %v492 = vmax.bf16 %v488, %v490
  %v494 = vsel %vm153, %v114, 4286644096
  %v496 = vmax.bf16 %v492, %v494
  %v498 = vsel %vm153, %v130, 4286644096
  %v500 = vmax.bf16 %v496, %v498
  %v502 = vsel %vm153, %v146, 4286644096
  %v504 = vmax.bf16 %v500, %v502
  %v506 = vsel %vm153, %v19, 4286644096
  %v509 = vsel %vm153, %v35, 4286644096
  %v511 = vmax.bf16 %v506, %v509
  %v513 = vsel %vm153, %v51, 4286644096
  %v515 = vmax.bf16 %v511, %v513
  %v517 = vsel %vm153, %v67, 4286644096
  %v519 = vmax.bf16 %v515, %v517
  %v521 = vsel %vm153, %v83, 4286644096
  %v523 = vmax.bf16 %v519, %v521
  %v525 = vsel %vm153, %v99, 4286644096
  %v527 = vmax.bf16 %v523, %v525
  %v529 = vsel %vm153, %v115, 4286644096
  %v531 = vmax.bf16 %v527, %v529
  %v533 = vsel %vm153, %v131, 4286644096
  %v535 = vmax.bf16 %v531, %v533
  %v537 = vsel %vm153, %v147, 4286644096
  %v539 = vmax.bf16 %v535, %v537
  %v541 = vsel %vm153, %v20, 4286644096
  %v544 = vsel %vm153, %v36, 4286644096
  %v546 = vmax.bf16 %v541, %v544
  %v548 = vsel %vm153, %v52, 4286644096
  %v550 = vmax.bf16 %v546, %v548
  %v552 = vsel %vm153, %v68, 4286644096
  %v554 = vmax.bf16 %v550, %v552
  %v556 = vsel %vm153, %v84, 4286644096
  %v558 = vmax.bf16 %v554, %v556
  %v560 = vsel %vm153, %v100, 4286644096
  %v562 = vmax.bf16 %v558, %v560
  %v564 = vsel %vm153, %v116, 4286644096
  %v566 = vmax.bf16 %v562, %v564
  %v568 = vsel %vm153, %v132, 4286644096
  %v570 = vmax.bf16 %v566, %v568
  %v572 = vsel %vm153, %v148, 4286644096
  %v574 = vmax.bf16 %v570, %v572
  %v576 = vsel %vm153, %v21, 4286644096
  %v579 = vsel %vm153, %v37, 4286644096
  %v581 = vmax.bf16 %v576, %v579
  %v583 = vsel %vm153, %v53, 4286644096
  %v585 = vmax.bf16 %v581, %v583
  %v587 = vsel %vm153, %v69, 4286644096
  %v589 = vmax.bf16 %v585, %v587
  %v591 = vsel %vm153, %v85, 4286644096
  %v593 = vmax.bf16 %v589, %v591
  %v595 = vsel %vm153, %v101, 4286644096
  %v597 = vmax.bf16 %v593, %v595
  %v599 = vsel %vm153, %v117, 4286644096
  %v601 = vmax.bf16 %v597, %v599
  %v603 = vsel %vm153, %v133, 4286644096
  %v605 = vmax.bf16 %v601, %v603
  %v607 = vsel %vm153, %v149, 4286644096
  %v609 = vmax.bf16 %v605, %v607
  %v611 = vsel %vm153, %v22, 4286644096
  %v614 = vsel %vm153, %v38, 4286644096
  %v616 = vmax.bf16 %v611, %v614
  %v618 = vsel %vm153, %v54, 4286644096
  %v620 = vmax.bf16 %v616, %v618
  %v622 = vsel %vm153, %v70, 4286644096
  %v624 = vmax.bf16 %v620, %v622
  %v626 = vsel %vm153, %v86, 4286644096
  %v628 = vmax.bf16 %v624, %v626
  %v630 = vsel %vm153, %v102, 4286644096
  %v632 = vmax.bf16 %v628, %v630
  %v634 = vsel %vm153, %v118, 4286644096
  %v636 = vmax.bf16 %v632, %v634
  %v638 = vsel %vm153, %v134, 4286644096
  %v640 = vmax.bf16 %v636, %v638
  %v642 = vsel %vm153, %v150, 4286644096
  %v644 = vmax.bf16 %v640, %v642
  %v646 = vsel %vm153, %v23, 4286644096
  %v649 = vsel %vm153, %v39, 4286644096
  %v651 = vmax.bf16 %v646, %v649
  %v653 = vsel %vm153, %v55, 4286644096
  %v655 = vmax.bf16 %v651, %v653
  %v657 = vsel %vm153, %v71, 4286644096
  %v659 = vmax.bf16 %v655, %v657
  %v661 = vsel %vm153, %v87, 4286644096
  %v663 = vmax.bf16 %v659, %v661
  %v665 = vsel %vm153, %v103, 4286644096
  %v667 = vmax.bf16 %v663, %v665
  %v669 = vsel %vm153, %v119, 4286644096
  %v671 = vmax.bf16 %v667, %v669
  %v673 = vsel %vm153, %v135, 4286644096
  %v675 = vmax.bf16 %v671, %v673
  %v677 = vsel %vm153, %v151, 4286644096
  %v679 = vmax.bf16 %v675, %v677
  %v681 = vsel %vm153, %v24, 4286644096
  %v684 = vsel %vm153, %v40, 4286644096
  %v686 = vmax.bf16 %v681, %v684
  %v688 = vsel %vm153, %v56, 4286644096
  %v690 = vmax.bf16 %v686, %v688
  %v692 = vsel %vm153, %v72, 4286644096
  %v694 = vmax.bf16 %v690, %v692
  %v696 = vsel %vm153, %v88, 4286644096
  %v698 = vmax.bf16 %v694, %v696
  %v700 = vsel %vm153, %v104, 4286644096
  %v702 = vmax.bf16 %v698, %v700
  %v704 = vsel %vm153, %v120, 4286644096
  %v706 = vmax.bf16 %v702, %v704
  %v708 = vsel %vm153, %v136, 4286644096
  %v710 = vmax.bf16 %v706, %v708
  %v712 = vsel %vm153, %v152, 4286644096
  %v714 = vmax.bf16 %v710, %v712
  %715 = vst.msk [vmem:[%s1] sm:$0xf] %vm153, %v189
  %716 = vst.msk [vmem:[%s1 + $0x4] sm:$0xf] %vm153, %v224
  %717 = vst.msk [vmem:[%s1 + $0x8] sm:$0xf] %vm153, %v259
  %718 = vst.msk [vmem:[%s1 + $0xc] sm:$0xf] %vm153, %v294
  %719 = vst.msk [vmem:[%s1 + $0x10] sm:$0xf] %vm153, %v329
  %720 = vst.msk [vmem:[%s1 + $0x14] sm:$0xf] %vm153, %v364
  %721 = vst.msk [vmem:[%s1 + $0x18] sm:$0xf] %vm153, %v399
  %722 = vst.msk [vmem:[%s1 + $0x1c] sm:$0xf] %vm153, %v434
  %723 = vst.msk [vmem:[%s1 + $0x20] sm:$0xf] %vm153, %v469
  %724 = vst.msk [vmem:[%s1 + $0x24] sm:$0xf] %vm153, %v504
  %725 = vst.msk [vmem:[%s1 + $0x28] sm:$0xf] %vm153, %v539
  %726 = vst.msk [vmem:[%s1 + $0x2c] sm:$0xf] %vm153, %v574
  %727 = vst.msk [vmem:[%s1 + $0x30] sm:$0xf] %vm153, %v609
  %728 = vst.msk [vmem:[%s1 + $0x34] sm:$0xf] %vm153, %v644
  %729 = vst.msk [vmem:[%s1 + $0x38] sm:$0xf] %vm153, %v679
  %730 = vst.msk [vmem:[%s1 + $0x3c] sm:$0xf] %vm153, %v714
  // Predicated region
  $region6: #{stage0_forward.10} parent=0 // pred_check
    _
  $region7: #{stage0_forward.10} parent=0 // pred_check_branch
    %732 = sbr.rel (0) target = $region9
  $region8: #{stage0_forward.10} parent=0 // pred_region
    _
  $region9: #{stage0_forward.10} parent=0 // pred_fallthru
    _
  // Predicated region
  $region10: #{stage0_forward.10} parent=0 // pred_check
    _
  $region11: #{stage0_forward.10} parent=0 // pred_check_branch
    %734 = sbr.rel (0) target = $region13
  $region12: #{stage0_forward.10} parent=0 // pred_region
    _
  $region13: #{stage0_forward.10} parent=0 // pred_fallthru
    _

// kernel: stage0_forward.12
$region0: #{stage0_forward.12}
  #allocation0 [shape = 'u32[]', space=smem, size = 0x4, offset = 0x4, fixed_abs, tag = 'smem constant byte address 0x4 - core index']
  #allocation1 [shape = 'u32[144,128]{1,0:T(1,128)}', space=vmem, size = 0x12000, scoped, tag = 'internal scratch']
  %s0 = inlined_call_operand.vmem [shape: f32[2,3,80,64], index: 0, kind: input, shape index: {}]
  %s1 = inlined_call_operand.vmem [shape: bf16[9,64,64], index: 1, kind: input, shape index: {}]
  %s2 = inlined_call_operand.vmem [shape: f32[1,64], index: 2, kind: input, shape index: {}]
  %s3 = inlined_call_operand.vmem [shape: bf16[2,64,64], index: 3, kind: output, shape index: {}]
  %s4 = sld [smem:[#allocation0]]
  $region45: #{stage0_forward.12} parent=0
    _
  %s6 = ssub.s32 1, %s4
  %s7 = scalar_select 0, %s6, %s4
  loop: start=0, step=1, limit=4
  $region2: #{stage0_forward.12} parent=0 // loop_pre_header
    _
  $region3: #{stage0_forward.12} parent=0 // loop_header
    %s9 = sphi 0, %s13
    %p10 = scmp.ge.s32.totalorder %s9, 4
    %s19 = sphi 0, %s21
    %s22 = sphi 0, %s19
    %s23 = sphi 0, %s22
    %s39 = sphi 0, %s23
    %s43 = sphi 0, %s43
    %s45 = sphi 0, %s43
    %s46 = sphi 0, %s45
    %s60 = sphi 0, %s46
    %s64 = sphi 0, %s64
    %s66 = sphi 0, %s64
    %s67 = sphi 0, %s66
    %s81 = sphi 0, %s67
    %s87 = sphi 0, %s89
    %s90 = sphi 0, %s87
    %s91 = sphi 0, %s90
    %s107 = sphi 0, %s91
  $region4: #{stage0_forward.12} parent=0 // loop_header_branch
    %12 = sbr.rel (%p10) target = $region8
  $region5: #{stage0_forward.12} parent=0 // loop_body
    %s14 = ssub.s32 %s9, 1
    %s15 = ssub.s32 %s9, 2
    %s16 = sadd.s32 %s9, 1
    %s17 = ssub.s32 %s9, %s16
    %p18 = scmp.eq.s32.totalorder %s17, 0
    %s20 = sadd.s32 %s19, 1
    %s21 = scalar_select %p18, %s19, %s20
    %p24 = pneg %p18
    %p25 = scmp.eq.s32.totalorder %s9, 1
    %p26 = por %p24, %p25
    %p27 = scmp.ne.s32.totalorder %s19, %s22
    %p28 = scmp.eq.s32.totalorder %s9, 0
    %p29 = por %p27, %p28
    %p30 = scmp.ne.s32.totalorder %s19, %s22
    %p31 = scmp.eq.s32.totalorder %s14, 1
    %p32 = por %p30, %p31
    %p33 = scmp.ne.s32.totalorder %s22, %s23
    %p34 = scmp.eq.s32.totalorder %s14, 0
    %p35 = por %p33, %p34
    %p36 = scmp.ne.s32.totalorder %s22, %s23
    %p37 = scmp.eq.s32.totalorder %s15, 1
    %p38 = por %p36, %p37
    %p40 = scmp.ne.s32.totalorder %s23, %s39
    %p41 = scmp.eq.s32.totalorder %s15, 0
    %p42 = por %p40, %p41
    %s44 = sadd.s32 %s43, 1
    %p47 = scmp.eq.s32.totalorder %s9, 1
    %p48 = scmp.ne.s32.totalorder %s43, %s45
    %p49 = scmp.eq.s32.totalorder %s9, 0
    %p50 = por %p48, %p49
    %p51 = scmp.ne.s32.totalorder %s43, %s45
    %p52 = scmp.eq.s32.totalorder %s14, 1
    %p53 = por %p51, %p52
    %p54 = scmp.ne.s32.totalorder %s45, %s46
    %p55 = scmp.eq.s32.totalorder %s14, 0
    %p56 = por %p54, %p55
    %p57 = scmp.ne.s32.totalorder %s45, %s46
    %p58 = scmp.eq.s32.totalorder %s15, 1
    %p59 = por %p57, %p58
    %p61 = scmp.ne.s32.totalorder %s46, %s60
    %p62 = scmp.eq.s32.totalorder %s15, 0
    %p63 = por %p61, %p62
    %s65 = sadd.s32 %s64, 1
    %p68 = scmp.eq.s32.totalorder %s9, 1
    %p69 = scmp.ne.s32.totalorder %s64, %s66
    %p70 = scmp.eq.s32.totalorder %s9, 0
    %p71 = por %p69, %p70
    %p72 = scmp.ne.s32.totalorder %s64, %s66
    %p73 = scmp.eq.s32.totalorder %s14, 1
    %p74 = por %p72, %p73
    %p75 = scmp.ne.s32.totalorder %s66, %s67
    %p76 = scmp.eq.s32.totalorder %s14, 0
    %p77 = por %p75, %p76
    %p78 = scmp.ne.s32.totalorder %s66, %s67
    %p79 = scmp.eq.s32.totalorder %s15, 1
    %p80 = por %p78, %p79
    %p82 = scmp.ne.s32.totalorder %s67, %s81
    %p83 = scmp.eq.s32.totalorder %s15, 0
    %p84 = por %p82, %p83
    %s85 = ssub.s32 %s9, %s16
    %p86 = scmp.eq.s32.totalorder %s85, 0
    %s88 = sadd.s32 %s87, 1
    %s89 = scalar_select %p86, %s87, %s88
    %p92 = pneg %p86
    %p93 = scmp.eq.s32.totalorder %s9, 1
    %p94 = por %p92, %p93
    %p95 = scmp.ne.s32.totalorder %s87, %s90
    %p96 = scmp.eq.s32.totalorder %s9, 0
    %p97 = por %p95, %p96
    %p98 = scmp.ne.s32.totalorder %s87, %s90
    %p99 = scmp.eq.s32.totalorder %s14, 1
    %p100 = por %p98, %p99
    %p101 = scmp.ne.s32.totalorder %s90, %s91
    %p102 = scmp.eq.s32.totalorder %s14, 0
    %p103 = por %p101, %p102
    %p104 = scmp.ne.s32.totalorder %s90, %s91
    %p105 = scmp.eq.s32.totalorder %s15, 1
    %p106 = por %p104, %p105
    %p108 = scmp.ne.s32.totalorder %s91, %s107
    %p109 = scmp.eq.s32.totalorder %s15, 0
    %p110 = por %p108, %p109
    %p111 = scmp.le.s32.totalorder 1, %s9
    %p112 = scmp.lt.s32.totalorder %s9, 3
    %p113 = pnand %p111, %p112
    %p114 = pneg %p113
    // Predicated region
    $region9: #{stage0_forward.12} parent=5 // pred_check
      _
    $region10: #{stage0_forward.12} parent=5 // pred_check_branch
      %116 = sbr.rel (%p113) target = $region12
    $region11: #{stage0_forward.12} parent=5 // pred_region
      %s117 = ssub.s32 %s9, 1
      // Predicated region
      $region13: #{stage0_forward.12} parent=11 // pred_check
        %p118 = pneg %p56
      $region14: #{stage0_forward.12} parent=11 // pred_check_branch
        %120 = sbr.rel (%p118) target = $region16
      $region15: #{stage0_forward.12} parent=11 // pred_region
        _
      $region16: #{stage0_forward.12} parent=11 // pred_fallthru
        _
      // Predicated region
      $region17: #{stage0_forward.12} parent=11 // pred_check
        %p121 = pneg %p77
      $region18: #{stage0_forward.12} parent=11 // pred_check_branch
        %123 = sbr.rel (%p121) target = $region20
      $region19: #{stage0_forward.12} parent=11 // pred_region
        _
      $region20: #{stage0_forward.12} parent=11 // pred_fallthru
        _
    $region12: #{stage0_forward.12} parent=5 // pred_fallthru
      _
    %p124 = scmp.lt.s32.totalorder %s9, 2
    // Predicated region
    $region21: #{stage0_forward.12} parent=5 // pred_check
      %p125 = pneg %p124
    $region22: #{stage0_forward.12} parent=5 // pred_check_branch
      %127 = sbr.rel (%p125) target = $region24
    $region23: #{stage0_forward.12} parent=5 // pred_region
      // Predicated region
      $region25: #{stage0_forward.12} parent=23 // pred_check
        %p128 = pneg %p29
      $region26: #{stage0_forward.12} parent=23 // pred_check_branch
        %130 = sbr.rel (%p128) target = $region28
      $region27: #{stage0_forward.12} parent=23 // pred_region
        %p131 = scmp.lt.s32.totalorder %s9, 1
        %s132 = scalar_select %p131, %s9, 1
        %s133 = smul.addr %s132, 30
        %s134 = smul.addr %s133, 8
        %s135 = scalar_lea.vmem %s0, %s134
      $region28: #{stage0_forward.12} parent=23 // pred_fallthru
        _
    $region24: #{stage0_forward.12} parent=5 // pred_fallthru
      _
    %p136 = scmp.le.s32.totalorder 1, %s9
    %p137 = scmp.lt.s32.totalorder %s9, 3
    %p138 = pnand %p136, %p137
    %p139 = pneg %p138
    // Predicated region
    $region29: #{stage0_forward.12} parent=5 // pred_check
      _
    $region30: #{stage0_forward.12} parent=5 // pred_check_branch
      %141 = sbr.rel (%p138) target = $region32
    $region31: #{stage0_forward.12} parent=5 // pred_region
      %s142 = ssub.s32 %s9, 1
      %p143 = scmp.lt.s32.totalorder %s14, 1
      %s144 = scalar_select %p143, %s14, 1
      %s145 = smul.addr %s144, 30
      %s146 = smul.addr %s145, 8
      %s147 = scalar_lea.vmem %s0, %s146
      %p148 = pneg %p35
      %p149 = pneg %p32
      %p150 = pneg %p56
      %p151 = pneg %p53
      %p152 = pneg %p77
      %p153 = pneg %p74
      %p154 = pneg %p103
      %p155 = pneg %p100
      %p156 = scmp.lt.s32.totalorder %s14, 1
      %s157 = scalar_select %p156, %s14, 1
      %s158 = smul.addr %s157, 8
      %s159 = smul.addr %s158, 4
      %s160 = scalar_lea.vmem %s3, %s159
      %p161 = scmp.lt.s32.totalorder %s14, 1
      %s162 = scalar_select %p161, %s14, 1
      %s163 = smul.addr %s162, 30
      %s164 = smul.addr %s163, 8
      %s165 = scalar_lea.vmem %s0, %s164
      %p166 = scmp.lt.s32.totalorder %s14, 1
      %s167 = scalar_select %p166, %s14, 1
      %s168 = smul.addr %s167, 8
      %s169 = smul.addr %s168, 4
      %s170 = scalar_lea.vmem %s3, %s169
      %v172 = vld [vmem:[%s165] sm:$0xff]
      %v173 = vld [vmem:[%s165 + $0x8] sm:$0xff]
      %v174 = vld [vmem:[%s165 + $0x10] sm:$0xff]
      %v175 = vld [vmem:[%s165 + $0x18] sm:$0xff]
      %v176 = vld [vmem:[%s165 + $0x20] sm:$0xff]
      %v177 = vld [vmem:[%s165 + $0x28] sm:$0xff]
      %v178 = vld [vmem:[%s165 + $0x30] sm:$0xff]
      %v179 = vld [vmem:[%s165 + $0x38] sm:$0xff]
      %v180 = vpack.c.bf16 %v173, %v172
      %v181 = vpack.c.bf16 %v175, %v174
      %v182 = vpack.c.bf16 %v177, %v176
      %v183 = vpack.c.bf16 %v179, %v178
      %v184 = vld [vmem:[%s1] sm:$0xf]
      %v185 = vld [vmem:[%s1 + $0x4] sm:$0xf]
      %v186 = vld [vmem:[%s1 + $0x8] sm:$0xf]
      %v187 = vld [vmem:[%s1 + $0xc] sm:$0xf]
      %v188 = vld [vmem:[%s1 + $0x10] sm:$0xf]
      %v189 = vld [vmem:[%s1 + $0x14] sm:$0xf]
      %v190 = vld [vmem:[%s1 + $0x18] sm:$0xf]
      %v191 = vld [vmem:[%s1 + $0x1c] sm:$0xf]
      %v192 = vld [vmem:[%s165 + $0x40] sm:$0xff]
      %v193 = vpack.c.bf16 %v174, %v173
      %v194 = vpack.c.bf16 %v176, %v175
      %v195 = vpack.c.bf16 %v178, %v177
      %v196 = vpack.c.bf16 %v192, %v179
      %s197 = scalar_lea.vmem %s1, 96
      %v198 = vld [vmem:[%s197] sm:$0xf]
      %v199 = vld [vmem:[%s197 + $0x4] sm:$0xf]
      %v200 = vld [vmem:[%s197 + $0x8] sm:$0xf]
      %v201 = vld [vmem:[%s197 + $0xc] sm:$0xf]
      %v202 = vld [vmem:[%s197 + $0x10] sm:$0xf]
      %v203 = vld [vmem:[%s197 + $0x14] sm:$0xf]
      %v204 = vld [vmem:[%s197 + $0x18] sm:$0xf]
      %v205 = vld [vmem:[%s197 + $0x1c] sm:$0xf]
      %v214 = vunpack.c.l.b16 %v198
      %v215 = vunpack.c.l.b16 %v199
      %v216 = vunpack.c.l.b16 %v200
      %v217 = vunpack.c.l.b16 %v201
      %v218 = vunpack.c.l.b16 %v202
      %v219 = vunpack.c.l.b16 %v203
      %v220 = vunpack.c.l.b16 %v204
      %v221 = vunpack.c.l.b16 %v205
      %v222 = vpack.c.b16 %v215, %v214
      %v223 = vpack.c.b16 %v217, %v216
      %v224 = vpack.c.b16 %v219, %v218
      %v225 = vpack.c.b16 %v221, %v220
      %vm230 = vcmask 523264
      %v232 = vsel %vm230, %v193, 0
      %v235 = vsel %vm230, %v194, 0
      %v238 = vsel %vm230, %v195, 0
      %v241 = vsel %vm230, %v196, 0
      %243 = vmatprep.subr.bf16.mxu0 0
      %244 = vmatpush1.bf16.msra.mxu0 %v222
      %245 = vmatprep.subr.bf16.mxu0 0
      %246 = vmatpush1.bf16.msra.mxu0 %v223
      %247 = vmatprep.subr.bf16.mxu0 0
      %248 = vmatpush1.bf16.msra.mxu0 %v224
      %249 = vmatprep.subr.bf16.mxu0 0
      %250 = vmatpush1.bf16.msra.mxu0 %v225
      %251 = vmatprep.subr.bf16.mxu0 0
      %252 = vmatpush1.bf16.msra.mxu0 0
      %253 = vmatprep.subr.bf16.mxu0 0
      %254 = vmatpush1.bf16.msra.mxu0 0
      %255 = vmatprep.subr.bf16.mxu0 0
      %256 = vmatpush1.bf16.msra.mxu0 0
      %257 = vmatprep.subr.bf16.mxu0 0
      %258 = vmatpush1.bf16.msra.mxu0 0
      %259 = vmatprep.subr.bf16.mxu0 0
      %260 = vmatpush1.bf16.msra.mxu0 0
      %261 = vmatprep.subr.bf16.mxu0 0
      %262 = vmatpush1.bf16.msra.mxu0 0
      %263 = vmatprep.subr.bf16.mxu0 0
      %264 = vmatpush1.bf16.msra.mxu0 0
      %265 = vmatprep.subr.bf16.mxu0 0
      %266 = vmatpush1.bf16.msra.mxu0 0
      %267 = vmatprep.subr.bf16.mxu0 0
      %268 = vmatpush1.bf16.msra.mxu0 0
      %269 = vmatprep.subr.bf16.mxu0 0
      %270 = vmatpush1.bf16.msra.mxu0 0
      %271 = vmatprep.subr.bf16.mxu0 0
      %272 = vmatpush1.bf16.msra.mxu0 0
      %273 = vmatprep.subr.bf16.mxu0 0
      %274 = vmatpush1.bf16.msra.mxu0 0
      %275 = vmatprep.mubr.bf16.mxu0 0
      %276 = vmatmul.mubr.bf16.gmra.mrb[0].mxu0 %v232
      %v277 = vpop.f32.mrb[0].mxu0
      %v278 = vadd.f32 0.0, %v277
      %v279 = vpop.f32.mrb[0].mxu0
      %v280 = vpop.f32.mrb[0].mxu0
      %v281 = vadd.f32 0.0, %v280
      %v282 = vpop.f32.mrb[0].mxu0
      %283 = vmatprep.mubr.bf16.mxu0 0
      %284 = vmatmul.mubr.bf16.gmra.mrb[0].mxu0 %v235
      %v285 = vpop.f32.mrb[0].mxu0
      %v286 = vadd.f32 0.0, %v285
      %v287 = vpop.f32.mrb[0].mxu0
      %v288 = vpop.f32.mrb[0].mxu0
      %v289 = vadd.f32 0.0, %v288
      %v290 = vpop.f32.mrb[0].mxu0
      %291 = vmatprep.mubr.bf16.mxu0 0
      %292 = vmatmul.mubr.bf16.gmra.mrb[0].mxu0 %v238
      %v293 = vpop.f32.mrb[0].mxu0
      %v294 = vadd.f32 0.0, %v293
      %v295 = vpop.f32.mrb[0].mxu0
      %v296 = vpop.f32.mrb[0].mxu0
      %v297 = vadd.f32 0.0, %v296
      %v298 = vpop.f32.mrb[0].mxu0
      %299 = vmatprep.mubr.bf16.mxu0 0
      %300 = vmatmul.mubr.bf16.gmra.mrb[0].mxu0 %v241
      %v301 = vpop.f32.mrb[0].mxu0
      %v302 = vadd.f32 0.0, %v301
      %v303 = vpop.f32.mrb[0].mxu0
      %v304 = vpop.f32.mrb[0].mxu0
      %v305 = vadd.f32 0.0, %v304
      %v306 = vpop.f32.mrb[0].mxu0
      %307 = vdwg.mxu0
      %v316 = vunpack.c.l.b16 %v184
      %v317 = vunpack.c.l.b16 %v185
      %v318 = vunpack.c.l.b16 %v186
      %v319 = vunpack.c.l.b16 %v187
      %v320 = vunpack.c.l.b16 %v188
      %v321 = vunpack.c.l.b16 %v189
      %v322 = vunpack.c.l.b16 %v190
      %v323 = vunpack.c.l.b16 %v191
      %v324 = vpack.c.b16 %v317, %v316
      %v325 = vpack.c.b16 %v319, %v318
      %v326 = vpack.c.b16 %v321, %v320
      %v327 = vpack.c.b16 %v323, %v322
      %v333 = vsel %vm230, %v180, 0
      %v336 = vsel %vm230, %v181, 0
      %v339 = vsel %vm230, %v182, 0
      %v342 = vsel %vm230, %v183, 0
      %344 = vmatprep.subr.bf16.mxu0 0
      %345 = vmatpush1.bf16.msra.mxu0 %v324
      %346 = vmatprep.subr.bf16.mxu0 0
      %347 = vmatpush1.bf16.msra.mxu0 %v325
      %348 = vmatprep.subr.bf16.mxu0 0
      %349 = vmatpush1.bf16.msra.mxu0 %v326
      %350 = vmatprep.subr.bf16.mxu0 0
      %351 = vmatpush1.bf16.msra.mxu0 %v327
      %352 = vmatprep.subr.bf16.mxu0 0
      %353 = vmatpush1.bf16.msra.mxu0 0
      %354 = vmatprep.subr.bf16.mxu0 0
      %355 = vmatpush1.bf16.msra.mxu0 0
      %356 = vmatprep.subr.bf16.mxu0 0
      %357 = vmatpush1.bf16.msra.mxu0 0
      %358 = vmatprep.subr.bf16.mxu0 0
      %359 = vmatpush1.bf16.msra.mxu0 0
      %360 = vmatprep.subr.bf16.mxu0 0
      %361 = vmatpush1.bf16.msra.mxu0 0
      %362 = vmatprep.subr.bf16.mxu0 0
      %363 = vmatpush1.bf16.msra.mxu0 0
      %364 = vmatprep.subr.bf16.mxu0 0
      %365 = vmatpush1.bf16.msra.mxu0 0
      %366 = vmatprep.subr.bf16.mxu0 0
      %367 = vmatpush1.bf16.msra.mxu0 0
      %368 = vmatprep.subr.bf16.mxu0 0
      %369 = vmatpush1.bf16.msra.mxu0 0
      %370 = vmatprep.subr.bf16.mxu0 0
      %371 = vmatpush1.bf16.msra.mxu0 0
      %372 = vmatprep.subr.bf16.mxu0 0
      %373 = vmatpush1.bf16.msra.mxu0 0
      %374 = vmatprep.subr.bf16.mxu0 0
      %375 = vmatpush1.bf16.msra.mxu0 0
      %376 = vmatprep.mubr.bf16.mxu0 0
      %377 = vmatmul.mubr.bf16.gmra.mrb[0].mxu0 %v333
      %v378 = vpop.f32.mrb[0].mxu0
      %v379 = vadd.f32 %v278, %v378
      %v380 = vpop.f32.mrb[0].mxu0
      %v381 = vpop.f32.mrb[0].mxu0
      %v382 = vadd.f32 %v281, %v381
      %v383 = vpop.f32.mrb[0].mxu0
      %384 = vmatprep.mubr.bf16.mxu0 0
      %385 = vmatmul.mubr.bf16.gmra.mrb[0].mxu0 %v336
      %v386 = vpop.f32.mrb[0].mxu0
      %v387 = vadd.f32 %v286, %v386
      %v388 = vpop.f32.mrb[0].mxu0
      %v389 = vpop.f32.mrb[0].mxu0
      %v390 = vadd.f32 %v289, %v389
      %v391 = vpop.f32.mrb[0].mxu0
      %392 = vmatprep.mubr.bf16.mxu0 0
      %393 = vmatmul.mubr.bf16.gmra.mrb[0].mxu0 %v339
      %v394 = vpop.f32.mrb[0].mxu0
      %v395 = vadd.f32 %v294, %v394
      %v396 = vpop.f32.mrb[0].mxu0
      %v397 = vpop.f32.mrb[0].mxu0
      %v398 = vadd.f32 %v297, %v397
      %v399 = vpop.f32.mrb[0].mxu0
      %400 = vmatprep.mubr.bf16.mxu0 0
      %401 = vmatmul.mubr.bf16.gmra.mrb[0].mxu0 %v342
      %v402 = vpop.f32.mrb[0].mxu0
      %v403 = vadd.f32 %v302, %v402
      %v404 = vpop.f32.mrb[0].mxu0
      %v405 = vpop.f32.mrb[0].mxu0
      %v406 = vadd.f32 %v305, %v405
      %v407 = vpop.f32.mrb[0].mxu0
      %408 = vdwg.mxu0
      %v409 = vld [vmem:[%s165 + $0x10] sm:$0xff]
      %v410 = vld [vmem:[%s165 + $0x18] sm:$0xff]
      %v411 = vld [vmem:[%s165 + $0x20] sm:$0xff]
      %v412 = vld [vmem:[%s165 + $0x28] sm:$0xff]
      %v413 = vld [vmem:[%s165 + $0x30] sm:$0xff]
      %v414 = vld [vmem:[%s165 + $0x38] sm:$0xff]
      %v415 = vld [vmem:[%s165 + $0x40] sm:$0xff]
      %v416 = vld [vmem:[%s165 + $0x48] sm:$0xff]
      %v417 = vpack.c.bf16 %v410, %v409
      %v418 = vpack.c.bf16 %v412, %v411
      %v419 = vpack.c.bf16 %v414, %v413
      %v420 = vpack.c.bf16 %v416, %v415
      %s421 = scalar_lea.vmem %s1, 192
      %v422 = vld [vmem:[%s421] sm:$0xf]
      %v423 = vld [vmem:[%s421 + $0x4] sm:$0xf]
      %v424 = vld [vmem:[%s421 + $0x8] sm:$0xf]
      %v425 = vld [vmem:[%s421 + $0xc] sm:$0xf]
      %v426 = vld [vmem:[%s421 + $0x10] sm:$0xf]
      %v427 = vld [vmem:[%s421 + $0x14] sm:$0xf]
      %v428 = vld [vmem:[%s421 + $0x18] sm:$0xf]
      %v429 = vld [vmem:[%s421 + $0x1c] sm:$0xf]
      %v438 = vunpack.c.l.b16 %v422
      %v439 = vunpack.c.l.b16 %v423
      %v440 = vunpack.c.l.b16 %v424
      %v441 = vunpack.c.l.b16 %v425
      %v442 = vunpack.c.l.b16 %v426
      %v443 = vunpack.c.l.b16 %v427
      %v444 = vunpack.c.l.b16 %v428
      %v445 = vunpack.c.l.b16 %v429
      %v446 = vpack.c.b16 %v439, %v438
      %v447 = vpack.c.b16 %v441, %v440
      %v448 = vpack.c.b16 %v443, %v442
      %v449 = vpack.c.b16 %v445, %v444
      %v455 = vsel %vm230, %v417, 0
      %v458 = vsel %vm230, %v418, 0
      %v461 = vsel %vm230, %v419, 0
      %v464 = vsel %vm230, %v420, 0
      %466 = vmatprep.subr.bf16.mxu0 0
      %467 = vmatpush1.bf16.msra.mxu0 %v446
      %468 = vmatprep.subr.bf16.mxu0 0
      %469 = vmatpush1.bf16.msra.mxu0 %v447
      %470 = vmatprep.subr.bf16.mxu0 0
      %471 = vmatpush1.bf16.msra.mxu0 %v448
      %472 = vmatprep.subr.bf16.mxu0 0
      %473 = vmatpush1.bf16.msra.mxu0 %v449
      %474 = vmatprep.subr.bf16.mxu0 0
      %475 = vmatpush1.bf16.msra.mxu0 0
      %476 = vmatprep.subr.bf16.mxu0 0
      %477 = vmatpush1.bf16.msra.mxu0 0
      %478 = vmatprep.subr.bf16.mxu0 0
      %479 = vmatpush1.bf16.msra.mxu0 0
      %480 = vmatprep.subr.bf16.mxu0 0
      %481 = vmatpush1.bf16.msra.mxu0 0
      %482 = vmatprep.subr.bf16.mxu0 0
      %483 = vmatpush1.bf16.msra.mxu0 0
      %484 = vmatprep.subr.bf16.mxu0 0
      %485 = vmatpush1.bf16.msra.mxu0 0
      %486 = vmatprep.subr.bf16.mxu0 0
      %487 = vmatpush1.bf16.msra.mxu0 0
      %488 = vmatprep.subr.bf16.mxu0 0
      %489 = vmatpush1.bf16.msra.mxu0 0
      %490 = vmatprep.subr.bf16.mxu0 0
      %491 = vmatpush1.bf16.msra.mxu0 0
      %492 = vmatprep.subr.bf16.mxu0 0
      %493 = vmatpush1.bf16.msra.mxu0 0
      %494 = vmatprep.subr.bf16.mxu0 0
      %495 = vmatpush1.bf16.msra.mxu0 0
      %496 = vmatprep.subr.bf16.mxu0 0
      %497 = vmatpush1.bf16.msra.mxu0 0
      %498 = vmatprep.mubr.bf16.mxu0 0
      %499 = vmatmul.mubr.bf16.gmra.mrb[0].mxu0 %v455
      %v500 = vpop.f32.mrb[0].mxu0
      %v501 = vadd.f32 0.0, %v500
      %v502 = vpop.f32.mrb[0].mxu0
      %v503 = vpop.f32.mrb[0].mxu0
      %v504 = vadd.f32 0.0, %v503
      %v505 = vpop.f32.mrb[0].mxu0
      %506 = vmatprep.mubr.bf16.mxu0 0
      %507 = vmatmul.mubr.bf16.gmra.mrb[0].mxu0 %v458
      %v508 = vpop.f32.mrb[0].mxu0
      %v509 = vadd.f32 0.0, %v508
      %v510 = vpop.f32.mrb[0].mxu0
      %v511 = vpop.f32.mrb[0].mxu0
      %v512 = vadd.f32 0.0, %v511
      %v513 = vpop.f32.mrb[0].mxu0
      %514 = vmatprep.mubr.bf16.mxu0 0
      %515 = vmatmul.mubr.bf16.gmra.mrb[0].mxu0 %v461
      %v516 = vpop.f32.mrb[0].mxu0
      %v517 = vadd.f32 0.0, %v516
      %v518 = vpop.f32.mrb[0].mxu0
      %v519 = vpop.f32.mrb[0].mxu0
      %v520 = vadd.f32 0.0, %v519
      %v521 = vpop.f32.mrb[0].mxu0
      %522 = vmatprep.mubr.bf16.mxu0 0
      %523 = vmatmul.mubr.bf16.gmra.mrb[0].mxu0 %v464
      %v524 = vpop.f32.mrb[0].mxu0
      %v525 = vadd.f32 0.0, %v524
      %v526 = vpop.f32.mrb[0].mxu0
      %v527 = vpop.f32.mrb[0].mxu0
      %v528 = vadd.f32 0.0, %v527
      %v529 = vpop.f32.mrb[0].mxu0
      %530 = vdwg.mxu0
      %v531 = vadd.f32 %v379, %v501
      %v532 = vadd.f32 %v382, %v504
      %v533 = vadd.f32 %v387, %v509
      %v534 = vadd.f32 %v390, %v512
      %v535 = vadd.f32 %v395, %v517
      %v536 = vadd.f32 %v398, %v520
      %v537 = vadd.f32 %v403, %v525
      %v538 = vadd.f32 %v406, %v528
      %s539 = scalar_lea.vmem %s165, 80
      %v540 = vld [vmem:[%s539] sm:$0xff]
      %v541 = vld [vmem:[%s539 + $0x8] sm:$0xff]
      %v542 = vld [vmem:[%s539 + $0x10] sm:$0xff]
      %v543 = vld [vmem:[%s539 + $0x18] sm:$0xff]
      %v544 = vld [vmem:[%s539 + $0x20] sm:$0xff]
      %v545 = vld [vmem:[%s539 + $0x28] sm:$0xff]
      %v546 = vld [vmem:[%s539 + $0x30] sm:$0xff]
      %v547 = vld [vmem:[%s539 + $0x38] sm:$0xff]
      %v548 = vpack.c.bf16 %v541, %v540
      %v549 = vpack.c.bf16 %v543, %v542
      %v550 = vpack.c.bf16 %v545, %v544
      %v551 = vpack.c.bf16 %v547, %v546
      %s552 = scalar_lea.vmem %s1, 32
      %v553 = vld [vmem:[%s552] sm:$0xf]
      %v554 = vld [vmem:[%s552 + $0x4] sm:$0xf]
      %v555 = vld [vmem:[%s552 + $0x8] sm:$0xf]
      %v556 = vld [vmem:[%s552 + $0xc] sm:$0xf]
      %v557 = vld [vmem:[%s552 + $0x10] sm:$0xf]
      %v558 = vld [vmem:[%s552 + $0x14] sm:$0xf]
      %v559 = vld [vmem:[%s552 + $0x18] sm:$0xf]
      %v560 = vld [vmem:[%s552 + $0x1c] sm:$0xf]
      %v569 = vunpack.c.l.b16 %v553
      %v570 = vunpack.c.l.b16 %v554
      %v571 = vunpack.c.l.b16 %v555
      %v572 = vunpack.c.l.b16 %v556
      %v573 = vunpack.c.l.b16 %v557
      %v574 = vunpack.c.l.b16 %v558
      %v575 = vunpack.c.l.b16 %v559
      %v576 = vunpack.c.l.b16 %v560
      %v577 = vpack.c.b16 %v570, %v569
      %v578 = vpack.c.b16 %v572, %v571
      %v579 = vpack.c.b16 %v574, %v573
      %v580 = vpack.c.b16 %v576, %v575
      %v586 = vsel %vm230, %v548, 0
      %v589 = vsel %vm230, %v549, 0
      %v592 = vsel %vm230, %v550, 0
      %v595 = vsel %vm230, %v551, 0
      %597 = vmatprep.subr.bf16.mxu0 0
      %598 = vmatpush1.bf16.msra.mxu0 %v577
      %599 = vmatprep.subr.bf16.mxu0 0
      %600 = vmatpush1.bf16.msra.mxu0 %v578
      %601 = vmatprep.subr.bf16.mxu0 0
      %602 = vmatpush1.bf16.msra.mxu0 %v579
      %603 = vmatprep.subr.bf16.mxu0 0
      %604 = vmatpush1.bf16.msra.mxu0 %v580
      %605 = vmatprep.subr.bf16.mxu0 0
      %606 = vmatpush1.bf16.msra.mxu0 0
      %607 = vmatprep.subr.bf16.mxu0 0
      %608 = vmatpush1.bf16.msra.mxu0 0
      %609 = vmatprep.subr.bf16.mxu0 0
      %610 = vmatpush1.bf16.msra.mxu0 0
      %611 = vmatprep.subr.bf16.mxu0 0
      %612 = vmatpush1.bf16.msra.mxu0 0
      %613 = vmatprep.subr.bf16.mxu0 0
      %614 = vmatpush1.bf16.msra.mxu0 0
      %615 = vmatprep.subr.bf16.mxu0 0
      %616 = vmatpush1.bf16.msra.mxu0 0
      %617 = vmatprep.subr.bf16.mxu0 0
      %618 = vmatpush1.bf16.msra.mxu0 0
      %619 = vmatprep.subr.bf16.mxu0 0
      %620 = vmatpush1.bf16.msra.mxu0 0
      %621 = vmatprep.subr.bf16.mxu0 0
      %622 = vmatpush1.bf16.msra.mxu0 0
      %623 = vmatprep.subr.bf16.mxu0 0
      %624 = vmatpush1.bf16.msra.mxu0 0
      %625 = vmatprep.subr.bf16.mxu0 0
      %626 = vmatpush1.bf16.msra.mxu0 0
      %627 = vmatprep.subr.bf16.mxu0 0
      %628 = vmatpush1.bf16.msra.mxu0 0
      %629 = vmatprep.mubr.bf16.mxu0 0
      %630 = vmatmul.mubr.bf16.gmra.mrb[0].mxu0 %v586
      %v631 = vpop.f32.mrb[0].mxu0
      %v632 = vadd.f32 0.0, %v631
      %v633 = vpop.f32.mrb[0].mxu0
      %v634 = vpop.f32.mrb[0].mxu0
      %v635 = vadd.f32 0.0, %v634
      %v636 = vpop.f32.mrb[0].mxu0
      %637 = vmatprep.mubr.bf16.mxu0 0
      %638 = vmatmul.mubr.bf16.gmra.mrb[0].mxu0 %v589
      %v639 = vpop.f32.mrb[0].mxu0
      %v640 = vadd.f32 0.0, %v639
      %v641 = vpop.f32.mrb[0].mxu0
      %v642 = vpop.f32.mrb[0].mxu0
      %v643 = vadd.f32 0.0, %v642
      %v644 = vpop.f32.mrb[0].mxu0
      %645 = vmatprep.mubr.bf16.mxu0 0
      %646 = vmatmul.mubr.bf16.gmra.mrb[0].mxu0 %v592
      %v647 = vpop.f32.mrb[0].mxu0
      %v648 = vadd.f32 0.0, %v647
      %v649 = vpop.f32.mrb[0].mxu0
      %v650 = vpop.f32.mrb[0].mxu0
      %v651 = vadd.f32 0.0, %v650
      %v652 = vpop.f32.mrb[0].mxu0
      %653 = vmatprep.mubr.bf16.mxu0 0
      %654 = vmatmul.mubr.bf16.gmra.mrb[0].mxu0 %v595
      %v655 = vpop.f32.mrb[0].mxu0
      %v656 = vadd.f32 0.0, %v655
      %v657 = vpop.f32.mrb[0].mxu0
      %v658 = vpop.f32.mrb[0].mxu0
      %v659 = vadd.f32 0.0, %v658
      %v660 = vpop.f32.mrb[0].mxu0
      %661 = vdwg.mxu0
      %v662 = vadd.f32 %v531, %v632
      %v663 = vadd.f32 %v532, %v635
      %v664 = vadd.f32 %v533, %v640
      %v665 = vadd.f32 %v534, %v643
      %v666 = vadd.f32 %v535, %v648
      %v667 = vadd.f32 %v536, %v651
      %v668 = vadd.f32 %v537, %v656
      %v669 = vadd.f32 %v538, %v659
      %v670 = vld [vmem:[%s539 + $0x8] sm:$0xff]
      %v671 = vld [vmem:[%s539 + $0x10] sm:$0xff]
      %v672 = vld [vmem:[%s539 + $0x18] sm:$0xff]
      %v673 = vld [vmem:[%s539 + $0x20] sm:$0xff]
      %v674 = vld [vmem:[%s539 + $0x28] sm:$0xff]
      %v675 = vld [vmem:[%s539 + $0x30] sm:$0xff]
      %v676 = vld [vmem:[%s539 + $0x38] sm:$0xff]
      %v677 = vld [vmem:[%s539 + $0x40] sm:$0xff]
      %v678 = vpack.c.bf16 %v671, %v670
      %v679 = vpack.c.bf16 %v673, %v672
      %v680 = vpack.c.bf16 %v675, %v674
      %v681 = vpack.c.bf16 %v677, %v676
      %s682 = scalar_lea.vmem %s1, 128
      %v683 = vld [vmem:[%s682] sm:$0xf]
      %v684 = vld [vmem:[%s682 + $0x4] sm:$0xf]
      %v685 = vld [vmem:[%s682 + $0x8] sm:$0xf]
      %v686 = vld [vmem:[%s682 + $0xc] sm:$0xf]
      %v687 = vld [vmem:[%s682 + $0x10] sm:$0xf]
      %v688 = vld [vmem:[%s682 + $0x14] sm:$0xf]
      %v689 = vld [vmem:[%s682 + $0x18] sm:$0xf]
      %v690 = vld [vmem:[%s682 + $0x1c] sm:$0xf]
      %v699 = vunpack.c.l.b16 %v683
      %v700 = vunpack.c.l.b16 %v684
      %v701 = vunpack.c.l.b16 %v685
      %v702 = vunpack.c.l.b16 %v686
      %v703 = vunpack.c.l.b16 %v687
      %v704 = vunpack.c.l.b16 %v688
      %v705 = vunpack.c.l.b16 %v689
      %v706 = vunpack.c.l.b16 %v690
      %v707 = vpack.c.b16 %v700, %v699
      %v708 = vpack.c.b16 %v702, %v701
      %v709 = vpack.c.b16 %v704, %v703
      %v710 = vpack.c.b16 %v706, %v705
      %v716 = vsel %vm230, %v678, 0
      %v719 = vsel %vm230, %v679, 0
      %v722 = vsel %vm230, %v680, 0
      %v725 = vsel %vm230, %v681, 0
      %727 = vmatprep.subr.bf16.mxu0 0
      %728 = vmatpush1.bf16.msra.mxu0 %v707
      %729 = vmatprep.subr.bf16.mxu0 0
      %730 = vmatpush1.bf16.msra.mxu0 %v708
      %731 = vmatprep.subr.bf16.mxu0 0
      %732 = vmatpush1.bf16.msra.mxu0 %v709
      %733 = vmatprep.subr.bf16.mxu0 0
      %734 = vmatpush1.bf16.msra.mxu0 %v710
      %735 = vmatprep.subr.bf16.mxu0 0
      %736 = vmatpush1.bf16.msra.mxu0 0
      %737 = vmatprep.subr.bf16.mxu0 0
      %738 = vmatpush1.bf16.msra.mxu0 0
      %739 = vmatprep.subr.bf16.mxu0 0
      %740 = vmatpush1.bf16.msra.mxu0 0
      %741 = vmatprep.subr.bf16.mxu0 0
      %742 = vmatpush1.bf16.msra.mxu0 0
      %743 = vmatprep.subr.bf16.mxu0 0
      %744 = vmatpush1.bf16.msra.mxu0 0
      %745 = vmatprep.subr.bf16.mxu0 0
      %746 = vmatpush1.bf16.msra.mxu0 0
      %747 = vmatprep.subr.bf16.mxu0 0
      %748 = vmatpush1.bf16.msra.mxu0 0
      %749 = vmatprep.subr.bf16.mxu0 0
      %750 = vmatpush1.bf16.msra.mxu0 0
      %751 = vmatprep.subr.bf16.mxu0 0
      %752 = vmatpush1.bf16.msra.mxu0 0
      %753 = vmatprep.subr.bf16.mxu0 0
      %754 = vmatpush1.bf16.msra.mxu0 0
      %755 = vmatprep.subr.bf16.mxu0 0
      %756 = vmatpush1.bf16.msra.mxu0 0
      %757 = vmatprep.subr.bf16.mxu0 0
      %758 = vmatpush1.bf16.msra.mxu0 0
      %759 = vmatprep.mubr.bf16.mxu0 0
      %760 = vmatmul.mubr.bf16.gmra.mrb[0].mxu0 %v716
      %v761 = vpop.f32.mrb[0].mxu0
      %v762 = vadd.f32 0.0, %v761
      %v763 = vpop.f32.mrb[0].mxu0
      %v764 = vpop.f32.mrb[0].mxu0
      %v765 = vadd.f32 0.0, %v764
      %v766 = vpop.f32.mrb[0].mxu0
      %767 = vmatprep.mubr.bf16.mxu0 0
      %768 = vmatmul.mubr.bf16.gmra.mrb[0].mxu0 %v719
      %v769 = vpop.f32.mrb[0].mxu0
      %v770 = vadd.f32 0.0, %v769
      %v771 = vpop.f32.mrb[0].mxu0
      %v772 = vpop.f32.mrb[0].mxu0
      %v773 = vadd.f32 0.0, %v772
      %v774 = vpop.f32.mrb[0].mxu0
      %775 = vmatprep.mubr.bf16.mxu0 0
      %776 = vmatmul.mubr.bf16.gmra.mrb[0].mxu0 %v722
      %v777 = vpop.f32.mrb[0].mxu0
      %v778 = vadd.f32 0.0, %v777
      %v779 = vpop.f32.mrb[0].mxu0
      %v780 = vpop.f32.mrb[0].mxu0
      %v781 = vadd.f32 0.0, %v780
      %v782 = vpop.f32.mrb[0].mxu0
      %783 = vmatprep.mubr.bf16.mxu0 0
      %784 = vmatmul.mubr.bf16.gmra.mrb[0].mxu0 %v725
      %v785 = vpop.f32.mrb[0].mxu0
      %v786 = vadd.f32 0.0, %v785
      %v787 = vpop.f32.mrb[0].mxu0
      %v788 = vpop.f32.mrb[0].mxu0
      %v789 = vadd.f32 0.0, %v788
      %v790 = vpop.f32.mrb[0].mxu0
      %791 = vdwg.mxu0
      %v792 = vadd.f32 %v662, %v762
      %v793 = vadd.f32 %v663, %v765
      %v794 = vadd.f32 %v664, %v770
      %v795 = vadd.f32 %v665, %v773
      %v796 = vadd.f32 %v666, %v778
      %v797 = vadd.f32 %v667, %v781
      %v798 = vadd.f32 %v668, %v786
      %v799 = vadd.f32 %v669, %v789
      %v800 = vld [vmem:[%s539 + $0x10] sm:$0xff]
      %v801 = vld [vmem:[%s539 + $0x18] sm:$0xff]
      %v802 = vld [vmem:[%s539 + $0x20] sm:$0xff]
      %v803 = vld [vmem:[%s539 + $0x28] sm:$0xff]
      %v804 = vld [vmem:[%s539 + $0x30] sm:$0xff]
      %v805 = vld [vmem:[%s539 + $0x38] sm:$0xff]
      %v806 = vld [vmem:[%s539 + $0x40] sm:$0xff]
      %v807 = vld [vmem:[%s539 + $0x48] sm:$0xff]
      %v808 = vpack.c.bf16 %v801, %v800
      %v809 = vpack.c.bf16 %v803, %v802
      %v810 = vpack.c.bf16 %v805, %v804
      %v811 = vpack.c.bf16 %v807, %v806
      %s812 = scalar_lea.vmem %s1, 224
      %v813 = vld [vmem:[%s812] sm:$0xf]
      %v814 = vld [vmem:[%s812 + $0x4] sm:$0xf]
      %v815 = vld [vmem:[%s812 + $0x8] sm:$0xf]
      %v816 = vld [vmem:[%s812 + $0xc] sm:$0xf]
      %v817 = vld [vmem:[%s812 + $0x10] sm:$0xf]
      %v818 = vld [vmem:[%s812 + $0x14] sm:$0xf]
      %v819 = vld [vmem:[%s812 + $0x18] sm:$0xf]
      %v820 = vld [vmem:[%s812 + $0x1c] sm:$0xf]
      %v829 = vunpack.c.l.b16 %v813
      %v830 = vunpack.c.l.b16 %v814
      %v831 = vunpack.c.l.b16 %v815
      %v832 = vunpack.c.l.b16 %v816
      %v833 = vunpack.c.l.b16 %v817
      %v834 = vunpack.c.l.b16 %v818
      %v835 = vunpack.c.l.b16 %v819
      %v836 = vunpack.c.l.b16 %v820
      %v837 = vpack.c.b16 %v830, %v829
      %v838 = vpack.c.b16 %v832, %v831
      %v839 = vpack.c.b16 %v834, %v833
      %v840 = vpack.c.b16 %v836, %v835
      %v846 = vsel %vm230, %v808, 0
      %v849 = vsel %vm230, %v809, 0
      %v852 = vsel %vm230, %v810, 0
      %v855 = vsel %vm230, %v811, 0
      %857 = vmatprep.subr.bf16.mxu0 0
      %858 = vmatpush1.bf16.msra.mxu0 %v837
      %859 = vmatprep.subr.bf16.mxu0 0
      %860 = vmatpush1.bf16.msra.mxu0 %v838
      %861 = vmatprep.subr.bf16.mxu0 0
      %862 = vmatpush1.bf16.msra.mxu0 %v839
      %863 = vmatprep.subr.bf16.mxu0 0
      %864 = vmatpush1.bf16.msra.mxu0 %v840
      %865 = vmatprep.subr.bf16.mxu0 0
      %866 = vmatpush1.bf16.msra.mxu0 0
      %867 = vmatprep.subr.bf16.mxu0 0
      %868 = vmatpush1.bf16.msra.mxu0 0
      %869 = vmatprep.subr.bf16.mxu0 0
      %870 = vmatpush1.bf16.msra.mxu0 0
      %871 = vmatprep.subr.bf16.mxu0 0
      %872 = vmatpush1.bf16.msra.mxu0 0
      %873 = vmatprep.subr.bf16.mxu0 0
      %874 = vmatpush1.bf16.msra.mxu0 0
      %875 = vmatprep.subr.bf16.mxu0 0
      %876 = vmatpush1.bf16.msra.mxu0 0
      %877 = vmatprep.subr.bf16.mxu0 0
      %878 = vmatpush1.bf16.msra.mxu0 0
      %879 = vmatprep.subr.bf16.mxu0 0
      %880 = vmatpush1.bf16.msra.mxu0 0
      %881 = vmatprep.subr.bf16.mxu0 0
      %882 = vmatpush1.bf16.msra.mxu0 0
      %883 = vmatprep.subr.bf16.mxu0 0
      %884 = vmatpush1.bf16.msra.mxu0 0
      %885 = vmatprep.subr.bf16.mxu0 0
      %886 = vmatpush1.bf16.msra.mxu0 0
      %887 = vmatprep.subr.bf16.mxu0 0
      %888 = vmatpush1.bf16.msra.mxu0 0
      %889 = vmatprep.mubr.bf16.mxu0 0
      %890 = vmatmul.mubr.bf16.gmra.mrb[0].mxu0 %v846
      %v891 = vpop.f32.mrb[0].mxu0
      %v892 = vadd.f32 0.0, %v891
      %v893 = vpop.f32.mrb[0].mxu0
      %v894 = vpop.f32.mrb[0].mxu0
      %v895 = vadd.f32 0.0, %v894
      %v896 = vpop.f32.mrb[0].mxu0
      %897 = vmatprep.mubr.bf16.mxu0 0
      %898 = vmatmul.mubr.bf16.gmra.mrb[0].mxu0 %v849
      %v899 = vpop.f32.mrb[0].mxu0
      %v900 = vadd.f32 0.0, %v899
      %v901 = vpop.f32.mrb[0].mxu0
      %v902 = vpop.f32.mrb[0].mxu0
      %v903 = vadd.f32 0.0, %v902
      %v904 = vpop.f32.mrb[0].mxu0
      %905 = vmatprep.mubr.bf16.mxu0 0
      %906 = vmatmul.mubr.bf16.gmra.mrb[0].mxu0 %v852
      %v907 = vpop.f32.mrb[0].mxu0
      %v908 = vadd.f32 0.0, %v907
      %v909 = vpop.f32.mrb[0].mxu0
      %v910 = vpop.f32.mrb[0].mxu0
      %v911 = vadd.f32 0.0, %v910
      %v912 = vpop.f32.mrb[0].mxu0
      %913 = vmatprep.mubr.bf16.mxu0 0
      %914 = vmatmul.mubr.bf16.gmra.mrb[0].mxu0 %v855
      %v915 = vpop.f32.mrb[0].mxu0
      %v916 = vadd.f32 0.0, %v915
      %v917 = vpop.f32.mrb[0].mxu0
      %v918 = vpop.f32.mrb[0].mxu0
      %v919 = vadd.f32 0.0, %v918
      %v920 = vpop.f32.mrb[0].mxu0
      %921 = vdwg.mxu0
      %v922 = vadd.f32 %v792, %v892
      %v923 = vadd.f32 %v793, %v895
      %v924 = vadd.f32 %v794, %v900
      %v925 = vadd.f32 %v795, %v903
      %v926 = vadd.f32 %v796, %v908
      %v927 = vadd.f32 %v797, %v911
      %v928 = vadd.f32 %v798, %v916
      %v929 = vadd.f32 %v799, %v919
      %s930 = scalar_lea.vmem %s165, 160
      %v931 = vld [vmem:[%s930] sm:$0xff]
      %v932 = vld [vmem:[%s930 + $0x8] sm:$0xff]
      %v933 = vld [vmem:[%s930 + $0x10] sm:$0xff]
      %v934 = vld [vmem:[%s930 + $0x18] sm:$0xff]
      %v935 = vld [vmem:[%s930 + $0x20] sm:$0xff]
      %v936 = vld [vmem:[%s930 + $0x28] sm:$0xff]
      %v937 = vld [vmem:[%s930 + $0x30] sm:$0xff]
      %v938 = vld [vmem:[%s930 + $0x38] sm:$0xff]
      %v939 = vpack.c.bf16 %v932, %v931
      %v940 = vpack.c.bf16 %v934, %v933
      %v941 = vpack.c.bf16 %v936, %v935
      %v942 = vpack.c.bf16 %v938, %v937
      %s943 = scalar_lea.vmem %s1, 64
      %v944 = vld [vmem:[%s943] sm:$0xf]
      %v945 = vld [vmem:[%s943 + $0x4] sm:$0xf]
      %v946 = vld [vmem:[%s943 + $0x8] sm:$0xf]
      %v947 = vld [vmem:[%s943 + $0xc] sm:$0xf]
      %v948 = vld [vmem:[%s943 + $0x10] sm:$0xf]
      %v949 = vld [vmem:[%s943 + $0x14] sm:$0xf]
      %v950 = vld [vmem:[%s943 + $0x18] sm:$0xf]
      %v951 = vld [vmem:[%s943 + $0x1c] sm:$0xf]
      %v960 = vunpack.c.l.b16 %v944
      %v961 = vunpack.c.l.b16 %v945
      %v962 = vunpack.c.l.b16 %v946
      %v963 = vunpack.c.l.b16 %v947
      %v964 = vunpack.c.l.b16 %v948
      %v965 = vunpack.c.l.b16 %v949
      %v966 = vunpack.c.l.b16 %v950
      %v967 = vunpack.c.l.b16 %v951
      %v968 = vpack.c.b16 %v961, %v960
      %v969 = vpack.c.b16 %v963, %v962
      %v970 = vpack.c.b16 %v965, %v964
      %v971 = vpack.c.b16 %v967, %v966
      %v977 = vsel %vm230, %v939, 0
      %v980 = vsel %vm230, %v940, 0
      %v983 = vsel %vm230, %v941, 0
      %v986 = vsel %vm230, %v942, 0
      %988 = vmatprep.subr.bf16.mxu0 0
      %989 = vmatpush1.bf16.msra.mxu0 %v968
      %990 = vmatprep.subr.bf16.mxu0 0
      %991 = vmatpush1.bf16.msra.mxu0 %v969
      %992 = vmatprep.subr.bf16.mxu0 0
      %993 = vmatpush1.bf16.msra.mxu0 %v970
      %994 = vmatprep.subr.bf16.mxu0 0
      %995 = vmatpush1.bf16.msra.mxu0 %v971
      %996 = vmatprep.subr.bf16.mxu0 0
      %997 = vmatpush1.bf16.msra.mxu0 0
      %998 = vmatprep.subr.bf16.mxu0 0
      %999 = vmatpush1.bf16.msra.mxu0 0
      %1000 = vmatprep.subr.bf16.mxu0 0
      %1001 = vmatpush1.bf16.msra.mxu0 0
      %1002 = vmatprep.subr.bf16.mxu0 0
      %1003 = vmatpush1.bf16.msra.mxu0 0
      %1004 = vmatprep.subr.bf16.mxu0 0
      %1005 = vmatpush1.bf16.msra.mxu0 0
      %1006 = vmatprep.subr.bf16.mxu0 0
      %1007 = vmatpush1.bf16.msra.mxu0 0
      %1008 = vmatprep.subr.bf16.mxu0 0
      %1009 = vmatpush1.bf16.msra.mxu0 0
      %1010 = vmatprep.subr.bf16.mxu0 0
      %1011 = vmatpush1.bf16.msra.mxu0 0
      %1012 = vmatprep.subr.bf16.mxu0 0
      %1013 = vmatpush1.bf16.msra.mxu0 0
      %1014 = vmatprep.subr.bf16.mxu0 0
      %1015 = vmatpush1.bf16.msra.mxu0 0
      %1016 = vmatprep.subr.bf16.mxu0 0
      %1017 = vmatpush1.bf16.msra.mxu0 0
      %1018 = vmatprep.subr.bf16.mxu0 0
      %1019 = vmatpush1.bf16.msra.mxu0 0
      %1020 = vmatprep.mubr.bf16.mxu0 0
      %1021 = vmatmul.mubr.bf16.gmra.mrb[0].mxu0 %v977
      %v1022 = vpop.f32.mrb[0].mxu0
      %v1023 = vadd.f32 0.0, %v1022
      %v1024 = vpop.f32.mrb[0].mxu0
      %v1025 = vpop.f32.mrb[0].mxu0
      %v1026 = vadd.f32 0.0, %v1025
      %v1027 = vpop.f32.mrb[0].mxu0
      %1028 = vmatprep.mubr.bf16.mxu0 0
      %1029 = vmatmul.mubr.bf16.gmra.mrb[0].mxu0 %v980
      %v1030 = vpop.f32.mrb[0].mxu0
      %v1031 = vadd.f32 0.0, %v1030
      %v1032 = vpop.f32.mrb[0].mxu0
      %v1033 = vpop.f32.mrb[0].mxu0
      %v1034 = vadd.f32 0.0, %v1033
      %v1035 = vpop.f32.mrb[0].mxu0
      %1036 = vmatprep.mubr.bf16.mxu0 0
      %1037 = vmatmul.mubr.bf16.gmra.mrb[0].mxu0 %v983
      %v1038 = vpop.f32.mrb[0].mxu0
      %v1039 = vadd.f32 0.0, %v1038
      %v1040 = vpop.f32.mrb[0].mxu0
      %v1041 = vpop.f32.mrb[0].mxu0
      %v1042 = vadd.f32 0.0, %v1041
      %v1043 = vpop.f32.mrb[0].mxu0
      %1044 = vmatprep.mubr.bf16.mxu0 0
      %1045 = vmatmul.mubr.bf16.gmra.mrb[0].mxu0 %v986
      %v1046 = vpop.f32.mrb[0].mxu0
      %v1047 = vadd.f32 0.0, %v1046
      %v1048 = vpop.f32.mrb[0].mxu0
      %v1049 = vpop.f32.mrb[0].mxu0
      %v1050 = vadd.f32 0.0, %v1049
      %v1051 = vpop.f32.mrb[0].mxu0
      %1052 = vdwg.mxu0
      %v1053 = vadd.f32 %v922, %v1023
      %v1054 = vadd.f32 %v923, %v1026
      %v1055 = vadd.f32 %v924, %v1031
      %v1056 = vadd.f32 %v925, %v1034
      %v1057 = vadd.f32 %v926, %v1039
      %v1058 = vadd.f32 %v927, %v1042
      %v1059 = vadd.f32 %v928, %v1047
      %v1060 = vadd.f32 %v929, %v1050
      %v1061 = vld [vmem:[%s930 + $0x8] sm:$0xff]
      %v1062 = vld [vmem:[%s930 + $0x10] sm:$0xff]
      %v1063 = vld [vmem:[%s930 + $0x18] sm:$0xff]
      %v1064 = vld [vmem:[%s930 + $0x20] sm:$0xff]
      %v1065 = vld [vmem:[%s930 + $0x28] sm:$0xff]
      %v1066 = vld [vmem:[%s930 + $0x30] sm:$0xff]
      %v1067 = vld [vmem:[%s930 + $0x38] sm:$0xff]
      %v1068 = vld [vmem:[%s930 + $0x40] sm:$0xff]
      %v1069 = vpack.c.bf16 %v1062, %v1061
      %v1070 = vpack.c.bf16 %v1064, %v1063
      %v1071 = vpack.c.bf16 %v1066, %v1065
      %v1072 = vpack.c.bf16 %v1068, %v1067
      %s1073 = scalar_lea.vmem %s1, 160
      %v1074 = vld [vmem:[%s1073] sm:$0xf]
      %v1075 = vld [vmem:[%s1073 + $0x4] sm:$0xf]
      %v1076 = vld [vmem:[%s1073 + $0x8] sm:$0xf]
      %v1077 = vld [vmem:[%s1073 + $0xc] sm:$0xf]
      %v1078 = vld [vmem:[%s1073 + $0x10] sm:$0xf]
      %v1079 = vld [vmem:[%s1073 + $0x14] sm:$0xf]
      %v1080 = vld [vmem:[%s1073 + $0x18] sm:$0xf]
      %v1081 = vld [vmem:[%s1073 + $0x1c] sm:$0xf]
      %v1090 = vunpack.c.l.b16 %v1074
      %v1091 = vunpack.c.l.b16 %v1075
      %v1092 = vunpack.c.l.b16 %v1076
      %v1093 = vunpack.c.l.b16 %v1077
      %v1094 = vunpack.c.l.b16 %v1078
      %v1095 = vunpack.c.l.b16 %v1079
      %v1096 = vunpack.c.l.b16 %v1080
      %v1097 = vunpack.c.l.b16 %v1081
      %v1098 = vpack.c.b16 %v1091, %v1090
      %v1099 = vpack.c.b16 %v1093, %v1092
      %v1100 = vpack.c.b16 %v1095, %v1094
      %v1101 = vpack.c.b16 %v1097, %v1096
      %v1107 = vsel %vm230, %v1069, 0
      %v1110 = vsel %vm230, %v1070, 0
      %v1113 = vsel %vm230, %v1071, 0
      %v1116 = vsel %vm230, %v1072, 0
      %1118 = vmatprep.subr.bf16.mxu0 0
      %1119 = vmatpush1.bf16.msra.mxu0 %v1098
      %1120 = vmatprep.subr.bf16.mxu0 0
      %1121 = vmatpush1.bf16.msra.mxu0 %v1099
      %1122 = vmatprep.subr.bf16.mxu0 0
      %1123 = vmatpush1.bf16.msra.mxu0 %v1100
      %1124 = vmatprep.subr.bf16.mxu0 0
      %1125 = vmatpush1.bf16.msra.mxu0 %v1101
      %1126 = vmatprep.subr.bf16.mxu0 0
      %1127 = vmatpush1.bf16.msra.mxu0 0
      %1128 = vmatprep.subr.bf16.mxu0 0
      %1129 = vmatpush1.bf16.msra.mxu0 0
      %1130 = vmatprep.subr.bf16.mxu0 0
      %1131 = vmatpush1.bf16.msra.mxu0 0
      %1132 = vmatprep.subr.bf16.mxu0 0
      %1133 = vmatpush1.bf16.msra.mxu0 0
      %1134 = vmatprep.subr.bf16.mxu0 0
      %1135 = vmatpush1.bf16.msra.mxu0 0
      %1136 = vmatprep.subr.bf16.mxu0 0
      %1137 = vmatpush1.bf16.msra.mxu0 0
      %1138 = vmatprep.subr.bf16.mxu0 0
      %1139 = vmatpush1.bf16.msra.mxu0 0
      %1140 = vmatprep.subr.bf16.mxu0 0
      %1141 = vmatpush1.bf16.msra.mxu0 0
      %1142 = vmatprep.subr.bf16.mxu0 0
      %1143 = vmatpush1.bf16.msra.mxu0 0
      %1144 = vmatprep.subr.bf16.mxu0 0
      %1145 = vmatpush1.bf16.msra.mxu0 0
      %1146 = vmatprep.subr.bf16.mxu0 0
      %1147 = vmatpush1.bf16.msra.mxu0 0
      %1148 = vmatprep.subr.bf16.mxu0 0
      %1149 = vmatpush1.bf16.msra.mxu0 0
      %1150 = vmatprep.mubr.bf16.mxu0 0
      %1151 = vmatmul.mubr.bf16.gmra.mrb[0].mxu0 %v1107
      %v1152 = vpop.f32.mrb[0].mxu0
      %v1153 = vadd.f32 0.0, %v1152
      %v1154 = vpop.f32.mrb[0].mxu0
      %v1155 = vpop.f32.mrb[0].mxu0
      %v1156 = vadd.f32 0.0, %v1155
      %v1157 = vpop.f32.mrb[0].mxu0
      %1158 = vmatprep.mubr.bf16.mxu0 0
      %1159 = vmatmul.mubr.bf16.gmra.mrb[0].mxu0 %v1110
      %v1160 = vpop.f32.mrb[0].mxu0
      %v1161 = vadd.f32 0.0, %v1160
      %v1162 = vpop.f32.mrb[0].mxu0
      %v1163 = vpop.f32.mrb[0].mxu0
      %v1164 = vadd.f32 0.0, %v1163
      %v1165 = vpop.f32.mrb[0].mxu0
      %1166 = vmatprep.mubr.bf16.mxu0 0
      %1167 = vmatmul.mubr.bf16.gmra.mrb[0].mxu0 %v1113
      %v1168 = vpop.f32.mrb[0].mxu0
      %v1169 = vadd.f32 0.0, %v1168
      %v1170 = vpop.f32.mrb[0].mxu0
      %v1171 = vpop.f32.mrb[0].mxu0
      %v1172 = vadd.f32 0.0, %v1171
      %v1173 = vpop.f32.mrb[0].mxu0
      %1174 = vmatprep.mubr.bf16.mxu0 0
      %1175 = vmatmul.mubr.bf16.gmra.mrb[0].mxu0 %v1116
      %v1176 = vpop.f32.mrb[0].mxu0
      %v1177 = vadd.f32 0.0, %v1176
      %v1178 = vpop.f32.mrb[0].mxu0
      %v1179 = vpop.f32.mrb[0].mxu0
      %v1180 = vadd.f32 0.0, %v1179
      %v1181 = vpop.f32.mrb[0].mxu0
      %1182 = vdwg.mxu0
      %v1183 = vadd.f32 %v1053, %v1153
      %v1184 = vadd.f32 %v1054, %v1156
      %v1185 = vadd.f32 %v1055, %v1161
      %v1186 = vadd.f32 %v1056, %v1164
      %v1187 = vadd.f32 %v1057, %v1169
      %v1188 = vadd.f32 %v1058, %v1172
      %v1189 = vadd.f32 %v1059, %v1177
      %v1190 = vadd.f32 %v1060, %v1180
      %v1191 = vld [vmem:[%s930 + $0x10] sm:$0xff]
      %v1192 = vld [vmem:[%s930 + $0x18] sm:$0xff]
      %v1193 = vld [vmem:[%s930 + $0x20] sm:$0xff]
      %v1194 = vld [vmem:[%s930 + $0x28] sm:$0xff]
      %v1195 = vld [vmem:[%s930 + $0x30] sm:$0xff]
      %v1196 = vld [vmem:[%s930 + $0x38] sm:$0xff]
      %v1197 = vld [vmem:[%s930 + $0x40] sm:$0xff]
      %v1198 = vld [vmem:[%s930 + $0x48] sm:$0xff]
      %v1199 = vpack.c.bf16 %v1192, %v1191
      %v1200 = vpack.c.bf16 %v1194, %v1193
      %v1201 = vpack.c.bf16 %v1196, %v1195
      %v1202 = vpack.c.bf16 %v1198, %v1197
      %s1203 = scalar_lea.vmem %s1, 256
      %v1204 = vld [vmem:[%s1203] sm:$0xf]
      %v1205 = vld [vmem:[%s1203 + $0x4] sm:$0xf]
      %v1206 = vld [vmem:[%s1203 + $0x8] sm:$0xf]
      %v1207 = vld [vmem:[%s1203 + $0xc] sm:$0xf]
      %v1208 = vld [vmem:[%s1203 + $0x10] sm:$0xf]
      %v1209 = vld [vmem:[%s1203 + $0x14] sm:$0xf]
      %v1210 = vld [vmem:[%s1203 + $0x18] sm:$0xf]
      %v1211 = vld [vmem:[%s1203 + $0x1c] sm:$0xf]
      %v1220 = vunpack.c.l.b16 %v1204
      %v1221 = vunpack.c.l.b16 %v1205
      %v1222 = vunpack.c.l.b16 %v1206
      %v1223 = vunpack.c.l.b16 %v1207
      %v1224 = vunpack.c.l.b16 %v1208
      %v1225 = vunpack.c.l.b16 %v1209
      %v1226 = vunpack.c.l.b16 %v1210
      %v1227 = vunpack.c.l.b16 %v1211
      %v1228 = vpack.c.b16 %v1221, %v1220
      %v1229 = vpack.c.b16 %v1223, %v1222
      %v1230 = vpack.c.b16 %v1225, %v1224
      %v1231 = vpack.c.b16 %v1227, %v1226
      %v1237 = vsel %vm230, %v1199, 0
      %v1240 = vsel %vm230, %v1200, 0
      %v1243 = vsel %vm230, %v1201, 0
      %v1246 = vsel %vm230, %v1202, 0
      %1248 = vmatprep.subr.bf16.mxu0 0
      %1249 = vmatpush1.bf16.msra.mxu0 %v1228
      %1250 = vmatprep.subr.bf16.mxu0 0
      %1251 = vmatpush1.bf16.msra.mxu0 %v1229
      %1252 = vmatprep.subr.bf16.mxu0 0
      %1253 = vmatpush1.bf16.msra.mxu0 %v1230
      %1254 = vmatprep.subr.bf16.mxu0 0
      %1255 = vmatpush1.bf16.msra.mxu0 %v1231
      %1256 = vmatprep.subr.bf16.mxu0 0
      %1257 = vmatpush1.bf16.msra.mxu0 0
      %1258 = vmatprep.subr.bf16.mxu0 0
      %1259 = vmatpush1.bf16.msra.mxu0 0
      %1260 = vmatprep.subr.bf16.mxu0 0
      %1261 = vmatpush1.bf16.msra.mxu0 0
      %1262 = vmatprep.subr.bf16.mxu0 0
      %1263 = vmatpush1.bf16.msra.mxu0 0
      %1264 = vmatprep.subr.bf16.mxu0 0
      %1265 = vmatpush1.bf16.msra.mxu0 0
      %1266 = vmatprep.subr.bf16.mxu0 0
      %1267 = vmatpush1.bf16.msra.mxu0 0
      %1268 = vmatprep.subr.bf16.mxu0 0
      %1269 = vmatpush1.bf16.msra.mxu0 0
      %1270 = vmatprep.subr.bf16.mxu0 0
      %1271 = vmatpush1.bf16.msra.mxu0 0
      %1272 = vmatprep.subr.bf16.mxu0 0
      %1273 = vmatpush1.bf16.msra.mxu0 0
      %1274 = vmatprep.subr.bf16.mxu0 0
      %1275 = vmatpush1.bf16.msra.mxu0 0
      %1276 = vmatprep.subr.bf16.mxu0 0
      %1277 = vmatpush1.bf16.msra.mxu0 0
      %1278 = vmatprep.subr.bf16.mxu0 0
      %1279 = vmatpush1.bf16.msra.mxu0 0
      %1280 = vmatprep.mubr.bf16.mxu0 0
      %1281 = vmatmul.mubr.bf16.gmra.mrb[0].mxu0 %v1237
      %v1282 = vpop.f32.mrb[0].mxu0
      %v1283 = vadd.f32 0.0, %v1282
      %v1284 = vpop.f32.mrb[0].mxu0
      %v1285 = vpop.f32.mrb[0].mxu0
      %v1286 = vadd.f32 0.0, %v1285
      %v1287 = vpop.f32.mrb[0].mxu0
      %1288 = vmatprep.mubr.bf16.mxu0 0
      %1289 = vmatmul.mubr.bf16.gmra.mrb[0].mxu0 %v1240
      %v1290 = vpop.f32.mrb[0].mxu0
      %v1291 = vadd.f32 0.0, %v1290
      %v1292 = vpop.f32.mrb[0].mxu0
      %v1293 = vpop.f32.mrb[0].mxu0
      %v1294 = vadd.f32 0.0, %v1293
      %v1295 = vpop.f32.mrb[0].mxu0
      %1296 = vmatprep.mubr.bf16.mxu0 0
      %1297 = vmatmul.mubr.bf16.gmra.mrb[0].mxu0 %v1243
      %v1298 = vpop.f32.mrb[0].mxu0
      %v1299 = vadd.f32 0.0, %v1298
      %v1300 = vpop.f32.mrb[0].mxu0
      %v1301 = vpop.f32.mrb[0].mxu0
      %v1302 = vadd.f32 0.0, %v1301
      %v1303 = vpop.f32.mrb[0].mxu0
      %1304 = vmatprep.mubr.bf16.mxu0 0
      %1305 = vmatmul.mubr.bf16.gmra.mrb[0].mxu0 %v1246
      %v1306 = vpop.f32.mrb[0].mxu0
      %v1307 = vadd.f32 0.0, %v1306
      %v1308 = vpop.f32.mrb[0].mxu0
      %v1309 = vpop.f32.mrb[0].mxu0
      %v1310 = vadd.f32 0.0, %v1309
      %v1311 = vpop.f32.mrb[0].mxu0
      %1312 = vdwg.mxu0
      %v1313 = vadd.f32 %v1183, %v1283
      %v1314 = vadd.f32 %v1184, %v1286
      %v1315 = vadd.f32 %v1185, %v1291
      %v1316 = vadd.f32 %v1186, %v1294
      %v1317 = vadd.f32 %v1187, %v1299
      %v1318 = vadd.f32 %v1188, %v1302
      %v1319 = vadd.f32 %v1189, %v1307
      %v1320 = vadd.f32 %v1190, %v1310
      %v1321 = vld [vmem:[%s2] sm:$0x1]
      %v1323 = vlaneseq
      %v1324 = vshrl.u32 %v1323, 7
      %v1325 = vsub.s32 0, %v1324
      %v1326 = vrot.slane %v1321, %v1325
      %v1328 = vadd.f32 %v1313, %v1326
      %v1329 = vadd.f32 %v1314, %v1326
      %v1330 = vadd.f32 %v1315, %v1326
      %v1331 = vadd.f32 %v1316, %v1326
      %v1332 = vadd.f32 %v1317, %v1326
      %v1333 = vadd.f32 %v1318, %v1326
      %v1334 = vadd.f32 %v1319, %v1326
      %v1335 = vadd.f32 %v1320, %v1326
      %v1336 = vmax.f32 %v1328, 0.0
      %v1337 = vmax.f32 %v1329, 0.0
      %v1338 = vmax.f32 %v1330, 0.0
      %v1339 = vmax.f32 %v1331, 0.0
      %v1340 = vmax.f32 %v1332, 0.0
      %v1341 = vmax.f32 %v1333, 0.0
      %v1342 = vmax.f32 %v1334, 0.0
      %v1343 = vmax.f32 %v1335, 0.0
      %v1344 = vpack.c.bf16 %v1337, %v1336
      %v1345 = vpack.c.bf16 %v1339, %v1338
      %v1346 = vpack.c.bf16 %v1341, %v1340
      %v1347 = vpack.c.bf16 %v1343, %v1342
      %v1352 = vunpack.c.l.b16 %v1344
      %v1353 = vunpack.c.h.b16 %v1344
      %v1354 = vunpack.c.l.b16 %v1345
      %v1355 = vunpack.c.h.b16 %v1345
      %v1356 = vunpack.c.l.b16 %v1346
      %v1357 = vunpack.c.h.b16 %v1346
      %v1358 = vunpack.c.l.b16 %v1347
      %v1359 = vunpack.c.h.b16 %v1347
      %v1360 = vpack.c.b16 %v1352, %v1352
      %v1361 = vpack.c.b16 %v1353, %v1353
      %v1362 = vpack.c.b16 %v1354, %v1354
      %v1363 = vpack.c.b16 %v1355, %v1355
      %v1364 = vpack.c.b16 %v1356, %v1356
      %v1365 = vpack.c.b16 %v1357, %v1357
      %v1366 = vpack.c.b16 %v1358, %v1358
      %v1367 = vpack.c.b16 %v1359, %v1359
      %vm1376 = vcmask 519168
      %1377 = vst.msk [vmem:[%s170] sm:$0xf] %vm1376, %v1360
      %1378 = vst.msk [vmem:[%s170 + $0x4] sm:$0xf] %vm1376, %v1361
      %1379 = vst.msk [vmem:[%s170 + $0x8] sm:$0xf] %vm1376, %v1362
      %1380 = vst.msk [vmem:[%s170 + $0xc] sm:$0xf] %vm1376, %v1363
      %1381 = vst.msk [vmem:[%s170 + $0x10] sm:$0xf] %vm1376, %v1364
      %1382 = vst.msk [vmem:[%s170 + $0x14] sm:$0xf] %vm1376, %v1365
      %1383 = vst.msk [vmem:[%s170 + $0x18] sm:$0xf] %vm1376, %v1366
      %1384 = vst.msk [vmem:[%s170 + $0x1c] sm:$0xf] %vm1376, %v1367
      %p1385 = scmp.lt.s32.totalorder %s14, 1
      %s1386 = scalar_select %p1385, %s14, 1
      %s1387 = smul.addr %s1386, 8
      %s1388 = smul.addr %s1387, 4
      %s1389 = scalar_lea.vmem %s3, %s1388
      // Predicated region
      $region33: #{stage0_forward.12} parent=31 // pred_check
        %p1390 = pneg %p100
      $region34: #{stage0_forward.12} parent=31 // pred_check_branch
        %1392 = sbr.rel (%p1390) target = $region36
      $region35: #{stage0_forward.12} parent=31 // pred_region
        _
      $region36: #{stage0_forward.12} parent=31 // pred_fallthru
        _
    $region32: #{stage0_forward.12} parent=5 // pred_fallthru
      _
    %p1393 = scmp.le.s32.totalorder 2, %s9
    // Predicated region
    $region37: #{stage0_forward.12} parent=5 // pred_check
      %p1394 = pneg %p1393
    $region38: #{stage0_forward.12} parent=5 // pred_check_branch
      %1396 = sbr.rel (%p1394) target = $region40
    $region39: #{stage0_forward.12} parent=5 // pred_region
      %s1397 = ssub.s32 %s9, 2
      // Predicated region
      $region41: #{stage0_forward.12} parent=39 // pred_check
        %p1398 = pneg %p106
      $region42: #{stage0_forward.12} parent=39 // pred_check_branch
        %1400 = sbr.rel (%p1398) target = $region44
      $region43: #{stage0_forward.12} parent=39 // pred_region
        %p1401 = scmp.lt.s32.totalorder %s15, 1
        %s1402 = scalar_select %p1401, %s15, 1
        %s1403 = smul.addr %s1402, 8
        %s1404 = smul.addr %s1403, 4
        %s1405 = scalar_lea.vmem %s3, %s1404
      $region44: #{stage0_forward.12} parent=39 // pred_fallthru
        _
    $region40: #{stage0_forward.12} parent=5 // pred_fallthru
      _
  $region6: #{stage0_forward.12} parent=0 // loop_footer
    %s13 = sadd.s32 1, %s9
  $region7: #{stage0_forward.12} parent=0 // loop_footer_branch
    %8 = sbr.rel target = $region3
  $region8: #{stage0_forward.12} parent=0 // loop_exit
    _

// kernel: stage0_forward.13
$region0: #{stage0_forward.13}
  #allocation0 [shape = 'u32[]', space=smem, size = 0x4, offset = 0x4, fixed_abs, tag = 'smem constant byte address 0x4 - core index']
  #allocation1 [shape = 'u32[144,128]{1,0:T(1,128)}', space=vmem, size = 0x12000, scoped, tag = 'internal scratch']
  #allocation2 [shape = 'f32[128,256]{1,0:T(8,128)}', space=vmem, size = 0x20000, scoped, tag = 'scratch operand']
  %s0 = inlined_call_operand.vmem [shape: bf16[128,64], index: 0, kind: input, shape index: {}]
  %s1 = inlined_call_operand.vmem [shape: bf16[64,256], index: 1, kind: input, shape index: {}]
  %s2 = inlined_call_operand.vmem [shape: f32[1,256], index: 2, kind: input, shape index: {}]
  %s3 = inlined_call_operand.vmem [shape: bf16[128,256], index: 3, kind: output, shape index: {}]
  %s4 = sld [smem:[#allocation0]]
  $region30: #{stage0_forward.13} parent=0
    _
  %s6 = ssub.s32 1, %s4
  %s7 = scalar_select 0, %s6, %s4
  // Predicated region
  $region2: #{stage0_forward.13} parent=0 // pred_check
    _
  $region3: #{stage0_forward.13} parent=0 // pred_check_branch
    %9 = sbr.rel (0) target = $region5
  $region4: #{stage0_forward.13} parent=0 // pred_region
    _
  $region5: #{stage0_forward.13} parent=0 // pred_fallthru
    _
  // Predicated region
  $region6: #{stage0_forward.13} parent=0 // pred_check
    _
  $region7: #{stage0_forward.13} parent=0 // pred_check_branch
    %11 = sbr.rel (0) target = $region9
  $region8: #{stage0_forward.13} parent=0 // pred_region
    _
  $region9: #{stage0_forward.13} parent=0 // pred_fallthru
    _
  // Predicated region
  $region10: #{stage0_forward.13} parent=0 // pred_check
    _
  $region11: #{stage0_forward.13} parent=0 // pred_check_branch
    %13 = sbr.rel (0) target = $region13
  $region12: #{stage0_forward.13} parent=0 // pred_region
    _
  $region13: #{stage0_forward.13} parent=0 // pred_fallthru
    _
  %p15 = scmp.eq.s32.totalorder 0, 0
  // Predicated region
  $region14: #{stage0_forward.13} parent=0 // pred_check
    %p16 = pneg %p15
  $region15: #{stage0_forward.13} parent=0 // pred_check_branch
    %18 = sbr.rel (%p16) target = $region17
  $region16: #{stage0_forward.13} parent=0 // pred_region
    %19 = vst [vmem:[#allocation2] sm:$0xff] 0.0
    %20 = vst [vmem:[#allocation2 + $0x8] sm:$0xff] 0.0
    %21 = vst [vmem:[#allocation2 + $0x10] sm:$0xff] 0.0
    %22 = vst [vmem:[#allocation2 + $0x18] sm:$0xff] 0.0
    %23 = vst [vmem:[#allocation2 + $0x20] sm:$0xff] 0.0
    %24 = vst [vmem:[#allocation2 + $0x28] sm:$0xff] 0.0
    %25 = vst [vmem:[#allocation2 + $0x30] sm:$0xff] 0.0
    %26 = vst [vmem:[#allocation2 + $0x38] sm:$0xff] 0.0
    %27 = vst [vmem:[#allocation2 + $0x40] sm:$0xff] 0.0
    %28 = vst [vmem:[#allocation2 + $0x48] sm:$0xff] 0.0
    %29 = vst [vmem:[#allocation2 + $0x50] sm:$0xff] 0.0
    %30 = vst [vmem:[#allocation2 + $0x58] sm:$0xff] 0.0
    %31 = vst [vmem:[#allocation2 + $0x60] sm:$0xff] 0.0
    %32 = vst [vmem:[#allocation2 + $0x68] sm:$0xff] 0.0
    %33 = vst [vmem:[#allocation2 + $0x70] sm:$0xff] 0.0
    %34 = vst [vmem:[#allocation2 + $0x78] sm:$0xff] 0.0
    %35 = vst [vmem:[#allocation2 + $0x80] sm:$0xff] 0.0
    %36 = vst [vmem:[#allocation2 + $0x88] sm:$0xff] 0.0
    %37 = vst [vmem:[#allocation2 + $0x90] sm:$0xff] 0.0
    %38 = vst [vmem:[#allocation2 + $0x98] sm:$0xff] 0.0
    %39 = vst [vmem:[#allocation2 + $0xa0] sm:$0xff] 0.0
    %40 = vst [vmem:[#allocation2 + $0xa8] sm:$0xff] 0.0
    %41 = vst [vmem:[#allocation2 + $0xb0] sm:$0xff] 0.0
    %42 = vst [vmem:[#allocation2 + $0xb8] sm:$0xff] 0.0
    %43 = vst [vmem:[#allocation2 + $0xc0] sm:$0xff] 0.0
    %44 = vst [vmem:[#allocation2 + $0xc8] sm:$0xff] 0.0
    %45 = vst [vmem:[#allocation2 + $0xd0] sm:$0xff] 0.0
    %46 = vst [vmem:[#allocation2 + $0xd8] sm:$0xff] 0.0
    %47 = vst [vmem:[#allocation2 + $0xe0] sm:$0xff] 0.0
    %48 = vst [vmem:[#allocation2 + $0xe8] sm:$0xff] 0.0
    %49 = vst [vmem:[#allocation2 + $0xf0] sm:$0xff] 0.0
    %50 = vst [vmem:[#allocation2 + $0xf8] sm:$0xff] 0.0
  $region17: #{stage0_forward.13} parent=0 // pred_fallthru
    _
  %v51 = vld [vmem:[#allocation2] sm:$0xff]
  %v52 = vld [vmem:[#allocation2 + $0x8] sm:$0xff]
  %v53 = vld [vmem:[#allocation2 + $0x10] sm:$0xff]
  %v54 = vld [vmem:[#allocation2 + $0x18] sm:$0xff]
  %v55 = vld [vmem:[#allocation2 + $0x20] sm:$0xff]
  %v56 = vld [vmem:[#allocation2 + $0x28] sm:$0xff]
  %v57 = vld [vmem:[#allocation2 + $0x30] sm:$0xff]
  %v58 = vld [vmem:[#allocation2 + $0x38] sm:$0xff]
  %v59 = vld [vmem:[#allocation2 + $0x40] sm:$0xff]
  %v60 = vld [vmem:[#allocation2 + $0x48] sm:$0xff]
  %v61 = vld [vmem:[#allocation2 + $0x50] sm:$0xff]
  %v62 = vld [vmem:[#allocation2 + $0x58] sm:$0xff]
  %v63 = vld [vmem:[#allocation2 + $0x60] sm:$0xff]
  %v64 = vld [vmem:[#allocation2 + $0x68] sm:$0xff]
  %v65 = vld [vmem:[#allocation2 + $0x70] sm:$0xff]
  %v66 = vld [vmem:[#allocation2 + $0x78] sm:$0xff]
  %v67 = vld [vmem:[#allocation2 + $0x80] sm:$0xff]
  %v68 = vld [vmem:[#allocation2 + $0x88] sm:$0xff]
  %v69 = vld [vmem:[#allocation2 + $0x90] sm:$0xff]
  %v70 = vld [vmem:[#allocation2 + $0x98] sm:$0xff]
  %v71 = vld [vmem:[#allocation2 + $0xa0] sm:$0xff]
  %v72 = vld [vmem:[#allocation2 + $0xa8] sm:$0xff]
  %v73 = vld [vmem:[#allocation2 + $0xb0] sm:$0xff]
  %v74 = vld [vmem:[#allocation2 + $0xb8] sm:$0xff]
  %v75 = vld [vmem:[#allocation2 + $0xc0] sm:$0xff]
  %v76 = vld [vmem:[#allocation2 + $0xc8] sm:$0xff]
  %v77 = vld [vmem:[#allocation2 + $0xd0] sm:$0xff]
  %v78 = vld [vmem:[#allocation2 + $0xd8] sm:$0xff]
  %v79 = vld [vmem:[#allocation2 + $0xe0] sm:$0xff]
  %v80 = vld [vmem:[#allocation2 + $0xe8] sm:$0xff]
  %v81 = vld [vmem:[#allocation2 + $0xf0] sm:$0xff]
  %v82 = vld [vmem:[#allocation2 + $0xf8] sm:$0xff]
  %v83 = vld [vmem:[%s0] sm:$0xf]
  %v84 = vld [vmem:[%s0 + $0x4] sm:$0xf]
  %v85 = vld [vmem:[%s0 + $0x8] sm:$0xf]
  %v86 = vld [vmem:[%s0 + $0xc] sm:$0xf]
  %v87 = vld [vmem:[%s0 + $0x10] sm:$0xf]
  %v88 = vld [vmem:[%s0 + $0x14] sm:$0xf]
  %v89 = vld [vmem:[%s0 + $0x18] sm:$0xf]
  %v90 = vld [vmem:[%s0 + $0x1c] sm:$0xf]
  %v91 = vld [vmem:[%s0 + $0x20] sm:$0xf]
  %v92 = vld [vmem:[%s0 + $0x24] sm:$0xf]
  %v93 = vld [vmem:[%s0 + $0x28] sm:$0xf]
  %v94 = vld [vmem:[%s0 + $0x2c] sm:$0xf]
  %v95 = vld [vmem:[%s0 + $0x30] sm:$0xf]
  %v96 = vld [vmem:[%s0 + $0x34] sm:$0xf]
  %v97 = vld [vmem:[%s0 + $0x38] sm:$0xf]
  %v98 = vld [vmem:[%s0 + $0x3c] sm:$0xf]
  %v99 = vld [vmem:[%s1] sm:$0xff]
  %v100 = vld [vmem:[%s1 + $0x8] sm:$0xff]
  %v101 = vld [vmem:[%s1 + $0x10] sm:$0xff]
  %v102 = vld [vmem:[%s1 + $0x18] sm:$0xff]
  %v103 = vld [vmem:[%s1 + $0x20] sm:$0xff]
  %v104 = vld [vmem:[%s1 + $0x28] sm:$0xff]
  %v105 = vld [vmem:[%s1 + $0x30] sm:$0xff]
  %v106 = vld [vmem:[%s1 + $0x38] sm:$0xff]
  %v123 = vunpack.c.l.b16 %v83
  %v124 = vunpack.c.l.b16 %v84
  %v125 = vunpack.c.l.b16 %v85
  %v126 = vunpack.c.l.b16 %v86
  %v127 = vunpack.c.l.b16 %v87
  %v128 = vunpack.c.l.b16 %v88
  %v129 = vunpack.c.l.b16 %v89
  %v130 = vunpack.c.l.b16 %v90
  %v131 = vunpack.c.l.b16 %v91
  %v132 = vunpack.c.l.b16 %v92
  %v133 = vunpack.c.l.b16 %v93
  %v134 = vunpack.c.l.b16 %v94
  %v135 = vunpack.c.l.b16 %v95
  %v136 = vunpack.c.l.b16 %v96
  %v137 = vunpack.c.l.b16 %v97
  %v138 = vunpack.c.l.b16 %v98
  %v139 = vpack.c.b16 %v124, %v123
  %v140 = vpack.c.b16 %v126, %v125
  %v141 = vpack.c.b16 %v128, %v127
  %v142 = vpack.c.b16 %v130, %v129
  %v143 = vpack.c.b16 %v132, %v131
  %v144 = vpack.c.b16 %v134, %v133
  %v145 = vpack.c.b16 %v136, %v135
  %v146 = vpack.c.b16 %v138, %v137
  %v155 = vunpack.c.l.b16 %v99
  %v156 = vunpack.c.h.b16 %v99
  %v157 = vunpack.c.l.b16 %v100
  %v158 = vunpack.c.h.b16 %v100
  %v159 = vunpack.c.l.b16 %v101
  %v160 = vunpack.c.h.b16 %v101
  %v161 = vunpack.c.l.b16 %v102
  %v162 = vunpack.c.h.b16 %v102
  %v163 = vunpack.c.l.b16 %v103
  %v164 = vunpack.c.h.b16 %v103
  %v165 = vunpack.c.l.b16 %v104
  %v166 = vunpack.c.h.b16 %v104
  %v167 = vunpack.c.l.b16 %v105
  %v168 = vunpack.c.h.b16 %v105
  %v169 = vunpack.c.l.b16 %v106
  %v170 = vunpack.c.h.b16 %v106
  %v171 = vpack.c.b16 %v157, %v155
  %v172 = vpack.c.b16 %v158, %v156
  %v173 = vpack.c.b16 %v161, %v159
  %v174 = vpack.c.b16 %v162, %v160
  %v175 = vpack.c.b16 %v165, %v163
  %v176 = vpack.c.b16 %v166, %v164
  %v177 = vpack.c.b16 %v169, %v167
  %v178 = vpack.c.b16 %v170, %v168
  %vm187 = vcmask 523264
  %v189 = vsel %vm187, %v139, 0
  %v192 = vsel %vm187, %v140, 0
  %v195 = vsel %vm187, %v141, 0
  %v198 = vsel %vm187, %v142, 0
  %v201 = vsel %vm187, %v143, 0
  %v204 = vsel %vm187, %v144, 0
  %v207 = vsel %vm187, %v145, 0
  %v210 = vsel %vm187, %v146, 0
  %212 = vmatprep.subr.bf16.mxu0 %v172
  %213 = vmatpush1.bf16.msra.mxu0 %v171
  %214 = vmatprep.subr.bf16.mxu0 %v174
  %215 = vmatpush1.bf16.msra.mxu0 %v173
  %216 = vmatprep.subr.bf16.mxu0 %v176
  %217 = vmatpush1.bf16.msra.mxu0 %v175
  %218 = vmatprep.subr.bf16.mxu0 %v178
  %219 = vmatpush1.bf16.msra.mxu0 %v177
  %220 = vmatprep.subr.bf16.mxu0 0
  %221 = vmatpush1.bf16.msra.mxu0 0
  %222 = vmatprep.subr.bf16.mxu0 0
  %223 = vmatpush1.bf16.msra.mxu0 0
  %224 = vmatprep.subr.bf16.mxu0 0
  %225 = vmatpush1.bf16.msra.mxu0 0
  %226 = vmatprep.subr.bf16.mxu0 0
  %227 = vmatpush1.bf16.msra.mxu0 0
  %228 = vmatprep.subr.bf16.mxu0 0
  %229 = vmatpush1.bf16.msra.mxu0 0
  %230 = vmatprep.subr.bf16.mxu0 0
  %231 = vmatpush1.bf16.msra.mxu0 0
  %232 = vmatprep.subr.bf16.mxu0 0
  %233 = vmatpush1.bf16.msra.mxu0 0
  %234 = vmatprep.subr.bf16.mxu0 0
  %235 = vmatpush1.bf16.msra.mxu0 0
  %236 = vmatprep.subr.bf16.mxu0 0
  %237 = vmatpush1.bf16.msra.mxu0 0
  %238 = vmatprep.subr.bf16.mxu0 0
  %239 = vmatpush1.bf16.msra.mxu0 0
  %240 = vmatprep.subr.bf16.mxu0 0
  %241 = vmatpush1.bf16.msra.mxu0 0
  %242 = vmatprep.subr.bf16.mxu0 0
  %243 = vmatpush1.bf16.msra.mxu0 0
  %244 = vmatprep.mubr.bf16.mxu0 0
  %245 = vmatmul.mubr.bf16.gmra.mrb[0].mxu0 %v189
  %v246 = vpop.f32.mrb[0].mxu0
  %v247 = vadd.f32 0.0, %v246
  %v248 = vpop.f32.mrb[0].mxu0
  %v249 = vadd.f32 0.0, %v248
  %v250 = vpop.f32.mrb[0].mxu0
  %v251 = vadd.f32 0.0, %v250
  %v252 = vpop.f32.mrb[0].mxu0
  %v253 = vadd.f32 0.0, %v252
  %254 = vmatprep.mubr.bf16.mxu0 0
  %255 = vmatmul.mubr.bf16.gmra.mrb[0].mxu0 %v192
  %v256 = vpop.f32.mrb[0].mxu0
  %v257 = vadd.f32 0.0, %v256
  %v258 = vpop.f32.mrb[0].mxu0
  %v259 = vadd.f32 0.0, %v258
  %v260 = vpop.f32.mrb[0].mxu0
  %v261 = vadd.f32 0.0, %v260
  %v262 = vpop.f32.mrb[0].mxu0
  %v263 = vadd.f32 0.0, %v262
  %264 = vmatprep.mubr.bf16.mxu0 0
  %265 = vmatmul.mubr.bf16.gmra.mrb[0].mxu0 %v195
  %v266 = vpop.f32.mrb[0].mxu0
  %v267 = vadd.f32 0.0, %v266
  %v268 = vpop.f32.mrb[0].mxu0
  %v269 = vadd.f32 0.0, %v268
  %v270 = vpop.f32.mrb[0].mxu0
  %v271 = vadd.f32 0.0, %v270
  %v272 = vpop.f32.mrb[0].mxu0
  %v273 = vadd.f32 0.0, %v272
  %274 = vmatprep.mubr.bf16.mxu0 0
  %275 = vmatmul.mubr.bf16.gmra.mrb[0].mxu0 %v198
  %v276 = vpop.f32.mrb[0].mxu0
  %v277 = vadd.f32 0.0, %v276
  %v278 = vpop.f32.mrb[0].mxu0
  %v279 = vadd.f32 0.0, %v278
  %v280 = vpop.f32.mrb[0].mxu0
  %v281 = vadd.f32 0.0, %v280
  %v282 = vpop.f32.mrb[0].mxu0
  %v283 = vadd.f32 0.0, %v282
  %284 = vmatprep.mubr.bf16.mxu0 0
  %285 = vmatmul.mubr.bf16.gmra.mrb[0].mxu0 %v201
  %v286 = vpop.f32.mrb[0].mxu0
  %v287 = vadd.f32 0.0, %v286
  %v288 = vpop.f32.mrb[0].mxu0
  %v289 = vadd.f32 0.0, %v288
  %v290 = vpop.f32.mrb[0].mxu0
  %v291 = vadd.f32 0.0, %v290
  %v292 = vpop.f32.mrb[0].mxu0
  %v293 = vadd.f32 0.0, %v292
  %294 = vmatprep.mubr.bf16.mxu0 0
  %295 = vmatmul.mubr.bf16.gmra.mrb[0].mxu0 %v204
  %v296 = vpop.f32.mrb[0].mxu0
  %v297 = vadd.f32 0.0, %v296
  %v298 = vpop.f32.mrb[0].mxu0
  %v299 = vadd.f32 0.0, %v298
  %v300 = vpop.f32.mrb[0].mxu0
  %v301 = vadd.f32 0.0, %v300
  %v302 = vpop.f32.mrb[0].mxu0
  %v303 = vadd.f32 0.0, %v302
  %304 = vmatprep.mubr.bf16.mxu0 0
  %305 = vmatmul.mubr.bf16.gmra.mrb[0].mxu0 %v207
  %v306 = vpop.f32.mrb[0].mxu0
  %v307 = vadd.f32 0.0, %v306
  %v308 = vpop.f32.mrb[0].mxu0
  %v309 = vadd.f32 0.0, %v308
  %v310 = vpop.f32.mrb[0].mxu0
  %v311 = vadd.f32 0.0, %v310
  %v312 = vpop.f32.mrb[0].mxu0
  %v313 = vadd.f32 0.0, %v312
  %314 = vmatprep.mubr.bf16.mxu0 0
  %315 = vmatmul.mubr.bf16.gmra.mrb[0].mxu0 %v210
  %v316 = vpop.f32.mrb[0].mxu0
  %v317 = vadd.f32 0.0, %v316
  %v318 = vpop.f32.mrb[0].mxu0
  %v319 = vadd.f32 0.0, %v318
  %v320 = vpop.f32.mrb[0].mxu0
  %v321 = vadd.f32 0.0, %v320
  %v322 = vpop.f32.mrb[0].mxu0
  %v323 = vadd.f32 0.0, %v322
  %324 = vdwg.mxu0
  %v325 = vadd.f32 %v51, %v247
  %v326 = vadd.f32 %v52, %v249
  %v327 = vadd.f32 %v53, %v251
  %v328 = vadd.f32 %v54, %v253
  %v329 = vadd.f32 %v55, %v257
  %v330 = vadd.f32 %v56, %v259
  %v331 = vadd.f32 %v57, %v261
  %v332 = vadd.f32 %v58, %v263
  %v333 = vadd.f32 %v59, %v267
  %v334 = vadd.f32 %v60, %v269
  %v335 = vadd.f32 %v61, %v271
  %v336 = vadd.f32 %v62, %v273
  %v337 = vadd.f32 %v63, %v277
  %v338 = vadd.f32 %v64, %v279
  %v339 = vadd.f32 %v65, %v281
  %v340 = vadd.f32 %v66, %v283
  %v341 = vadd.f32 %v67, %v287
  %v342 = vadd.f32 %v68, %v289
  %v343 = vadd.f32 %v69, %v291
  %v344 = vadd.f32 %v70, %v293
  %v345 = vadd.f32 %v71, %v297
  %v346 = vadd.f32 %v72, %v299
  %v347 = vadd.f32 %v73, %v301
  %v348 = vadd.f32 %v74, %v303
  %v349 = vadd.f32 %v75, %v307
  %v350 = vadd.f32 %v76, %v309
  %v351 = vadd.f32 %v77, %v311
  %v352 = vadd.f32 %v78, %v313
  %v353 = vadd.f32 %v79, %v317
  %v354 = vadd.f32 %v80, %v319
  %v355 = vadd.f32 %v81, %v321
  %v356 = vadd.f32 %v82, %v323
  %357 = vst [vmem:[#allocation2] sm:$0xff] %v325
  %358 = vst [vmem:[#allocation2 + $0x8] sm:$0xff] %v326
  %359 = vst [vmem:[#allocation2 + $0x10] sm:$0xff] %v327
  %360 = vst [vmem:[#allocation2 + $0x18] sm:$0xff] %v328
  %361 = vst [vmem:[#allocation2 + $0x20] sm:$0xff] %v329
  %362 = vst [vmem:[#allocation2 + $0x28] sm:$0xff] %v330
  %363 = vst [vmem:[#allocation2 + $0x30] sm:$0xff] %v331
  %364 = vst [vmem:[#allocation2 + $0x38] sm:$0xff] %v332
  %365 = vst [vmem:[#allocation2 + $0x40] sm:$0xff] %v333
  %366 = vst [vmem:[#allocation2 + $0x48] sm:$0xff] %v334
  %367 = vst [vmem:[#allocation2 + $0x50] sm:$0xff] %v335
  %368 = vst [vmem:[#allocation2 + $0x58] sm:$0xff] %v336
  %369 = vst [vmem:[#allocation2 + $0x60] sm:$0xff] %v337
  %370 = vst [vmem:[#allocation2 + $0x68] sm:$0xff] %v338
  %371 = vst [vmem:[#allocation2 + $0x70] sm:$0xff] %v339
  %372 = vst [vmem:[#allocation2 + $0x78] sm:$0xff] %v340
  %373 = vst [vmem:[#allocation2 + $0x80] sm:$0xff] %v341
  %374 = vst [vmem:[#allocation2 + $0x88] sm:$0xff] %v342
  %375 = vst [vmem:[#allocation2 + $0x90] sm:$0xff] %v343
  %376 = vst [vmem:[#allocation2 + $0x98] sm:$0xff] %v344
  %377 = vst [vmem:[#allocation2 + $0xa0] sm:$0xff] %v345
  %378 = vst [vmem:[#allocation2 + $0xa8] sm:$0xff] %v346
  %379 = vst [vmem:[#allocation2 + $0xb0] sm:$0xff] %v347
  %380 = vst [vmem:[#allocation2 + $0xb8] sm:$0xff] %v348
  %381 = vst [vmem:[#allocation2 + $0xc0] sm:$0xff] %v349
  %382 = vst [vmem:[#allocation2 + $0xc8] sm:$0xff] %v350
  %383 = vst [vmem:[#allocation2 + $0xd0] sm:$0xff] %v351
  %384 = vst [vmem:[#allocation2 + $0xd8] sm:$0xff] %v352
  %385 = vst [vmem:[#allocation2 + $0xe0] sm:$0xff] %v353
  %386 = vst [vmem:[#allocation2 + $0xe8] sm:$0xff] %v354
  %387 = vst [vmem:[#allocation2 + $0xf0] sm:$0xff] %v355
  %388 = vst [vmem:[#allocation2 + $0xf8] sm:$0xff] %v356
  // Predicated region
  $region18: #{stage0_forward.13} parent=0 // pred_check
    %p389 = pneg %p15
  $region19: #{stage0_forward.13} parent=0 // pred_check_branch
    %391 = sbr.rel (%p389) target = $region21
  $region20: #{stage0_forward.13} parent=0 // pred_region
    %v392 = vld [vmem:[#allocation2] sm:$0xff]
    %v393 = vld [vmem:[#allocation2 + $0x8] sm:$0xff]
    %v394 = vld [vmem:[#allocation2 + $0x10] sm:$0xff]
    %v395 = vld [vmem:[#allocation2 + $0x18] sm:$0xff]
    %v396 = vld [vmem:[#allocation2 + $0x20] sm:$0xff]
    %v397 = vld [vmem:[#allocation2 + $0x28] sm:$0xff]
    %v398 = vld [vmem:[#allocation2 + $0x30] sm:$0xff]
    %v399 = vld [vmem:[#allocation2 + $0x38] sm:$0xff]
    %v400 = vld [vmem:[#allocation2 + $0x40] sm:$0xff]
    %v401 = vld [vmem:[#allocation2 + $0x48] sm:$0xff]
    %v402 = vld [vmem:[#allocation2 + $0x50] sm:$0xff]
    %v403 = vld [vmem:[#allocation2 + $0x58] sm:$0xff]
    %v404 = vld [vmem:[#allocation2 + $0x60] sm:$0xff]
    %v405 = vld [vmem:[#allocation2 + $0x68] sm:$0xff]
    %v406 = vld [vmem:[#allocation2 + $0x70] sm:$0xff]
    %v407 = vld [vmem:[#allocation2 + $0x78] sm:$0xff]
    %v408 = vld [vmem:[#allocation2 + $0x80] sm:$0xff]
    %v409 = vld [vmem:[#allocation2 + $0x88] sm:$0xff]
    %v410 = vld [vmem:[#allocation2 + $0x90] sm:$0xff]
    %v411 = vld [vmem:[#allocation2 + $0x98] sm:$0xff]
    %v412 = vld [vmem:[#allocation2 + $0xa0] sm:$0xff]
    %v413 = vld [vmem:[#allocation2 + $0xa8] sm:$0xff]
    %v414 = vld [vmem:[#allocation2 + $0xb0] sm:$0xff]
    %v415 = vld [vmem:[#allocation2 + $0xb8] sm:$0xff]
    %v416 = vld [vmem:[#allocation2 + $0xc0] sm:$0xff]
    %v417 = vld [vmem:[#allocation2 + $0xc8] sm:$0xff]
    %v418 = vld [vmem:[#allocation2 + $0xd0] sm:$0xff]
    %v419 = vld [vmem:[#allocation2 + $0xd8] sm:$0xff]
    %v420 = vld [vmem:[#allocation2 + $0xe0] sm:$0xff]
    %v421 = vld [vmem:[#allocation2 + $0xe8] sm:$0xff]
    %v422 = vld [vmem:[#allocation2 + $0xf0] sm:$0xff]
    %v423 = vld [vmem:[#allocation2 + $0xf8] sm:$0xff]
    %v424 = vld [vmem:[%s2] sm:$0x3]
    %v426 = vlaneseq
    %v427 = vshrl.u32 %v426, 7
    %v428 = vsub.s32 0, %v427
    %v429 = vrot.slane %v424, %v428
    %v430 = vlaneseq
    %v431 = vshrl.u32 %v430, 7
    %v432 = vsub.s32 1, %v431
    %v433 = vrot.slane %v424, %v432
    %v436 = vadd.f32 %v392, %v429
    %v437 = vadd.f32 %v393, %v433
    %v438 = vadd.f32 %v394, %v429
    %v439 = vadd.f32 %v395, %v433
    %v440 = vadd.f32 %v396, %v429
    %v441 = vadd.f32 %v397, %v433
    %v442 = vadd.f32 %v398, %v429
    %v443 = vadd.f32 %v399, %v433
    %v444 = vadd.f32 %v400, %v429
    %v445 = vadd.f32 %v401, %v433
    %v446 = vadd.f32 %v402, %v429
    %v447 = vadd.f32 %v403, %v433
    %v448 = vadd.f32 %v404, %v429
    %v449 = vadd.f32 %v405, %v433
    %v450 = vadd.f32 %v406, %v429
    %v451 = vadd.f32 %v407, %v433
    %v452 = vadd.f32 %v408, %v429
    %v453 = vadd.f32 %v409, %v433
    %v454 = vadd.f32 %v410, %v429
    %v455 = vadd.f32 %v411, %v433
    %v456 = vadd.f32 %v412, %v429
    %v457 = vadd.f32 %v413, %v433
    %v458 = vadd.f32 %v414, %v429
    %v459 = vadd.f32 %v415, %v433
    %v460 = vadd.f32 %v416, %v429
    %v461 = vadd.f32 %v417, %v433
    %v462 = vadd.f32 %v418, %v429
    %v463 = vadd.f32 %v419, %v433
    %v464 = vadd.f32 %v420, %v429
    %v465 = vadd.f32 %v421, %v433
    %v466 = vadd.f32 %v422, %v429
    %v467 = vadd.f32 %v423, %v433
    %v468 = vpack.c.bf16 %v438, %v436
    %v469 = vpack.c.bf16 %v439, %v437
    %v470 = vpack.c.bf16 %v442, %v440
    %v471 = vpack.c.bf16 %v443, %v441
    %v472 = vpack.c.bf16 %v446, %v444
    %v473 = vpack.c.bf16 %v447, %v445
    %v474 = vpack.c.bf16 %v450, %v448
    %v475 = vpack.c.bf16 %v451, %v449
    %v476 = vpack.c.bf16 %v454, %v452
    %v477 = vpack.c.bf16 %v455, %v453
    %v478 = vpack.c.bf16 %v458, %v456
    %v479 = vpack.c.bf16 %v459, %v457
    %v480 = vpack.c.bf16 %v462, %v460
    %v481 = vpack.c.bf16 %v463, %v461
    %v482 = vpack.c.bf16 %v466, %v464
    %v483 = vpack.c.bf16 %v467, %v465
    %v500 = vunpack.c.l.b16 %v468
    %v501 = vunpack.c.l.b16 %v469
    %v502 = vunpack.c.h.b16 %v468
    %v503 = vunpack.c.h.b16 %v469
    %v504 = vunpack.c.l.b16 %v470
    %v505 = vunpack.c.l.b16 %v471
    %v506 = vunpack.c.h.b16 %v470
    %v507 = vunpack.c.h.b16 %v471
    %v508 = vunpack.c.l.b16 %v472
    %v509 = vunpack.c.l.b16 %v473
    %v510 = vunpack.c.h.b16 %v472
    %v511 = vunpack.c.h.b16 %v473
    %v512 = vunpack.c.l.b16 %v474
    %v513 = vunpack.c.l.b16 %v475
    %v514 = vunpack.c.h.b16 %v474
    %v515 = vunpack.c.h.b16 %v475
    %v516 = vunpack.c.l.b16 %v476
    %v517 = vunpack.c.l.b16 %v477
    %v518 = vunpack.c.h.b16 %v476
    %v519 = vunpack.c.h.b16 %v477
    %v520 = vunpack.c.l.b16 %v478
    %v521 = vunpack.c.l.b16 %v479
    %v522 = vunpack.c.h.b16 %v478
    %v523 = vunpack.c.h.b16 %v479
    %v524 = vunpack.c.l.b16 %v480
    %v525 = vunpack.c.l.b16 %v481
    %v526 = vunpack.c.h.b16 %v480
    %v527 = vunpack.c.h.b16 %v481
    %v528 = vunpack.c.l.b16 %v482
    %v529 = vunpack.c.l.b16 %v483
    %v530 = vunpack.c.h.b16 %v482
    %v531 = vunpack.c.h.b16 %v483
    %v532 = vpack.c.b16 %v501, %v500
    %v533 = vpack.c.b16 %v503, %v502
    %v534 = vpack.c.b16 %v505, %v504
    %v535 = vpack.c.b16 %v507, %v506
    %v536 = vpack.c.b16 %v509, %v508
    %v537 = vpack.c.b16 %v511, %v510
    %v538 = vpack.c.b16 %v513, %v512
    %v539 = vpack.c.b16 %v515, %v514
    %v540 = vpack.c.b16 %v517, %v516
    %v541 = vpack.c.b16 %v519, %v518
    %v542 = vpack.c.b16 %v521, %v520
    %v543 = vpack.c.b16 %v523, %v522
    %v544 = vpack.c.b16 %v525, %v524
    %v545 = vpack.c.b16 %v527, %v526
    %v546 = vpack.c.b16 %v529, %v528
    %v547 = vpack.c.b16 %v531, %v530
    %564 = vst [vmem:[%s3] sm:$0xff] %v532
    %565 = vst [vmem:[%s3 + $0x8] sm:$0xff] %v533
    %566 = vst [vmem:[%s3 + $0x10] sm:$0xff] %v534
    %567 = vst [vmem:[%s3 + $0x18] sm:$0xff] %v535
    %568 = vst [vmem:[%s3 + $0x20] sm:$0xff] %v536
    %569 = vst [vmem:[%s3 + $0x28] sm:$0xff] %v537
    %570 = vst [vmem:[%s3 + $0x30] sm:$0xff] %v538
    %571 = vst [vmem:[%s3 + $0x38] sm:$0xff] %v539
    %572 = vst [vmem:[%s3 + $0x40] sm:$0xff] %v540
    %573 = vst [vmem:[%s3 + $0x48] sm:$0xff] %v541
    %574 = vst [vmem:[%s3 + $0x50] sm:$0xff] %v542
    %575 = vst [vmem:[%s3 + $0x58] sm:$0xff] %v543
    %576 = vst [vmem:[%s3 + $0x60] sm:$0xff] %v544
    %577 = vst [vmem:[%s3 + $0x68] sm:$0xff] %v545
    %578 = vst [vmem:[%s3 + $0x70] sm:$0xff] %v546
    %579 = vst [vmem:[%s3 + $0x78] sm:$0xff] %v547
  $region21: #{stage0_forward.13} parent=0 // pred_fallthru
    _
  // Predicated region
  $region22: #{stage0_forward.13} parent=0 // pred_check
    _
  $region23: #{stage0_forward.13} parent=0 // pred_check_branch
    %581 = sbr.rel (0) target = $region25
  $region24: #{stage0_forward.13} parent=0 // pred_region
    _
  $region25: #{stage0_forward.13} parent=0 // pred_fallthru
    _
  // Predicated region
  $region26: #{stage0_forward.13} parent=0 // pred_check
    _
  $region27: #{stage0_forward.13} parent=0 // pred_check_branch
    %583 = sbr.rel (0) target = $region29
  $region28: #{stage0_forward.13} parent=0 // pred_region
    _
  $region29: #{stage0_forward.13} parent=0 // pred_fallthru
    _

// kernel: stage0_forward.14
$region0: #{stage0_forward.14}
  #allocation0 [shape = 'u32[]', space=smem, size = 0x4, offset = 0x4, fixed_abs, tag = 'smem constant byte address 0x4 - core index']
  #allocation1 [shape = 'u32[144,128]{1,0:T(1,128)}', space=vmem, size = 0x12000, scoped, tag = 'internal scratch']
  #allocation2 [shape = 'f32[128,256]{1,0:T(8,128)}', space=vmem, size = 0x20000, scoped, tag = 'scratch operand']
  %s0 = inlined_call_operand.vmem [shape: bf16[128,64], index: 0, kind: input, shape index: {}]
  %s1 = inlined_call_operand.vmem [shape: bf16[64,256], index: 1, kind: input, shape index: {}]
  %s2 = inlined_call_operand.vmem [shape: f32[1,256], index: 2, kind: input, shape index: {}]
  %s3 = inlined_call_operand.vmem [shape: bf16[128,256], index: 3, kind: input, shape index: {}]
  %s4 = inlined_call_operand.vmem [shape: bf16[128,256], index: 4, kind: output, shape index: {}]
  %s5 = sld [smem:[#allocation0]]
  $region34: #{stage0_forward.14} parent=0
    _
  %s7 = ssub.s32 1, %s5
  %s8 = scalar_select 0, %s7, %s5
  // Predicated region
  $region2: #{stage0_forward.14} parent=0 // pred_check
    _
  $region3: #{stage0_forward.14} parent=0 // pred_check_branch
    %10 = sbr.rel (0) target = $region5
  $region4: #{stage0_forward.14} parent=0 // pred_region
    _
  $region5: #{stage0_forward.14} parent=0 // pred_fallthru
    _
  // Predicated region
  $region6: #{stage0_forward.14} parent=0 // pred_check
    _
  $region7: #{stage0_forward.14} parent=0 // pred_check_branch
    %12 = sbr.rel (0) target = $region9
  $region8: #{stage0_forward.14} parent=0 // pred_region
    _
  $region9: #{stage0_forward.14} parent=0 // pred_fallthru
    _
  // Predicated region
  $region10: #{stage0_forward.14} parent=0 // pred_check
    _
  $region11: #{stage0_forward.14} parent=0 // pred_check_branch
    %14 = sbr.rel (0) target = $region13
  $region12: #{stage0_forward.14} parent=0 // pred_region
    _
  $region13: #{stage0_forward.14} parent=0 // pred_fallthru
    _
  // Predicated region
  $region14: #{stage0_forward.14} parent=0 // pred_check
    _
  $region15: #{stage0_forward.14} parent=0 // pred_check_branch
    %16 = sbr.rel (0) target = $region17
  $region16: #{stage0_forward.14} parent=0 // pred_region
    _
  $region17: #{stage0_forward.14} parent=0 // pred_fallthru
    _
  %p18 = scmp.eq.s32.totalorder 0, 0
  // Predicated region
  $region18: #{stage0_forward.14} parent=0 // pred_check
    %p19 = pneg %p18
  $region19: #{stage0_forward.14} parent=0 // pred_check_branch
    %21 = sbr.rel (%p19) target = $region21
  $region20: #{stage0_forward.14} parent=0 // pred_region
    %22 = vst [vmem:[#allocation2] sm:$0xff] 0.0
    %23 = vst [vmem:[#allocation2 + $0x8] sm:$0xff] 0.0
    %24 = vst [vmem:[#allocation2 + $0x10] sm:$0xff] 0.0
    %25 = vst [vmem:[#allocation2 + $0x18] sm:$0xff] 0.0
    %26 = vst [vmem:[#allocation2 + $0x20] sm:$0xff] 0.0
    %27 = vst [vmem:[#allocation2 + $0x28] sm:$0xff] 0.0
    %28 = vst [vmem:[#allocation2 + $0x30] sm:$0xff] 0.0
    %29 = vst [vmem:[#allocation2 + $0x38] sm:$0xff] 0.0
    %30 = vst [vmem:[#allocation2 + $0x40] sm:$0xff] 0.0
    %31 = vst [vmem:[#allocation2 + $0x48] sm:$0xff] 0.0
    %32 = vst [vmem:[#allocation2 + $0x50] sm:$0xff] 0.0
    %33 = vst [vmem:[#allocation2 + $0x58] sm:$0xff] 0.0
    %34 = vst [vmem:[#allocation2 + $0x60] sm:$0xff] 0.0
    %35 = vst [vmem:[#allocation2 + $0x68] sm:$0xff] 0.0
    %36 = vst [vmem:[#allocation2 + $0x70] sm:$0xff] 0.0
    %37 = vst [vmem:[#allocation2 + $0x78] sm:$0xff] 0.0
    %38 = vst [vmem:[#allocation2 + $0x80] sm:$0xff] 0.0
    %39 = vst [vmem:[#allocation2 + $0x88] sm:$0xff] 0.0
    %40 = vst [vmem:[#allocation2 + $0x90] sm:$0xff] 0.0
    %41 = vst [vmem:[#allocation2 + $0x98] sm:$0xff] 0.0
    %42 = vst [vmem:[#allocation2 + $0xa0] sm:$0xff] 0.0
    %43 = vst [vmem:[#allocation2 + $0xa8] sm:$0xff] 0.0
    %44 = vst [vmem:[#allocation2 + $0xb0] sm:$0xff] 0.0
    %45 = vst [vmem:[#allocation2 + $0xb8] sm:$0xff] 0.0
    %46 = vst [vmem:[#allocation2 + $0xc0] sm:$0xff] 0.0
    %47 = vst [vmem:[#allocation2 + $0xc8] sm:$0xff] 0.0
    %48 = vst [vmem:[#allocation2 + $0xd0] sm:$0xff] 0.0
    %49 = vst [vmem:[#allocation2 + $0xd8] sm:$0xff] 0.0
    %50 = vst [vmem:[#allocation2 + $0xe0] sm:$0xff] 0.0
    %51 = vst [vmem:[#allocation2 + $0xe8] sm:$0xff] 0.0
    %52 = vst [vmem:[#allocation2 + $0xf0] sm:$0xff] 0.0
    %53 = vst [vmem:[#allocation2 + $0xf8] sm:$0xff] 0.0
  $region21: #{stage0_forward.14} parent=0 // pred_fallthru
    _
  %v54 = vld [vmem:[#allocation2] sm:$0xff]
  %v55 = vld [vmem:[#allocation2 + $0x8] sm:$0xff]
  %v56 = vld [vmem:[#allocation2 + $0x10] sm:$0xff]
  %v57 = vld [vmem:[#allocation2 + $0x18] sm:$0xff]
  %v58 = vld [vmem:[#allocation2 + $0x20] sm:$0xff]
  %v59 = vld [vmem:[#allocation2 + $0x28] sm:$0xff]
  %v60 = vld [vmem:[#allocation2 + $0x30] sm:$0xff]
  %v61 = vld [vmem:[#allocation2 + $0x38] sm:$0xff]
  %v62 = vld [vmem:[#allocation2 + $0x40] sm:$0xff]
  %v63 = vld [vmem:[#allocation2 + $0x48] sm:$0xff]
  %v64 = vld [vmem:[#allocation2 + $0x50] sm:$0xff]
  %v65 = vld [vmem:[#allocation2 + $0x58] sm:$0xff]
  %v66 = vld [vmem:[#allocation2 + $0x60] sm:$0xff]
  %v67 = vld [vmem:[#allocation2 + $0x68] sm:$0xff]
  %v68 = vld [vmem:[#allocation2 + $0x70] sm:$0xff]
  %v69 = vld [vmem:[#allocation2 + $0x78] sm:$0xff]
  %v70 = vld [vmem:[#allocation2 + $0x80] sm:$0xff]
  %v71 = vld [vmem:[#allocation2 + $0x88] sm:$0xff]
  %v72 = vld [vmem:[#allocation2 + $0x90] sm:$0xff]
  %v73 = vld [vmem:[#allocation2 + $0x98] sm:$0xff]
  %v74 = vld [vmem:[#allocation2 + $0xa0] sm:$0xff]
  %v75 = vld [vmem:[#allocation2 + $0xa8] sm:$0xff]
  %v76 = vld [vmem:[#allocation2 + $0xb0] sm:$0xff]
  %v77 = vld [vmem:[#allocation2 + $0xb8] sm:$0xff]
  %v78 = vld [vmem:[#allocation2 + $0xc0] sm:$0xff]
  %v79 = vld [vmem:[#allocation2 + $0xc8] sm:$0xff]
  %v80 = vld [vmem:[#allocation2 + $0xd0] sm:$0xff]
  %v81 = vld [vmem:[#allocation2 + $0xd8] sm:$0xff]
  %v82 = vld [vmem:[#allocation2 + $0xe0] sm:$0xff]
  %v83 = vld [vmem:[#allocation2 + $0xe8] sm:$0xff]
  %v84 = vld [vmem:[#allocation2 + $0xf0] sm:$0xff]
  %v85 = vld [vmem:[#allocation2 + $0xf8] sm:$0xff]
  %v86 = vld [vmem:[%s0] sm:$0xf]
  %v87 = vld [vmem:[%s0 + $0x4] sm:$0xf]
  %v88 = vld [vmem:[%s0 + $0x8] sm:$0xf]
  %v89 = vld [vmem:[%s0 + $0xc] sm:$0xf]
  %v90 = vld [vmem:[%s0 + $0x10] sm:$0xf]
  %v91 = vld [vmem:[%s0 + $0x14] sm:$0xf]
  %v92 = vld [vmem:[%s0 + $0x18] sm:$0xf]
  %v93 = vld [vmem:[%s0 + $0x1c] sm:$0xf]
  %v94 = vld [vmem:[%s0 + $0x20] sm:$0xf]
  %v95 = vld [vmem:[%s0 + $0x24] sm:$0xf]
  %v96 = vld [vmem:[%s0 + $0x28] sm:$0xf]
  %v97 = vld [vmem:[%s0 + $0x2c] sm:$0xf]
  %v98 = vld [vmem:[%s0 + $0x30] sm:$0xf]
  %v99 = vld [vmem:[%s0 + $0x34] sm:$0xf]
  %v100 = vld [vmem:[%s0 + $0x38] sm:$0xf]
  %v101 = vld [vmem:[%s0 + $0x3c] sm:$0xf]
  %v102 = vld [vmem:[%s1] sm:$0xff]
  %v103 = vld [vmem:[%s1 + $0x8] sm:$0xff]
  %v104 = vld [vmem:[%s1 + $0x10] sm:$0xff]
  %v105 = vld [vmem:[%s1 + $0x18] sm:$0xff]
  %v106 = vld [vmem:[%s1 + $0x20] sm:$0xff]
  %v107 = vld [vmem:[%s1 + $0x28] sm:$0xff]
  %v108 = vld [vmem:[%s1 + $0x30] sm:$0xff]
  %v109 = vld [vmem:[%s1 + $0x38] sm:$0xff]
  %v126 = vunpack.c.l.b16 %v86
  %v127 = vunpack.c.l.b16 %v87
  %v128 = vunpack.c.l.b16 %v88
  %v129 = vunpack.c.l.b16 %v89
  %v130 = vunpack.c.l.b16 %v90
  %v131 = vunpack.c.l.b16 %v91
  %v132 = vunpack.c.l.b16 %v92
  %v133 = vunpack.c.l.b16 %v93
  %v134 = vunpack.c.l.b16 %v94
  %v135 = vunpack.c.l.b16 %v95
  %v136 = vunpack.c.l.b16 %v96
  %v137 = vunpack.c.l.b16 %v97
  %v138 = vunpack.c.l.b16 %v98
  %v139 = vunpack.c.l.b16 %v99
  %v140 = vunpack.c.l.b16 %v100
  %v141 = vunpack.c.l.b16 %v101
  %v142 = vpack.c.b16 %v127, %v126
  %v143 = vpack.c.b16 %v129, %v128
  %v144 = vpack.c.b16 %v131, %v130
  %v145 = vpack.c.b16 %v133, %v132
  %v146 = vpack.c.b16 %v135, %v134
  %v147 = vpack.c.b16 %v137, %v136
  %v148 = vpack.c.b16 %v139, %v138
  %v149 = vpack.c.b16 %v141, %v140
  %v158 = vunpack.c.l.b16 %v102
  %v159 = vunpack.c.h.b16 %v102
  %v160 = vunpack.c.l.b16 %v103
  %v161 = vunpack.c.h.b16 %v103
  %v162 = vunpack.c.l.b16 %v104
  %v163 = vunpack.c.h.b16 %v104
  %v164 = vunpack.c.l.b16 %v105
  %v165 = vunpack.c.h.b16 %v105
  %v166 = vunpack.c.l.b16 %v106
  %v167 = vunpack.c.h.b16 %v106
  %v168 = vunpack.c.l.b16 %v107
  %v169 = vunpack.c.h.b16 %v107
  %v170 = vunpack.c.l.b16 %v108
  %v171 = vunpack.c.h.b16 %v108
  %v172 = vunpack.c.l.b16 %v109
  %v173 = vunpack.c.h.b16 %v109
  %v174 = vpack.c.b16 %v160, %v158
  %v175 = vpack.c.b16 %v161, %v159
  %v176 = vpack.c.b16 %v164, %v162
  %v177 = vpack.c.b16 %v165, %v163
  %v178 = vpack.c.b16 %v168, %v166
  %v179 = vpack.c.b16 %v169, %v167
  %v180 = vpack.c.b16 %v172, %v170
  %v181 = vpack.c.b16 %v173, %v171
  %vm190 = vcmask 523264
  %v192 = vsel %vm190, %v142, 0
  %v195 = vsel %vm190, %v143, 0
  %v198 = vsel %vm190, %v144, 0
  %v201 = vsel %vm190, %v145, 0
  %v204 = vsel %vm190, %v146, 0
  %v207 = vsel %vm190, %v147, 0
  %v210 = vsel %vm190, %v148, 0
  %v213 = vsel %vm190, %v149, 0
  %215 = vmatprep.subr.bf16.mxu0 %v175
  %216 = vmatpush1.bf16.msra.mxu0 %v174
  %217 = vmatprep.subr.bf16.mxu0 %v177
  %218 = vmatpush1.bf16.msra.mxu0 %v176
  %219 = vmatprep.subr.bf16.mxu0 %v179
  %220 = vmatpush1.bf16.msra.mxu0 %v178
  %221 = vmatprep.subr.bf16.mxu0 %v181
  %222 = vmatpush1.bf16.msra.mxu0 %v180
  %223 = vmatprep.subr.bf16.mxu0 0
  %224 = vmatpush1.bf16.msra.mxu0 0
  %225 = vmatprep.subr.bf16.mxu0 0
  %226 = vmatpush1.bf16.msra.mxu0 0
  %227 = vmatprep.subr.bf16.mxu0 0
  %228 = vmatpush1.bf16.msra.mxu0 0
  %229 = vmatprep.subr.bf16.mxu0 0
  %230 = vmatpush1.bf16.msra.mxu0 0
  %231 = vmatprep.subr.bf16.mxu0 0
  %232 = vmatpush1.bf16.msra.mxu0 0
  %233 = vmatprep.subr.bf16.mxu0 0
  %234 = vmatpush1.bf16.msra.mxu0 0
  %235 = vmatprep.subr.bf16.mxu0 0
  %236 = vmatpush1.bf16.msra.mxu0 0
  %237 = vmatprep.subr.bf16.mxu0 0
  %238 = vmatpush1.bf16.msra.mxu0 0
  %239 = vmatprep.subr.bf16.mxu0 0
  %240 = vmatpush1.bf16.msra.mxu0 0
  %241 = vmatprep.subr.bf16.mxu0 0
  %242 = vmatpush1.bf16.msra.mxu0 0
  %243 = vmatprep.subr.bf16.mxu0 0
  %244 = vmatpush1.bf16.msra.mxu0 0
  %245 = vmatprep.subr.bf16.mxu0 0
  %246 = vmatpush1.bf16.msra.mxu0 0
  %247 = vmatprep.mubr.bf16.mxu0 0
  %248 = vmatmul.mubr.bf16.gmra.mrb[0].mxu0 %v192
  %v249 = vpop.f32.mrb[0].mxu0
  %v250 = vadd.f32 0.0, %v249
  %v251 = vpop.f32.mrb[0].mxu0
  %v252 = vadd.f32 0.0, %v251
  %v253 = vpop.f32.mrb[0].mxu0
  %v254 = vadd.f32 0.0, %v253
  %v255 = vpop.f32.mrb[0].mxu0
  %v256 = vadd.f32 0.0, %v255
  %257 = vmatprep.mubr.bf16.mxu0 0
  %258 = vmatmul.mubr.bf16.gmra.mrb[0].mxu0 %v195
  %v259 = vpop.f32.mrb[0].mxu0
  %v260 = vadd.f32 0.0, %v259
  %v261 = vpop.f32.mrb[0].mxu0
  %v262 = vadd.f32 0.0, %v261
  %v263 = vpop.f32.mrb[0].mxu0
  %v264 = vadd.f32 0.0, %v263
  %v265 = vpop.f32.mrb[0].mxu0
  %v266 = vadd.f32 0.0, %v265
  %267 = vmatprep.mubr.bf16.mxu0 0
  %268 = vmatmul.mubr.bf16.gmra.mrb[0].mxu0 %v198
  %v269 = vpop.f32.mrb[0].mxu0
  %v270 = vadd.f32 0.0, %v269
  %v271 = vpop.f32.mrb[0].mxu0
  %v272 = vadd.f32 0.0, %v271
  %v273 = vpop.f32.mrb[0].mxu0
  %v274 = vadd.f32 0.0, %v273
  %v275 = vpop.f32.mrb[0].mxu0
  %v276 = vadd.f32 0.0, %v275
  %277 = vmatprep.mubr.bf16.mxu0 0
  %278 = vmatmul.mubr.bf16.gmra.mrb[0].mxu0 %v201
  %v279 = vpop.f32.mrb[0].mxu0
  %v280 = vadd.f32 0.0, %v279
  %v281 = vpop.f32.mrb[0].mxu0
  %v282 = vadd.f32 0.0, %v281
  %v283 = vpop.f32.mrb[0].mxu0
  %v284 = vadd.f32 0.0, %v283
  %v285 = vpop.f32.mrb[0].mxu0
  %v286 = vadd.f32 0.0, %v285
  %287 = vmatprep.mubr.bf16.mxu0 0
  %288 = vmatmul.mubr.bf16.gmra.mrb[0].mxu0 %v204
  %v289 = vpop.f32.mrb[0].mxu0
  %v290 = vadd.f32 0.0, %v289
  %v291 = vpop.f32.mrb[0].mxu0
  %v292 = vadd.f32 0.0, %v291
  %v293 = vpop.f32.mrb[0].mxu0
  %v294 = vadd.f32 0.0, %v293
  %v295 = vpop.f32.mrb[0].mxu0
  %v296 = vadd.f32 0.0, %v295
  %297 = vmatprep.mubr.bf16.mxu0 0
  %298 = vmatmul.mubr.bf16.gmra.mrb[0].mxu0 %v207
  %v299 = vpop.f32.mrb[0].mxu0
  %v300 = vadd.f32 0.0, %v299
  %v301 = vpop.f32.mrb[0].mxu0
  %v302 = vadd.f32 0.0, %v301
  %v303 = vpop.f32.mrb[0].mxu0
  %v304 = vadd.f32 0.0, %v303
  %v305 = vpop.f32.mrb[0].mxu0
  %v306 = vadd.f32 0.0, %v305
  %307 = vmatprep.mubr.bf16.mxu0 0
  %308 = vmatmul.mubr.bf16.gmra.mrb[0].mxu0 %v210
  %v309 = vpop.f32.mrb[0].mxu0
  %v310 = vadd.f32 0.0, %v309
  %v311 = vpop.f32.mrb[0].mxu0
  %v312 = vadd.f32 0.0, %v311
  %v313 = vpop.f32.mrb[0].mxu0
  %v314 = vadd.f32 0.0, %v313
  %v315 = vpop.f32.mrb[0].mxu0
  %v316 = vadd.f32 0.0, %v315
  %317 = vmatprep.mubr.bf16.mxu0 0
  %318 = vmatmul.mubr.bf16.gmra.mrb[0].mxu0 %v213
  %v319 = vpop.f32.mrb[0].mxu0
  %v320 = vadd.f32 0.0, %v319
  %v321 = vpop.f32.mrb[0].mxu0
  %v322 = vadd.f32 0.0, %v321
  %v323 = vpop.f32.mrb[0].mxu0
  %v324 = vadd.f32 0.0, %v323
  %v325 = vpop.f32.mrb[0].mxu0
  %v326 = vadd.f32 0.0, %v325
  %327 = vdwg.mxu0
  %v328 = vadd.f32 %v54, %v250
  %v329 = vadd.f32 %v55, %v252
  %v330 = vadd.f32 %v56, %v254
  %v331 = vadd.f32 %v57, %v256
  %v332 = vadd.f32 %v58, %v260
  %v333 = vadd.f32 %v59, %v262
  %v334 = vadd.f32 %v60, %v264
  %v335 = vadd.f32 %v61, %v266
  %v336 = vadd.f32 %v62, %v270
  %v337 = vadd.f32 %v63, %v272
  %v338 = vadd.f32 %v64, %v274
  %v339 = vadd.f32 %v65, %v276
  %v340 = vadd.f32 %v66, %v280
  %v341 = vadd.f32 %v67, %v282
  %v342 = vadd.f32 %v68, %v284
  %v343 = vadd.f32 %v69, %v286
  %v344 = vadd.f32 %v70, %v290
  %v345 = vadd.f32 %v71, %v292
  %v346 = vadd.f32 %v72, %v294
  %v347 = vadd.f32 %v73, %v296
  %v348 = vadd.f32 %v74, %v300
  %v349 = vadd.f32 %v75, %v302
  %v350 = vadd.f32 %v76, %v304
  %v351 = vadd.f32 %v77, %v306
  %v352 = vadd.f32 %v78, %v310
  %v353 = vadd.f32 %v79, %v312
  %v354 = vadd.f32 %v80, %v314
  %v355 = vadd.f32 %v81, %v316
  %v356 = vadd.f32 %v82, %v320
  %v357 = vadd.f32 %v83, %v322
  %v358 = vadd.f32 %v84, %v324
  %v359 = vadd.f32 %v85, %v326
  %360 = vst [vmem:[#allocation2] sm:$0xff] %v328
  %361 = vst [vmem:[#allocation2 + $0x8] sm:$0xff] %v329
  %362 = vst [vmem:[#allocation2 + $0x10] sm:$0xff] %v330
  %363 = vst [vmem:[#allocation2 + $0x18] sm:$0xff] %v331
  %364 = vst [vmem:[#allocation2 + $0x20] sm:$0xff] %v332
  %365 = vst [vmem:[#allocation2 + $0x28] sm:$0xff] %v333
  %366 = vst [vmem:[#allocation2 + $0x30] sm:$0xff] %v334
  %367 = vst [vmem:[#allocation2 + $0x38] sm:$0xff] %v335
  %368 = vst [vmem:[#allocation2 + $0x40] sm:$0xff] %v336
  %369 = vst [vmem:[#allocation2 + $0x48] sm:$0xff] %v337
  %370 = vst [vmem:[#allocation2 + $0x50] sm:$0xff] %v338
  %371 = vst [vmem:[#allocation2 + $0x58] sm:$0xff] %v339
  %372 = vst [vmem:[#allocation2 + $0x60] sm:$0xff] %v340
  %373 = vst [vmem:[#allocation2 + $0x68] sm:$0xff] %v341
  %374 = vst [vmem:[#allocation2 + $0x70] sm:$0xff] %v342
  %375 = vst [vmem:[#allocation2 + $0x78] sm:$0xff] %v343
  %376 = vst [vmem:[#allocation2 + $0x80] sm:$0xff] %v344
  %377 = vst [vmem:[#allocation2 + $0x88] sm:$0xff] %v345
  %378 = vst [vmem:[#allocation2 + $0x90] sm:$0xff] %v346
  %379 = vst [vmem:[#allocation2 + $0x98] sm:$0xff] %v347
  %380 = vst [vmem:[#allocation2 + $0xa0] sm:$0xff] %v348
  %381 = vst [vmem:[#allocation2 + $0xa8] sm:$0xff] %v349
  %382 = vst [vmem:[#allocation2 + $0xb0] sm:$0xff] %v350
  %383 = vst [vmem:[#allocation2 + $0xb8] sm:$0xff] %v351
  %384 = vst [vmem:[#allocation2 + $0xc0] sm:$0xff] %v352
  %385 = vst [vmem:[#allocation2 + $0xc8] sm:$0xff] %v353
  %386 = vst [vmem:[#allocation2 + $0xd0] sm:$0xff] %v354
  %387 = vst [vmem:[#allocation2 + $0xd8] sm:$0xff] %v355
  %388 = vst [vmem:[#allocation2 + $0xe0] sm:$0xff] %v356
  %389 = vst [vmem:[#allocation2 + $0xe8] sm:$0xff] %v357
  %390 = vst [vmem:[#allocation2 + $0xf0] sm:$0xff] %v358
  %391 = vst [vmem:[#allocation2 + $0xf8] sm:$0xff] %v359
  // Predicated region
  $region22: #{stage0_forward.14} parent=0 // pred_check
    %p392 = pneg %p18
  $region23: #{stage0_forward.14} parent=0 // pred_check_branch
    %394 = sbr.rel (%p392) target = $region25
  $region24: #{stage0_forward.14} parent=0 // pred_region
    %v395 = vld [vmem:[#allocation2] sm:$0xff]
    %v396 = vld [vmem:[#allocation2 + $0x8] sm:$0xff]
    %v397 = vld [vmem:[#allocation2 + $0x10] sm:$0xff]
    %v398 = vld [vmem:[#allocation2 + $0x18] sm:$0xff]
    %v399 = vld [vmem:[#allocation2 + $0x20] sm:$0xff]
    %v400 = vld [vmem:[#allocation2 + $0x28] sm:$0xff]
    %v401 = vld [vmem:[#allocation2 + $0x30] sm:$0xff]
    %v402 = vld [vmem:[#allocation2 + $0x38] sm:$0xff]
    %v403 = vld [vmem:[#allocation2 + $0x40] sm:$0xff]
    %v404 = vld [vmem:[#allocation2 + $0x48] sm:$0xff]
    %v405 = vld [vmem:[#allocation2 + $0x50] sm:$0xff]
    %v406 = vld [vmem:[#allocation2 + $0x58] sm:$0xff]
    %v407 = vld [vmem:[#allocation2 + $0x60] sm:$0xff]
    %v408 = vld [vmem:[#allocation2 + $0x68] sm:$0xff]
    %v409 = vld [vmem:[#allocation2 + $0x70] sm:$0xff]
    %v410 = vld [vmem:[#allocation2 + $0x78] sm:$0xff]
    %v411 = vld [vmem:[#allocation2 + $0x80] sm:$0xff]
    %v412 = vld [vmem:[#allocation2 + $0x88] sm:$0xff]
    %v413 = vld [vmem:[#allocation2 + $0x90] sm:$0xff]
    %v414 = vld [vmem:[#allocation2 + $0x98] sm:$0xff]
    %v415 = vld [vmem:[#allocation2 + $0xa0] sm:$0xff]
    %v416 = vld [vmem:[#allocation2 + $0xa8] sm:$0xff]
    %v417 = vld [vmem:[#allocation2 + $0xb0] sm:$0xff]
    %v418 = vld [vmem:[#allocation2 + $0xb8] sm:$0xff]
    %v419 = vld [vmem:[#allocation2 + $0xc0] sm:$0xff]
    %v420 = vld [vmem:[#allocation2 + $0xc8] sm:$0xff]
    %v421 = vld [vmem:[#allocation2 + $0xd0] sm:$0xff]
    %v422 = vld [vmem:[#allocation2 + $0xd8] sm:$0xff]
    %v423 = vld [vmem:[#allocation2 + $0xe0] sm:$0xff]
    %v424 = vld [vmem:[#allocation2 + $0xe8] sm:$0xff]
    %v425 = vld [vmem:[#allocation2 + $0xf0] sm:$0xff]
    %v426 = vld [vmem:[#allocation2 + $0xf8] sm:$0xff]
    %v427 = vld [vmem:[%s2] sm:$0x3]
    %v429 = vlaneseq
    %v430 = vshrl.u32 %v429, 7
    %v431 = vsub.s32 0, %v430
    %v432 = vrot.slane %v427, %v431
    %v433 = vlaneseq
    %v434 = vshrl.u32 %v433, 7
    %v435 = vsub.s32 1, %v434
    %v436 = vrot.slane %v427, %v435
    %v439 = vadd.f32 %v395, %v432
    %v440 = vadd.f32 %v396, %v436
    %v441 = vadd.f32 %v397, %v432
    %v442 = vadd.f32 %v398, %v436
    %v443 = vadd.f32 %v399, %v432
    %v444 = vadd.f32 %v400, %v436
    %v445 = vadd.f32 %v401, %v432
    %v446 = vadd.f32 %v402, %v436
    %v447 = vadd.f32 %v403, %v432
    %v448 = vadd.f32 %v404, %v436
    %v449 = vadd.f32 %v405, %v432
    %v450 = vadd.f32 %v406, %v436
    %v451 = vadd.f32 %v407, %v432
    %v452 = vadd.f32 %v408, %v436
    %v453 = vadd.f32 %v409, %v432
    %v454 = vadd.f32 %v410, %v436
    %v455 = vadd.f32 %v411, %v432
    %v456 = vadd.f32 %v412, %v436
    %v457 = vadd.f32 %v413, %v432
    %v458 = vadd.f32 %v414, %v436
    %v459 = vadd.f32 %v415, %v432
    %v460 = vadd.f32 %v416, %v436
    %v461 = vadd.f32 %v417, %v432
    %v462 = vadd.f32 %v418, %v436
    %v463 = vadd.f32 %v419, %v432
    %v464 = vadd.f32 %v420, %v436
    %v465 = vadd.f32 %v421, %v432
    %v466 = vadd.f32 %v422, %v436
    %v467 = vadd.f32 %v423, %v432
    %v468 = vadd.f32 %v424, %v436
    %v469 = vadd.f32 %v425, %v432
    %v470 = vadd.f32 %v426, %v436
    %v471 = vld [vmem:[%s3] sm:$0xff]
    %v472 = vld [vmem:[%s3 + $0x8] sm:$0xff]
    %v473 = vld [vmem:[%s3 + $0x10] sm:$0xff]
    %v474 = vld [vmem:[%s3 + $0x18] sm:$0xff]
    %v475 = vld [vmem:[%s3 + $0x20] sm:$0xff]
    %v476 = vld [vmem:[%s3 + $0x28] sm:$0xff]
    %v477 = vld [vmem:[%s3 + $0x30] sm:$0xff]
    %v478 = vld [vmem:[%s3 + $0x38] sm:$0xff]
    %v479 = vld [vmem:[%s3 + $0x40] sm:$0xff]
    %v480 = vld [vmem:[%s3 + $0x48] sm:$0xff]
    %v481 = vld [vmem:[%s3 + $0x50] sm:$0xff]
    %v482 = vld [vmem:[%s3 + $0x58] sm:$0xff]
    %v483 = vld [vmem:[%s3 + $0x60] sm:$0xff]
    %v484 = vld [vmem:[%s3 + $0x68] sm:$0xff]
    %v485 = vld [vmem:[%s3 + $0x70] sm:$0xff]
    %v486 = vld [vmem:[%s3 + $0x78] sm:$0xff]
    %v487 = vunpack.c.l.bf16 %v471
    %v488 = vunpack.c.h.bf16 %v471
    %v489 = vunpack.c.l.bf16 %v472
    %v490 = vunpack.c.h.bf16 %v472
    %v491 = vunpack.c.l.bf16 %v473
    %v492 = vunpack.c.h.bf16 %v473
    %v493 = vunpack.c.l.bf16 %v474
    %v494 = vunpack.c.h.bf16 %v474
    %v495 = vunpack.c.l.bf16 %v475
    %v496 = vunpack.c.h.bf16 %v475
    %v497 = vunpack.c.l.bf16 %v476
    %v498 = vunpack.c.h.bf16 %v476
    %v499 = vunpack.c.l.bf16 %v477
    %v500 = vunpack.c.h.bf16 %v477
    %v501 = vunpack.c.l.bf16 %v478
    %v502 = vunpack.c.h.bf16 %v478
    %v503 = vunpack.c.l.bf16 %v479
    %v504 = vunpack.c.h.bf16 %v479
    %v505 = vunpack.c.l.bf16 %v480
    %v506 = vunpack.c.h.bf16 %v480
    %v507 = vunpack.c.l.bf16 %v481
    %v508 = vunpack.c.h.bf16 %v481
    %v509 = vunpack.c.l.bf16 %v482
    %v510 = vunpack.c.h.bf16 %v482
    %v511 = vunpack.c.l.bf16 %v483
    %v512 = vunpack.c.h.bf16 %v483
    %v513 = vunpack.c.l.bf16 %v484
    %v514 = vunpack.c.h.bf16 %v484
    %v515 = vunpack.c.l.bf16 %v485
    %v516 = vunpack.c.h.bf16 %v485
    %v517 = vunpack.c.l.bf16 %v486
    %v518 = vunpack.c.h.bf16 %v486
    %v519 = vadd.f32 %v439, %v487
    %v520 = vadd.f32 %v440, %v488
    %v521 = vadd.f32 %v441, %v489
    %v522 = vadd.f32 %v442, %v490
    %v523 = vadd.f32 %v443, %v491
    %v524 = vadd.f32 %v444, %v492
    %v525 = vadd.f32 %v445, %v493
    %v526 = vadd.f32 %v446, %v494
    %v527 = vadd.f32 %v447, %v495
    %v528 = vadd.f32 %v448, %v496
    %v529 = vadd.f32 %v449, %v497
    %v530 = vadd.f32 %v450, %v498
    %v531 = vadd.f32 %v451, %v499
    %v532 = vadd.f32 %v452, %v500
    %v533 = vadd.f32 %v453, %v501
    %v534 = vadd.f32 %v454, %v502
    %v535 = vadd.f32 %v455, %v503
    %v536 = vadd.f32 %v456, %v504
    %v537 = vadd.f32 %v457, %v505
    %v538 = vadd.f32 %v458, %v506
    %v539 = vadd.f32 %v459, %v507
    %v540 = vadd.f32 %v460, %v508
    %v541 = vadd.f32 %v461, %v509
    %v542 = vadd.f32 %v462, %v510
    %v543 = vadd.f32 %v463, %v511
    %v544 = vadd.f32 %v464, %v512
    %v545 = vadd.f32 %v465, %v513
    %v546 = vadd.f32 %v466, %v514
    %v547 = vadd.f32 %v467, %v515
    %v548 = vadd.f32 %v468, %v516
    %v549 = vadd.f32 %v469, %v517
    %v550 = vadd.f32 %v470, %v518
    %v551 = vmax.f32 %v519, 0.0
    %v552 = vmax.f32 %v520, 0.0
    %v553 = vmax.f32 %v521, 0.0
    %v554 = vmax.f32 %v522, 0.0
    %v555 = vmax.f32 %v523, 0.0
    %v556 = vmax.f32 %v524, 0.0
    %v557 = vmax.f32 %v525, 0.0
    %v558 = vmax.f32 %v526, 0.0
    %v559 = vmax.f32 %v527, 0.0
    %v560 = vmax.f32 %v528, 0.0
    %v561 = vmax.f32 %v529, 0.0
    %v562 = vmax.f32 %v530, 0.0
    %v563 = vmax.f32 %v531, 0.0
    %v564 = vmax.f32 %v532, 0.0
    %v565 = vmax.f32 %v533, 0.0
    %v566 = vmax.f32 %v534, 0.0
    %v567 = vmax.f32 %v535, 0.0
    %v568 = vmax.f32 %v536, 0.0
    %v569 = vmax.f32 %v537, 0.0
    %v570 = vmax.f32 %v538, 0.0
    %v571 = vmax.f32 %v539, 0.0
    %v572 = vmax.f32 %v540, 0.0
    %v573 = vmax.f32 %v541, 0.0
    %v574 = vmax.f32 %v542, 0.0
    %v575 = vmax.f32 %v543, 0.0
    %v576 = vmax.f32 %v544, 0.0
    %v577 = vmax.f32 %v545, 0.0
    %v578 = vmax.f32 %v546, 0.0
    %v579 = vmax.f32 %v547, 0.0
    %v580 = vmax.f32 %v548, 0.0
    %v581 = vmax.f32 %v549, 0.0
    %v582 = vmax.f32 %v550, 0.0
    %v583 = vpack.c.bf16 %v553, %v551
    %v584 = vpack.c.bf16 %v554, %v552
    %v585 = vpack.c.bf16 %v557, %v555
    %v586 = vpack.c.bf16 %v558, %v556
    %v587 = vpack.c.bf16 %v561, %v559
    %v588 = vpack.c.bf16 %v562, %v560
    %v589 = vpack.c.bf16 %v565, %v563
    %v590 = vpack.c.bf16 %v566, %v564
    %v591 = vpack.c.bf16 %v569, %v567
    %v592 = vpack.c.bf16 %v570, %v568
    %v593 = vpack.c.bf16 %v573, %v571
    %v594 = vpack.c.bf16 %v574, %v572
    %v595 = vpack.c.bf16 %v577, %v575
    %v596 = vpack.c.bf16 %v578, %v576
    %v597 = vpack.c.bf16 %v581, %v579
    %v598 = vpack.c.bf16 %v582, %v580
    %v615 = vunpack.c.l.b16 %v583
    %v616 = vunpack.c.l.b16 %v584
    %v617 = vunpack.c.h.b16 %v583
    %v618 = vunpack.c.h.b16 %v584
    %v619 = vunpack.c.l.b16 %v585
    %v620 = vunpack.c.l.b16 %v586
    %v621 = vunpack.c.h.b16 %v585
    %v622 = vunpack.c.h.b16 %v586
    %v623 = vunpack.c.l.b16 %v587
    %v624 = vunpack.c.l.b16 %v588
    %v625 = vunpack.c.h.b16 %v587
    %v626 = vunpack.c.h.b16 %v588
    %v627 = vunpack.c.l.b16 %v589
    %v628 = vunpack.c.l.b16 %v590
    %v629 = vunpack.c.h.b16 %v589
    %v630 = vunpack.c.h.b16 %v590
    %v631 = vunpack.c.l.b16 %v591
    %v632 = vunpack.c.l.b16 %v592
    %v633 = vunpack.c.h.b16 %v591
    %v634 = vunpack.c.h.b16 %v592
    %v635 = vunpack.c.l.b16 %v593
    %v636 = vunpack.c.l.b16 %v594
    %v637 = vunpack.c.h.b16 %v593
    %v638 = vunpack.c.h.b16 %v594
    %v639 = vunpack.c.l.b16 %v595
    %v640 = vunpack.c.l.b16 %v596
    %v641 = vunpack.c.h.b16 %v595
    %v642 = vunpack.c.h.b16 %v596
    %v643 = vunpack.c.l.b16 %v597
    %v644 = vunpack.c.l.b16 %v598
    %v645 = vunpack.c.h.b16 %v597
    %v646 = vunpack.c.h.b16 %v598
    %v647 = vpack.c.b16 %v616, %v615
    %v648 = vpack.c.b16 %v618, %v617
    %v649 = vpack.c.b16 %v620, %v619
    %v650 = vpack.c.b16 %v622, %v621
    %v651 = vpack.c.b16 %v624, %v623
    %v652 = vpack.c.b16 %v626, %v625
    %v653 = vpack.c.b16 %v628, %v627
    %v654 = vpack.c.b16 %v630, %v629
    %v655 = vpack.c.b16 %v632, %v631
    %v656 = vpack.c.b16 %v634, %v633
    %v657 = vpack.c.b16 %v636, %v635
    %v658 = vpack.c.b16 %v638, %v637
    %v659 = vpack.c.b16 %v640, %v639
    %v660 = vpack.c.b16 %v642, %v641
    %v661 = vpack.c.b16 %v644, %v643
    %v662 = vpack.c.b16 %v646, %v645
    %679 = vst [vmem:[%s4] sm:$0xff] %v647
    %680 = vst [vmem:[%s4 + $0x8] sm:$0xff] %v648
    %681 = vst [vmem:[%s4 + $0x10] sm:$0xff] %v649
    %682 = vst [vmem:[%s4 + $0x18] sm:$0xff] %v650
    %683 = vst [vmem:[%s4 + $0x20] sm:$0xff] %v651
    %684 = vst [vmem:[%s4 + $0x28] sm:$0xff] %v652
    %685 = vst [vmem:[%s4 + $0x30] sm:$0xff] %v653
    %686 = vst [vmem:[%s4 + $0x38] sm:$0xff] %v654
    %687 = vst [vmem:[%s4 + $0x40] sm:$0xff] %v655
    %688 = vst [vmem:[%s4 + $0x48] sm:$0xff] %v656
    %689 = vst [vmem:[%s4 + $0x50] sm:$0xff] %v657
    %690 = vst [vmem:[%s4 + $0x58] sm:$0xff] %v658
    %691 = vst [vmem:[%s4 + $0x60] sm:$0xff] %v659
    %692 = vst [vmem:[%s4 + $0x68] sm:$0xff] %v660
    %693 = vst [vmem:[%s4 + $0x70] sm:$0xff] %v661
    %694 = vst [vmem:[%s4 + $0x78] sm:$0xff] %v662
  $region25: #{stage0_forward.14} parent=0 // pred_fallthru
    _
  // Predicated region
  $region26: #{stage0_forward.14} parent=0 // pred_check
    _
  $region27: #{stage0_forward.14} parent=0 // pred_check_branch
    %696 = sbr.rel (0) target = $region29
  $region28: #{stage0_forward.14} parent=0 // pred_region
    _
  $region29: #{stage0_forward.14} parent=0 // pred_fallthru
    _
  // Predicated region
  $region30: #{stage0_forward.14} parent=0 // pred_check
    _
  $region31: #{stage0_forward.14} parent=0 // pred_check_branch
    %698 = sbr.rel (0) target = $region33
  $region32: #{stage0_forward.14} parent=0 // pred_region
    _
  $region33: #{stage0_forward.14} parent=0 // pred_fallthru
    _

// kernel: stage0_forward.15
$region0: #{stage0_forward.15}
  #allocation0 [shape = 'u32[]', space=smem, size = 0x4, offset = 0x4, fixed_abs, tag = 'smem constant byte address 0x4 - core index']
  #allocation1 [shape = 'u32[144,128]{1,0:T(1,128)}', space=vmem, size = 0x12000, scoped, tag = 'internal scratch']
  #allocation2 [shape = 'f32[128,64]{1,0:T(8,128)}', space=vmem, size = 0x10000, scoped, tag = 'scratch operand']
  %s0 = inlined_call_operand.vmem [shape: bf16[128,256], index: 0, kind: input, shape index: {}]
  %s1 = inlined_call_operand.vmem [shape: bf16[256,64], index: 1, kind: input, shape index: {}]
  %s2 = inlined_call_operand.vmem [shape: f32[1,64], index: 2, kind: input, shape index: {}]
  %s3 = inlined_call_operand.vmem [shape: bf16[128,64], index: 3, kind: output, shape index: {}]
  %s4 = sld [smem:[#allocation0]]
  $region30: #{stage0_forward.15} parent=0
    _
  %s6 = ssub.s32 1, %s4
  %s7 = scalar_select 0, %s6, %s4
  // Predicated region
  $region2: #{stage0_forward.15} parent=0 // pred_check
    _
  $region3: #{stage0_forward.15} parent=0 // pred_check_branch
    %9 = sbr.rel (0) target = $region5
  $region4: #{stage0_forward.15} parent=0 // pred_region
    _
  $region5: #{stage0_forward.15} parent=0 // pred_fallthru
    _
  // Predicated region
  $region6: #{stage0_forward.15} parent=0 // pred_check
    _
  $region7: #{stage0_forward.15} parent=0 // pred_check_branch
    %11 = sbr.rel (0) target = $region9
  $region8: #{stage0_forward.15} parent=0 // pred_region
    _
  $region9: #{stage0_forward.15} parent=0 // pred_fallthru
    _
  // Predicated region
  $region10: #{stage0_forward.15} parent=0 // pred_check
    _
  $region11: #{stage0_forward.15} parent=0 // pred_check_branch
    %13 = sbr.rel (0) target = $region13
  $region12: #{stage0_forward.15} parent=0 // pred_region
    _
  $region13: #{stage0_forward.15} parent=0 // pred_fallthru
    _
  %p15 = scmp.eq.s32.totalorder 0, 0
  // Predicated region
  $region14: #{stage0_forward.15} parent=0 // pred_check
    %p16 = pneg %p15
  $region15: #{stage0_forward.15} parent=0 // pred_check_branch
    %18 = sbr.rel (%p16) target = $region17
  $region16: #{stage0_forward.15} parent=0 // pred_region
    %vm19 = vcmask 523264
    %20 = vst.msk [vmem:[#allocation2] sm:$0xff] %vm19, 0.0
    %21 = vst.msk [vmem:[#allocation2 + $0x8] sm:$0xff] %vm19, 0.0
    %22 = vst.msk [vmem:[#allocation2 + $0x10] sm:$0xff] %vm19, 0.0
    %23 = vst.msk [vmem:[#allocation2 + $0x18] sm:$0xff] %vm19, 0.0
    %24 = vst.msk [vmem:[#allocation2 + $0x20] sm:$0xff] %vm19, 0.0
    %25 = vst.msk [vmem:[#allocation2 + $0x28] sm:$0xff] %vm19, 0.0
    %26 = vst.msk [vmem:[#allocation2 + $0x30] sm:$0xff] %vm19, 0.0
    %27 = vst.msk [vmem:[#allocation2 + $0x38] sm:$0xff] %vm19, 0.0
    %28 = vst.msk [vmem:[#allocation2 + $0x40] sm:$0xff] %vm19, 0.0
    %29 = vst.msk [vmem:[#allocation2 + $0x48] sm:$0xff] %vm19, 0.0
    %30 = vst.msk [vmem:[#allocation2 + $0x50] sm:$0xff] %vm19, 0.0
    %31 = vst.msk [vmem:[#allocation2 + $0x58] sm:$0xff] %vm19, 0.0
    %32 = vst.msk [vmem:[#allocation2 + $0x60] sm:$0xff] %vm19, 0.0
    %33 = vst.msk [vmem:[#allocation2 + $0x68] sm:$0xff] %vm19, 0.0
    %34 = vst.msk [vmem:[#allocation2 + $0x70] sm:$0xff] %vm19, 0.0
    %35 = vst.msk [vmem:[#allocation2 + $0x78] sm:$0xff] %vm19, 0.0
  $region17: #{stage0_forward.15} parent=0 // pred_fallthru
    _
  %v36 = vld [vmem:[#allocation2] sm:$0xff]
  %v37 = vld [vmem:[#allocation2 + $0x8] sm:$0xff]
  %v38 = vld [vmem:[#allocation2 + $0x10] sm:$0xff]
  %v39 = vld [vmem:[#allocation2 + $0x18] sm:$0xff]
  %v40 = vld [vmem:[#allocation2 + $0x20] sm:$0xff]
  %v41 = vld [vmem:[#allocation2 + $0x28] sm:$0xff]
  %v42 = vld [vmem:[#allocation2 + $0x30] sm:$0xff]
  %v43 = vld [vmem:[#allocation2 + $0x38] sm:$0xff]
  %v44 = vld [vmem:[#allocation2 + $0x40] sm:$0xff]
  %v45 = vld [vmem:[#allocation2 + $0x48] sm:$0xff]
  %v46 = vld [vmem:[#allocation2 + $0x50] sm:$0xff]
  %v47 = vld [vmem:[#allocation2 + $0x58] sm:$0xff]
  %v48 = vld [vmem:[#allocation2 + $0x60] sm:$0xff]
  %v49 = vld [vmem:[#allocation2 + $0x68] sm:$0xff]
  %v50 = vld [vmem:[#allocation2 + $0x70] sm:$0xff]
  %v51 = vld [vmem:[#allocation2 + $0x78] sm:$0xff]
  %v52 = vld [vmem:[%s0] sm:$0xff]
  %v53 = vld [vmem:[%s0 + $0x8] sm:$0xff]
  %v54 = vld [vmem:[%s0 + $0x10] sm:$0xff]
  %v55 = vld [vmem:[%s0 + $0x18] sm:$0xff]
  %v56 = vld [vmem:[%s0 + $0x20] sm:$0xff]
  %v57 = vld [vmem:[%s0 + $0x28] sm:$0xff]
  %v58 = vld [vmem:[%s0 + $0x30] sm:$0xff]
  %v59 = vld [vmem:[%s0 + $0x38] sm:$0xff]
  %v60 = vld [vmem:[%s0 + $0x40] sm:$0xff]
  %v61 = vld [vmem:[%s0 + $0x48] sm:$0xff]
  %v62 = vld [vmem:[%s0 + $0x50] sm:$0xff]
  %v63 = vld [vmem:[%s0 + $0x58] sm:$0xff]
  %v64 = vld [vmem:[%s0 + $0x60] sm:$0xff]
  %v65 = vld [vmem:[%s0 + $0x68] sm:$0xff]
  %v66 = vld [vmem:[%s0 + $0x70] sm:$0xff]
  %v67 = vld [vmem:[%s0 + $0x78] sm:$0xff]
  %v68 = vld [vmem:[%s1] sm:$0xf]
  %v69 = vld [vmem:[%s1 + $0x4] sm:$0xf]
  %v70 = vld [vmem:[%s1 + $0x8] sm:$0xf]
  %v71 = vld [vmem:[%s1 + $0xc] sm:$0xf]
  %v72 = vld [vmem:[%s1 + $0x10] sm:$0xf]
  %v73 = vld [vmem:[%s1 + $0x14] sm:$0xf]
  %v74 = vld [vmem:[%s1 + $0x18] sm:$0xf]
  %v75 = vld [vmem:[%s1 + $0x1c] sm:$0xf]
  %v76 = vld [vmem:[%s1 + $0x20] sm:$0xf]
  %v77 = vld [vmem:[%s1 + $0x24] sm:$0xf]
  %v78 = vld [vmem:[%s1 + $0x28] sm:$0xf]
  %v79 = vld [vmem:[%s1 + $0x2c] sm:$0xf]
  %v80 = vld [vmem:[%s1 + $0x30] sm:$0xf]
  %v81 = vld [vmem:[%s1 + $0x34] sm:$0xf]
  %v82 = vld [vmem:[%s1 + $0x38] sm:$0xf]
  %v83 = vld [vmem:[%s1 + $0x3c] sm:$0xf]
  %v84 = vld [vmem:[%s1 + $0x40] sm:$0xf]
  %v85 = vld [vmem:[%s1 + $0x44] sm:$0xf]
  %v86 = vld [vmem:[%s1 + $0x48] sm:$0xf]
  %v87 = vld [vmem:[%s1 + $0x4c] sm:$0xf]
  %v88 = vld [vmem:[%s1 + $0x50] sm:$0xf]
  %v89 = vld [vmem:[%s1 + $0x54] sm:$0xf]
  %v90 = vld [vmem:[%s1 + $0x58] sm:$0xf]
  %v91 = vld [vmem:[%s1 + $0x5c] sm:$0xf]
  %v92 = vld [vmem:[%s1 + $0x60] sm:$0xf]
  %v93 = vld [vmem:[%s1 + $0x64] sm:$0xf]
  %v94 = vld [vmem:[%s1 + $0x68] sm:$0xf]
  %v95 = vld [vmem:[%s1 + $0x6c] sm:$0xf]
  %v96 = vld [vmem:[%s1 + $0x70] sm:$0xf]
  %v97 = vld [vmem:[%s1 + $0x74] sm:$0xf]
  %v98 = vld [vmem:[%s1 + $0x78] sm:$0xf]
  %v99 = vld [vmem:[%s1 + $0x7c] sm:$0xf]
  %v116 = vunpack.c.l.b16 %v52
  %v117 = vunpack.c.h.b16 %v52
  %v118 = vunpack.c.l.b16 %v53
  %v119 = vunpack.c.h.b16 %v53
  %v120 = vunpack.c.l.b16 %v54
  %v121 = vunpack.c.h.b16 %v54
  %v122 = vunpack.c.l.b16 %v55
  %v123 = vunpack.c.h.b16 %v55
  %v124 = vunpack.c.l.b16 %v56
  %v125 = vunpack.c.h.b16 %v56
  %v126 = vunpack.c.l.b16 %v57
  %v127 = vunpack.c.h.b16 %v57
  %v128 = vunpack.c.l.b16 %v58
  %v129 = vunpack.c.h.b16 %v58
  %v130 = vunpack.c.l.b16 %v59
  %v131 = vunpack.c.h.b16 %v59
  %v132 = vunpack.c.l.b16 %v60
  %v133 = vunpack.c.h.b16 %v60
  %v134 = vunpack.c.l.b16 %v61
  %v135 = vunpack.c.h.b16 %v61
  %v136 = vunpack.c.l.b16 %v62
  %v137 = vunpack.c.h.b16 %v62
  %v138 = vunpack.c.l.b16 %v63
  %v139 = vunpack.c.h.b16 %v63
  %v140 = vunpack.c.l.b16 %v64
  %v141 = vunpack.c.h.b16 %v64
  %v142 = vunpack.c.l.b16 %v65
  %v143 = vunpack.c.h.b16 %v65
  %v144 = vunpack.c.l.b16 %v66
  %v145 = vunpack.c.h.b16 %v66
  %v146 = vunpack.c.l.b16 %v67
  %v147 = vunpack.c.h.b16 %v67
  %v148 = vpack.c.b16 %v118, %v116
  %v149 = vpack.c.b16 %v119, %v117
  %v150 = vpack.c.b16 %v122, %v120
  %v151 = vpack.c.b16 %v123, %v121
  %v152 = vpack.c.b16 %v126, %v124
  %v153 = vpack.c.b16 %v127, %v125
  %v154 = vpack.c.b16 %v130, %v128
  %v155 = vpack.c.b16 %v131, %v129
  %v156 = vpack.c.b16 %v134, %v132
  %v157 = vpack.c.b16 %v135, %v133
  %v158 = vpack.c.b16 %v138, %v136
  %v159 = vpack.c.b16 %v139, %v137
  %v160 = vpack.c.b16 %v142, %v140
  %v161 = vpack.c.b16 %v143, %v141
  %v162 = vpack.c.b16 %v146, %v144
  %v163 = vpack.c.b16 %v147, %v145
  %v212 = vunpack.c.l.b16 %v68
  %v213 = vunpack.c.l.b16 %v69
  %v214 = vunpack.c.l.b16 %v70
  %v215 = vunpack.c.l.b16 %v71
  %v216 = vunpack.c.l.b16 %v72
  %v217 = vunpack.c.l.b16 %v73
  %v218 = vunpack.c.l.b16 %v74
  %v219 = vunpack.c.l.b16 %v75
  %v220 = vunpack.c.l.b16 %v76
  %v221 = vunpack.c.l.b16 %v77
  %v222 = vunpack.c.l.b16 %v78
  %v223 = vunpack.c.l.b16 %v79
  %v224 = vunpack.c.l.b16 %v80
  %v225 = vunpack.c.l.b16 %v81
  %v226 = vunpack.c.l.b16 %v82
  %v227 = vunpack.c.l.b16 %v83
  %v228 = vunpack.c.l.b16 %v84
  %v229 = vunpack.c.l.b16 %v85
  %v230 = vunpack.c.l.b16 %v86
  %v231 = vunpack.c.l.b16 %v87
  %v232 = vunpack.c.l.b16 %v88
  %v233 = vunpack.c.l.b16 %v89
  %v234 = vunpack.c.l.b16 %v90
  %v235 = vunpack.c.l.b16 %v91
  %v236 = vunpack.c.l.b16 %v92
  %v237 = vunpack.c.l.b16 %v93
  %v238 = vunpack.c.l.b16 %v94
  %v239 = vunpack.c.l.b16 %v95
  %v240 = vunpack.c.l.b16 %v96
  %v241 = vunpack.c.l.b16 %v97
  %v242 = vunpack.c.l.b16 %v98
  %v243 = vunpack.c.l.b16 %v99
  %v244 = vpack.c.b16 %v213, %v212
  %v245 = vpack.c.b16 %v215, %v214
  %v246 = vpack.c.b16 %v217, %v216
  %v247 = vpack.c.b16 %v219, %v218
  %v248 = vpack.c.b16 %v221, %v220
  %v249 = vpack.c.b16 %v223, %v222
  %v250 = vpack.c.b16 %v225, %v224
  %v251 = vpack.c.b16 %v227, %v226
  %v252 = vpack.c.b16 %v229, %v228
  %v253 = vpack.c.b16 %v231, %v230
  %v254 = vpack.c.b16 %v233, %v232
  %v255 = vpack.c.b16 %v235, %v234
  %v256 = vpack.c.b16 %v237, %v236
  %v257 = vpack.c.b16 %v239, %v238
  %v258 = vpack.c.b16 %v241, %v240
  %v259 = vpack.c.b16 %v243, %v242
  %276 = vmatprep.subr.bf16.mxu0 0
  %277 = vmatpush1.bf16.msra.mxu0 %v244
  %278 = vmatprep.subr.bf16.mxu0 0
  %279 = vmatpush1.bf16.msra.mxu0 %v245
  %280 = vmatprep.subr.bf16.mxu0 0
  %281 = vmatpush1.bf16.msra.mxu0 %v246
  %282 = vmatprep.subr.bf16.mxu0 0
  %283 = vmatpush1.bf16.msra.mxu0 %v247
  %284 = vmatprep.subr.bf16.mxu0 0
  %285 = vmatpush1.bf16.msra.mxu0 %v248
  %286 = vmatprep.subr.bf16.mxu0 0
  %287 = vmatpush1.bf16.msra.mxu0 %v249
  %288 = vmatprep.subr.bf16.mxu0 0
  %289 = vmatpush1.bf16.msra.mxu0 %v250
  %290 = vmatprep.subr.bf16.mxu0 0
  %291 = vmatpush1.bf16.msra.mxu0 %v251
  %292 = vmatprep.subr.bf16.mxu0 0
  %293 = vmatpush1.bf16.msra.mxu0 %v252
  %294 = vmatprep.subr.bf16.mxu0 0
  %295 = vmatpush1.bf16.msra.mxu0 %v253
  %296 = vmatprep.subr.bf16.mxu0 0
  %297 = vmatpush1.bf16.msra.mxu0 %v254
  %298 = vmatprep.subr.bf16.mxu0 0
  %299 = vmatpush1.bf16.msra.mxu0 %v255
  %300 = vmatprep.subr.bf16.mxu0 0
  %301 = vmatpush1.bf16.msra.mxu0 %v256
  %302 = vmatprep.subr.bf16.mxu0 0
  %303 = vmatpush1.bf16.msra.mxu0 %v257
  %304 = vmatprep.subr.bf16.mxu0 0
  %305 = vmatpush1.bf16.msra.mxu0 %v258
  %306 = vmatprep.subr.bf16.mxu0 0
  %307 = vmatpush1.bf16.msra.mxu0 %v259
  %308 = vmatprep.mubr.bf16.mxu0 %v149
  %309 = vmatmul.mubr.bf16.gmra.mrb[0].mxu0 %v148
  %v310 = vpop.f32.mrb[0].mxu0
  %v311 = vadd.f32 0.0, %v310
  %v312 = vpop.f32.mrb[0].mxu0
  %v313 = vpop.f32.mrb[0].mxu0
  %v314 = vadd.f32 0.0, %v313
  %v315 = vpop.f32.mrb[0].mxu0
  %316 = vmatprep.mubr.bf16.mxu0 %v151
  %317 = vmatmul.mubr.bf16.gmra.mrb[0].mxu0 %v150
  %v318 = vpop.f32.mrb[0].mxu0
  %v319 = vadd.f32 0.0, %v318
  %v320 = vpop.f32.mrb[0].mxu0
  %v321 = vpop.f32.mrb[0].mxu0
  %v322 = vadd.f32 0.0, %v321
  %v323 = vpop.f32.mrb[0].mxu0
  %324 = vmatprep.mubr.bf16.mxu0 %v153
  %325 = vmatmul.mubr.bf16.gmra.mrb[0].mxu0 %v152
  %v326 = vpop.f32.mrb[0].mxu0
  %v327 = vadd.f32 0.0, %v326
  %v328 = vpop.f32.mrb[0].mxu0
  %v329 = vpop.f32.mrb[0].mxu0
  %v330 = vadd.f32 0.0, %v329
  %v331 = vpop.f32.mrb[0].mxu0
  %332 = vmatprep.mubr.bf16.mxu0 %v155
  %333 = vmatmul.mubr.bf16.gmra.mrb[0].mxu0 %v154
  %v334 = vpop.f32.mrb[0].mxu0
  %v335 = vadd.f32 0.0, %v334
  %v336 = vpop.f32.mrb[0].mxu0
  %v337 = vpop.f32.mrb[0].mxu0
  %v338 = vadd.f32 0.0, %v337
  %v339 = vpop.f32.mrb[0].mxu0
  %340 = vmatprep.mubr.bf16.mxu0 %v157
  %341 = vmatmul.mubr.bf16.gmra.mrb[0].mxu0 %v156
  %v342 = vpop.f32.mrb[0].mxu0
  %v343 = vadd.f32 0.0, %v342
  %v344 = vpop.f32.mrb[0].mxu0
  %v345 = vpop.f32.mrb[0].mxu0
  %v346 = vadd.f32 0.0, %v345
  %v347 = vpop.f32.mrb[0].mxu0
  %348 = vmatprep.mubr.bf16.mxu0 %v159
  %349 = vmatmul.mubr.bf16.gmra.mrb[0].mxu0 %v158
  %v350 = vpop.f32.mrb[0].mxu0
  %v351 = vadd.f32 0.0, %v350
  %v352 = vpop.f32.mrb[0].mxu0
  %v353 = vpop.f32.mrb[0].mxu0
  %v354 = vadd.f32 0.0, %v353
  %v355 = vpop.f32.mrb[0].mxu0
  %356 = vmatprep.mubr.bf16.mxu0 %v161
  %357 = vmatmul.mubr.bf16.gmra.mrb[0].mxu0 %v160
  %v358 = vpop.f32.mrb[0].mxu0
  %v359 = vadd.f32 0.0, %v358
  %v360 = vpop.f32.mrb[0].mxu0
  %v361 = vpop.f32.mrb[0].mxu0
  %v362 = vadd.f32 0.0, %v361
  %v363 = vpop.f32.mrb[0].mxu0
  %364 = vmatprep.mubr.bf16.mxu0 %v163
  %365 = vmatmul.mubr.bf16.gmra.mrb[0].mxu0 %v162
  %v366 = vpop.f32.mrb[0].mxu0
  %v367 = vadd.f32 0.0, %v366
  %v368 = vpop.f32.mrb[0].mxu0
  %v369 = vpop.f32.mrb[0].mxu0
  %v370 = vadd.f32 0.0, %v369
  %v371 = vpop.f32.mrb[0].mxu0
  %372 = vdwg.mxu0
  %v373 = vadd.f32 %v36, %v311
  %v374 = vadd.f32 %v37, %v314
  %v375 = vadd.f32 %v38, %v319
  %v376 = vadd.f32 %v39, %v322
  %v377 = vadd.f32 %v40, %v327
  %v378 = vadd.f32 %v41, %v330
  %v379 = vadd.f32 %v42, %v335
  %v380 = vadd.f32 %v43, %v338
  %v381 = vadd.f32 %v44, %v343
  %v382 = vadd.f32 %v45, %v346
  %v383 = vadd.f32 %v46, %v351
  %v384 = vadd.f32 %v47, %v354
  %v385 = vadd.f32 %v48, %v359
  %v386 = vadd.f32 %v49, %v362
  %v387 = vadd.f32 %v50, %v367
  %v388 = vadd.f32 %v51, %v370
  %vm389 = vcmask 523264
  %390 = vst.msk [vmem:[#allocation2] sm:$0xff] %vm389, %v373
  %391 = vst.msk [vmem:[#allocation2 + $0x8] sm:$0xff] %vm389, %v374
  %392 = vst.msk [vmem:[#allocation2 + $0x10] sm:$0xff] %vm389, %v375
  %393 = vst.msk [vmem:[#allocation2 + $0x18] sm:$0xff] %vm389, %v376
  %394 = vst.msk [vmem:[#allocation2 + $0x20] sm:$0xff] %vm389, %v377
  %395 = vst.msk [vmem:[#allocation2 + $0x28] sm:$0xff] %vm389, %v378
  %396 = vst.msk [vmem:[#allocation2 + $0x30] sm:$0xff] %vm389, %v379
  %397 = vst.msk [vmem:[#allocation2 + $0x38] sm:$0xff] %vm389, %v380
  %398 = vst.msk [vmem:[#allocation2 + $0x40] sm:$0xff] %vm389, %v381
  %399 = vst.msk [vmem:[#allocation2 + $0x48] sm:$0xff] %vm389, %v382
  %400 = vst.msk [vmem:[#allocation2 + $0x50] sm:$0xff] %vm389, %v383
  %401 = vst.msk [vmem:[#allocation2 + $0x58] sm:$0xff] %vm389, %v384
  %402 = vst.msk [vmem:[#allocation2 + $0x60] sm:$0xff] %vm389, %v385
  %403 = vst.msk [vmem:[#allocation2 + $0x68] sm:$0xff] %vm389, %v386
  %404 = vst.msk [vmem:[#allocation2 + $0x70] sm:$0xff] %vm389, %v387
  %405 = vst.msk [vmem:[#allocation2 + $0x78] sm:$0xff] %vm389, %v388
  // Predicated region
  $region18: #{stage0_forward.15} parent=0 // pred_check
    %p406 = pneg %p15
  $region19: #{stage0_forward.15} parent=0 // pred_check_branch
    %408 = sbr.rel (%p406) target = $region21
  $region20: #{stage0_forward.15} parent=0 // pred_region
    %v409 = vld [vmem:[#allocation2] sm:$0xff]
    %v410 = vld [vmem:[#allocation2 + $0x8] sm:$0xff]
    %v411 = vld [vmem:[#allocation2 + $0x10] sm:$0xff]
    %v412 = vld [vmem:[#allocation2 + $0x18] sm:$0xff]
    %v413 = vld [vmem:[#allocation2 + $0x20] sm:$0xff]
    %v414 = vld [vmem:[#allocation2 + $0x28] sm:$0xff]
    %v415 = vld [vmem:[#allocation2 + $0x30] sm:$0xff]
    %v416 = vld [vmem:[#allocation2 + $0x38] sm:$0xff]
    %v417 = vld [vmem:[#allocation2 + $0x40] sm:$0xff]
    %v418 = vld [vmem:[#allocation2 + $0x48] sm:$0xff]
    %v419 = vld [vmem:[#allocation2 + $0x50] sm:$0xff]
    %v420 = vld [vmem:[#allocation2 + $0x58] sm:$0xff]
    %v421 = vld [vmem:[#allocation2 + $0x60] sm:$0xff]
    %v422 = vld [vmem:[#allocation2 + $0x68] sm:$0xff]
    %v423 = vld [vmem:[#allocation2 + $0x70] sm:$0xff]
    %v424 = vld [vmem:[#allocation2 + $0x78] sm:$0xff]
    %v425 = vld [vmem:[%s2] sm:$0x1]
    %v427 = vlaneseq
    %v428 = vshrl.u32 %v427, 7
    %v429 = vsub.s32 0, %v428
    %v430 = vrot.slane %v425, %v429
    %v432 = vadd.f32 %v409, %v430
    %v433 = vadd.f32 %v410, %v430
    %v434 = vadd.f32 %v411, %v430
    %v435 = vadd.f32 %v412, %v430
    %v436 = vadd.f32 %v413, %v430
    %v437 = vadd.f32 %v414, %v430
    %v438 = vadd.f32 %v415, %v430
    %v439 = vadd.f32 %v416, %v430
    %v440 = vadd.f32 %v417, %v430
    %v441 = vadd.f32 %v418, %v430
    %v442 = vadd.f32 %v419, %v430
    %v443 = vadd.f32 %v420, %v430
    %v444 = vadd.f32 %v421, %v430
    %v445 = vadd.f32 %v422, %v430
    %v446 = vadd.f32 %v423, %v430
    %v447 = vadd.f32 %v424, %v430
    %v448 = vmax.f32 %v432, 0.0
    %v449 = vmax.f32 %v433, 0.0
    %v450 = vmax.f32 %v434, 0.0
    %v451 = vmax.f32 %v435, 0.0
    %v452 = vmax.f32 %v436, 0.0
    %v453 = vmax.f32 %v437, 0.0
    %v454 = vmax.f32 %v438, 0.0
    %v455 = vmax.f32 %v439, 0.0
    %v456 = vmax.f32 %v440, 0.0
    %v457 = vmax.f32 %v441, 0.0
    %v458 = vmax.f32 %v442, 0.0
    %v459 = vmax.f32 %v443, 0.0
    %v460 = vmax.f32 %v444, 0.0
    %v461 = vmax.f32 %v445, 0.0
    %v462 = vmax.f32 %v446, 0.0
    %v463 = vmax.f32 %v447, 0.0
    %v464 = vpack.c.bf16 %v449, %v448
    %v465 = vpack.c.bf16 %v451, %v450
    %v466 = vpack.c.bf16 %v453, %v452
    %v467 = vpack.c.bf16 %v455, %v454
    %v468 = vpack.c.bf16 %v457, %v456
    %v469 = vpack.c.bf16 %v459, %v458
    %v470 = vpack.c.bf16 %v461, %v460
    %v471 = vpack.c.bf16 %v463, %v462
    %v480 = vunpack.c.l.b16 %v464
    %v481 = vunpack.c.h.b16 %v464
    %v482 = vunpack.c.l.b16 %v465
    %v483 = vunpack.c.h.b16 %v465
    %v484 = vunpack.c.l.b16 %v466
    %v485 = vunpack.c.h.b16 %v466
    %v486 = vunpack.c.l.b16 %v467
    %v487 = vunpack.c.h.b16 %v467
    %v488 = vunpack.c.l.b16 %v468
    %v489 = vunpack.c.h.b16 %v468
    %v490 = vunpack.c.l.b16 %v469
    %v491 = vunpack.c.h.b16 %v469
    %v492 = vunpack.c.l.b16 %v470
    %v493 = vunpack.c.h.b16 %v470
    %v494 = vunpack.c.l.b16 %v471
    %v495 = vunpack.c.h.b16 %v471
    %v496 = vpack.c.b16 %v480, %v480
    %v497 = vpack.c.b16 %v481, %v481
    %v498 = vpack.c.b16 %v482, %v482
    %v499 = vpack.c.b16 %v483, %v483
    %v500 = vpack.c.b16 %v484, %v484
    %v501 = vpack.c.b16 %v485, %v485
    %v502 = vpack.c.b16 %v486, %v486
    %v503 = vpack.c.b16 %v487, %v487
    %v504 = vpack.c.b16 %v488, %v488
    %v505 = vpack.c.b16 %v489, %v489
    %v506 = vpack.c.b16 %v490, %v490
    %v507 = vpack.c.b16 %v491, %v491
    %v508 = vpack.c.b16 %v492, %v492
    %v509 = vpack.c.b16 %v493, %v493
    %v510 = vpack.c.b16 %v494, %v494
    %v511 = vpack.c.b16 %v495, %v495
    %vm528 = vcmask 519168
    %529 = vst.msk [vmem:[%s3] sm:$0xf] %vm528, %v496
    %530 = vst.msk [vmem:[%s3 + $0x4] sm:$0xf] %vm528, %v497
    %531 = vst.msk [vmem:[%s3 + $0x8] sm:$0xf] %vm528, %v498
    %532 = vst.msk [vmem:[%s3 + $0xc] sm:$0xf] %vm528, %v499
    %533 = vst.msk [vmem:[%s3 + $0x10] sm:$0xf] %vm528, %v500
    %534 = vst.msk [vmem:[%s3 + $0x14] sm:$0xf] %vm528, %v501
    %535 = vst.msk [vmem:[%s3 + $0x18] sm:$0xf] %vm528, %v502
    %536 = vst.msk [vmem:[%s3 + $0x1c] sm:$0xf] %vm528, %v503
    %537 = vst.msk [vmem:[%s3 + $0x20] sm:$0xf] %vm528, %v504
    %538 = vst.msk [vmem:[%s3 + $0x24] sm:$0xf] %vm528, %v505
    %539 = vst.msk [vmem:[%s3 + $0x28] sm:$0xf] %vm528, %v506
    %540 = vst.msk [vmem:[%s3 + $0x2c] sm:$0xf] %vm528, %v507
    %541 = vst.msk [vmem:[%s3 + $0x30] sm:$0xf] %vm528, %v508
    %542 = vst.msk [vmem:[%s3 + $0x34] sm:$0xf] %vm528, %v509
    %543 = vst.msk [vmem:[%s3 + $0x38] sm:$0xf] %vm528, %v510
    %544 = vst.msk [vmem:[%s3 + $0x3c] sm:$0xf] %vm528, %v511
  $region21: #{stage0_forward.15} parent=0 // pred_fallthru
    _
  // Predicated region
  $region22: #{stage0_forward.15} parent=0 // pred_check
    _
  $region23: #{stage0_forward.15} parent=0 // pred_check_branch
    %546 = sbr.rel (0) target = $region25
  $region24: #{stage0_forward.15} parent=0 // pred_region
    _
  $region25: #{stage0_forward.15} parent=0 // pred_fallthru
    _
  // Predicated region
  $region26: #{stage0_forward.15} parent=0 // pred_check
    _
  $region27: #{stage0_forward.15} parent=0 // pred_check_branch
    %548 = sbr.rel (0) target = $region29
  $region28: #{stage0_forward.15} parent=0 // pred_region
    _
  $region29: #{stage0_forward.15} parent=0 // pred_fallthru
    _

// kernel: stage0_forward.17
$region0: #{stage0_forward.17}
  #allocation0 [shape = 'u32[]', space=smem, size = 0x4, offset = 0x4, fixed_abs, tag = 'smem constant byte address 0x4 - core index']
  #allocation1 [shape = 'u32[144,128]{1,0:T(1,128)}', space=vmem, size = 0x12000, scoped, tag = 'internal scratch']
  #allocation2 [shape = 'f32[128,256]{1,0:T(8,128)}', space=vmem, size = 0x20000, scoped, tag = 'scratch operand']
  %s0 = inlined_call_operand.vmem [shape: bf16[128,64], index: 0, kind: input, shape index: {}]
  %s1 = inlined_call_operand.vmem [shape: bf16[64,256], index: 1, kind: input, shape index: {}]
  %s2 = inlined_call_operand.vmem [shape: f32[1,256], index: 2, kind: input, shape index: {}]
  %s3 = inlined_call_operand.vmem [shape: bf16[128,256], index: 3, kind: input, shape index: {}]
  %s4 = inlined_call_operand.vmem [shape: bf16[128,256], index: 4, kind: output, shape index: {}]
  %s5 = sld [smem:[#allocation0]]
  $region34: #{stage0_forward.17} parent=0
    _
  %s7 = ssub.s32 1, %s5
  %s8 = scalar_select 0, %s7, %s5
  // Predicated region
  $region2: #{stage0_forward.17} parent=0 // pred_check
    _
  $region3: #{stage0_forward.17} parent=0 // pred_check_branch
    %10 = sbr.rel (0) target = $region5
  $region4: #{stage0_forward.17} parent=0 // pred_region
    _
  $region5: #{stage0_forward.17} parent=0 // pred_fallthru
    _
  // Predicated region
  $region6: #{stage0_forward.17} parent=0 // pred_check
    _
  $region7: #{stage0_forward.17} parent=0 // pred_check_branch
    %12 = sbr.rel (0) target = $region9
  $region8: #{stage0_forward.17} parent=0 // pred_region
    _
  $region9: #{stage0_forward.17} parent=0 // pred_fallthru
    _
  // Predicated region
  $region10: #{stage0_forward.17} parent=0 // pred_check
    _
  $region11: #{stage0_forward.17} parent=0 // pred_check_branch
    %14 = sbr.rel (0) target = $region13
  $region12: #{stage0_forward.17} parent=0 // pred_region
    _
  $region13: #{stage0_forward.17} parent=0 // pred_fallthru
    _
  // Predicated region
  $region14: #{stage0_forward.17} parent=0 // pred_check
    _
  $region15: #{stage0_forward.17} parent=0 // pred_check_branch
    %16 = sbr.rel (0) target = $region17
  $region16: #{stage0_forward.17} parent=0 // pred_region
    _
  $region17: #{stage0_forward.17} parent=0 // pred_fallthru
    _
  %p18 = scmp.eq.s32.totalorder 0, 0
  // Predicated region
  $region18: #{stage0_forward.17} parent=0 // pred_check
    %p19 = pneg %p18
  $region19: #{stage0_forward.17} parent=0 // pred_check_branch
    %21 = sbr.rel (%p19) target = $region21
  $region20: #{stage0_forward.17} parent=0 // pred_region
    %22 = vst [vmem:[#allocation2] sm:$0xff] 0.0
    %23 = vst [vmem:[#allocation2 + $0x8] sm:$0xff] 0.0
    %24 = vst [vmem:[#allocation2 + $0x10] sm:$0xff] 0.0
    %25 = vst [vmem:[#allocation2 + $0x18] sm:$0xff] 0.0
    %26 = vst [vmem:[#allocation2 + $0x20] sm:$0xff] 0.0
    %27 = vst [vmem:[#allocation2 + $0x28] sm:$0xff] 0.0
    %28 = vst [vmem:[#allocation2 + $0x30] sm:$0xff] 0.0
    %29 = vst [vmem:[#allocation2 + $0x38] sm:$0xff] 0.0
    %30 = vst [vmem:[#allocation2 + $0x40] sm:$0xff] 0.0
    %31 = vst [vmem:[#allocation2 + $0x48] sm:$0xff] 0.0
    %32 = vst [vmem:[#allocation2 + $0x50] sm:$0xff] 0.0
    %33 = vst [vmem:[#allocation2 + $0x58] sm:$0xff] 0.0
    %34 = vst [vmem:[#allocation2 + $0x60] sm:$0xff] 0.0
    %35 = vst [vmem:[#allocation2 + $0x68] sm:$0xff] 0.0
    %36 = vst [vmem:[#allocation2 + $0x70] sm:$0xff] 0.0
    %37 = vst [vmem:[#allocation2 + $0x78] sm:$0xff] 0.0
    %38 = vst [vmem:[#allocation2 + $0x80] sm:$0xff] 0.0
    %39 = vst [vmem:[#allocation2 + $0x88] sm:$0xff] 0.0
    %40 = vst [vmem:[#allocation2 + $0x90] sm:$0xff] 0.0
    %41 = vst [vmem:[#allocation2 + $0x98] sm:$0xff] 0.0
    %42 = vst [vmem:[#allocation2 + $0xa0] sm:$0xff] 0.0
    %43 = vst [vmem:[#allocation2 + $0xa8] sm:$0xff] 0.0
    %44 = vst [vmem:[#allocation2 + $0xb0] sm:$0xff] 0.0
    %45 = vst [vmem:[#allocation2 + $0xb8] sm:$0xff] 0.0
    %46 = vst [vmem:[#allocation2 + $0xc0] sm:$0xff] 0.0
    %47 = vst [vmem:[#allocation2 + $0xc8] sm:$0xff] 0.0
    %48 = vst [vmem:[#allocation2 + $0xd0] sm:$0xff] 0.0
    %49 = vst [vmem:[#allocation2 + $0xd8] sm:$0xff] 0.0
    %50 = vst [vmem:[#allocation2 + $0xe0] sm:$0xff] 0.0
    %51 = vst [vmem:[#allocation2 + $0xe8] sm:$0xff] 0.0
    %52 = vst [vmem:[#allocation2 + $0xf0] sm:$0xff] 0.0
    %53 = vst [vmem:[#allocation2 + $0xf8] sm:$0xff] 0.0
  $region21: #{stage0_forward.17} parent=0 // pred_fallthru
    _
  %v54 = vld [vmem:[#allocation2] sm:$0xff]
  %v55 = vld [vmem:[#allocation2 + $0x8] sm:$0xff]
  %v56 = vld [vmem:[#allocation2 + $0x10] sm:$0xff]
  %v57 = vld [vmem:[#allocation2 + $0x18] sm:$0xff]
  %v58 = vld [vmem:[#allocation2 + $0x20] sm:$0xff]
  %v59 = vld [vmem:[#allocation2 + $0x28] sm:$0xff]
  %v60 = vld [vmem:[#allocation2 + $0x30] sm:$0xff]
  %v61 = vld [vmem:[#allocation2 + $0x38] sm:$0xff]
  %v62 = vld [vmem:[#allocation2 + $0x40] sm:$0xff]
  %v63 = vld [vmem:[#allocation2 + $0x48] sm:$0xff]
  %v64 = vld [vmem:[#allocation2 + $0x50] sm:$0xff]
  %v65 = vld [vmem:[#allocation2 + $0x58] sm:$0xff]
  %v66 = vld [vmem:[#allocation2 + $0x60] sm:$0xff]
  %v67 = vld [vmem:[#allocation2 + $0x68] sm:$0xff]
  %v68 = vld [vmem:[#allocation2 + $0x70] sm:$0xff]
  %v69 = vld [vmem:[#allocation2 + $0x78] sm:$0xff]
  %v70 = vld [vmem:[#allocation2 + $0x80] sm:$0xff]
  %v71 = vld [vmem:[#allocation2 + $0x88] sm:$0xff]
  %v72 = vld [vmem:[#allocation2 + $0x90] sm:$0xff]
  %v73 = vld [vmem:[#allocation2 + $0x98] sm:$0xff]
  %v74 = vld [vmem:[#allocation2 + $0xa0] sm:$0xff]
  %v75 = vld [vmem:[#allocation2 + $0xa8] sm:$0xff]
  %v76 = vld [vmem:[#allocation2 + $0xb0] sm:$0xff]
  %v77 = vld [vmem:[#allocation2 + $0xb8] sm:$0xff]
  %v78 = vld [vmem:[#allocation2 + $0xc0] sm:$0xff]
  %v79 = vld [vmem:[#allocation2 + $0xc8] sm:$0xff]
  %v80 = vld [vmem:[#allocation2 + $0xd0] sm:$0xff]
  %v81 = vld [vmem:[#allocation2 + $0xd8] sm:$0xff]
  %v82 = vld [vmem:[#allocation2 + $0xe0] sm:$0xff]
  %v83 = vld [vmem:[#allocation2 + $0xe8] sm:$0xff]
  %v84 = vld [vmem:[#allocation2 + $0xf0] sm:$0xff]
  %v85 = vld [vmem:[#allocation2 + $0xf8] sm:$0xff]
  %v86 = vld [vmem:[%s0] sm:$0xf]
  %v87 = vld [vmem:[%s0 + $0x4] sm:$0xf]
  %v88 = vld [vmem:[%s0 + $0x8] sm:$0xf]
  %v89 = vld [vmem:[%s0 + $0xc] sm:$0xf]
  %v90 = vld [vmem:[%s0 + $0x10] sm:$0xf]
  %v91 = vld [vmem:[%s0 + $0x14] sm:$0xf]
  %v92 = vld [vmem:[%s0 + $0x18] sm:$0xf]
  %v93 = vld [vmem:[%s0 + $0x1c] sm:$0xf]
  %v94 = vld [vmem:[%s0 + $0x20] sm:$0xf]
  %v95 = vld [vmem:[%s0 + $0x24] sm:$0xf]
  %v96 = vld [vmem:[%s0 + $0x28] sm:$0xf]
  %v97 = vld [vmem:[%s0 + $0x2c] sm:$0xf]
  %v98 = vld [vmem:[%s0 + $0x30] sm:$0xf]
  %v99 = vld [vmem:[%s0 + $0x34] sm:$0xf]
  %v100 = vld [vmem:[%s0 + $0x38] sm:$0xf]
  %v101 = vld [vmem:[%s0 + $0x3c] sm:$0xf]
  %v102 = vld [vmem:[%s1] sm:$0xff]
  %v103 = vld [vmem:[%s1 + $0x8] sm:$0xff]
  %v104 = vld [vmem:[%s1 + $0x10] sm:$0xff]
  %v105 = vld [vmem:[%s1 + $0x18] sm:$0xff]
  %v106 = vld [vmem:[%s1 + $0x20] sm:$0xff]
  %v107 = vld [vmem:[%s1 + $0x28] sm:$0xff]
  %v108 = vld [vmem:[%s1 + $0x30] sm:$0xff]
  %v109 = vld [vmem:[%s1 + $0x38] sm:$0xff]
  %v126 = vunpack.c.l.b16 %v86
  %v127 = vunpack.c.l.b16 %v87
  %v128 = vunpack.c.l.b16 %v88
  %v129 = vunpack.c.l.b16 %v89
  %v130 = vunpack.c.l.b16 %v90
  %v131 = vunpack.c.l.b16 %v91
  %v132 = vunpack.c.l.b16 %v92
  %v133 = vunpack.c.l.b16 %v93
  %v134 = vunpack.c.l.b16 %v94
  %v135 = vunpack.c.l.b16 %v95
  %v136 = vunpack.c.l.b16 %v96
  %v137 = vunpack.c.l.b16 %v97
  %v138 = vunpack.c.l.b16 %v98
  %v139 = vunpack.c.l.b16 %v99
  %v140 = vunpack.c.l.b16 %v100
  %v141 = vunpack.c.l.b16 %v101
  %v142 = vpack.c.b16 %v127, %v126
  %v143 = vpack.c.b16 %v129, %v128
  %v144 = vpack.c.b16 %v131, %v130
  %v145 = vpack.c.b16 %v133, %v132
  %v146 = vpack.c.b16 %v135, %v134
  %v147 = vpack.c.b16 %v137, %v136
  %v148 = vpack.c.b16 %v139, %v138
  %v149 = vpack.c.b16 %v141, %v140
  %v158 = vunpack.c.l.b16 %v102
  %v159 = vunpack.c.h.b16 %v102
  %v160 = vunpack.c.l.b16 %v103
  %v161 = vunpack.c.h.b16 %v103
  %v162 = vunpack.c.l.b16 %v104
  %v163 = vunpack.c.h.b16 %v104
  %v164 = vunpack.c.l.b16 %v105
  %v165 = vunpack.c.h.b16 %v105
  %v166 = vunpack.c.l.b16 %v106
  %v167 = vunpack.c.h.b16 %v106
  %v168 = vunpack.c.l.b16 %v107
  %v169 = vunpack.c.h.b16 %v107
  %v170 = vunpack.c.l.b16 %v108
  %v171 = vunpack.c.h.b16 %v108
  %v172 = vunpack.c.l.b16 %v109
  %v173 = vunpack.c.h.b16 %v109
  %v174 = vpack.c.b16 %v160, %v158
  %v175 = vpack.c.b16 %v161, %v159
  %v176 = vpack.c.b16 %v164, %v162
  %v177 = vpack.c.b16 %v165, %v163
  %v178 = vpack.c.b16 %v168, %v166
  %v179 = vpack.c.b16 %v169, %v167
  %v180 = vpack.c.b16 %v172, %v170
  %v181 = vpack.c.b16 %v173, %v171
  %vm190 = vcmask 523264
  %v192 = vsel %vm190, %v142, 0
  %v195 = vsel %vm190, %v143, 0
  %v198 = vsel %vm190, %v144, 0
  %v201 = vsel %vm190, %v145, 0
  %v204 = vsel %vm190, %v146, 0
  %v207 = vsel %vm190, %v147, 0
  %v210 = vsel %vm190, %v148, 0
  %v213 = vsel %vm190, %v149, 0
  %215 = vmatprep.subr.bf16.mxu0 %v175
  %216 = vmatpush1.bf16.msra.mxu0 %v174
  %217 = vmatprep.subr.bf16.mxu0 %v177
  %218 = vmatpush1.bf16.msra.mxu0 %v176
  %219 = vmatprep.subr.bf16.mxu0 %v179
  %220 = vmatpush1.bf16.msra.mxu0 %v178
  %221 = vmatprep.subr.bf16.mxu0 %v181
  %222 = vmatpush1.bf16.msra.mxu0 %v180
  %223 = vmatprep.subr.bf16.mxu0 0
  %224 = vmatpush1.bf16.msra.mxu0 0
  %225 = vmatprep.subr.bf16.mxu0 0
  %226 = vmatpush1.bf16.msra.mxu0 0
  %227 = vmatprep.subr.bf16.mxu0 0
  %228 = vmatpush1.bf16.msra.mxu0 0
  %229 = vmatprep.subr.bf16.mxu0 0
  %230 = vmatpush1.bf16.msra.mxu0 0
  %231 = vmatprep.subr.bf16.mxu0 0
  %232 = vmatpush1.bf16.msra.mxu0 0
  %233 = vmatprep.subr.bf16.mxu0 0
  %234 = vmatpush1.bf16.msra.mxu0 0
  %235 = vmatprep.subr.bf16.mxu0 0
  %236 = vmatpush1.bf16.msra.mxu0 0
  %237 = vmatprep.subr.bf16.mxu0 0
  %238 = vmatpush1.bf16.msra.mxu0 0
  %239 = vmatprep.subr.bf16.mxu0 0
  %240 = vmatpush1.bf16.msra.mxu0 0
  %241 = vmatprep.subr.bf16.mxu0 0
  %242 = vmatpush1.bf16.msra.mxu0 0
  %243 = vmatprep.subr.bf16.mxu0 0
  %244 = vmatpush1.bf16.msra.mxu0 0
  %245 = vmatprep.subr.bf16.mxu0 0
  %246 = vmatpush1.bf16.msra.mxu0 0
  %247 = vmatprep.mubr.bf16.mxu0 0
  %248 = vmatmul.mubr.bf16.gmra.mrb[0].mxu0 %v192
  %v249 = vpop.f32.mrb[0].mxu0
  %v250 = vadd.f32 0.0, %v249
  %v251 = vpop.f32.mrb[0].mxu0
  %v252 = vadd.f32 0.0, %v251
  %v253 = vpop.f32.mrb[0].mxu0
  %v254 = vadd.f32 0.0, %v253
  %v255 = vpop.f32.mrb[0].mxu0
  %v256 = vadd.f32 0.0, %v255
  %257 = vmatprep.mubr.bf16.mxu0 0
  %258 = vmatmul.mubr.bf16.gmra.mrb[0].mxu0 %v195
  %v259 = vpop.f32.mrb[0].mxu0
  %v260 = vadd.f32 0.0, %v259
  %v261 = vpop.f32.mrb[0].mxu0
  %v262 = vadd.f32 0.0, %v261
  %v263 = vpop.f32.mrb[0].mxu0
  %v264 = vadd.f32 0.0, %v263
  %v265 = vpop.f32.mrb[0].mxu0
  %v266 = vadd.f32 0.0, %v265
  %267 = vmatprep.mubr.bf16.mxu0 0
  %268 = vmatmul.mubr.bf16.gmra.mrb[0].mxu0 %v198
  %v269 = vpop.f32.mrb[0].mxu0
  %v270 = vadd.f32 0.0, %v269
  %v271 = vpop.f32.mrb[0].mxu0
  %v272 = vadd.f32 0.0, %v271
  %v273 = vpop.f32.mrb[0].mxu0
  %v274 = vadd.f32 0.0, %v273
  %v275 = vpop.f32.mrb[0].mxu0
  %v276 = vadd.f32 0.0, %v275
  %277 = vmatprep.mubr.bf16.mxu0 0
  %278 = vmatmul.mubr.bf16.gmra.mrb[0].mxu0 %v201
  %v279 = vpop.f32.mrb[0].mxu0
  %v280 = vadd.f32 0.0, %v279
  %v281 = vpop.f32.mrb[0].mxu0
  %v282 = vadd.f32 0.0, %v281
  %v283 = vpop.f32.mrb[0].mxu0
  %v284 = vadd.f32 0.0, %v283
  %v285 = vpop.f32.mrb[0].mxu0
  %v286 = vadd.f32 0.0, %v285
  %287 = vmatprep.mubr.bf16.mxu0 0
  %288 = vmatmul.mubr.bf16.gmra.mrb[0].mxu0 %v204
  %v289 = vpop.f32.mrb[0].mxu0
  %v290 = vadd.f32 0.0, %v289
  %v291 = vpop.f32.mrb[0].mxu0
  %v292 = vadd.f32 0.0, %v291
  %v293 = vpop.f32.mrb[0].mxu0
  %v294 = vadd.f32 0.0, %v293
  %v295 = vpop.f32.mrb[0].mxu0
  %v296 = vadd.f32 0.0, %v295
  %297 = vmatprep.mubr.bf16.mxu0 0
  %298 = vmatmul.mubr.bf16.gmra.mrb[0].mxu0 %v207
  %v299 = vpop.f32.mrb[0].mxu0
  %v300 = vadd.f32 0.0, %v299
  %v301 = vpop.f32.mrb[0].mxu0
  %v302 = vadd.f32 0.0, %v301
  %v303 = vpop.f32.mrb[0].mxu0
  %v304 = vadd.f32 0.0, %v303
  %v305 = vpop.f32.mrb[0].mxu0
  %v306 = vadd.f32 0.0, %v305
  %307 = vmatprep.mubr.bf16.mxu0 0
  %308 = vmatmul.mubr.bf16.gmra.mrb[0].mxu0 %v210
  %v309 = vpop.f32.mrb[0].mxu0
  %v310 = vadd.f32 0.0, %v309
  %v311 = vpop.f32.mrb[0].mxu0
  %v312 = vadd.f32 0.0, %v311
  %v313 = vpop.f32.mrb[0].mxu0
  %v314 = vadd.f32 0.0, %v313
  %v315 = vpop.f32.mrb[0].mxu0
  %v316 = vadd.f32 0.0, %v315
  %317 = vmatprep.mubr.bf16.mxu0 0
  %318 = vmatmul.mubr.bf16.gmra.mrb[0].mxu0 %v213
  %v319 = vpop.f32.mrb[0].mxu0
  %v320 = vadd.f32 0.0, %v319
  %v321 = vpop.f32.mrb[0].mxu0
  %v322 = vadd.f32 0.0, %v321
  %v323 = vpop.f32.mrb[0].mxu0
  %v324 = vadd.f32 0.0, %v323
  %v325 = vpop.f32.mrb[0].mxu0
  %v326 = vadd.f32 0.0, %v325
  %327 = vdwg.mxu0
  %v328 = vadd.f32 %v54, %v250
  %v329 = vadd.f32 %v55, %v252
  %v330 = vadd.f32 %v56, %v254
  %v331 = vadd.f32 %v57, %v256
  %v332 = vadd.f32 %v58, %v260
  %v333 = vadd.f32 %v59, %v262
  %v334 = vadd.f32 %v60, %v264
  %v335 = vadd.f32 %v61, %v266
  %v336 = vadd.f32 %v62, %v270
  %v337 = vadd.f32 %v63, %v272
  %v338 = vadd.f32 %v64, %v274
  %v339 = vadd.f32 %v65, %v276
  %v340 = vadd.f32 %v66, %v280
  %v341 = vadd.f32 %v67, %v282
  %v342 = vadd.f32 %v68, %v284
  %v343 = vadd.f32 %v69, %v286
  %v344 = vadd.f32 %v70, %v290
  %v345 = vadd.f32 %v71, %v292
  %v346 = vadd.f32 %v72, %v294
  %v347 = vadd.f32 %v73, %v296
  %v348 = vadd.f32 %v74, %v300
  %v349 = vadd.f32 %v75, %v302
  %v350 = vadd.f32 %v76, %v304
  %v351 = vadd.f32 %v77, %v306
  %v352 = vadd.f32 %v78, %v310
  %v353 = vadd.f32 %v79, %v312
  %v354 = vadd.f32 %v80, %v314
  %v355 = vadd.f32 %v81, %v316
  %v356 = vadd.f32 %v82, %v320
  %v357 = vadd.f32 %v83, %v322
  %v358 = vadd.f32 %v84, %v324
  %v359 = vadd.f32 %v85, %v326
  %360 = vst [vmem:[#allocation2] sm:$0xff] %v328
  %361 = vst [vmem:[#allocation2 + $0x8] sm:$0xff] %v329
  %362 = vst [vmem:[#allocation2 + $0x10] sm:$0xff] %v330
  %363 = vst [vmem:[#allocation2 + $0x18] sm:$0xff] %v331
  %364 = vst [vmem:[#allocation2 + $0x20] sm:$0xff] %v332
  %365 = vst [vmem:[#allocation2 + $0x28] sm:$0xff] %v333
  %366 = vst [vmem:[#allocation2 + $0x30] sm:$0xff] %v334
  %367 = vst [vmem:[#allocation2 + $0x38] sm:$0xff] %v335
  %368 = vst [vmem:[#allocation2 + $0x40] sm:$0xff] %v336
  %369 = vst [vmem:[#allocation2 + $0x48] sm:$0xff] %v337
  %370 = vst [vmem:[#allocation2 + $0x50] sm:$0xff] %v338
  %371 = vst [vmem:[#allocation2 + $0x58] sm:$0xff] %v339
  %372 = vst [vmem:[#allocation2 + $0x60] sm:$0xff] %v340
  %373 = vst [vmem:[#allocation2 + $0x68] sm:$0xff] %v341
  %374 = vst [vmem:[#allocation2 + $0x70] sm:$0xff] %v342
  %375 = vst [vmem:[#allocation2 + $0x78] sm:$0xff] %v343
  %376 = vst [vmem:[#allocation2 + $0x80] sm:$0xff] %v344
  %377 = vst [vmem:[#allocation2 + $0x88] sm:$0xff] %v345
  %378 = vst [vmem:[#allocation2 + $0x90] sm:$0xff] %v346
  %379 = vst [vmem:[#allocation2 + $0x98] sm:$0xff] %v347
  %380 = vst [vmem:[#allocation2 + $0xa0] sm:$0xff] %v348
  %381 = vst [vmem:[#allocation2 + $0xa8] sm:$0xff] %v349
  %382 = vst [vmem:[#allocation2 + $0xb0] sm:$0xff] %v350
  %383 = vst [vmem:[#allocation2 + $0xb8] sm:$0xff] %v351
  %384 = vst [vmem:[#allocation2 + $0xc0] sm:$0xff] %v352
  %385 = vst [vmem:[#allocation2 + $0xc8] sm:$0xff] %v353
  %386 = vst [vmem:[#allocation2 + $0xd0] sm:$0xff] %v354
  %387 = vst [vmem:[#allocation2 + $0xd8] sm:$0xff] %v355
  %388 = vst [vmem:[#allocation2 + $0xe0] sm:$0xff] %v356
  %389 = vst [vmem:[#allocation2 + $0xe8] sm:$0xff] %v357
  %390 = vst [vmem:[#allocation2 + $0xf0] sm:$0xff] %v358
  %391 = vst [vmem:[#allocation2 + $0xf8] sm:$0xff] %v359
  // Predicated region
  $region22: #{stage0_forward.17} parent=0 // pred_check
    %p392 = pneg %p18
  $region23: #{stage0_forward.17} parent=0 // pred_check_branch
    %394 = sbr.rel (%p392) target = $region25
  $region24: #{stage0_forward.17} parent=0 // pred_region
    %v395 = vld [vmem:[#allocation2] sm:$0xff]
    %v396 = vld [vmem:[#allocation2 + $0x8] sm:$0xff]
    %v397 = vld [vmem:[#allocation2 + $0x10] sm:$0xff]
    %v398 = vld [vmem:[#allocation2 + $0x18] sm:$0xff]
    %v399 = vld [vmem:[#allocation2 + $0x20] sm:$0xff]
    %v400 = vld [vmem:[#allocation2 + $0x28] sm:$0xff]
    %v401 = vld [vmem:[#allocation2 + $0x30] sm:$0xff]
    %v402 = vld [vmem:[#allocation2 + $0x38] sm:$0xff]
    %v403 = vld [vmem:[#allocation2 + $0x40] sm:$0xff]
    %v404 = vld [vmem:[#allocation2 + $0x48] sm:$0xff]
    %v405 = vld [vmem:[#allocation2 + $0x50] sm:$0xff]
    %v406 = vld [vmem:[#allocation2 + $0x58] sm:$0xff]
    %v407 = vld [vmem:[#allocation2 + $0x60] sm:$0xff]
    %v408 = vld [vmem:[#allocation2 + $0x68] sm:$0xff]
    %v409 = vld [vmem:[#allocation2 + $0x70] sm:$0xff]
    %v410 = vld [vmem:[#allocation2 + $0x78] sm:$0xff]
    %v411 = vld [vmem:[#allocation2 + $0x80] sm:$0xff]
    %v412 = vld [vmem:[#allocation2 + $0x88] sm:$0xff]
    %v413 = vld [vmem:[#allocation2 + $0x90] sm:$0xff]
    %v414 = vld [vmem:[#allocation2 + $0x98] sm:$0xff]
    %v415 = vld [vmem:[#allocation2 + $0xa0] sm:$0xff]
    %v416 = vld [vmem:[#allocation2 + $0xa8] sm:$0xff]
    %v417 = vld [vmem:[#allocation2 + $0xb0] sm:$0xff]
    %v418 = vld [vmem:[#allocation2 + $0xb8] sm:$0xff]
    %v419 = vld [vmem:[#allocation2 + $0xc0] sm:$0xff]
    %v420 = vld [vmem:[#allocation2 + $0xc8] sm:$0xff]
    %v421 = vld [vmem:[#allocation2 + $0xd0] sm:$0xff]
    %v422 = vld [vmem:[#allocation2 + $0xd8] sm:$0xff]
    %v423 = vld [vmem:[#allocation2 + $0xe0] sm:$0xff]
    %v424 = vld [vmem:[#allocation2 + $0xe8] sm:$0xff]
    %v425 = vld [vmem:[#allocation2 + $0xf0] sm:$0xff]
    %v426 = vld [vmem:[#allocation2 + $0xf8] sm:$0xff]
    %v427 = vld [vmem:[%s2] sm:$0x3]
    %v429 = vlaneseq
    %v430 = vshrl.u32 %v429, 7
    %v431 = vsub.s32 0, %v430
    %v432 = vrot.slane %v427, %v431
    %v433 = vlaneseq
    %v434 = vshrl.u32 %v433, 7
    %v435 = vsub.s32 1, %v434
    %v436 = vrot.slane %v427, %v435
    %v439 = vadd.f32 %v395, %v432
    %v440 = vadd.f32 %v396, %v436
    %v441 = vadd.f32 %v397, %v432
    %v442 = vadd.f32 %v398, %v436
    %v443 = vadd.f32 %v399, %v432
    %v444 = vadd.f32 %v400, %v436
    %v445 = vadd.f32 %v401, %v432
    %v446 = vadd.f32 %v402, %v436
    %v447 = vadd.f32 %v403, %v432
    %v448 = vadd.f32 %v404, %v436
    %v449 = vadd.f32 %v405, %v432
    %v450 = vadd.f32 %v406, %v436
    %v451 = vadd.f32 %v407, %v432
    %v452 = vadd.f32 %v408, %v436
    %v453 = vadd.f32 %v409, %v432
    %v454 = vadd.f32 %v410, %v436
    %v455 = vadd.f32 %v411, %v432
    %v456 = vadd.f32 %v412, %v436
    %v457 = vadd.f32 %v413, %v432
    %v458 = vadd.f32 %v414, %v436
    %v459 = vadd.f32 %v415, %v432
    %v460 = vadd.f32 %v416, %v436
    %v461 = vadd.f32 %v417, %v432
    %v462 = vadd.f32 %v418, %v436
    %v463 = vadd.f32 %v419, %v432
    %v464 = vadd.f32 %v420, %v436
    %v465 = vadd.f32 %v421, %v432
    %v466 = vadd.f32 %v422, %v436
    %v467 = vadd.f32 %v423, %v432
    %v468 = vadd.f32 %v424, %v436
    %v469 = vadd.f32 %v425, %v432
    %v470 = vadd.f32 %v426, %v436
    %v471 = vld [vmem:[%s3] sm:$0xff]
    %v472 = vld [vmem:[%s3 + $0x8] sm:$0xff]
    %v473 = vld [vmem:[%s3 + $0x10] sm:$0xff]
    %v474 = vld [vmem:[%s3 + $0x18] sm:$0xff]
    %v475 = vld [vmem:[%s3 + $0x20] sm:$0xff]
    %v476 = vld [vmem:[%s3 + $0x28] sm:$0xff]
    %v477 = vld [vmem:[%s3 + $0x30] sm:$0xff]
    %v478 = vld [vmem:[%s3 + $0x38] sm:$0xff]
    %v479 = vld [vmem:[%s3 + $0x40] sm:$0xff]
    %v480 = vld [vmem:[%s3 + $0x48] sm:$0xff]
    %v481 = vld [vmem:[%s3 + $0x50] sm:$0xff]
    %v482 = vld [vmem:[%s3 + $0x58] sm:$0xff]
    %v483 = vld [vmem:[%s3 + $0x60] sm:$0xff]
    %v484 = vld [vmem:[%s3 + $0x68] sm:$0xff]
    %v485 = vld [vmem:[%s3 + $0x70] sm:$0xff]
    %v486 = vld [vmem:[%s3 + $0x78] sm:$0xff]
    %v487 = vunpack.c.l.bf16 %v471
    %v488 = vunpack.c.h.bf16 %v471
    %v489 = vunpack.c.l.bf16 %v472
    %v490 = vunpack.c.h.bf16 %v472
    %v491 = vunpack.c.l.bf16 %v473
    %v492 = vunpack.c.h.bf16 %v473
    %v493 = vunpack.c.l.bf16 %v474
    %v494 = vunpack.c.h.bf16 %v474
    %v495 = vunpack.c.l.bf16 %v475
    %v496 = vunpack.c.h.bf16 %v475
    %v497 = vunpack.c.l.bf16 %v476
    %v498 = vunpack.c.h.bf16 %v476
    %v499 = vunpack.c.l.bf16 %v477
    %v500 = vunpack.c.h.bf16 %v477
    %v501 = vunpack.c.l.bf16 %v478
    %v502 = vunpack.c.h.bf16 %v478
    %v503 = vunpack.c.l.bf16 %v479
    %v504 = vunpack.c.h.bf16 %v479
    %v505 = vunpack.c.l.bf16 %v480
    %v506 = vunpack.c.h.bf16 %v480
    %v507 = vunpack.c.l.bf16 %v481
    %v508 = vunpack.c.h.bf16 %v481
    %v509 = vunpack.c.l.bf16 %v482
    %v510 = vunpack.c.h.bf16 %v482
    %v511 = vunpack.c.l.bf16 %v483
    %v512 = vunpack.c.h.bf16 %v483
    %v513 = vunpack.c.l.bf16 %v484
    %v514 = vunpack.c.h.bf16 %v484
    %v515 = vunpack.c.l.bf16 %v485
    %v516 = vunpack.c.h.bf16 %v485
    %v517 = vunpack.c.l.bf16 %v486
    %v518 = vunpack.c.h.bf16 %v486
    %v519 = vadd.f32 %v439, %v487
    %v520 = vadd.f32 %v440, %v488
    %v521 = vadd.f32 %v441, %v489
    %v522 = vadd.f32 %v442, %v490
    %v523 = vadd.f32 %v443, %v491
    %v524 = vadd.f32 %v444, %v492
    %v525 = vadd.f32 %v445, %v493
    %v526 = vadd.f32 %v446, %v494
    %v527 = vadd.f32 %v447, %v495
    %v528 = vadd.f32 %v448, %v496
    %v529 = vadd.f32 %v449, %v497
    %v530 = vadd.f32 %v450, %v498
    %v531 = vadd.f32 %v451, %v499
    %v532 = vadd.f32 %v452, %v500
    %v533 = vadd.f32 %v453, %v501
    %v534 = vadd.f32 %v454, %v502
    %v535 = vadd.f32 %v455, %v503
    %v536 = vadd.f32 %v456, %v504
    %v537 = vadd.f32 %v457, %v505
    %v538 = vadd.f32 %v458, %v506
    %v539 = vadd.f32 %v459, %v507
    %v540 = vadd.f32 %v460, %v508
    %v541 = vadd.f32 %v461, %v509
    %v542 = vadd.f32 %v462, %v510
    %v543 = vadd.f32 %v463, %v511
    %v544 = vadd.f32 %v464, %v512
    %v545 = vadd.f32 %v465, %v513
    %v546 = vadd.f32 %v466, %v514
    %v547 = vadd.f32 %v467, %v515
    %v548 = vadd.f32 %v468, %v516
    %v549 = vadd.f32 %v469, %v517
    %v550 = vadd.f32 %v470, %v518
    %v551 = vpack.c.bf16 %v521, %v519
    %v552 = vpack.c.bf16 %v522, %v520
    %v553 = vpack.c.bf16 %v525, %v523
    %v554 = vpack.c.bf16 %v526, %v524
    %v555 = vpack.c.bf16 %v529, %v527
    %v556 = vpack.c.bf16 %v530, %v528
    %v557 = vpack.c.bf16 %v533, %v531
    %v558 = vpack.c.bf16 %v534, %v532
    %v559 = vpack.c.bf16 %v537, %v535
    %v560 = vpack.c.bf16 %v538, %v536
    %v561 = vpack.c.bf16 %v541, %v539
    %v562 = vpack.c.bf16 %v542, %v540
    %v563 = vpack.c.bf16 %v545, %v543
    %v564 = vpack.c.bf16 %v546, %v544
    %v565 = vpack.c.bf16 %v549, %v547
    %v566 = vpack.c.bf16 %v550, %v548
    %v583 = vunpack.c.l.b16 %v551
    %v584 = vunpack.c.l.b16 %v552
    %v585 = vunpack.c.h.b16 %v551
    %v586 = vunpack.c.h.b16 %v552
    %v587 = vunpack.c.l.b16 %v553
    %v588 = vunpack.c.l.b16 %v554
    %v589 = vunpack.c.h.b16 %v553
    %v590 = vunpack.c.h.b16 %v554
    %v591 = vunpack.c.l.b16 %v555
    %v592 = vunpack.c.l.b16 %v556
    %v593 = vunpack.c.h.b16 %v555
    %v594 = vunpack.c.h.b16 %v556
    %v595 = vunpack.c.l.b16 %v557
    %v596 = vunpack.c.l.b16 %v558
    %v597 = vunpack.c.h.b16 %v557
    %v598 = vunpack.c.h.b16 %v558
    %v599 = vunpack.c.l.b16 %v559
    %v600 = vunpack.c.l.b16 %v560
    %v601 = vunpack.c.h.b16 %v559
    %v602 = vunpack.c.h.b16 %v560
    %v603 = vunpack.c.l.b16 %v561
    %v604 = vunpack.c.l.b16 %v562
    %v605 = vunpack.c.h.b16 %v561
    %v606 = vunpack.c.h.b16 %v562
    %v607 = vunpack.c.l.b16 %v563
    %v608 = vunpack.c.l.b16 %v564
    %v609 = vunpack.c.h.b16 %v563
    %v610 = vunpack.c.h.b16 %v564
    %v611 = vunpack.c.l.b16 %v565
    %v612 = vunpack.c.l.b16 %v566
    %v613 = vunpack.c.h.b16 %v565
    %v614 = vunpack.c.h.b16 %v566
    %v615 = vpack.c.b16 %v584, %v583
    %v616 = vpack.c.b16 %v586, %v585
    %v617 = vpack.c.b16 %v588, %v587
    %v618 = vpack.c.b16 %v590, %v589
    %v619 = vpack.c.b16 %v592, %v591
    %v620 = vpack.c.b16 %v594, %v593
    %v621 = vpack.c.b16 %v596, %v595
    %v622 = vpack.c.b16 %v598, %v597
    %v623 = vpack.c.b16 %v600, %v599
    %v624 = vpack.c.b16 %v602, %v601
    %v625 = vpack.c.b16 %v604, %v603
    %v626 = vpack.c.b16 %v606, %v605
    %v627 = vpack.c.b16 %v608, %v607
    %v628 = vpack.c.b16 %v610, %v609
    %v629 = vpack.c.b16 %v612, %v611
    %v630 = vpack.c.b16 %v614, %v613
    %647 = vst [vmem:[%s4] sm:$0xff] %v615
    %648 = vst [vmem:[%s4 + $0x8] sm:$0xff] %v616
    %649 = vst [vmem:[%s4 + $0x10] sm:$0xff] %v617
    %650 = vst [vmem:[%s4 + $0x18] sm:$0xff] %v618
    %651 = vst [vmem:[%s4 + $0x20] sm:$0xff] %v619
    %652 = vst [vmem:[%s4 + $0x28] sm:$0xff] %v620
    %653 = vst [vmem:[%s4 + $0x30] sm:$0xff] %v621
    %654 = vst [vmem:[%s4 + $0x38] sm:$0xff] %v622
    %655 = vst [vmem:[%s4 + $0x40] sm:$0xff] %v623
    %656 = vst [vmem:[%s4 + $0x48] sm:$0xff] %v624
    %657 = vst [vmem:[%s4 + $0x50] sm:$0xff] %v625
    %658 = vst [vmem:[%s4 + $0x58] sm:$0xff] %v626
    %659 = vst [vmem:[%s4 + $0x60] sm:$0xff] %v627
    %660 = vst [vmem:[%s4 + $0x68] sm:$0xff] %v628
    %661 = vst [vmem:[%s4 + $0x70] sm:$0xff] %v629
    %662 = vst [vmem:[%s4 + $0x78] sm:$0xff] %v630
  $region25: #{stage0_forward.17} parent=0 // pred_fallthru
    _
  // Predicated region
  $region26: #{stage0_forward.17} parent=0 // pred_check
    _
  $region27: #{stage0_forward.17} parent=0 // pred_check_branch
    %664 = sbr.rel (0) target = $region29
  $region28: #{stage0_forward.17} parent=0 // pred_region
    _
  $region29: #{stage0_forward.17} parent=0 // pred_fallthru
    _
  // Predicated region
  $region30: #{stage0_forward.17} parent=0 // pred_check
    _
  $region31: #{stage0_forward.17} parent=0 // pred_check_branch
    %666 = sbr.rel (0) target = $region33
  $region32: #{stage0_forward.17} parent=0 // pred_region
    _
  $region33: #{stage0_forward.17} parent=0 // pred_fallthru
    _

</llo_original>
